<compile_context>
chip_gen: v7x
topology: tpu7x:2x2x1
jax: 0.10.0
libtpu: 0.0.40
codegen_flags: <defaults>
</compile_context>

<pallas_src>
import jax
import jax.numpy as jnp
from jax.experimental import pallas as pl
from jax.experimental.pallas import tpu as pltpu


N_DW = 8                              # depthwise-separable convs in the trunk

# lane-replicated per-channel bias tables, shape (NUM_TABS, C, B_TILE*HW)
T_BN1_S, T_BN1_B, T_BN2_S, T_BN2_B = 0, 1, 2, 3
T_DWB_BASE = 4                        # depthwise-BN bias per trunk DWConv
T_PWB_BASE = T_DWB_BASE + N_DW        # pointwise-BN bias per trunk DWConv
NUM_TABS = T_PWB_BASE + N_DW          # 20

# (C, C) matrices, rows = out channels (following BN scale folded into rows)
M_CONV1 = 0
M_PW_BASE = 1
M_CONV2 = M_PW_BASE + N_DW
M_ATT_LIN = M_CONV2 + 1
NUM_MATS = M_ATT_LIN + 1              # 11

# columns of the small (C, 4) attention scale/bias array
A_BN_S, A_BN_B, A_DW_B, A_LIN_B = 0, 1, 2, 3


def _dw_defs(mid_c):
    """(cin, cout, dilation, out_channel_offset) for the 8 trunk DWConvs in
    execution order.  out_channel_offset folds torch.cat into the pointwise
    weight rows of the branch-final convs."""
    h = mid_c // 2
    return [
        (mid_c, h, 1, 0),          # iter0 mid1 conv a
        (h,     h, 1, 0),          # iter0 mid1 conv b  -> channels [0, h)
        (mid_c, h, 2, 0),          # iter0 mid2 conv a  (dilation 2)
        (h,     h, 1, h),          # iter0 mid2 conv b  -> channels [h, 2h)
        (mid_c, mid_c, 1, 0),      # iter1 mid1 conv a
        (mid_c, mid_c, 1, 0),      # iter1 mid1 conv b  -> channels [0, mid_c)
        (mid_c, mid_c, 2, 0),      # iter1 mid2 conv a  (dilation 2)
        (mid_c, mid_c, 1, mid_c),  # iter1 mid2 conv b  -> [mid_c, 2*mid_c)
    ]


# -----------------------------------------------------------------------------
# The fused kernel.
# -----------------------------------------------------------------------------
def _make_me_att_kernel(W, C, LHW):
    dils = [d for (_, _, d, _) in _dw_defs(C // 2)]
    # static roll shifts per trunk conv (flattened-HW tap offsets)
    shifts = []
    for d in dils:
        ss = []
        for dy in (-d, 0, d):
            for dx in (-d, 0, d):
                ss.append((-(dy * W + dx)) % LHW)
        shifts.append(ss)

    def kernel(x_ref, tab_ref, dwt_ref, mat_ref, attsb_ref, watt_ref,
               pfold_ref, ssum_ref, gexp_ref, o_ref):
        f32 = jnp.float32

        def conv1x1(i, t):                               # MXU
            return jnp.dot(mat_ref[i], t, preferred_element_type=f32)

        def dwconv(t, k):
            # depthwise 3x3: 'same' masks + dw-BN scale folded into dwt tables
            acc = tab_ref[T_DWB_BASE + k]                # dw-BN bias table
            for tap in range(9):
                s = shifts[k][tap]
                shifted = t if s == 0 else pltpu.roll(t, shift=s, axis=1)
                acc = acc + dwt_ref[9 * k + tap] * shifted
            h = jnp.maximum(acc, 0.0)
            # pointwise 1x1 (pw-BN scale folded into matrix rows) + bias + ReLU
            y = conv1x1(M_PW_BASE + k, h) + tab_ref[T_PWB_BASE + k]
            return jnp.maximum(y, 0.0)

        # ---- conv1 = BRC(in_c, mid_c, 1): BN + SiLU + 1x1 conv --------------
        t = x_ref[0].astype(f32) * tab_ref[T_BN1_S] + tab_ref[T_BN1_B]
        t = t * jax.nn.sigmoid(t)
        m = conv1x1(M_CONV1, t)

        # ---- two mid iterations; torch.cat folded into pw weight rows -------
        k = 0
        for _ in range(2):
            m1 = dwconv(dwconv(m, k + 0), k + 1)
            m2 = dwconv(dwconv(m, k + 2), k + 3)
            m = m1 + m2
            k += 4

        # ---- residual + conv2 = BRC(in_c, out_c, 1) --------------------------
        t = (m + x_ref[0].astype(f32)) * tab_ref[T_BN2_S] + tab_ref[T_BN2_B]
        t = t * jax.nn.sigmoid(t)
        y = conv1x1(M_CONV2, t)                          # (C, LHW)

        # ---- 'ca' attention head: everything on the (mostly idle) MXU --------
        # AdaptiveAvgPool2d((3,3)) as  y @ Pfold  -> (C, B_TILE*9)
        pooled = jnp.dot(y, pfold_ref[...], preferred_element_type=f32)
        pr = jnp.maximum(pooled * attsb_ref[:, A_BN_S:A_BN_S + 1]
                         + attsb_ref[:, A_BN_B:A_BN_B + 1], 0.0)
        # depthwise 3x3 (valid) == per-channel tap weighting + per-image sum
        z = (jnp.dot(pr * watt_ref[...], ssum_ref[...],
                     preferred_element_type=f32)
             + attsb_ref[:, A_DW_B:A_DW_B + 1])          # (C, B_TILE)
        # Dropout(p=0.3) is eval-mode identity.  Linear + Sigmoid.
        a = jax.nn.sigmoid(conv1x1(M_ATT_LIN, z)
                           + attsb_ref[:, A_LIN_B:A_LIN_B + 1])
        # per-image gate broadcast via 0/1 expansion matrix (MXU)
        gate = jnp.dot(a, gexp_ref[...], preferred_element_type=f32)  # (C, LHW)
        o_ref[0] = (y * gate).astype(o_ref.dtype)

    return kernel


@jax.jit
def me_att_forward(x_nchw, packed):
    tab, dwt, mats, attsb, watt, pfold, ssum, gexp = packed
    B, C, H, W = x_nchw.shape
    HW = H * W
    LHW = tab.shape[-1]
    b_tile = LHW // HW
    assert HW % 128 == 0, "lane-dense layout assumes H*W % 128 == 0"
    assert 2 * W + 2 < HW, "dilation-2 roll must stay inside one image"
    assert B % b_tile == 0
    G = B // b_tile

    # fold B_TILE images onto the lane axis (layout plumbing, outside kernel)
    xg = (x_nchw.reshape(G, b_tile, C, HW)
                 .transpose(0, 2, 1, 3)
                 .reshape(G, C, LHW))

    out = pl.pallas_call(
        _make_me_att_kernel(W, C, LHW),
        out_shape=jax.ShapeDtypeStruct((G, C, LHW), x_nchw.dtype),
        grid=(G,),
        in_specs=[
            pl.BlockSpec((1, C, LHW), lambda g: (g, 0, 0)),
            pl.BlockSpec(tab.shape, lambda g: (0, 0, 0)),
            pl.BlockSpec(dwt.shape, lambda g: (0, 0, 0)),
            pl.BlockSpec(mats.shape, lambda g: (0, 0, 0)),
            pl.BlockSpec(attsb.shape, lambda g: (0, 0)),
            pl.BlockSpec(watt.shape, lambda g: (0, 0)),
            pl.BlockSpec(pfold.shape, lambda g: (0, 0)),
            pl.BlockSpec(ssum.shape, lambda g: (0, 0)),
            pl.BlockSpec(gexp.shape, lambda g: (0, 0)),
        ],
        out_specs=pl.BlockSpec((1, C, LHW), lambda g: (g, 0, 0)),
        compiler_params=pltpu.CompilerParams(
            dimension_semantics=("parallel",)),
    )(xg, tab, dwt, mats, attsb, watt, pfold, ssum, gexp)

    return (out.reshape(G, C, b_tile, HW)
               .transpose(0, 2, 1, 3)
               .reshape(B, C, H, W))


# -----------------------------------------------------------------------------
# Deterministic parameter generation, BN folding, padding, pre-broadcasting.
# -----------------------------------------------------------------------------
def _fold_bn(key, c):
    """Eval-mode BatchNorm folded into per-channel (scale, bias)."""
    k1, k2, k3, k4 = jax.random.split(key, 4)
    gamma = 1.0 + 0.1 * jax.random.normal(k1, (c,), jnp.float32)
    beta = 0.1 * jax.random.normal(k2, (c,), jnp.float32)
    mean = 0.1 * jax.random.normal(k3, (c,), jnp.float32)
    var = 1.0 + 0.1 * jax.random.uniform(k4, (c,), jnp.float32)
    scale = gamma / jnp.sqrt(var + 1e-5)
    return scale, beta - mean * scale


def _embed_vec(v, c_pad, off=0):
    return jnp.zeros((c_pad,), jnp.float32).at[off:off + v.shape[0]].set(v)


def _embed_mat(w, c_pad, row_off=0):
    return (jnp.zeros((c_pad, c_pad), jnp.float32)
            .at[row_off:row_off + w.shape[0], :w.shape[1]].set(w))


def init_packed_params(key, in_c, out_c, H, W, b_tile):
    assert in_c == out_c, "fused kernel assumes in_c == out_c (residual add)"
    assert in_c % 4 == 0
    C = in_c
    mid_c = in_c // 2
    HW = H * W
    LHW = b_tile * HW
    ks = jax.random.split(key, 8)

    bn1_s, bn1_b = _fold_bn(ks[0], in_c)
    conv1_w = 0.1 * jax.random.normal(ks[1], (mid_c, in_c), jnp.float32)
    bn2_s, bn2_b = _fold_bn(ks[2], in_c)
    conv2_w = 0.1 * jax.random.normal(ks[3], (out_c, in_c), jnp.float32)
    att_bn_s, att_bn_b = _fold_bn(ks[4], out_c)
    k_adw, k_adb, k_alw, k_alb = jax.random.split(ks[5], 4)
    att_dw_w = 0.1 * jax.random.normal(k_adw, (out_c, 9), jnp.float32)
    att_dw_b = 0.1 * jax.random.normal(k_adb, (out_c,), jnp.float32)
    att_lin_w = 0.1 * jax.random.normal(k_alw, (out_c, out_c), jnp.float32)
    att_lin_b = 0.1 * jax.random.normal(k_alb, (out_c,), jnp.float32)

    defs = _dw_defs(mid_c)
    dws = []
    for kk, (cin, cout, _dil, _ooff) in zip(jax.random.split(ks[6], N_DW), defs):
        k1, k2, k3, k4 = jax.random.split(kk, 4)
        dw_s, dw_b = _fold_bn(k2, cin)
        pw_s, pw_b = _fold_bn(k4, cout)
        dws.append(dict(
            dw_w=0.1 * jax.random.normal(k1, (cin, 9), jnp.float32),
            dw_s=dw_s, dw_b=dw_b,
            pw_w=0.1 * jax.random.normal(k3, (cout, cin), jnp.float32),
            pw_s=pw_s, pw_b=pw_b))

    # ---- lane-replicated per-channel bias tables (NUM_TABS, C, LHW) ----------
    def lane_bc(v):
        return jnp.broadcast_to(v[:, None], (C, LHW))

    tabs = [None] * NUM_TABS
    tabs[T_BN1_S], tabs[T_BN1_B] = lane_bc(bn1_s), lane_bc(bn1_b)
    tabs[T_BN2_S], tabs[T_BN2_B] = lane_bc(bn2_s), lane_bc(bn2_b)
    for k, (p, (_cin, _cout, _dil, ooff)) in enumerate(zip(dws, defs)):
        tabs[T_DWB_BASE + k] = lane_bc(_embed_vec(p["dw_b"], C))
        tabs[T_PWB_BASE + k] = lane_bc(_embed_vec(p["pw_b"], C, ooff))
    tab = jnp.stack(tabs, axis=0)

    # ---- depthwise tap tables with dw-BN scale + 'same'-pad masks folded in --
    hh = jnp.arange(H)
    ww = jnp.arange(W)

    def tap_mask(dy, dx):
        mh = ((hh + dy) >= 0) & ((hh + dy) < H)
        mw = ((ww + dx) >= 0) & ((ww + dx) < W)
        return (mh[:, None] & mw[None, :]).astype(jnp.float32).reshape(HW)

    dwt_list = []
    for p, (cin, _cout, d, _ooff) in zip(dws, defs):
        w_scaled = (jnp.zeros((C, 9), jnp.float32)
                    .at[:cin, :].set(p["dw_w"] * p["dw_s"][:, None]))
        tap = 0
        for dy in (-d, 0, d):
            for dx in (-d, 0, d):
                msk = jnp.tile(tap_mask(dy, dx), b_tile)          # (LHW,)
                dwt_list.append(w_scaled[:, tap][:, None] * msk[None, :])
                tap += 1
    dwt = jnp.stack(dwt_list, axis=0)                             # (72, C, LHW)

    # ---- 1x1 conv / linear matrices (pw-BN scale folded into rows) ----------
    mats = [None] * NUM_MATS
    mats[M_CONV1] = _embed_mat(conv1_w, C)
    mats[M_CONV2] = _embed_mat(conv2_w, C)
    mats[M_ATT_LIN] = _embed_mat(att_lin_w, C)
    for k, (p, (_cin, _cout, _dil, ooff)) in enumerate(zip(dws, defs)):
        mats[M_PW_BASE + k] = _embed_mat(p["pw_w"] * p["pw_s"][:, None], C,
                                         row_off=ooff)
    mats = jnp.stack(mats, axis=0)

    # ---- small attention-head params -----------------------------------------
    attsb = jnp.stack([att_bn_s, att_bn_b, att_dw_b, att_lin_b], axis=1)  # (C,4)
    watt = jnp.tile(att_dw_w, (1, b_tile))                        # (C, b_tile*9)

    # ---- AdaptiveAvgPool2d((3,3)) as matmul (PyTorch floor/ceil bounds) ------
    P = jnp.zeros((HW, 9), jnp.float32)
    for i in range(3):
        hs, he = (i * H) // 3, -(-((i + 1) * H) // 3)
        for j in range(3):
            ws, we = (j * W) // 3, -(-((j + 1) * W) // 3)
            cell = ((hh[:, None] >= hs) & (hh[:, None] < he) &
                    (ww[None, :] >= ws) & (ww[None, :] < we)).astype(jnp.float32)
            P = P.at[:, 3 * i + j].set(cell.reshape(HW) /
                                       float((he - hs) * (we - ws)))
    eye = jnp.eye(b_tile, dtype=jnp.float32)
    pfold = jnp.kron(eye, P)                                      # (LHW, b_tile*9)
    ssum = jnp.kron(eye, jnp.ones((9, 1), jnp.float32))           # (b_tile*9, b_tile)
    gexp = jnp.kron(eye, jnp.ones((1, HW), jnp.float32))          # (b_tile, LHW)

    return tab, dwt, mats, attsb, watt, pfold, ssum, gexp


if __name__ == "__main__":
    key = jax.random.PRNGKey(0)
    kx, kp = jax.random.split(key)

    B, in_c, out_c, H, W = 4, 16, 16, 16, 16
    x = jax.random.normal(kx, (B, in_c, H, W), jnp.float32)

    # B_TILE=2: two images folded onto the lane axis per grid step -> grid=(2,)
    # ("parallel" so both v7x TensorCores get one step each).
    packed2 = init_packed_params(kp, in_c, out_c, H, W, b_tile=2)
    y2 = jax.block_until_ready(me_att_forward(x, packed2))
    assert y2.shape == (B, out_c, H, W), y2.shape
    assert bool(jnp.all(jnp.isfinite(y2)))

    # consistency check: same model, unfolded batch (B_TILE=1, grid=(4,))
    packed1 = init_packed_params(kp, in_c, out_c, H, W, b_tile=1)
    y1 = jax.block_until_ready(me_att_forward(x, packed1))
    assert bool(jnp.allclose(y1, y2, rtol=1e-4, atol=1e-4))

    print("KERNEL_OK")
</pallas_src>

<mosaic_0001>
module attributes {stable_mosaic.version = 11 : i64} {
  func.func @kernel(%arg0: i32, %arg1: memref<1x16x512xf32, #tpu.memory_space<vmem>>, %arg2: memref<20x16x512xf32, #tpu.memory_space<vmem>>, %arg3: memref<72x16x512xf32, #tpu.memory_space<vmem>>, %arg4: memref<11x16x16xf32, #tpu.memory_space<vmem>>, %arg5: memref<16x4xf32, #tpu.memory_space<vmem>>, %arg6: memref<16x18xf32, #tpu.memory_space<vmem>>, %arg7: memref<512x18xf32, #tpu.memory_space<vmem>>, %arg8: memref<18x2xf32, #tpu.memory_space<vmem>>, %arg9: memref<2x512xf32, #tpu.memory_space<vmem>>, %arg10: memref<1x16x512xf32, #tpu.memory_space<vmem>>) attributes {dimension_semantics = [#tpu.dimension_semantics<parallel>], iteration_bounds = array<i64: 2>, scalar_prefetch = 0 : i64, scratch_operands = 0 : i64, tpu.core_type = #tpu.core_type<tc>, window_params = [{transform_indices = @transform_0, window_bounds = array<i64: 1, 16, 512>}, {pipeline_mode = #tpu.pipeline_mode<synchronous>, transform_indices = @transform_1, window_bounds = array<i64: 20, 16, 512>}, {pipeline_mode = #tpu.pipeline_mode<synchronous>, transform_indices = @transform_2, window_bounds = array<i64: 72, 16, 512>}, {pipeline_mode = #tpu.pipeline_mode<synchronous>, transform_indices = @transform_3, window_bounds = array<i64: 11, 16, 16>}, {pipeline_mode = #tpu.pipeline_mode<synchronous>, transform_indices = @transform_4, window_bounds = array<i64: 16, 4>}, {pipeline_mode = #tpu.pipeline_mode<synchronous>, transform_indices = @transform_5, window_bounds = array<i64: 16, 18>}, {pipeline_mode = #tpu.pipeline_mode<synchronous>, transform_indices = @transform_6, window_bounds = array<i64: 512, 18>}, {pipeline_mode = #tpu.pipeline_mode<synchronous>, transform_indices = @transform_7, window_bounds = array<i64: 18, 2>}, {pipeline_mode = #tpu.pipeline_mode<synchronous>, transform_indices = @transform_8, window_bounds = array<i64: 2, 512>}, {transform_indices = @transform_9, window_bounds = array<i64: 1, 16, 512>}]} {
    %c0 = arith.constant 0 : index
    %c0_0 = arith.constant 0 : index
    %c0_1 = arith.constant 0 : index
    %0 = vector.load %arg1[%c0, %c0_0, %c0_1] : memref<1x16x512xf32, #tpu.memory_space<vmem>>, vector<1x16x512xf32>
    %1 = vector.shape_cast %0 : vector<1x16x512xf32> to vector<16x512xf32>
    %c0_2 = arith.constant 0 : index
    %c0_3 = arith.constant 0 : index
    %c0_4 = arith.constant 0 : index
    %2 = vector.load %arg2[%c0_2, %c0_3, %c0_4] : memref<20x16x512xf32, #tpu.memory_space<vmem>>, vector<1x16x512xf32>
    %3 = vector.shape_cast %2 : vector<1x16x512xf32> to vector<16x512xf32>
    %4 = arith.mulf %1, %3 : vector<16x512xf32>
    %c1 = arith.constant 1 : index
    %c0_5 = arith.constant 0 : index
    %c0_6 = arith.constant 0 : index
    %5 = vector.load %arg2[%c1, %c0_5, %c0_6] : memref<20x16x512xf32, #tpu.memory_space<vmem>>, vector<1x16x512xf32>
    %6 = vector.shape_cast %5 : vector<1x16x512xf32> to vector<16x512xf32>
    %7 = arith.addf %4, %6 : vector<16x512xf32>
    %8 = arith.negf %7 : vector<16x512xf32>
    %9 = math.exp %8 : vector<16x512xf32>
    %cst = arith.constant 1.000000e+00 : f32
    %10 = vector.broadcast %cst : f32 to vector<16x512xf32>
    %11 = arith.addf %10, %9 : vector<16x512xf32>
    %12 = arith.divf %10, %11 : vector<16x512xf32>
    %13 = arith.mulf %7, %12 : vector<16x512xf32>
    %c0_7 = arith.constant 0 : index
    %c0_8 = arith.constant 0 : index
    %c0_9 = arith.constant 0 : index
    %14 = vector.load %arg4[%c0_7, %c0_8, %c0_9] : memref<11x16x16xf32, #tpu.memory_space<vmem>>, vector<1x16x16xf32>
    %15 = vector.shape_cast %14 : vector<1x16x16xf32> to vector<16x16xf32>
    %cst_10 = arith.constant dense<0.000000e+00> : vector<16x512xf32>
    %16 = tpu.matmul %15, %13, %cst_10 {dimension_numbers = #tpu.dot_dimension_numbers<[1], [0], [0], [1], [0, 0, 1, 1], [], []>} : vector<16x16xf32>, vector<16x512xf32>, vector<16x512xf32> -> vector<16x512xf32>
    %c4 = arith.constant 4 : index
    %c0_11 = arith.constant 0 : index
    %c0_12 = arith.constant 0 : index
    %17 = vector.load %arg2[%c4, %c0_11, %c0_12] : memref<20x16x512xf32, #tpu.memory_space<vmem>>, vector<1x16x512xf32>
    %18 = vector.shape_cast %17 : vector<1x16x512xf32> to vector<16x512xf32>
    %c17_i32 = arith.constant 17 : i32
    %19 = tpu.dynamic_rotate %16 by %c17_i32 dim 1 : vector<16x512xf32>, i32 -> vector<16x512xf32>
    %c0_13 = arith.constant 0 : index
    %c0_14 = arith.constant 0 : index
    %c0_15 = arith.constant 0 : index
    %20 = vector.load %arg3[%c0_13, %c0_14, %c0_15] : memref<72x16x512xf32, #tpu.memory_space<vmem>>, vector<1x16x512xf32>
    %21 = vector.shape_cast %20 : vector<1x16x512xf32> to vector<16x512xf32>
    %22 = arith.mulf %21, %19 : vector<16x512xf32>
    %23 = arith.addf %18, %22 : vector<16x512xf32>
    %c16_i32 = arith.constant 16 : i32
    %24 = tpu.dynamic_rotate %16 by %c16_i32 dim 1 : vector<16x512xf32>, i32 -> vector<16x512xf32>
    %c1_16 = arith.constant 1 : index
    %c0_17 = arith.constant 0 : index
    %c0_18 = arith.constant 0 : index
    %25 = vector.load %arg3[%c1_16, %c0_17, %c0_18] : memref<72x16x512xf32, #tpu.memory_space<vmem>>, vector<1x16x512xf32>
    %26 = vector.shape_cast %25 : vector<1x16x512xf32> to vector<16x512xf32>
    %27 = arith.mulf %26, %24 : vector<16x512xf32>
    %28 = arith.addf %23, %27 : vector<16x512xf32>
    %c15_i32 = arith.constant 15 : i32
    %29 = tpu.dynamic_rotate %16 by %c15_i32 dim 1 : vector<16x512xf32>, i32 -> vector<16x512xf32>
    %c2 = arith.constant 2 : index
    %c0_19 = arith.constant 0 : index
    %c0_20 = arith.constant 0 : index
    %30 = vector.load %arg3[%c2, %c0_19, %c0_20] : memref<72x16x512xf32, #tpu.memory_space<vmem>>, vector<1x16x512xf32>
    %31 = vector.shape_cast %30 : vector<1x16x512xf32> to vector<16x512xf32>
    %32 = arith.mulf %31, %29 : vector<16x512xf32>
    %33 = arith.addf %28, %32 : vector<16x512xf32>
    %c1_i32 = arith.constant 1 : i32
    %34 = tpu.dynamic_rotate %16 by %c1_i32 dim 1 : vector<16x512xf32>, i32 -> vector<16x512xf32>
    %c3 = arith.constant 3 : index
    %c0_21 = arith.constant 0 : index
    %c0_22 = arith.constant 0 : index
    %35 = vector.load %arg3[%c3, %c0_21, %c0_22] : memref<72x16x512xf32, #tpu.memory_space<vmem>>, vector<1x16x512xf32>
    %36 = vector.shape_cast %35 : vector<1x16x512xf32> to vector<16x512xf32>
    %37 = arith.mulf %36, %34 : vector<16x512xf32>
    %38 = arith.addf %33, %37 : vector<16x512xf32>
    %c4_23 = arith.constant 4 : index
    %c0_24 = arith.constant 0 : index
    %c0_25 = arith.constant 0 : index
    %39 = vector.load %arg3[%c4_23, %c0_24, %c0_25] : memref<72x16x512xf32, #tpu.memory_space<vmem>>, vector<1x16x512xf32>
    %40 = vector.shape_cast %39 : vector<1x16x512xf32> to vector<16x512xf32>
    %41 = arith.mulf %40, %16 : vector<16x512xf32>
    %42 = arith.addf %38, %41 : vector<16x512xf32>
    %c511_i32 = arith.constant 511 : i32
    %43 = tpu.dynamic_rotate %16 by %c511_i32 dim 1 : vector<16x512xf32>, i32 -> vector<16x512xf32>
    %c5 = arith.constant 5 : index
    %c0_26 = arith.constant 0 : index
    %c0_27 = arith.constant 0 : index
    %44 = vector.load %arg3[%c5, %c0_26, %c0_27] : memref<72x16x512xf32, #tpu.memory_space<vmem>>, vector<1x16x512xf32>
    %45 = vector.shape_cast %44 : vector<1x16x512xf32> to vector<16x512xf32>
    %46 = arith.mulf %45, %43 : vector<16x512xf32>
    %47 = arith.addf %42, %46 : vector<16x512xf32>
    %c497_i32 = arith.constant 497 : i32
    %48 = tpu.dynamic_rotate %16 by %c497_i32 dim 1 : vector<16x512xf32>, i32 -> vector<16x512xf32>
    %c6 = arith.constant 6 : index
    %c0_28 = arith.constant 0 : index
    %c0_29 = arith.constant 0 : index
    %49 = vector.load %arg3[%c6, %c0_28, %c0_29] : memref<72x16x512xf32, #tpu.memory_space<vmem>>, vector<1x16x512xf32>
    %50 = vector.shape_cast %49 : vector<1x16x512xf32> to vector<16x512xf32>
    %51 = arith.mulf %50, %48 : vector<16x512xf32>
    %52 = arith.addf %47, %51 : vector<16x512xf32>
    %c496_i32 = arith.constant 496 : i32
    %53 = tpu.dynamic_rotate %16 by %c496_i32 dim 1 : vector<16x512xf32>, i32 -> vector<16x512xf32>
    %c7 = arith.constant 7 : index
    %c0_30 = arith.constant 0 : index
    %c0_31 = arith.constant 0 : index
    %54 = vector.load %arg3[%c7, %c0_30, %c0_31] : memref<72x16x512xf32, #tpu.memory_space<vmem>>, vector<1x16x512xf32>
    %55 = vector.shape_cast %54 : vector<1x16x512xf32> to vector<16x512xf32>
    %56 = arith.mulf %55, %53 : vector<16x512xf32>
    %57 = arith.addf %52, %56 : vector<16x512xf32>
    %c495_i32 = arith.constant 495 : i32
    %58 = tpu.dynamic_rotate %16 by %c495_i32 dim 1 : vector<16x512xf32>, i32 -> vector<16x512xf32>
    %c8 = arith.constant 8 : index
    %c0_32 = arith.constant 0 : index
    %c0_33 = arith.constant 0 : index
    %59 = vector.load %arg3[%c8, %c0_32, %c0_33] : memref<72x16x512xf32, #tpu.memory_space<vmem>>, vector<1x16x512xf32>
    %60 = vector.shape_cast %59 : vector<1x16x512xf32> to vector<16x512xf32>
    %61 = arith.mulf %60, %58 : vector<16x512xf32>
    %62 = arith.addf %57, %61 : vector<16x512xf32>
    %cst_34 = arith.constant 0.000000e+00 : f32
    %63 = vector.broadcast %cst_34 : f32 to vector<16x512xf32>
    %64 = arith.maximumf %62, %63 : vector<16x512xf32>
    %c1_35 = arith.constant 1 : index
    %c0_36 = arith.constant 0 : index
    %c0_37 = arith.constant 0 : index
    %65 = vector.load %arg4[%c1_35, %c0_36, %c0_37] : memref<11x16x16xf32, #tpu.memory_space<vmem>>, vector<1x16x16xf32>
    %66 = vector.shape_cast %65 : vector<1x16x16xf32> to vector<16x16xf32>
    %cst_38 = arith.constant dense<0.000000e+00> : vector<16x512xf32>
    %67 = tpu.matmul %66, %64, %cst_38 {dimension_numbers = #tpu.dot_dimension_numbers<[1], [0], [0], [1], [0, 0, 1, 1], [], []>} : vector<16x16xf32>, vector<16x512xf32>, vector<16x512xf32> -> vector<16x512xf32>
    %c12 = arith.constant 12 : index
    %c0_39 = arith.constant 0 : index
    %c0_40 = arith.constant 0 : index
    %68 = vector.load %arg2[%c12, %c0_39, %c0_40] : memref<20x16x512xf32, #tpu.memory_space<vmem>>, vector<1x16x512xf32>
    %69 = vector.shape_cast %68 : vector<1x16x512xf32> to vector<16x512xf32>
    %70 = arith.addf %67, %69 : vector<16x512xf32>
    %cst_41 = arith.constant 0.000000e+00 : f32
    %71 = vector.broadcast %cst_41 : f32 to vector<16x512xf32>
    %72 = arith.maximumf %70, %71 : vector<16x512xf32>
    %c5_42 = arith.constant 5 : index
    %c0_43 = arith.constant 0 : index
    %c0_44 = arith.constant 0 : index
    %73 = vector.load %arg2[%c5_42, %c0_43, %c0_44] : memref<20x16x512xf32, #tpu.memory_space<vmem>>, vector<1x16x512xf32>
    %74 = vector.shape_cast %73 : vector<1x16x512xf32> to vector<16x512xf32>
    %c17_i32_45 = arith.constant 17 : i32
    %75 = tpu.dynamic_rotate %72 by %c17_i32_45 dim 1 : vector<16x512xf32>, i32 -> vector<16x512xf32>
    %c9 = arith.constant 9 : index
    %c0_46 = arith.constant 0 : index
    %c0_47 = arith.constant 0 : index
    %76 = vector.load %arg3[%c9, %c0_46, %c0_47] : memref<72x16x512xf32, #tpu.memory_space<vmem>>, vector<1x16x512xf32>
    %77 = vector.shape_cast %76 : vector<1x16x512xf32> to vector<16x512xf32>
    %78 = arith.mulf %77, %75 : vector<16x512xf32>
    %79 = arith.addf %74, %78 : vector<16x512xf32>
    %c16_i32_48 = arith.constant 16 : i32
    %80 = tpu.dynamic_rotate %72 by %c16_i32_48 dim 1 : vector<16x512xf32>, i32 -> vector<16x512xf32>
    %c10 = arith.constant 10 : index
    %c0_49 = arith.constant 0 : index
    %c0_50 = arith.constant 0 : index
    %81 = vector.load %arg3[%c10, %c0_49, %c0_50] : memref<72x16x512xf32, #tpu.memory_space<vmem>>, vector<1x16x512xf32>
    %82 = vector.shape_cast %81 : vector<1x16x512xf32> to vector<16x512xf32>
    %83 = arith.mulf %82, %80 : vector<16x512xf32>
    %84 = arith.addf %79, %83 : vector<16x512xf32>
    %c15_i32_51 = arith.constant 15 : i32
    %85 = tpu.dynamic_rotate %72 by %c15_i32_51 dim 1 : vector<16x512xf32>, i32 -> vector<16x512xf32>
    %c11 = arith.constant 11 : index
    %c0_52 = arith.constant 0 : index
    %c0_53 = arith.constant 0 : index
    %86 = vector.load %arg3[%c11, %c0_52, %c0_53] : memref<72x16x512xf32, #tpu.memory_space<vmem>>, vector<1x16x512xf32>
    %87 = vector.shape_cast %86 : vector<1x16x512xf32> to vector<16x512xf32>
    %88 = arith.mulf %87, %85 : vector<16x512xf32>
    %89 = arith.addf %84, %88 : vector<16x512xf32>
    %c1_i32_54 = arith.constant 1 : i32
    %90 = tpu.dynamic_rotate %72 by %c1_i32_54 dim 1 : vector<16x512xf32>, i32 -> vector<16x512xf32>
    %c12_55 = arith.constant 12 : index
    %c0_56 = arith.constant 0 : index
    %c0_57 = arith.constant 0 : index
    %91 = vector.load %arg3[%c12_55, %c0_56, %c0_57] : memref<72x16x512xf32, #tpu.memory_space<vmem>>, vector<1x16x512xf32>
    %92 = vector.shape_cast %91 : vector<1x16x512xf32> to vector<16x512xf32>
    %93 = arith.mulf %92, %90 : vector<16x512xf32>
    %94 = arith.addf %89, %93 : vector<16x512xf32>
    %c13 = arith.constant 13 : index
    %c0_58 = arith.constant 0 : index
    %c0_59 = arith.constant 0 : index
    %95 = vector.load %arg3[%c13, %c0_58, %c0_59] : memref<72x16x512xf32, #tpu.memory_space<vmem>>, vector<1x16x512xf32>
    %96 = vector.shape_cast %95 : vector<1x16x512xf32> to vector<16x512xf32>
    %97 = arith.mulf %96, %72 : vector<16x512xf32>
    %98 = arith.addf %94, %97 : vector<16x512xf32>
    %c511_i32_60 = arith.constant 511 : i32
    %99 = tpu.dynamic_rotate %72 by %c511_i32_60 dim 1 : vector<16x512xf32>, i32 -> vector<16x512xf32>
    %c14 = arith.constant 14 : index
    %c0_61 = arith.constant 0 : index
    %c0_62 = arith.constant 0 : index
    %100 = vector.load %arg3[%c14, %c0_61, %c0_62] : memref<72x16x512xf32, #tpu.memory_space<vmem>>, vector<1x16x512xf32>
    %101 = vector.shape_cast %100 : vector<1x16x512xf32> to vector<16x512xf32>
    %102 = arith.mulf %101, %99 : vector<16x512xf32>
    %103 = arith.addf %98, %102 : vector<16x512xf32>
    %c497_i32_63 = arith.constant 497 : i32
    %104 = tpu.dynamic_rotate %72 by %c497_i32_63 dim 1 : vector<16x512xf32>, i32 -> vector<16x512xf32>
    %c15 = arith.constant 15 : index
    %c0_64 = arith.constant 0 : index
    %c0_65 = arith.constant 0 : index
    %105 = vector.load %arg3[%c15, %c0_64, %c0_65] : memref<72x16x512xf32, #tpu.memory_space<vmem>>, vector<1x16x512xf32>
    %106 = vector.shape_cast %105 : vector<1x16x512xf32> to vector<16x512xf32>
    %107 = arith.mulf %106, %104 : vector<16x512xf32>
    %108 = arith.addf %103, %107 : vector<16x512xf32>
    %c496_i32_66 = arith.constant 496 : i32
    %109 = tpu.dynamic_rotate %72 by %c496_i32_66 dim 1 : vector<16x512xf32>, i32 -> vector<16x512xf32>
    %c16 = arith.constant 16 : index
    %c0_67 = arith.constant 0 : index
    %c0_68 = arith.constant 0 : index
    %110 = vector.load %arg3[%c16, %c0_67, %c0_68] : memref<72x16x512xf32, #tpu.memory_space<vmem>>, vector<1x16x512xf32>
    %111 = vector.shape_cast %110 : vector<1x16x512xf32> to vector<16x512xf32>
    %112 = arith.mulf %111, %109 : vector<16x512xf32>
    %113 = arith.addf %108, %112 : vector<16x512xf32>
    %c495_i32_69 = arith.constant 495 : i32
    %114 = tpu.dynamic_rotate %72 by %c495_i32_69 dim 1 : vector<16x512xf32>, i32 -> vector<16x512xf32>
    %c17 = arith.constant 17 : index
    %c0_70 = arith.constant 0 : index
    %c0_71 = arith.constant 0 : index
    %115 = vector.load %arg3[%c17, %c0_70, %c0_71] : memref<72x16x512xf32, #tpu.memory_space<vmem>>, vector<1x16x512xf32>
    %116 = vector.shape_cast %115 : vector<1x16x512xf32> to vector<16x512xf32>
    %117 = arith.mulf %116, %114 : vector<16x512xf32>
    %118 = arith.addf %113, %117 : vector<16x512xf32>
    %cst_72 = arith.constant 0.000000e+00 : f32
    %119 = vector.broadcast %cst_72 : f32 to vector<16x512xf32>
    %120 = arith.maximumf %118, %119 : vector<16x512xf32>
    %c2_73 = arith.constant 2 : index
    %c0_74 = arith.constant 0 : index
    %c0_75 = arith.constant 0 : index
    %121 = vector.load %arg4[%c2_73, %c0_74, %c0_75] : memref<11x16x16xf32, #tpu.memory_space<vmem>>, vector<1x16x16xf32>
    %122 = vector.shape_cast %121 : vector<1x16x16xf32> to vector<16x16xf32>
    %cst_76 = arith.constant dense<0.000000e+00> : vector<16x512xf32>
    %123 = tpu.matmul %122, %120, %cst_76 {dimension_numbers = #tpu.dot_dimension_numbers<[1], [0], [0], [1], [0, 0, 1, 1], [], []>} : vector<16x16xf32>, vector<16x512xf32>, vector<16x512xf32> -> vector<16x512xf32>
    %c13_77 = arith.constant 13 : index
    %c0_78 = arith.constant 0 : index
    %c0_79 = arith.constant 0 : index
    %124 = vector.load %arg2[%c13_77, %c0_78, %c0_79] : memref<20x16x512xf32, #tpu.memory_space<vmem>>, vector<1x16x512xf32>
    %125 = vector.shape_cast %124 : vector<1x16x512xf32> to vector<16x512xf32>
    %126 = arith.addf %123, %125 : vector<16x512xf32>
    %cst_80 = arith.constant 0.000000e+00 : f32
    %127 = vector.broadcast %cst_80 : f32 to vector<16x512xf32>
    %128 = arith.maximumf %126, %127 : vector<16x512xf32>
    %c6_81 = arith.constant 6 : index
    %c0_82 = arith.constant 0 : index
    %c0_83 = arith.constant 0 : index
    %129 = vector.load %arg2[%c6_81, %c0_82, %c0_83] : memref<20x16x512xf32, #tpu.memory_space<vmem>>, vector<1x16x512xf32>
    %130 = vector.shape_cast %129 : vector<1x16x512xf32> to vector<16x512xf32>
    %c34_i32 = arith.constant 34 : i32
    %131 = tpu.dynamic_rotate %16 by %c34_i32 dim 1 : vector<16x512xf32>, i32 -> vector<16x512xf32>
    %c18 = arith.constant 18 : index
    %c0_84 = arith.constant 0 : index
    %c0_85 = arith.constant 0 : index
    %132 = vector.load %arg3[%c18, %c0_84, %c0_85] : memref<72x16x512xf32, #tpu.memory_space<vmem>>, vector<1x16x512xf32>
    %133 = vector.shape_cast %132 : vector<1x16x512xf32> to vector<16x512xf32>
    %134 = arith.mulf %133, %131 : vector<16x512xf32>
    %135 = arith.addf %130, %134 : vector<16x512xf32>
    %c32_i32 = arith.constant 32 : i32
    %136 = tpu.dynamic_rotate %16 by %c32_i32 dim 1 : vector<16x512xf32>, i32 -> vector<16x512xf32>
    %c19 = arith.constant 19 : index
    %c0_86 = arith.constant 0 : index
    %c0_87 = arith.constant 0 : index
    %137 = vector.load %arg3[%c19, %c0_86, %c0_87] : memref<72x16x512xf32, #tpu.memory_space<vmem>>, vector<1x16x512xf32>
    %138 = vector.shape_cast %137 : vector<1x16x512xf32> to vector<16x512xf32>
    %139 = arith.mulf %138, %136 : vector<16x512xf32>
    %140 = arith.addf %135, %139 : vector<16x512xf32>
    %c30_i32 = arith.constant 30 : i32
    %141 = tpu.dynamic_rotate %16 by %c30_i32 dim 1 : vector<16x512xf32>, i32 -> vector<16x512xf32>
    %c20 = arith.constant 20 : index
    %c0_88 = arith.constant 0 : index
    %c0_89 = arith.constant 0 : index
    %142 = vector.load %arg3[%c20, %c0_88, %c0_89] : memref<72x16x512xf32, #tpu.memory_space<vmem>>, vector<1x16x512xf32>
    %143 = vector.shape_cast %142 : vector<1x16x512xf32> to vector<16x512xf32>
    %144 = arith.mulf %143, %141 : vector<16x512xf32>
    %145 = arith.addf %140, %144 : vector<16x512xf32>
    %c2_i32 = arith.constant 2 : i32
    %146 = tpu.dynamic_rotate %16 by %c2_i32 dim 1 : vector<16x512xf32>, i32 -> vector<16x512xf32>
    %c21 = arith.constant 21 : index
    %c0_90 = arith.constant 0 : index
    %c0_91 = arith.constant 0 : index
    %147 = vector.load %arg3[%c21, %c0_90, %c0_91] : memref<72x16x512xf32, #tpu.memory_space<vmem>>, vector<1x16x512xf32>
    %148 = vector.shape_cast %147 : vector<1x16x512xf32> to vector<16x512xf32>
    %149 = arith.mulf %148, %146 : vector<16x512xf32>
    %150 = arith.addf %145, %149 : vector<16x512xf32>
    %c22 = arith.constant 22 : index
    %c0_92 = arith.constant 0 : index
    %c0_93 = arith.constant 0 : index
    %151 = vector.load %arg3[%c22, %c0_92, %c0_93] : memref<72x16x512xf32, #tpu.memory_space<vmem>>, vector<1x16x512xf32>
    %152 = vector.shape_cast %151 : vector<1x16x512xf32> to vector<16x512xf32>
    %153 = arith.mulf %152, %16 : vector<16x512xf32>
    %154 = arith.addf %150, %153 : vector<16x512xf32>
    %c510_i32 = arith.constant 510 : i32
    %155 = tpu.dynamic_rotate %16 by %c510_i32 dim 1 : vector<16x512xf32>, i32 -> vector<16x512xf32>
    %c23 = arith.constant 23 : index
    %c0_94 = arith.constant 0 : index
    %c0_95 = arith.constant 0 : index
    %156 = vector.load %arg3[%c23, %c0_94, %c0_95] : memref<72x16x512xf32, #tpu.memory_space<vmem>>, vector<1x16x512xf32>
    %157 = vector.shape_cast %156 : vector<1x16x512xf32> to vector<16x512xf32>
    %158 = arith.mulf %157, %155 : vector<16x512xf32>
    %159 = arith.addf %154, %158 : vector<16x512xf32>
    %c482_i32 = arith.constant 482 : i32
    %160 = tpu.dynamic_rotate %16 by %c482_i32 dim 1 : vector<16x512xf32>, i32 -> vector<16x512xf32>
    %c24 = arith.constant 24 : index
    %c0_96 = arith.constant 0 : index
    %c0_97 = arith.constant 0 : index
    %161 = vector.load %arg3[%c24, %c0_96, %c0_97] : memref<72x16x512xf32, #tpu.memory_space<vmem>>, vector<1x16x512xf32>
    %162 = vector.shape_cast %161 : vector<1x16x512xf32> to vector<16x512xf32>
    %163 = arith.mulf %162, %160 : vector<16x512xf32>
    %164 = arith.addf %159, %163 : vector<16x512xf32>
    %c480_i32 = arith.constant 480 : i32
    %165 = tpu.dynamic_rotate %16 by %c480_i32 dim 1 : vector<16x512xf32>, i32 -> vector<16x512xf32>
    %c25 = arith.constant 25 : index
    %c0_98 = arith.constant 0 : index
    %c0_99 = arith.constant 0 : index
    %166 = vector.load %arg3[%c25, %c0_98, %c0_99] : memref<72x16x512xf32, #tpu.memory_space<vmem>>, vector<1x16x512xf32>
    %167 = vector.shape_cast %166 : vector<1x16x512xf32> to vector<16x512xf32>
    %168 = arith.mulf %167, %165 : vector<16x512xf32>
    %169 = arith.addf %164, %168 : vector<16x512xf32>
    %c478_i32 = arith.constant 478 : i32
    %170 = tpu.dynamic_rotate %16 by %c478_i32 dim 1 : vector<16x512xf32>, i32 -> vector<16x512xf32>
    %c26 = arith.constant 26 : index
    %c0_100 = arith.constant 0 : index
    %c0_101 = arith.constant 0 : index
    %171 = vector.load %arg3[%c26, %c0_100, %c0_101] : memref<72x16x512xf32, #tpu.memory_space<vmem>>, vector<1x16x512xf32>
    %172 = vector.shape_cast %171 : vector<1x16x512xf32> to vector<16x512xf32>
    %173 = arith.mulf %172, %170 : vector<16x512xf32>
    %174 = arith.addf %169, %173 : vector<16x512xf32>
    %cst_102 = arith.constant 0.000000e+00 : f32
    %175 = vector.broadcast %cst_102 : f32 to vector<16x512xf32>
    %176 = arith.maximumf %174, %175 : vector<16x512xf32>
    %c3_103 = arith.constant 3 : index
    %c0_104 = arith.constant 0 : index
    %c0_105 = arith.constant 0 : index
    %177 = vector.load %arg4[%c3_103, %c0_104, %c0_105] : memref<11x16x16xf32, #tpu.memory_space<vmem>>, vector<1x16x16xf32>
    %178 = vector.shape_cast %177 : vector<1x16x16xf32> to vector<16x16xf32>
    %cst_106 = arith.constant dense<0.000000e+00> : vector<16x512xf32>
    %179 = tpu.matmul %178, %176, %cst_106 {dimension_numbers = #tpu.dot_dimension_numbers<[1], [0], [0], [1], [0, 0, 1, 1], [], []>} : vector<16x16xf32>, vector<16x512xf32>, vector<16x512xf32> -> vector<16x512xf32>
    %c14_107 = arith.constant 14 : index
    %c0_108 = arith.constant 0 : index
    %c0_109 = arith.constant 0 : index
    %180 = vector.load %arg2[%c14_107, %c0_108, %c0_109] : memref<20x16x512xf32, #tpu.memory_space<vmem>>, vector<1x16x512xf32>
    %181 = vector.shape_cast %180 : vector<1x16x512xf32> to vector<16x512xf32>
    %182 = arith.addf %179, %181 : vector<16x512xf32>
    %cst_110 = arith.constant 0.000000e+00 : f32
    %183 = vector.broadcast %cst_110 : f32 to vector<16x512xf32>
    %184 = arith.maximumf %182, %183 : vector<16x512xf32>
    %c7_111 = arith.constant 7 : index
    %c0_112 = arith.constant 0 : index
    %c0_113 = arith.constant 0 : index
    %185 = vector.load %arg2[%c7_111, %c0_112, %c0_113] : memref<20x16x512xf32, #tpu.memory_space<vmem>>, vector<1x16x512xf32>
    %186 = vector.shape_cast %185 : vector<1x16x512xf32> to vector<16x512xf32>
    %c17_i32_114 = arith.constant 17 : i32
    %187 = tpu.dynamic_rotate %184 by %c17_i32_114 dim 1 : vector<16x512xf32>, i32 -> vector<16x512xf32>
    %c27 = arith.constant 27 : index
    %c0_115 = arith.constant 0 : index
    %c0_116 = arith.constant 0 : index
    %188 = vector.load %arg3[%c27, %c0_115, %c0_116] : memref<72x16x512xf32, #tpu.memory_space<vmem>>, vector<1x16x512xf32>
    %189 = vector.shape_cast %188 : vector<1x16x512xf32> to vector<16x512xf32>
    %190 = arith.mulf %189, %187 : vector<16x512xf32>
    %191 = arith.addf %186, %190 : vector<16x512xf32>
    %c16_i32_117 = arith.constant 16 : i32
    %192 = tpu.dynamic_rotate %184 by %c16_i32_117 dim 1 : vector<16x512xf32>, i32 -> vector<16x512xf32>
    %c28 = arith.constant 28 : index
    %c0_118 = arith.constant 0 : index
    %c0_119 = arith.constant 0 : index
    %193 = vector.load %arg3[%c28, %c0_118, %c0_119] : memref<72x16x512xf32, #tpu.memory_space<vmem>>, vector<1x16x512xf32>
    %194 = vector.shape_cast %193 : vector<1x16x512xf32> to vector<16x512xf32>
    %195 = arith.mulf %194, %192 : vector<16x512xf32>
    %196 = arith.addf %191, %195 : vector<16x512xf32>
    %c15_i32_120 = arith.constant 15 : i32
    %197 = tpu.dynamic_rotate %184 by %c15_i32_120 dim 1 : vector<16x512xf32>, i32 -> vector<16x512xf32>
    %c29 = arith.constant 29 : index
    %c0_121 = arith.constant 0 : index
    %c0_122 = arith.constant 0 : index
    %198 = vector.load %arg3[%c29, %c0_121, %c0_122] : memref<72x16x512xf32, #tpu.memory_space<vmem>>, vector<1x16x512xf32>
    %199 = vector.shape_cast %198 : vector<1x16x512xf32> to vector<16x512xf32>
    %200 = arith.mulf %199, %197 : vector<16x512xf32>
    %201 = arith.addf %196, %200 : vector<16x512xf32>
    %c1_i32_123 = arith.constant 1 : i32
    %202 = tpu.dynamic_rotate %184 by %c1_i32_123 dim 1 : vector<16x512xf32>, i32 -> vector<16x512xf32>
    %c30 = arith.constant 30 : index
    %c0_124 = arith.constant 0 : index
    %c0_125 = arith.constant 0 : index
    %203 = vector.load %arg3[%c30, %c0_124, %c0_125] : memref<72x16x512xf32, #tpu.memory_space<vmem>>, vector<1x16x512xf32>
    %204 = vector.shape_cast %203 : vector<1x16x512xf32> to vector<16x512xf32>
    %205 = arith.mulf %204, %202 : vector<16x512xf32>
    %206 = arith.addf %201, %205 : vector<16x512xf32>
    %c31 = arith.constant 31 : index
    %c0_126 = arith.constant 0 : index
    %c0_127 = arith.constant 0 : index
    %207 = vector.load %arg3[%c31, %c0_126, %c0_127] : memref<72x16x512xf32, #tpu.memory_space<vmem>>, vector<1x16x512xf32>
    %208 = vector.shape_cast %207 : vector<1x16x512xf32> to vector<16x512xf32>
    %209 = arith.mulf %208, %184 : vector<16x512xf32>
    %210 = arith.addf %206, %209 : vector<16x512xf32>
    %c511_i32_128 = arith.constant 511 : i32
    %211 = tpu.dynamic_rotate %184 by %c511_i32_128 dim 1 : vector<16x512xf32>, i32 -> vector<16x512xf32>
    %c32 = arith.constant 32 : index
    %c0_129 = arith.constant 0 : index
    %c0_130 = arith.constant 0 : index
    %212 = vector.load %arg3[%c32, %c0_129, %c0_130] : memref<72x16x512xf32, #tpu.memory_space<vmem>>, vector<1x16x512xf32>
    %213 = vector.shape_cast %212 : vector<1x16x512xf32> to vector<16x512xf32>
    %214 = arith.mulf %213, %211 : vector<16x512xf32>
    %215 = arith.addf %210, %214 : vector<16x512xf32>
    %c497_i32_131 = arith.constant 497 : i32
    %216 = tpu.dynamic_rotate %184 by %c497_i32_131 dim 1 : vector<16x512xf32>, i32 -> vector<16x512xf32>
    %c33 = arith.constant 33 : index
    %c0_132 = arith.constant 0 : index
    %c0_133 = arith.constant 0 : index
    %217 = vector.load %arg3[%c33, %c0_132, %c0_133] : memref<72x16x512xf32, #tpu.memory_space<vmem>>, vector<1x16x512xf32>
    %218 = vector.shape_cast %217 : vector<1x16x512xf32> to vector<16x512xf32>
    %219 = arith.mulf %218, %216 : vector<16x512xf32>
    %220 = arith.addf %215, %219 : vector<16x512xf32>
    %c496_i32_134 = arith.constant 496 : i32
    %221 = tpu.dynamic_rotate %184 by %c496_i32_134 dim 1 : vector<16x512xf32>, i32 -> vector<16x512xf32>
    %c34 = arith.constant 34 : index
    %c0_135 = arith.constant 0 : index
    %c0_136 = arith.constant 0 : index
    %222 = vector.load %arg3[%c34, %c0_135, %c0_136] : memref<72x16x512xf32, #tpu.memory_space<vmem>>, vector<1x16x512xf32>
    %223 = vector.shape_cast %222 : vector<1x16x512xf32> to vector<16x512xf32>
    %224 = arith.mulf %223, %221 : vector<16x512xf32>
    %225 = arith.addf %220, %224 : vector<16x512xf32>
    %c495_i32_137 = arith.constant 495 : i32
    %226 = tpu.dynamic_rotate %184 by %c495_i32_137 dim 1 : vector<16x512xf32>, i32 -> vector<16x512xf32>
    %c35 = arith.constant 35 : index
    %c0_138 = arith.constant 0 : index
    %c0_139 = arith.constant 0 : index
    %227 = vector.load %arg3[%c35, %c0_138, %c0_139] : memref<72x16x512xf32, #tpu.memory_space<vmem>>, vector<1x16x512xf32>
    %228 = vector.shape_cast %227 : vector<1x16x512xf32> to vector<16x512xf32>
    %229 = arith.mulf %228, %226 : vector<16x512xf32>
    %230 = arith.addf %225, %229 : vector<16x512xf32>
    %cst_140 = arith.constant 0.000000e+00 : f32
    %231 = vector.broadcast %cst_140 : f32 to vector<16x512xf32>
    %232 = arith.maximumf %230, %231 : vector<16x512xf32>
    %c4_141 = arith.constant 4 : index
    %c0_142 = arith.constant 0 : index
    %c0_143 = arith.constant 0 : index
    %233 = vector.load %arg4[%c4_141, %c0_142, %c0_143] : memref<11x16x16xf32, #tpu.memory_space<vmem>>, vector<1x16x16xf32>
    %234 = vector.shape_cast %233 : vector<1x16x16xf32> to vector<16x16xf32>
    %cst_144 = arith.constant dense<0.000000e+00> : vector<16x512xf32>
    %235 = tpu.matmul %234, %232, %cst_144 {dimension_numbers = #tpu.dot_dimension_numbers<[1], [0], [0], [1], [0, 0, 1, 1], [], []>} : vector<16x16xf32>, vector<16x512xf32>, vector<16x512xf32> -> vector<16x512xf32>
    %c15_145 = arith.constant 15 : index
    %c0_146 = arith.constant 0 : index
    %c0_147 = arith.constant 0 : index
    %236 = vector.load %arg2[%c15_145, %c0_146, %c0_147] : memref<20x16x512xf32, #tpu.memory_space<vmem>>, vector<1x16x512xf32>
    %237 = vector.shape_cast %236 : vector<1x16x512xf32> to vector<16x512xf32>
    %238 = arith.addf %235, %237 : vector<16x512xf32>
    %cst_148 = arith.constant 0.000000e+00 : f32
    %239 = vector.broadcast %cst_148 : f32 to vector<16x512xf32>
    %240 = arith.maximumf %238, %239 : vector<16x512xf32>
    %241 = arith.addf %128, %240 : vector<16x512xf32>
    %c8_149 = arith.constant 8 : index
    %c0_150 = arith.constant 0 : index
    %c0_151 = arith.constant 0 : index
    %242 = vector.load %arg2[%c8_149, %c0_150, %c0_151] : memref<20x16x512xf32, #tpu.memory_space<vmem>>, vector<1x16x512xf32>
    %243 = vector.shape_cast %242 : vector<1x16x512xf32> to vector<16x512xf32>
    %c17_i32_152 = arith.constant 17 : i32
    %244 = tpu.dynamic_rotate %241 by %c17_i32_152 dim 1 : vector<16x512xf32>, i32 -> vector<16x512xf32>
    %c36 = arith.constant 36 : index
    %c0_153 = arith.constant 0 : index
    %c0_154 = arith.constant 0 : index
    %245 = vector.load %arg3[%c36, %c0_153, %c0_154] : memref<72x16x512xf32, #tpu.memory_space<vmem>>, vector<1x16x512xf32>
    %246 = vector.shape_cast %245 : vector<1x16x512xf32> to vector<16x512xf32>
    %247 = arith.mulf %246, %244 : vector<16x512xf32>
    %248 = arith.addf %243, %247 : vector<16x512xf32>
    %c16_i32_155 = arith.constant 16 : i32
    %249 = tpu.dynamic_rotate %241 by %c16_i32_155 dim 1 : vector<16x512xf32>, i32 -> vector<16x512xf32>
    %c37 = arith.constant 37 : index
    %c0_156 = arith.constant 0 : index
    %c0_157 = arith.constant 0 : index
    %250 = vector.load %arg3[%c37, %c0_156, %c0_157] : memref<72x16x512xf32, #tpu.memory_space<vmem>>, vector<1x16x512xf32>
    %251 = vector.shape_cast %250 : vector<1x16x512xf32> to vector<16x512xf32>
    %252 = arith.mulf %251, %249 : vector<16x512xf32>
    %253 = arith.addf %248, %252 : vector<16x512xf32>
    %c15_i32_158 = arith.constant 15 : i32
    %254 = tpu.dynamic_rotate %241 by %c15_i32_158 dim 1 : vector<16x512xf32>, i32 -> vector<16x512xf32>
    %c38 = arith.constant 38 : index
    %c0_159 = arith.constant 0 : index
    %c0_160 = arith.constant 0 : index
    %255 = vector.load %arg3[%c38, %c0_159, %c0_160] : memref<72x16x512xf32, #tpu.memory_space<vmem>>, vector<1x16x512xf32>
    %256 = vector.shape_cast %255 : vector<1x16x512xf32> to vector<16x512xf32>
    %257 = arith.mulf %256, %254 : vector<16x512xf32>
    %258 = arith.addf %253, %257 : vector<16x512xf32>
    %c1_i32_161 = arith.constant 1 : i32
    %259 = tpu.dynamic_rotate %241 by %c1_i32_161 dim 1 : vector<16x512xf32>, i32 -> vector<16x512xf32>
    %c39 = arith.constant 39 : index
    %c0_162 = arith.constant 0 : index
    %c0_163 = arith.constant 0 : index
    %260 = vector.load %arg3[%c39, %c0_162, %c0_163] : memref<72x16x512xf32, #tpu.memory_space<vmem>>, vector<1x16x512xf32>
    %261 = vector.shape_cast %260 : vector<1x16x512xf32> to vector<16x512xf32>
    %262 = arith.mulf %261, %259 : vector<16x512xf32>
    %263 = arith.addf %258, %262 : vector<16x512xf32>
    %c40 = arith.constant 40 : index
    %c0_164 = arith.constant 0 : index
    %c0_165 = arith.constant 0 : index
    %264 = vector.load %arg3[%c40, %c0_164, %c0_165] : memref<72x16x512xf32, #tpu.memory_space<vmem>>, vector<1x16x512xf32>
    %265 = vector.shape_cast %264 : vector<1x16x512xf32> to vector<16x512xf32>
    %266 = arith.mulf %265, %241 : vector<16x512xf32>
    %267 = arith.addf %263, %266 : vector<16x512xf32>
    %c511_i32_166 = arith.constant 511 : i32
    %268 = tpu.dynamic_rotate %241 by %c511_i32_166 dim 1 : vector<16x512xf32>, i32 -> vector<16x512xf32>
    %c41 = arith.constant 41 : index
    %c0_167 = arith.constant 0 : index
    %c0_168 = arith.constant 0 : index
    %269 = vector.load %arg3[%c41, %c0_167, %c0_168] : memref<72x16x512xf32, #tpu.memory_space<vmem>>, vector<1x16x512xf32>
    %270 = vector.shape_cast %269 : vector<1x16x512xf32> to vector<16x512xf32>
    %271 = arith.mulf %270, %268 : vector<16x512xf32>
    %272 = arith.addf %267, %271 : vector<16x512xf32>
    %c497_i32_169 = arith.constant 497 : i32
    %273 = tpu.dynamic_rotate %241 by %c497_i32_169 dim 1 : vector<16x512xf32>, i32 -> vector<16x512xf32>
    %c42 = arith.constant 42 : index
    %c0_170 = arith.constant 0 : index
    %c0_171 = arith.constant 0 : index
    %274 = vector.load %arg3[%c42, %c0_170, %c0_171] : memref<72x16x512xf32, #tpu.memory_space<vmem>>, vector<1x16x512xf32>
    %275 = vector.shape_cast %274 : vector<1x16x512xf32> to vector<16x512xf32>
    %276 = arith.mulf %275, %273 : vector<16x512xf32>
    %277 = arith.addf %272, %276 : vector<16x512xf32>
    %c496_i32_172 = arith.constant 496 : i32
    %278 = tpu.dynamic_rotate %241 by %c496_i32_172 dim 1 : vector<16x512xf32>, i32 -> vector<16x512xf32>
    %c43 = arith.constant 43 : index
    %c0_173 = arith.constant 0 : index
    %c0_174 = arith.constant 0 : index
    %279 = vector.load %arg3[%c43, %c0_173, %c0_174] : memref<72x16x512xf32, #tpu.memory_space<vmem>>, vector<1x16x512xf32>
    %280 = vector.shape_cast %279 : vector<1x16x512xf32> to vector<16x512xf32>
    %281 = arith.mulf %280, %278 : vector<16x512xf32>
    %282 = arith.addf %277, %281 : vector<16x512xf32>
    %c495_i32_175 = arith.constant 495 : i32
    %283 = tpu.dynamic_rotate %241 by %c495_i32_175 dim 1 : vector<16x512xf32>, i32 -> vector<16x512xf32>
    %c44 = arith.constant 44 : index
    %c0_176 = arith.constant 0 : index
    %c0_177 = arith.constant 0 : index
    %284 = vector.load %arg3[%c44, %c0_176, %c0_177] : memref<72x16x512xf32, #tpu.memory_space<vmem>>, vector<1x16x512xf32>
    %285 = vector.shape_cast %284 : vector<1x16x512xf32> to vector<16x512xf32>
    %286 = arith.mulf %285, %283 : vector<16x512xf32>
    %287 = arith.addf %282, %286 : vector<16x512xf32>
    %cst_178 = arith.constant 0.000000e+00 : f32
    %288 = vector.broadcast %cst_178 : f32 to vector<16x512xf32>
    %289 = arith.maximumf %287, %288 : vector<16x512xf32>
    %c5_179 = arith.constant 5 : index
    %c0_180 = arith.constant 0 : index
    %c0_181 = arith.constant 0 : index
    %290 = vector.load %arg4[%c5_179, %c0_180, %c0_181] : memref<11x16x16xf32, #tpu.memory_space<vmem>>, vector<1x16x16xf32>
    %291 = vector.shape_cast %290 : vector<1x16x16xf32> to vector<16x16xf32>
    %cst_182 = arith.constant dense<0.000000e+00> : vector<16x512xf32>
    %292 = tpu.matmul %291, %289, %cst_182 {dimension_numbers = #tpu.dot_dimension_numbers<[1], [0], [0], [1], [0, 0, 1, 1], [], []>} : vector<16x16xf32>, vector<16x512xf32>, vector<16x512xf32> -> vector<16x512xf32>
    %c16_183 = arith.constant 16 : index
    %c0_184 = arith.constant 0 : index
    %c0_185 = arith.constant 0 : index
    %293 = vector.load %arg2[%c16_183, %c0_184, %c0_185] : memref<20x16x512xf32, #tpu.memory_space<vmem>>, vector<1x16x512xf32>
    %294 = vector.shape_cast %293 : vector<1x16x512xf32> to vector<16x512xf32>
    %295 = arith.addf %292, %294 : vector<16x512xf32>
    %cst_186 = arith.constant 0.000000e+00 : f32
    %296 = vector.broadcast %cst_186 : f32 to vector<16x512xf32>
    %297 = arith.maximumf %295, %296 : vector<16x512xf32>
    %c9_187 = arith.constant 9 : index
    %c0_188 = arith.constant 0 : index
    %c0_189 = arith.constant 0 : index
    %298 = vector.load %arg2[%c9_187, %c0_188, %c0_189] : memref<20x16x512xf32, #tpu.memory_space<vmem>>, vector<1x16x512xf32>
    %299 = vector.shape_cast %298 : vector<1x16x512xf32> to vector<16x512xf32>
    %c17_i32_190 = arith.constant 17 : i32
    %300 = tpu.dynamic_rotate %297 by %c17_i32_190 dim 1 : vector<16x512xf32>, i32 -> vector<16x512xf32>
    %c45 = arith.constant 45 : index
    %c0_191 = arith.constant 0 : index
    %c0_192 = arith.constant 0 : index
    %301 = vector.load %arg3[%c45, %c0_191, %c0_192] : memref<72x16x512xf32, #tpu.memory_space<vmem>>, vector<1x16x512xf32>
    %302 = vector.shape_cast %301 : vector<1x16x512xf32> to vector<16x512xf32>
    %303 = arith.mulf %302, %300 : vector<16x512xf32>
    %304 = arith.addf %299, %303 : vector<16x512xf32>
    %c16_i32_193 = arith.constant 16 : i32
    %305 = tpu.dynamic_rotate %297 by %c16_i32_193 dim 1 : vector<16x512xf32>, i32 -> vector<16x512xf32>
    %c46 = arith.constant 46 : index
    %c0_194 = arith.constant 0 : index
    %c0_195 = arith.constant 0 : index
    %306 = vector.load %arg3[%c46, %c0_194, %c0_195] : memref<72x16x512xf32, #tpu.memory_space<vmem>>, vector<1x16x512xf32>
    %307 = vector.shape_cast %306 : vector<1x16x512xf32> to vector<16x512xf32>
    %308 = arith.mulf %307, %305 : vector<16x512xf32>
    %309 = arith.addf %304, %308 : vector<16x512xf32>
    %c15_i32_196 = arith.constant 15 : i32
    %310 = tpu.dynamic_rotate %297 by %c15_i32_196 dim 1 : vector<16x512xf32>, i32 -> vector<16x512xf32>
    %c47 = arith.constant 47 : index
    %c0_197 = arith.constant 0 : index
    %c0_198 = arith.constant 0 : index
    %311 = vector.load %arg3[%c47, %c0_197, %c0_198] : memref<72x16x512xf32, #tpu.memory_space<vmem>>, vector<1x16x512xf32>
    %312 = vector.shape_cast %311 : vector<1x16x512xf32> to vector<16x512xf32>
    %313 = arith.mulf %312, %310 : vector<16x512xf32>
    %314 = arith.addf %309, %313 : vector<16x512xf32>
    %c1_i32_199 = arith.constant 1 : i32
    %315 = tpu.dynamic_rotate %297 by %c1_i32_199 dim 1 : vector<16x512xf32>, i32 -> vector<16x512xf32>
    %c48 = arith.constant 48 : index
    %c0_200 = arith.constant 0 : index
    %c0_201 = arith.constant 0 : index
    %316 = vector.load %arg3[%c48, %c0_200, %c0_201] : memref<72x16x512xf32, #tpu.memory_space<vmem>>, vector<1x16x512xf32>
    %317 = vector.shape_cast %316 : vector<1x16x512xf32> to vector<16x512xf32>
    %318 = arith.mulf %317, %315 : vector<16x512xf32>
    %319 = arith.addf %314, %318 : vector<16x512xf32>
    %c49 = arith.constant 49 : index
    %c0_202 = arith.constant 0 : index
    %c0_203 = arith.constant 0 : index
    %320 = vector.load %arg3[%c49, %c0_202, %c0_203] : memref<72x16x512xf32, #tpu.memory_space<vmem>>, vector<1x16x512xf32>
    %321 = vector.shape_cast %320 : vector<1x16x512xf32> to vector<16x512xf32>
    %322 = arith.mulf %321, %297 : vector<16x512xf32>
    %323 = arith.addf %319, %322 : vector<16x512xf32>
    %c511_i32_204 = arith.constant 511 : i32
    %324 = tpu.dynamic_rotate %297 by %c511_i32_204 dim 1 : vector<16x512xf32>, i32 -> vector<16x512xf32>
    %c50 = arith.constant 50 : index
    %c0_205 = arith.constant 0 : index
    %c0_206 = arith.constant 0 : index
    %325 = vector.load %arg3[%c50, %c0_205, %c0_206] : memref<72x16x512xf32, #tpu.memory_space<vmem>>, vector<1x16x512xf32>
    %326 = vector.shape_cast %325 : vector<1x16x512xf32> to vector<16x512xf32>
    %327 = arith.mulf %326, %324 : vector<16x512xf32>
    %328 = arith.addf %323, %327 : vector<16x512xf32>
    %c497_i32_207 = arith.constant 497 : i32
    %329 = tpu.dynamic_rotate %297 by %c497_i32_207 dim 1 : vector<16x512xf32>, i32 -> vector<16x512xf32>
    %c51 = arith.constant 51 : index
    %c0_208 = arith.constant 0 : index
    %c0_209 = arith.constant 0 : index
    %330 = vector.load %arg3[%c51, %c0_208, %c0_209] : memref<72x16x512xf32, #tpu.memory_space<vmem>>, vector<1x16x512xf32>
    %331 = vector.shape_cast %330 : vector<1x16x512xf32> to vector<16x512xf32>
    %332 = arith.mulf %331, %329 : vector<16x512xf32>
    %333 = arith.addf %328, %332 : vector<16x512xf32>
    %c496_i32_210 = arith.constant 496 : i32
    %334 = tpu.dynamic_rotate %297 by %c496_i32_210 dim 1 : vector<16x512xf32>, i32 -> vector<16x512xf32>
    %c52 = arith.constant 52 : index
    %c0_211 = arith.constant 0 : index
    %c0_212 = arith.constant 0 : index
    %335 = vector.load %arg3[%c52, %c0_211, %c0_212] : memref<72x16x512xf32, #tpu.memory_space<vmem>>, vector<1x16x512xf32>
    %336 = vector.shape_cast %335 : vector<1x16x512xf32> to vector<16x512xf32>
    %337 = arith.mulf %336, %334 : vector<16x512xf32>
    %338 = arith.addf %333, %337 : vector<16x512xf32>
    %c495_i32_213 = arith.constant 495 : i32
    %339 = tpu.dynamic_rotate %297 by %c495_i32_213 dim 1 : vector<16x512xf32>, i32 -> vector<16x512xf32>
    %c53 = arith.constant 53 : index
    %c0_214 = arith.constant 0 : index
    %c0_215 = arith.constant 0 : index
    %340 = vector.load %arg3[%c53, %c0_214, %c0_215] : memref<72x16x512xf32, #tpu.memory_space<vmem>>, vector<1x16x512xf32>
    %341 = vector.shape_cast %340 : vector<1x16x512xf32> to vector<16x512xf32>
    %342 = arith.mulf %341, %339 : vector<16x512xf32>
    %343 = arith.addf %338, %342 : vector<16x512xf32>
    %cst_216 = arith.constant 0.000000e+00 : f32
    %344 = vector.broadcast %cst_216 : f32 to vector<16x512xf32>
    %345 = arith.maximumf %343, %344 : vector<16x512xf32>
    %c6_217 = arith.constant 6 : index
    %c0_218 = arith.constant 0 : index
    %c0_219 = arith.constant 0 : index
    %346 = vector.load %arg4[%c6_217, %c0_218, %c0_219] : memref<11x16x16xf32, #tpu.memory_space<vmem>>, vector<1x16x16xf32>
    %347 = vector.shape_cast %346 : vector<1x16x16xf32> to vector<16x16xf32>
    %cst_220 = arith.constant dense<0.000000e+00> : vector<16x512xf32>
    %348 = tpu.matmul %347, %345, %cst_220 {dimension_numbers = #tpu.dot_dimension_numbers<[1], [0], [0], [1], [0, 0, 1, 1], [], []>} : vector<16x16xf32>, vector<16x512xf32>, vector<16x512xf32> -> vector<16x512xf32>
    %c17_221 = arith.constant 17 : index
    %c0_222 = arith.constant 0 : index
    %c0_223 = arith.constant 0 : index
    %349 = vector.load %arg2[%c17_221, %c0_222, %c0_223] : memref<20x16x512xf32, #tpu.memory_space<vmem>>, vector<1x16x512xf32>
    %350 = vector.shape_cast %349 : vector<1x16x512xf32> to vector<16x512xf32>
    %351 = arith.addf %348, %350 : vector<16x512xf32>
    %cst_224 = arith.constant 0.000000e+00 : f32
    %352 = vector.broadcast %cst_224 : f32 to vector<16x512xf32>
    %353 = arith.maximumf %351, %352 : vector<16x512xf32>
    %c10_225 = arith.constant 10 : index
    %c0_226 = arith.constant 0 : index
    %c0_227 = arith.constant 0 : index
    %354 = vector.load %arg2[%c10_225, %c0_226, %c0_227] : memref<20x16x512xf32, #tpu.memory_space<vmem>>, vector<1x16x512xf32>
    %355 = vector.shape_cast %354 : vector<1x16x512xf32> to vector<16x512xf32>
    %c34_i32_228 = arith.constant 34 : i32
    %356 = tpu.dynamic_rotate %241 by %c34_i32_228 dim 1 : vector<16x512xf32>, i32 -> vector<16x512xf32>
    %c54 = arith.constant 54 : index
    %c0_229 = arith.constant 0 : index
    %c0_230 = arith.constant 0 : index
    %357 = vector.load %arg3[%c54, %c0_229, %c0_230] : memref<72x16x512xf32, #tpu.memory_space<vmem>>, vector<1x16x512xf32>
    %358 = vector.shape_cast %357 : vector<1x16x512xf32> to vector<16x512xf32>
    %359 = arith.mulf %358, %356 : vector<16x512xf32>
    %360 = arith.addf %355, %359 : vector<16x512xf32>
    %c32_i32_231 = arith.constant 32 : i32
    %361 = tpu.dynamic_rotate %241 by %c32_i32_231 dim 1 : vector<16x512xf32>, i32 -> vector<16x512xf32>
    %c55 = arith.constant 55 : index
    %c0_232 = arith.constant 0 : index
    %c0_233 = arith.constant 0 : index
    %362 = vector.load %arg3[%c55, %c0_232, %c0_233] : memref<72x16x512xf32, #tpu.memory_space<vmem>>, vector<1x16x512xf32>
    %363 = vector.shape_cast %362 : vector<1x16x512xf32> to vector<16x512xf32>
    %364 = arith.mulf %363, %361 : vector<16x512xf32>
    %365 = arith.addf %360, %364 : vector<16x512xf32>
    %c30_i32_234 = arith.constant 30 : i32
    %366 = tpu.dynamic_rotate %241 by %c30_i32_234 dim 1 : vector<16x512xf32>, i32 -> vector<16x512xf32>
    %c56 = arith.constant 56 : index
    %c0_235 = arith.constant 0 : index
    %c0_236 = arith.constant 0 : index
    %367 = vector.load %arg3[%c56, %c0_235, %c0_236] : memref<72x16x512xf32, #tpu.memory_space<vmem>>, vector<1x16x512xf32>
    %368 = vector.shape_cast %367 : vector<1x16x512xf32> to vector<16x512xf32>
    %369 = arith.mulf %368, %366 : vector<16x512xf32>
    %370 = arith.addf %365, %369 : vector<16x512xf32>
    %c2_i32_237 = arith.constant 2 : i32
    %371 = tpu.dynamic_rotate %241 by %c2_i32_237 dim 1 : vector<16x512xf32>, i32 -> vector<16x512xf32>
    %c57 = arith.constant 57 : index
    %c0_238 = arith.constant 0 : index
    %c0_239 = arith.constant 0 : index
    %372 = vector.load %arg3[%c57, %c0_238, %c0_239] : memref<72x16x512xf32, #tpu.memory_space<vmem>>, vector<1x16x512xf32>
    %373 = vector.shape_cast %372 : vector<1x16x512xf32> to vector<16x512xf32>
    %374 = arith.mulf %373, %371 : vector<16x512xf32>
    %375 = arith.addf %370, %374 : vector<16x512xf32>
    %c58 = arith.constant 58 : index
    %c0_240 = arith.constant 0 : index
    %c0_241 = arith.constant 0 : index
    %376 = vector.load %arg3[%c58, %c0_240, %c0_241] : memref<72x16x512xf32, #tpu.memory_space<vmem>>, vector<1x16x512xf32>
    %377 = vector.shape_cast %376 : vector<1x16x512xf32> to vector<16x512xf32>
    %378 = arith.mulf %377, %241 : vector<16x512xf32>
    %379 = arith.addf %375, %378 : vector<16x512xf32>
    %c510_i32_242 = arith.constant 510 : i32
    %380 = tpu.dynamic_rotate %241 by %c510_i32_242 dim 1 : vector<16x512xf32>, i32 -> vector<16x512xf32>
    %c59 = arith.constant 59 : index
    %c0_243 = arith.constant 0 : index
    %c0_244 = arith.constant 0 : index
    %381 = vector.load %arg3[%c59, %c0_243, %c0_244] : memref<72x16x512xf32, #tpu.memory_space<vmem>>, vector<1x16x512xf32>
    %382 = vector.shape_cast %381 : vector<1x16x512xf32> to vector<16x512xf32>
    %383 = arith.mulf %382, %380 : vector<16x512xf32>
    %384 = arith.addf %379, %383 : vector<16x512xf32>
    %c482_i32_245 = arith.constant 482 : i32
    %385 = tpu.dynamic_rotate %241 by %c482_i32_245 dim 1 : vector<16x512xf32>, i32 -> vector<16x512xf32>
    %c60 = arith.constant 60 : index
    %c0_246 = arith.constant 0 : index
    %c0_247 = arith.constant 0 : index
    %386 = vector.load %arg3[%c60, %c0_246, %c0_247] : memref<72x16x512xf32, #tpu.memory_space<vmem>>, vector<1x16x512xf32>
    %387 = vector.shape_cast %386 : vector<1x16x512xf32> to vector<16x512xf32>
    %388 = arith.mulf %387, %385 : vector<16x512xf32>
    %389 = arith.addf %384, %388 : vector<16x512xf32>
    %c480_i32_248 = arith.constant 480 : i32
    %390 = tpu.dynamic_rotate %241 by %c480_i32_248 dim 1 : vector<16x512xf32>, i32 -> vector<16x512xf32>
    %c61 = arith.constant 61 : index
    %c0_249 = arith.constant 0 : index
    %c0_250 = arith.constant 0 : index
    %391 = vector.load %arg3[%c61, %c0_249, %c0_250] : memref<72x16x512xf32, #tpu.memory_space<vmem>>, vector<1x16x512xf32>
    %392 = vector.shape_cast %391 : vector<1x16x512xf32> to vector<16x512xf32>
    %393 = arith.mulf %392, %390 : vector<16x512xf32>
    %394 = arith.addf %389, %393 : vector<16x512xf32>
    %c478_i32_251 = arith.constant 478 : i32
    %395 = tpu.dynamic_rotate %241 by %c478_i32_251 dim 1 : vector<16x512xf32>, i32 -> vector<16x512xf32>
    %c62 = arith.constant 62 : index
    %c0_252 = arith.constant 0 : index
    %c0_253 = arith.constant 0 : index
    %396 = vector.load %arg3[%c62, %c0_252, %c0_253] : memref<72x16x512xf32, #tpu.memory_space<vmem>>, vector<1x16x512xf32>
    %397 = vector.shape_cast %396 : vector<1x16x512xf32> to vector<16x512xf32>
    %398 = arith.mulf %397, %395 : vector<16x512xf32>
    %399 = arith.addf %394, %398 : vector<16x512xf32>
    %cst_254 = arith.constant 0.000000e+00 : f32
    %400 = vector.broadcast %cst_254 : f32 to vector<16x512xf32>
    %401 = arith.maximumf %399, %400 : vector<16x512xf32>
    %c7_255 = arith.constant 7 : index
    %c0_256 = arith.constant 0 : index
    %c0_257 = arith.constant 0 : index
    %402 = vector.load %arg4[%c7_255, %c0_256, %c0_257] : memref<11x16x16xf32, #tpu.memory_space<vmem>>, vector<1x16x16xf32>
    %403 = vector.shape_cast %402 : vector<1x16x16xf32> to vector<16x16xf32>
    %cst_258 = arith.constant dense<0.000000e+00> : vector<16x512xf32>
    %404 = tpu.matmul %403, %401, %cst_258 {dimension_numbers = #tpu.dot_dimension_numbers<[1], [0], [0], [1], [0, 0, 1, 1], [], []>} : vector<16x16xf32>, vector<16x512xf32>, vector<16x512xf32> -> vector<16x512xf32>
    %c18_259 = arith.constant 18 : index
    %c0_260 = arith.constant 0 : index
    %c0_261 = arith.constant 0 : index
    %405 = vector.load %arg2[%c18_259, %c0_260, %c0_261] : memref<20x16x512xf32, #tpu.memory_space<vmem>>, vector<1x16x512xf32>
    %406 = vector.shape_cast %405 : vector<1x16x512xf32> to vector<16x512xf32>
    %407 = arith.addf %404, %406 : vector<16x512xf32>
    %cst_262 = arith.constant 0.000000e+00 : f32
    %408 = vector.broadcast %cst_262 : f32 to vector<16x512xf32>
    %409 = arith.maximumf %407, %408 : vector<16x512xf32>
    %c11_263 = arith.constant 11 : index
    %c0_264 = arith.constant 0 : index
    %c0_265 = arith.constant 0 : index
    %410 = vector.load %arg2[%c11_263, %c0_264, %c0_265] : memref<20x16x512xf32, #tpu.memory_space<vmem>>, vector<1x16x512xf32>
    %411 = vector.shape_cast %410 : vector<1x16x512xf32> to vector<16x512xf32>
    %c17_i32_266 = arith.constant 17 : i32
    %412 = tpu.dynamic_rotate %409 by %c17_i32_266 dim 1 : vector<16x512xf32>, i32 -> vector<16x512xf32>
    %c63 = arith.constant 63 : index
    %c0_267 = arith.constant 0 : index
    %c0_268 = arith.constant 0 : index
    %413 = vector.load %arg3[%c63, %c0_267, %c0_268] : memref<72x16x512xf32, #tpu.memory_space<vmem>>, vector<1x16x512xf32>
    %414 = vector.shape_cast %413 : vector<1x16x512xf32> to vector<16x512xf32>
    %415 = arith.mulf %414, %412 : vector<16x512xf32>
    %416 = arith.addf %411, %415 : vector<16x512xf32>
    %c16_i32_269 = arith.constant 16 : i32
    %417 = tpu.dynamic_rotate %409 by %c16_i32_269 dim 1 : vector<16x512xf32>, i32 -> vector<16x512xf32>
    %c64 = arith.constant 64 : index
    %c0_270 = arith.constant 0 : index
    %c0_271 = arith.constant 0 : index
    %418 = vector.load %arg3[%c64, %c0_270, %c0_271] : memref<72x16x512xf32, #tpu.memory_space<vmem>>, vector<1x16x512xf32>
    %419 = vector.shape_cast %418 : vector<1x16x512xf32> to vector<16x512xf32>
    %420 = arith.mulf %419, %417 : vector<16x512xf32>
    %421 = arith.addf %416, %420 : vector<16x512xf32>
    %c15_i32_272 = arith.constant 15 : i32
    %422 = tpu.dynamic_rotate %409 by %c15_i32_272 dim 1 : vector<16x512xf32>, i32 -> vector<16x512xf32>
    %c65 = arith.constant 65 : index
    %c0_273 = arith.constant 0 : index
    %c0_274 = arith.constant 0 : index
    %423 = vector.load %arg3[%c65, %c0_273, %c0_274] : memref<72x16x512xf32, #tpu.memory_space<vmem>>, vector<1x16x512xf32>
    %424 = vector.shape_cast %423 : vector<1x16x512xf32> to vector<16x512xf32>
    %425 = arith.mulf %424, %422 : vector<16x512xf32>
    %426 = arith.addf %421, %425 : vector<16x512xf32>
    %c1_i32_275 = arith.constant 1 : i32
    %427 = tpu.dynamic_rotate %409 by %c1_i32_275 dim 1 : vector<16x512xf32>, i32 -> vector<16x512xf32>
    %c66 = arith.constant 66 : index
    %c0_276 = arith.constant 0 : index
    %c0_277 = arith.constant 0 : index
    %428 = vector.load %arg3[%c66, %c0_276, %c0_277] : memref<72x16x512xf32, #tpu.memory_space<vmem>>, vector<1x16x512xf32>
    %429 = vector.shape_cast %428 : vector<1x16x512xf32> to vector<16x512xf32>
    %430 = arith.mulf %429, %427 : vector<16x512xf32>
    %431 = arith.addf %426, %430 : vector<16x512xf32>
    %c67 = arith.constant 67 : index
    %c0_278 = arith.constant 0 : index
    %c0_279 = arith.constant 0 : index
    %432 = vector.load %arg3[%c67, %c0_278, %c0_279] : memref<72x16x512xf32, #tpu.memory_space<vmem>>, vector<1x16x512xf32>
    %433 = vector.shape_cast %432 : vector<1x16x512xf32> to vector<16x512xf32>
    %434 = arith.mulf %433, %409 : vector<16x512xf32>
    %435 = arith.addf %431, %434 : vector<16x512xf32>
    %c511_i32_280 = arith.constant 511 : i32
    %436 = tpu.dynamic_rotate %409 by %c511_i32_280 dim 1 : vector<16x512xf32>, i32 -> vector<16x512xf32>
    %c68 = arith.constant 68 : index
    %c0_281 = arith.constant 0 : index
    %c0_282 = arith.constant 0 : index
    %437 = vector.load %arg3[%c68, %c0_281, %c0_282] : memref<72x16x512xf32, #tpu.memory_space<vmem>>, vector<1x16x512xf32>
    %438 = vector.shape_cast %437 : vector<1x16x512xf32> to vector<16x512xf32>
    %439 = arith.mulf %438, %436 : vector<16x512xf32>
    %440 = arith.addf %435, %439 : vector<16x512xf32>
    %c497_i32_283 = arith.constant 497 : i32
    %441 = tpu.dynamic_rotate %409 by %c497_i32_283 dim 1 : vector<16x512xf32>, i32 -> vector<16x512xf32>
    %c69 = arith.constant 69 : index
    %c0_284 = arith.constant 0 : index
    %c0_285 = arith.constant 0 : index
    %442 = vector.load %arg3[%c69, %c0_284, %c0_285] : memref<72x16x512xf32, #tpu.memory_space<vmem>>, vector<1x16x512xf32>
    %443 = vector.shape_cast %442 : vector<1x16x512xf32> to vector<16x512xf32>
    %444 = arith.mulf %443, %441 : vector<16x512xf32>
    %445 = arith.addf %440, %444 : vector<16x512xf32>
    %c496_i32_286 = arith.constant 496 : i32
    %446 = tpu.dynamic_rotate %409 by %c496_i32_286 dim 1 : vector<16x512xf32>, i32 -> vector<16x512xf32>
    %c70 = arith.constant 70 : index
    %c0_287 = arith.constant 0 : index
    %c0_288 = arith.constant 0 : index
    %447 = vector.load %arg3[%c70, %c0_287, %c0_288] : memref<72x16x512xf32, #tpu.memory_space<vmem>>, vector<1x16x512xf32>
    %448 = vector.shape_cast %447 : vector<1x16x512xf32> to vector<16x512xf32>
    %449 = arith.mulf %448, %446 : vector<16x512xf32>
    %450 = arith.addf %445, %449 : vector<16x512xf32>
    %c495_i32_289 = arith.constant 495 : i32
    %451 = tpu.dynamic_rotate %409 by %c495_i32_289 dim 1 : vector<16x512xf32>, i32 -> vector<16x512xf32>
    %c71 = arith.constant 71 : index
    %c0_290 = arith.constant 0 : index
    %c0_291 = arith.constant 0 : index
    %452 = vector.load %arg3[%c71, %c0_290, %c0_291] : memref<72x16x512xf32, #tpu.memory_space<vmem>>, vector<1x16x512xf32>
    %453 = vector.shape_cast %452 : vector<1x16x512xf32> to vector<16x512xf32>
    %454 = arith.mulf %453, %451 : vector<16x512xf32>
    %455 = arith.addf %450, %454 : vector<16x512xf32>
    %cst_292 = arith.constant 0.000000e+00 : f32
    %456 = vector.broadcast %cst_292 : f32 to vector<16x512xf32>
    %457 = arith.maximumf %455, %456 : vector<16x512xf32>
    %c8_293 = arith.constant 8 : index
    %c0_294 = arith.constant 0 : index
    %c0_295 = arith.constant 0 : index
    %458 = vector.load %arg4[%c8_293, %c0_294, %c0_295] : memref<11x16x16xf32, #tpu.memory_space<vmem>>, vector<1x16x16xf32>
    %459 = vector.shape_cast %458 : vector<1x16x16xf32> to vector<16x16xf32>
    %cst_296 = arith.constant dense<0.000000e+00> : vector<16x512xf32>
    %460 = tpu.matmul %459, %457, %cst_296 {dimension_numbers = #tpu.dot_dimension_numbers<[1], [0], [0], [1], [0, 0, 1, 1], [], []>} : vector<16x16xf32>, vector<16x512xf32>, vector<16x512xf32> -> vector<16x512xf32>
    %c19_297 = arith.constant 19 : index
    %c0_298 = arith.constant 0 : index
    %c0_299 = arith.constant 0 : index
    %461 = vector.load %arg2[%c19_297, %c0_298, %c0_299] : memref<20x16x512xf32, #tpu.memory_space<vmem>>, vector<1x16x512xf32>
    %462 = vector.shape_cast %461 : vector<1x16x512xf32> to vector<16x512xf32>
    %463 = arith.addf %460, %462 : vector<16x512xf32>
    %cst_300 = arith.constant 0.000000e+00 : f32
    %464 = vector.broadcast %cst_300 : f32 to vector<16x512xf32>
    %465 = arith.maximumf %463, %464 : vector<16x512xf32>
    %466 = arith.addf %353, %465 : vector<16x512xf32>
    %c0_301 = arith.constant 0 : index
    %c0_302 = arith.constant 0 : index
    %c0_303 = arith.constant 0 : index
    %467 = vector.load %arg1[%c0_301, %c0_302, %c0_303] : memref<1x16x512xf32, #tpu.memory_space<vmem>>, vector<1x16x512xf32>
    %468 = vector.shape_cast %467 : vector<1x16x512xf32> to vector<16x512xf32>
    %469 = arith.addf %466, %468 : vector<16x512xf32>
    %c2_304 = arith.constant 2 : index
    %c0_305 = arith.constant 0 : index
    %c0_306 = arith.constant 0 : index
    %470 = vector.load %arg2[%c2_304, %c0_305, %c0_306] : memref<20x16x512xf32, #tpu.memory_space<vmem>>, vector<1x16x512xf32>
    %471 = vector.shape_cast %470 : vector<1x16x512xf32> to vector<16x512xf32>
    %472 = arith.mulf %469, %471 : vector<16x512xf32>
    %c3_307 = arith.constant 3 : index
    %c0_308 = arith.constant 0 : index
    %c0_309 = arith.constant 0 : index
    %473 = vector.load %arg2[%c3_307, %c0_308, %c0_309] : memref<20x16x512xf32, #tpu.memory_space<vmem>>, vector<1x16x512xf32>
    %474 = vector.shape_cast %473 : vector<1x16x512xf32> to vector<16x512xf32>
    %475 = arith.addf %472, %474 : vector<16x512xf32>
    %476 = arith.negf %475 : vector<16x512xf32>
    %477 = math.exp %476 : vector<16x512xf32>
    %cst_310 = arith.constant 1.000000e+00 : f32
    %478 = vector.broadcast %cst_310 : f32 to vector<16x512xf32>
    %479 = arith.addf %478, %477 : vector<16x512xf32>
    %480 = arith.divf %478, %479 : vector<16x512xf32>
    %481 = arith.mulf %475, %480 : vector<16x512xf32>
    %c9_311 = arith.constant 9 : index
    %c0_312 = arith.constant 0 : index
    %c0_313 = arith.constant 0 : index
    %482 = vector.load %arg4[%c9_311, %c0_312, %c0_313] : memref<11x16x16xf32, #tpu.memory_space<vmem>>, vector<1x16x16xf32>
    %483 = vector.shape_cast %482 : vector<1x16x16xf32> to vector<16x16xf32>
    %cst_314 = arith.constant dense<0.000000e+00> : vector<16x512xf32>
    %484 = tpu.matmul %483, %481, %cst_314 {dimension_numbers = #tpu.dot_dimension_numbers<[1], [0], [0], [1], [0, 0, 1, 1], [], []>} : vector<16x16xf32>, vector<16x512xf32>, vector<16x512xf32> -> vector<16x512xf32>
    %c0_315 = arith.constant 0 : index
    %c0_316 = arith.constant 0 : index
    %485 = vector.load %arg7[%c0_315, %c0_316] : memref<512x18xf32, #tpu.memory_space<vmem>>, vector<512x18xf32>
    %cst_317 = arith.constant dense<0.000000e+00> : vector<16x18xf32>
    %486 = tpu.matmul %484, %485, %cst_317 {dimension_numbers = #tpu.dot_dimension_numbers<[1], [0], [0], [1], [0, 0, 1, 1], [], []>} : vector<16x512xf32>, vector<512x18xf32>, vector<16x18xf32> -> vector<16x18xf32>
    %c0_318 = arith.constant 0 : index
    %c0_319 = arith.constant 0 : index
    %487 = vector.load %arg5[%c0_318, %c0_319] : memref<16x4xf32, #tpu.memory_space<vmem>>, vector<16x1xf32>
    %488 = vector.broadcast %487 : vector<16x1xf32> to vector<16x18xf32>
    %489 = arith.mulf %486, %488 : vector<16x18xf32>
    %c0_320 = arith.constant 0 : index
    %c1_321 = arith.constant 1 : index
    %490 = vector.load %arg5[%c0_320, %c1_321] : memref<16x4xf32, #tpu.memory_space<vmem>>, vector<16x1xf32>
    %491 = vector.broadcast %490 : vector<16x1xf32> to vector<16x18xf32>
    %492 = arith.addf %489, %491 : vector<16x18xf32>
    %cst_322 = arith.constant 0.000000e+00 : f32
    %493 = vector.broadcast %cst_322 : f32 to vector<16x18xf32>
    %494 = arith.maximumf %492, %493 : vector<16x18xf32>
    %c0_323 = arith.constant 0 : index
    %c0_324 = arith.constant 0 : index
    %495 = vector.load %arg6[%c0_323, %c0_324] : memref<16x18xf32, #tpu.memory_space<vmem>>, vector<16x18xf32>
    %496 = arith.mulf %494, %495 : vector<16x18xf32>
    %c0_325 = arith.constant 0 : index
    %c0_326 = arith.constant 0 : index
    %497 = vector.load %arg8[%c0_325, %c0_326] : memref<18x2xf32, #tpu.memory_space<vmem>>, vector<18x2xf32>
    %cst_327 = arith.constant dense<0.000000e+00> : vector<16x2xf32>
    %498 = tpu.matmul %496, %497, %cst_327 {dimension_numbers = #tpu.dot_dimension_numbers<[1], [0], [0], [1], [0, 0, 1, 1], [], []>} : vector<16x18xf32>, vector<18x2xf32>, vector<16x2xf32> -> vector<16x2xf32>
    %c0_328 = arith.constant 0 : index
    %c2_329 = arith.constant 2 : index
    %499 = vector.load %arg5[%c0_328, %c2_329] : memref<16x4xf32, #tpu.memory_space<vmem>>, vector<16x1xf32>
    %500 = vector.broadcast %499 : vector<16x1xf32> to vector<16x2xf32>
    %501 = arith.addf %498, %500 : vector<16x2xf32>
    %c10_330 = arith.constant 10 : index
    %c0_331 = arith.constant 0 : index
    %c0_332 = arith.constant 0 : index
    %502 = vector.load %arg4[%c10_330, %c0_331, %c0_332] : memref<11x16x16xf32, #tpu.memory_space<vmem>>, vector<1x16x16xf32>
    %503 = vector.shape_cast %502 : vector<1x16x16xf32> to vector<16x16xf32>
    %cst_333 = arith.constant dense<0.000000e+00> : vector<16x2xf32>
    %504 = tpu.matmul %503, %501, %cst_333 {dimension_numbers = #tpu.dot_dimension_numbers<[1], [0], [0], [1], [0, 0, 1, 1], [], []>} : vector<16x16xf32>, vector<16x2xf32>, vector<16x2xf32> -> vector<16x2xf32>
    %c0_334 = arith.constant 0 : index
    %c3_335 = arith.constant 3 : index
    %505 = vector.load %arg5[%c0_334, %c3_335] : memref<16x4xf32, #tpu.memory_space<vmem>>, vector<16x1xf32>
    %506 = vector.broadcast %505 : vector<16x1xf32> to vector<16x2xf32>
    %507 = arith.addf %504, %506 : vector<16x2xf32>
    %508 = arith.negf %507 : vector<16x2xf32>
    %509 = math.exp %508 : vector<16x2xf32>
    %cst_336 = arith.constant 1.000000e+00 : f32
    %510 = vector.broadcast %cst_336 : f32 to vector<16x2xf32>
    %511 = arith.addf %510, %509 : vector<16x2xf32>
    %512 = arith.divf %510, %511 : vector<16x2xf32>
    %c0_337 = arith.constant 0 : index
    %c0_338 = arith.constant 0 : index
    %513 = vector.load %arg9[%c0_337, %c0_338] : memref<2x512xf32, #tpu.memory_space<vmem>>, vector<2x512xf32>
    %cst_339 = arith.constant dense<0.000000e+00> : vector<16x512xf32>
    %514 = tpu.matmul %512, %513, %cst_339 {dimension_numbers = #tpu.dot_dimension_numbers<[1], [0], [0], [1], [0, 0, 1, 1], [], []>} : vector<16x2xf32>, vector<2x512xf32>, vector<16x512xf32> -> vector<16x512xf32>
    %515 = arith.mulf %484, %514 : vector<16x512xf32>
    %c0_340 = arith.constant 0 : index
    %c0_341 = arith.constant 0 : index
    %c0_342 = arith.constant 0 : index
    %516 = vector.load %arg10[%c0_340, %c0_341, %c0_342] : memref<1x16x512xf32, #tpu.memory_space<vmem>>, vector<1x16x512xf32>
    %517 = vector.shape_cast %516 : vector<1x16x512xf32> to vector<16x512xf32>
    %518 = vector.shape_cast %515 : vector<16x512xf32> to vector<1x16x512xf32>
    tpu.vector_store %arg10[%c0_340, %c0_341, %c0_342], %518 {strides = array<i32>} : memref<1x16x512xf32, #tpu.memory_space<vmem>>, vector<1x16x512xf32>,
    return
  }
  func.func @transform_0(%arg0: i32) -> (i32, i32, i32) {
    %c0_i32 = arith.constant 0 : i32
    %c0_i32_0 = arith.constant 0 : i32
    %c0_i32_1 = arith.constant 0 : i32
    return %arg0, %c0_i32, %c0_i32_0 : i32, i32, i32
  }
  func.func @transform_1(%arg0: i32) -> (i32, i32, i32) {
    %c0_i32 = arith.constant 0 : i32
    %c0_i32_0 = arith.constant 0 : i32
    %c0_i32_1 = arith.constant 0 : i32
    %c0_i32_2 = arith.constant 0 : i32
    return %c0_i32, %c0_i32_0, %c0_i32_1 : i32, i32, i32
  }
  func.func @transform_2(%arg0: i32) -> (i32, i32, i32) {
    %c0_i32 = arith.constant 0 : i32
    %c0_i32_0 = arith.constant 0 : i32
    %c0_i32_1 = arith.constant 0 : i32
    %c0_i32_2 = arith.constant 0 : i32
    return %c0_i32, %c0_i32_0, %c0_i32_1 : i32, i32, i32
  }
  func.func @transform_3(%arg0: i32) -> (i32, i32, i32) {
    %c0_i32 = arith.constant 0 : i32
    %c0_i32_0 = arith.constant 0 : i32
    %c0_i32_1 = arith.constant 0 : i32
    %c0_i32_2 = arith.constant 0 : i32
    return %c0_i32, %c0_i32_0, %c0_i32_1 : i32, i32, i32
  }
  func.func @transform_4(%arg0: i32) -> (i32, i32) {
    %c0_i32 = arith.constant 0 : i32
    %c0_i32_0 = arith.constant 0 : i32
    %c0_i32_1 = arith.constant 0 : i32
    return %c0_i32, %c0_i32_0 : i32, i32
  }
  func.func @transform_5(%arg0: i32) -> (i32, i32) {
    %c0_i32 = arith.constant 0 : i32
    %c0_i32_0 = arith.constant 0 : i32
    %c0_i32_1 = arith.constant 0 : i32
    return %c0_i32, %c0_i32_0 : i32, i32
  }
  func.func @transform_6(%arg0: i32) -> (i32, i32) {
    %c0_i32 = arith.constant 0 : i32
    %c0_i32_0 = arith.constant 0 : i32
    %c0_i32_1 = arith.constant 0 : i32
    return %c0_i32, %c0_i32_0 : i32, i32
  }
  func.func @transform_7(%arg0: i32) -> (i32, i32) {
    %c0_i32 = arith.constant 0 : i32
    %c0_i32_0 = arith.constant 0 : i32
    %c0_i32_1 = arith.constant 0 : i32
    return %c0_i32, %c0_i32_0 : i32, i32
  }
  func.func @transform_8(%arg0: i32) -> (i32, i32) {
    %c0_i32 = arith.constant 0 : i32
    %c0_i32_0 = arith.constant 0 : i32
    %c0_i32_1 = arith.constant 0 : i32
    return %c0_i32, %c0_i32_0 : i32, i32
  }
  func.func @transform_9(%arg0: i32) -> (i32, i32, i32) {
    %c0_i32 = arith.constant 0 : i32
    %c0_i32_0 = arith.constant 0 : i32
    %c0_i32_1 = arith.constant 0 : i32
    return %arg0, %c0_i32, %c0_i32_0 : i32, i32, i32
  }
}

</mosaic_0001>

<llo_original>
// kernel: me_att_forward.1
$region0: #{me_att_forward.1}
  #allocation0 [shape = 'u32[]', space=smem, size = 0x4, offset = 0x4, fixed_abs, tag = 'smem constant byte address 0x4 - core index']
  #allocation1 [shape = 'u32[144,128]{1,0:T(1,128)}', space=vmem, size = 0x12000, scoped, tag = 'internal scratch']
  %s0 = inlined_call_operand.vmem [shape: f32[2,16,512], index: 0, kind: input, shape index: {}]
  %s1 = inlined_call_operand.hbm [shape: f32[20,16,512], index: 1, kind: input, shape index: {}]
  %s2 = inlined_call_operand.hbm [shape: f32[72,16,512], index: 2, kind: input, shape index: {}]
  %s3 = inlined_call_operand.hbm [shape: f32[11,16,16], index: 3, kind: input, shape index: {}]
  %s4 = inlined_call_operand.vmem [shape: f32[16,4], index: 4, kind: input, shape index: {}]
  %s5 = inlined_call_operand.hbm [shape: f32[16,18], index: 5, kind: input, shape index: {}]
  %s6 = inlined_call_operand.vmem [shape: f32[512,18], index: 6, kind: input, shape index: {}]
  %s7 = inlined_call_operand.vmem [shape: f32[18,2], index: 7, kind: input, shape index: {}]
  %s8 = inlined_call_operand.hbm [shape: f32[2,512], index: 8, kind: input, shape index: {}]
  %s9 = inlined_call_operand.vmem [shape: f32[2,16,512], index: 9, kind: output, shape index: {}]
  %s10 = sld [smem:[#allocation0]]
  $region89: #{me_att_forward.1} parent=0
    _
  %s12 = ssub.s32 1, %s10
  %s13 = scalar_select 0, %s12, %s10
  $region1: #{me_att_forward.1} parent=0
    #allocation2 [shape = 'u8[655360]{0}', space=vmem, size = 0xa0000, scoped, tag = 'input window, operand 1, single buffered']
    #allocation3 [shape = 's32[2]{0}', space=sflag, size = 0x8, scoped, tag = 'scoped memory for me_att_forward.1']
    #allocation4 [shape = 'u8[2359296]{0}', space=vmem, size = 0x240000, scoped, tag = 'input window, operand 2, single buffered']
    #allocation5 [shape = 's32[1]{0}', space=sflag, size = 0x4, scoped, tag = 'scoped memory for me_att_forward.1']
    #allocation6 [shape = 'u8[90112]{0}', space=vmem, size = 0x16000, scoped, tag = 'input window, operand 3, single buffered']
    #allocation7 [shape = 'u8[8192]{0}', space=vmem, size = 0x2000, scoped, tag = 'input window, operand 5, single buffered']
    #allocation8 [shape = 's32[1]{0}', space=sflag, size = 0x4, scoped, tag = 'scoped memory for me_att_forward.1']
    #allocation9 [shape = 'u8[4096]{0}', space=vmem, size = 0x1000, scoped, tag = 'input window, operand 8, single buffered']
    %14 = vsyncpa [#allocation3], 0
    %15 = vsyncpa [#allocation5], 0
    %16 = vsyncpa [#allocation8], 0
    loop: start=0, step=1, limit=4
    $region2: #{me_att_forward.1} parent=1 // loop_pre_header
      _
    $region3: #{me_att_forward.1} parent=1 // loop_header
      %s18 = sphi 0, %s22
      %p19 = scmp.ge.s32.totalorder %s18, 4
      %s28 = sphi 0, %s30
      %s31 = sphi 0, %s28
      %s32 = sphi 0, %s31
      %s48 = sphi 0, %s32
      %s52 = sphi 0, %s52
      %s54 = sphi 0, %s52
      %s55 = sphi 0, %s54
      %s69 = sphi 0, %s55
      %s73 = sphi 0, %s73
      %s75 = sphi 0, %s73
      %s76 = sphi 0, %s75
      %s90 = sphi 0, %s76
      %s94 = sphi 0, %s94
      %s96 = sphi 0, %s94
      %s97 = sphi 0, %s96
      %s111 = sphi 0, %s97
      %s115 = sphi 0, %s115
      %s117 = sphi 0, %s115
      %s118 = sphi 0, %s117
      %s132 = sphi 0, %s118
      %s136 = sphi 0, %s136
      %s138 = sphi 0, %s136
      %s139 = sphi 0, %s138
      %s153 = sphi 0, %s139
      %s157 = sphi 0, %s157
      %s159 = sphi 0, %s157
      %s160 = sphi 0, %s159
      %s174 = sphi 0, %s160
      %s178 = sphi 0, %s178
      %s180 = sphi 0, %s178
      %s181 = sphi 0, %s180
      %s195 = sphi 0, %s181
      %s199 = sphi 0, %s199
      %s201 = sphi 0, %s199
      %s202 = sphi 0, %s201
      %s216 = sphi 0, %s202
      %s222 = sphi 0, %s224
      %s225 = sphi 0, %s222
      %s226 = sphi 0, %s225
      %s242 = sphi 0, %s226
    $region4: #{me_att_forward.1} parent=1 // loop_header_branch
      %21 = sbr.rel (%p19) target = $region8
    $region5: #{me_att_forward.1} parent=1 // loop_body
      %s23 = ssub.s32 %s18, 1
      %s24 = ssub.s32 %s18, 2
      %s25 = sadd.s32 %s18, 1
      %s26 = ssub.s32 %s18, %s25
      %p27 = scmp.eq.s32.totalorder %s26, 0
      %s29 = sadd.s32 %s28, 1
      %s30 = scalar_select %p27, %s28, %s29
      %p33 = pneg %p27
      %p34 = scmp.eq.s32.totalorder %s18, 1
      %p35 = por %p33, %p34
      %p36 = scmp.ne.s32.totalorder %s28, %s31
      %p37 = scmp.eq.s32.totalorder %s18, 0
      %p38 = por %p36, %p37
      %p39 = scmp.ne.s32.totalorder %s28, %s31
      %p40 = scmp.eq.s32.totalorder %s23, 1
      %p41 = por %p39, %p40
      %p42 = scmp.ne.s32.totalorder %s31, %s32
      %p43 = scmp.eq.s32.totalorder %s23, 0
      %p44 = por %p42, %p43
      %p45 = scmp.ne.s32.totalorder %s31, %s32
      %p46 = scmp.eq.s32.totalorder %s24, 1
      %p47 = por %p45, %p46
      %p49 = scmp.ne.s32.totalorder %s32, %s48
      %p50 = scmp.eq.s32.totalorder %s24, 0
      %p51 = por %p49, %p50
      %s53 = sadd.s32 %s52, 1
      %p56 = scmp.eq.s32.totalorder %s18, 1
      %p57 = scmp.ne.s32.totalorder %s52, %s54
      %p58 = scmp.eq.s32.totalorder %s18, 0
      %p59 = por %p57, %p58
      %p60 = scmp.ne.s32.totalorder %s52, %s54
      %p61 = scmp.eq.s32.totalorder %s23, 1
      %p62 = por %p60, %p61
      %p63 = scmp.ne.s32.totalorder %s54, %s55
      %p64 = scmp.eq.s32.totalorder %s23, 0
      %p65 = por %p63, %p64
      %p66 = scmp.ne.s32.totalorder %s54, %s55
      %p67 = scmp.eq.s32.totalorder %s24, 1
      %p68 = por %p66, %p67
      %p70 = scmp.ne.s32.totalorder %s55, %s69
      %p71 = scmp.eq.s32.totalorder %s24, 0
      %p72 = por %p70, %p71
      %s74 = sadd.s32 %s73, 1
      %p77 = scmp.eq.s32.totalorder %s18, 1
      %p78 = scmp.ne.s32.totalorder %s73, %s75
      %p79 = scmp.eq.s32.totalorder %s18, 0
      %p80 = por %p78, %p79
      %p81 = scmp.ne.s32.totalorder %s73, %s75
      %p82 = scmp.eq.s32.totalorder %s23, 1
      %p83 = por %p81, %p82
      %p84 = scmp.ne.s32.totalorder %s75, %s76
      %p85 = scmp.eq.s32.totalorder %s23, 0
      %p86 = por %p84, %p85
      %p87 = scmp.ne.s32.totalorder %s75, %s76
      %p88 = scmp.eq.s32.totalorder %s24, 1
      %p89 = por %p87, %p88
      %p91 = scmp.ne.s32.totalorder %s76, %s90
      %p92 = scmp.eq.s32.totalorder %s24, 0
      %p93 = por %p91, %p92
      %s95 = sadd.s32 %s94, 1
      %p98 = scmp.eq.s32.totalorder %s18, 1
      %p99 = scmp.ne.s32.totalorder %s94, %s96
      %p100 = scmp.eq.s32.totalorder %s18, 0
      %p101 = por %p99, %p100
      %p102 = scmp.ne.s32.totalorder %s94, %s96
      %p103 = scmp.eq.s32.totalorder %s23, 1
      %p104 = por %p102, %p103
      %p105 = scmp.ne.s32.totalorder %s96, %s97
      %p106 = scmp.eq.s32.totalorder %s23, 0
      %p107 = por %p105, %p106
      %p108 = scmp.ne.s32.totalorder %s96, %s97
      %p109 = scmp.eq.s32.totalorder %s24, 1
      %p110 = por %p108, %p109
      %p112 = scmp.ne.s32.totalorder %s97, %s111
      %p113 = scmp.eq.s32.totalorder %s24, 0
      %p114 = por %p112, %p113
      %s116 = sadd.s32 %s115, 1
      %p119 = scmp.eq.s32.totalorder %s18, 1
      %p120 = scmp.ne.s32.totalorder %s115, %s117
      %p121 = scmp.eq.s32.totalorder %s18, 0
      %p122 = por %p120, %p121
      %p123 = scmp.ne.s32.totalorder %s115, %s117
      %p124 = scmp.eq.s32.totalorder %s23, 1
      %p125 = por %p123, %p124
      %p126 = scmp.ne.s32.totalorder %s117, %s118
      %p127 = scmp.eq.s32.totalorder %s23, 0
      %p128 = por %p126, %p127
      %p129 = scmp.ne.s32.totalorder %s117, %s118
      %p130 = scmp.eq.s32.totalorder %s24, 1
      %p131 = por %p129, %p130
      %p133 = scmp.ne.s32.totalorder %s118, %s132
      %p134 = scmp.eq.s32.totalorder %s24, 0
      %p135 = por %p133, %p134
      %s137 = sadd.s32 %s136, 1
      %p140 = scmp.eq.s32.totalorder %s18, 1
      %p141 = scmp.ne.s32.totalorder %s136, %s138
      %p142 = scmp.eq.s32.totalorder %s18, 0
      %p143 = por %p141, %p142
      %p144 = scmp.ne.s32.totalorder %s136, %s138
      %p145 = scmp.eq.s32.totalorder %s23, 1
      %p146 = por %p144, %p145
      %p147 = scmp.ne.s32.totalorder %s138, %s139
      %p148 = scmp.eq.s32.totalorder %s23, 0
      %p149 = por %p147, %p148
      %p150 = scmp.ne.s32.totalorder %s138, %s139
      %p151 = scmp.eq.s32.totalorder %s24, 1
      %p152 = por %p150, %p151
      %p154 = scmp.ne.s32.totalorder %s139, %s153
      %p155 = scmp.eq.s32.totalorder %s24, 0
      %p156 = por %p154, %p155
      %s158 = sadd.s32 %s157, 1
      %p161 = scmp.eq.s32.totalorder %s18, 1
      %p162 = scmp.ne.s32.totalorder %s157, %s159
      %p163 = scmp.eq.s32.totalorder %s18, 0
      %p164 = por %p162, %p163
      %p165 = scmp.ne.s32.totalorder %s157, %s159
      %p166 = scmp.eq.s32.totalorder %s23, 1
      %p167 = por %p165, %p166
      %p168 = scmp.ne.s32.totalorder %s159, %s160
      %p169 = scmp.eq.s32.totalorder %s23, 0
      %p170 = por %p168, %p169
      %p171 = scmp.ne.s32.totalorder %s159, %s160
      %p172 = scmp.eq.s32.totalorder %s24, 1
      %p173 = por %p171, %p172
      %p175 = scmp.ne.s32.totalorder %s160, %s174
      %p176 = scmp.eq.s32.totalorder %s24, 0
      %p177 = por %p175, %p176
      %s179 = sadd.s32 %s178, 1
      %p182 = scmp.eq.s32.totalorder %s18, 1
      %p183 = scmp.ne.s32.totalorder %s178, %s180
      %p184 = scmp.eq.s32.totalorder %s18, 0
      %p185 = por %p183, %p184
      %p186 = scmp.ne.s32.totalorder %s178, %s180
      %p187 = scmp.eq.s32.totalorder %s23, 1
      %p188 = por %p186, %p187
      %p189 = scmp.ne.s32.totalorder %s180, %s181
      %p190 = scmp.eq.s32.totalorder %s23, 0
      %p191 = por %p189, %p190
      %p192 = scmp.ne.s32.totalorder %s180, %s181
      %p193 = scmp.eq.s32.totalorder %s24, 1
      %p194 = por %p192, %p193
      %p196 = scmp.ne.s32.totalorder %s181, %s195
      %p197 = scmp.eq.s32.totalorder %s24, 0
      %p198 = por %p196, %p197
      %s200 = sadd.s32 %s199, 1
      %p203 = scmp.eq.s32.totalorder %s18, 1
      %p204 = scmp.ne.s32.totalorder %s199, %s201
      %p205 = scmp.eq.s32.totalorder %s18, 0
      %p206 = por %p204, %p205
      %p207 = scmp.ne.s32.totalorder %s199, %s201
      %p208 = scmp.eq.s32.totalorder %s23, 1
      %p209 = por %p207, %p208
      %p210 = scmp.ne.s32.totalorder %s201, %s202
      %p211 = scmp.eq.s32.totalorder %s23, 0
      %p212 = por %p210, %p211
      %p213 = scmp.ne.s32.totalorder %s201, %s202
      %p214 = scmp.eq.s32.totalorder %s24, 1
      %p215 = por %p213, %p214
      %p217 = scmp.ne.s32.totalorder %s202, %s216
      %p218 = scmp.eq.s32.totalorder %s24, 0
      %p219 = por %p217, %p218
      %s220 = ssub.s32 %s18, %s25
      %p221 = scmp.eq.s32.totalorder %s220, 0
      %s223 = sadd.s32 %s222, 1
      %s224 = scalar_select %p221, %s222, %s223
      %p227 = pneg %p221
      %p228 = scmp.eq.s32.totalorder %s18, 1
      %p229 = por %p227, %p228
      %p230 = scmp.ne.s32.totalorder %s222, %s225
      %p231 = scmp.eq.s32.totalorder %s18, 0
      %p232 = por %p230, %p231
      %p233 = scmp.ne.s32.totalorder %s222, %s225
      %p234 = scmp.eq.s32.totalorder %s23, 1
      %p235 = por %p233, %p234
      %p236 = scmp.ne.s32.totalorder %s225, %s226
      %p237 = scmp.eq.s32.totalorder %s23, 0
      %p238 = por %p236, %p237
      %p239 = scmp.ne.s32.totalorder %s225, %s226
      %p240 = scmp.eq.s32.totalorder %s24, 1
      %p241 = por %p239, %p240
      %p243 = scmp.ne.s32.totalorder %s226, %s242
      %p244 = scmp.eq.s32.totalorder %s24, 0
      %p245 = por %p243, %p244
      %p246 = scmp.le.s32.totalorder 1, %s18
      %p247 = scmp.lt.s32.totalorder %s18, 3
      %p248 = pnand %p246, %p247
      %p249 = pneg %p248
      // Predicated region
      $region9: #{me_att_forward.1} parent=5 // pred_check
        _
      $region10: #{me_att_forward.1} parent=5 // pred_check_branch
        %251 = sbr.rel (%p248) target = $region12
      $region11: #{me_att_forward.1} parent=5 // pred_region
        %s252 = ssub.s32 %s18, 1
        // Predicated region
        $region13: #{me_att_forward.1} parent=11 // pred_check
          %p253 = pneg %p65
        $region14: #{me_att_forward.1} parent=11 // pred_check_branch
          %255 = sbr.rel (%p253) target = $region16
        $region15: #{me_att_forward.1} parent=11 // pred_region
          %s257 = ssub.s32 20480, 20480
          %258 = vsyncadd [#allocation3], %s257
          %s259 = sshll.u32 [#allocation2], 4
          %s260 = int_to_ptr.vmem [resolvable:$true] %s259
          %265 = dma.hbm_to_vmem [thread:$0]  %s1, 20480, %s260, [#allocation3], 512, 512, 32
        $region16: #{me_att_forward.1} parent=11 // pred_fallthru
          _
        // Predicated region
        $region17: #{me_att_forward.1} parent=11 // pred_check
          %p266 = pneg %p86
        $region18: #{me_att_forward.1} parent=11 // pred_check_branch
          %268 = sbr.rel (%p266) target = $region20
        $region19: #{me_att_forward.1} parent=11 // pred_region
          %s270 = ssub.s32 73728, 73728
          %271 = vsyncadd [#allocation5], %s270
          %s272 = sshll.u32 [#allocation4], 4
          %s273 = int_to_ptr.vmem [resolvable:$true] %s272
          %278 = dma.hbm_to_vmem [thread:$0]  %s2, 73728, %s273, [#allocation5], 512, 512, 32
        $region20: #{me_att_forward.1} parent=11 // pred_fallthru
          _
        // Predicated region
        $region21: #{me_att_forward.1} parent=11 // pred_check
          %p279 = pneg %p107
        $region22: #{me_att_forward.1} parent=11 // pred_check_branch
          %281 = sbr.rel (%p279) target = $region24
        $region23: #{me_att_forward.1} parent=11 // pred_region
          %s283 = ssub.s32 2816, 2816
          %284 = vsyncadd [#allocation5], %s283
          %s285 = sshll.u32 [#allocation6], 4
          %s286 = int_to_ptr.vmem [resolvable:$true] %s285
          %291 = dma.hbm_to_vmem [thread:$0]  %s3, 2816, %s286, [#allocation5], 128, 128, 8
        $region24: #{me_att_forward.1} parent=11 // pred_fallthru
          _
        // Predicated region
        $region25: #{me_att_forward.1} parent=11 // pred_check
          %p292 = pneg %p128
        $region26: #{me_att_forward.1} parent=11 // pred_check_branch
          %294 = sbr.rel (%p292) target = $region28
        $region27: #{me_att_forward.1} parent=11 // pred_region
          _
        $region28: #{me_att_forward.1} parent=11 // pred_fallthru
          _
        // Predicated region
        $region29: #{me_att_forward.1} parent=11 // pred_check
          %p295 = pneg %p149
        $region30: #{me_att_forward.1} parent=11 // pred_check_branch
          %297 = sbr.rel (%p295) target = $region32
        $region31: #{me_att_forward.1} parent=11 // pred_region
          %s299 = ssub.s32 256, 256
          %300 = vsyncadd [#allocation8], %s299
          %s301 = sshll.u32 [#allocation7], 4
          %s302 = int_to_ptr.vmem [resolvable:$true] %s301
          %307 = dma.hbm_to_vmem [thread:$0]  %s5, 256, %s302, [#allocation8], 128, 128, 8
        $region32: #{me_att_forward.1} parent=11 // pred_fallthru
          _
        // Predicated region
        $region33: #{me_att_forward.1} parent=11 // pred_check
          %p308 = pneg %p170
        $region34: #{me_att_forward.1} parent=11 // pred_check_branch
          %310 = sbr.rel (%p308) target = $region36
        $region35: #{me_att_forward.1} parent=11 // pred_region
          _
        $region36: #{me_att_forward.1} parent=11 // pred_fallthru
          _
        // Predicated region
        $region37: #{me_att_forward.1} parent=11 // pred_check
          %p311 = pneg %p191
        $region38: #{me_att_forward.1} parent=11 // pred_check_branch
          %313 = sbr.rel (%p311) target = $region40
        $region39: #{me_att_forward.1} parent=11 // pred_region
          _
        $region40: #{me_att_forward.1} parent=11 // pred_fallthru
          _
        // Predicated region
        $region41: #{me_att_forward.1} parent=11 // pred_check
          %p314 = pneg %p212
        $region42: #{me_att_forward.1} parent=11 // pred_check_branch
          %316 = sbr.rel (%p314) target = $region44
        $region43: #{me_att_forward.1} parent=11 // pred_region
          %s318 = ssub.s32 128, 128
          %319 = vsyncadd [#allocation8], %s318
          %s321 = sshll.u32 [#allocation9], 4
          %s322 = int_to_ptr.vmem [resolvable:$true] %s321
          %324 = dma.hbm_to_vmem [thread:$0]  %s8, 128, %s322, [#allocation8]
        $region44: #{me_att_forward.1} parent=11 // pred_fallthru
          _
      $region12: #{me_att_forward.1} parent=5 // pred_fallthru
        _
      %p325 = scmp.lt.s32.totalorder %s18, 2
      // Predicated region
      $region45: #{me_att_forward.1} parent=5 // pred_check
        %p326 = pneg %p325
      $region46: #{me_att_forward.1} parent=5 // pred_check_branch
        %328 = sbr.rel (%p326) target = $region48
      $region47: #{me_att_forward.1} parent=5 // pred_region
        // Predicated region
        $region49: #{me_att_forward.1} parent=47 // pred_check
          %p329 = pneg %p38
        $region50: #{me_att_forward.1} parent=47 // pred_check_branch
          %331 = sbr.rel (%p329) target = $region52
        $region51: #{me_att_forward.1} parent=47 // pred_region
          %p332 = scmp.lt.s32.totalorder %s18, 1
          %s333 = scalar_select %p332, %s18, 1
          %s334 = smul.addr %s333, 8
          %s335 = smul.addr %s334, 8
          %s336 = scalar_lea.vmem %s0, %s335
        $region52: #{me_att_forward.1} parent=47 // pred_fallthru
          _
      $region48: #{me_att_forward.1} parent=5 // pred_fallthru
        _
      %p337 = scmp.le.s32.totalorder 1, %s18
      %p338 = scmp.lt.s32.totalorder %s18, 3
      %p339 = pnand %p337, %p338
      %p340 = pneg %p339
      // Predicated region
      $region53: #{me_att_forward.1} parent=5 // pred_check
        _
      $region54: #{me_att_forward.1} parent=5 // pred_check_branch
        %342 = sbr.rel (%p339) target = $region56
      $region55: #{me_att_forward.1} parent=5 // pred_region
        %s343 = ssub.s32 %s18, 1
        // Predicated region
        $region57: #{me_att_forward.1} parent=55 // pred_check
          %p344 = pneg %p65
        $region58: #{me_att_forward.1} parent=55 // pred_check_branch
          %346 = sbr.rel (%p344) target = $region60
        $region59: #{me_att_forward.1} parent=55 // pred_region
          %347 = dma.done [#allocation3], 20480
        $region60: #{me_att_forward.1} parent=55 // pred_fallthru
          _
        // Predicated region
        $region61: #{me_att_forward.1} parent=55 // pred_check
          %p348 = pneg %p86
        $region62: #{me_att_forward.1} parent=55 // pred_check_branch
          %350 = sbr.rel (%p348) target = $region64
        $region63: #{me_att_forward.1} parent=55 // pred_region
          %351 = dma.done [#allocation5], 73728
        $region64: #{me_att_forward.1} parent=55 // pred_fallthru
          _
        // Predicated region
        $region65: #{me_att_forward.1} parent=55 // pred_check
          %p352 = pneg %p107
        $region66: #{me_att_forward.1} parent=55 // pred_check_branch
          %354 = sbr.rel (%p352) target = $region68
        $region67: #{me_att_forward.1} parent=55 // pred_region
          %355 = dma.done [#allocation5], 2816
        $region68: #{me_att_forward.1} parent=55 // pred_fallthru
          _
        // Predicated region
        $region69: #{me_att_forward.1} parent=55 // pred_check
          %p356 = pneg %p149
        $region70: #{me_att_forward.1} parent=55 // pred_check_branch
          %358 = sbr.rel (%p356) target = $region72
        $region71: #{me_att_forward.1} parent=55 // pred_region
          %359 = dma.done [#allocation8], 256
        $region72: #{me_att_forward.1} parent=55 // pred_fallthru
          _
        // Predicated region
        $region73: #{me_att_forward.1} parent=55 // pred_check
          %p360 = pneg %p212
        $region74: #{me_att_forward.1} parent=55 // pred_check_branch
          %362 = sbr.rel (%p360) target = $region76
        $region75: #{me_att_forward.1} parent=55 // pred_region
          %363 = dma.done [#allocation8], 128
        $region76: #{me_att_forward.1} parent=55 // pred_fallthru
          _
        %p364 = scmp.lt.s32.totalorder %s23, 1
        %s365 = scalar_select %p364, %s23, 1
        %s366 = smul.addr %s365, 8
        %s367 = smul.addr %s366, 8
        %s368 = scalar_lea.vmem %s0, %s367
        %p369 = pneg %p44
        %p370 = pneg %p41
        %p371 = pneg %p65
        %p372 = pneg %p62
        %p373 = pneg %p86
        %p374 = pneg %p83
        %p375 = pneg %p107
        %p376 = pneg %p104
        %p377 = pneg %p128
        %p378 = pneg %p125
        %p379 = pneg %p149
        %p380 = pneg %p146
        %p381 = pneg %p170
        %p382 = pneg %p167
        %p383 = pneg %p191
        %p384 = pneg %p188
        %p385 = pneg %p212
        %p386 = pneg %p209
        %p387 = pneg %p238
        %p388 = pneg %p235
        %p389 = scmp.lt.s32.totalorder %s23, 1
        %s390 = scalar_select %p389, %s23, 1
        %s391 = smul.addr %s390, 8
        %s392 = smul.addr %s391, 8
        %s393 = scalar_lea.vmem %s9, %s392
        %p394 = scmp.lt.s32.totalorder %s23, 1
        %s395 = scalar_select %p394, %s23, 1
        %s396 = smul.addr %s395, 8
        %s397 = smul.addr %s396, 8
        %s398 = scalar_lea.vmem %s0, %s397
        %p399 = scmp.lt.s32.totalorder %s23, 1
        %s400 = scalar_select %p399, %s23, 1
        %s401 = smul.addr %s400, 8
        %s402 = smul.addr %s401, 8
        %s403 = scalar_lea.vmem %s9, %s402
        %v404 = vld [vmem:[%s398] sm:$0xff]
        %v405 = vld [vmem:[%s398 + $0x8] sm:$0xff]
        %v406 = vld [vmem:[%s398 + $0x10] sm:$0xff]
        %v407 = vld [vmem:[%s398 + $0x18] sm:$0xff]
        %v408 = vld [vmem:[%s398 + $0x20] sm:$0xff]
        %v409 = vld [vmem:[%s398 + $0x28] sm:$0xff]
        %v410 = vld [vmem:[%s398 + $0x30] sm:$0xff]
        %v411 = vld [vmem:[%s398 + $0x38] sm:$0xff]
        %v412 = vld [vmem:[#allocation2] sm:$0xff]
        %v413 = vld [vmem:[#allocation2 + $0x8] sm:$0xff]
        %v414 = vld [vmem:[#allocation2 + $0x10] sm:$0xff]
        %v415 = vld [vmem:[#allocation2 + $0x18] sm:$0xff]
        %v416 = vld [vmem:[#allocation2 + $0x20] sm:$0xff]
        %v417 = vld [vmem:[#allocation2 + $0x28] sm:$0xff]
        %v418 = vld [vmem:[#allocation2 + $0x30] sm:$0xff]
        %v419 = vld [vmem:[#allocation2 + $0x38] sm:$0xff]
        %v420 = vmul.f32 %v404, %v412
        %v421 = vmul.f32 %v405, %v413
        %v422 = vmul.f32 %v406, %v414
        %v423 = vmul.f32 %v407, %v415
        %v424 = vmul.f32 %v408, %v416
        %v425 = vmul.f32 %v409, %v417
        %v426 = vmul.f32 %v410, %v418
        %v427 = vmul.f32 %v411, %v419
        %s428 = scalar_lea.vmem [#allocation2], 64
        %v429 = vld [vmem:[%s428] sm:$0xff]
        %v430 = vld [vmem:[%s428 + $0x8] sm:$0xff]
        %v431 = vld [vmem:[%s428 + $0x10] sm:$0xff]
        %v432 = vld [vmem:[%s428 + $0x18] sm:$0xff]
        %v433 = vld [vmem:[%s428 + $0x20] sm:$0xff]
        %v434 = vld [vmem:[%s428 + $0x28] sm:$0xff]
        %v435 = vld [vmem:[%s428 + $0x30] sm:$0xff]
        %v436 = vld [vmem:[%s428 + $0x38] sm:$0xff]
        %v437 = vadd.f32 %v420, %v429
        %v438 = vadd.f32 %v421, %v430
        %v439 = vadd.f32 %v422, %v431
        %v440 = vadd.f32 %v423, %v432
        %v441 = vadd.f32 %v424, %v433
        %v442 = vadd.f32 %v425, %v434
        %v443 = vadd.f32 %v426, %v435
        %v444 = vadd.f32 %v427, %v436
        %v445 = vxor.u32 %v437, 2147483648
        %v446 = vxor.u32 %v438, 2147483648
        %v447 = vxor.u32 %v439, 2147483648
        %v448 = vxor.u32 %v440, 2147483648
        %v449 = vxor.u32 %v441, 2147483648
        %v450 = vxor.u32 %v442, 2147483648
        %v451 = vxor.u32 %v443, 2147483648
        %v452 = vxor.u32 %v444, 2147483648
        %v453 = vmul.f32 %v445, 1.442695
        %v454 = vpow.pop %v453
        %v455 = vmul.f32 %v446, 1.442695
        %v456 = vpow.pop %v455
        %v457 = vmul.f32 %v447, 1.442695
        %v458 = vpow.pop %v457
        %v459 = vmul.f32 %v448, 1.442695
        %v460 = vpow.pop %v459
        %v461 = vmul.f32 %v449, 1.442695
        %v462 = vpow.pop %v461
        %v463 = vmul.f32 %v450, 1.442695
        %v464 = vpow.pop %v463
        %v465 = vmul.f32 %v451, 1.442695
        %v466 = vpow.pop %v465
        %v467 = vmul.f32 %v452, 1.442695
        %v468 = vpow.pop %v467
        %v469 = vadd.f32 %v454, 1.0
        %v470 = vadd.f32 %v456, 1.0
        %v471 = vadd.f32 %v458, 1.0
        %v472 = vadd.f32 %v460, 1.0
        %v473 = vadd.f32 %v462, 1.0
        %v474 = vadd.f32 %v464, 1.0
        %v475 = vadd.f32 %v466, 1.0
        %v476 = vadd.f32 %v468, 1.0
        %v477 = vrcp.pop %v469
        %v478 = vmul.f32 1.0, %v477
        %v479 = vrcp.pop %v470
        %v480 = vmul.f32 1.0, %v479
        %v481 = vrcp.pop %v471
        %v482 = vmul.f32 1.0, %v481
        %v483 = vrcp.pop %v472
        %v484 = vmul.f32 1.0, %v483
        %v485 = vrcp.pop %v473
        %v486 = vmul.f32 1.0, %v485
        %v487 = vrcp.pop %v474
        %v488 = vmul.f32 1.0, %v487
        %v489 = vrcp.pop %v475
        %v490 = vmul.f32 1.0, %v489
        %v491 = vrcp.pop %v476
        %v492 = vmul.f32 1.0, %v491
        %v493 = vmul.f32 %v437, %v478
        %v494 = vmul.f32 %v438, %v480
        %v495 = vmul.f32 %v439, %v482
        %v496 = vmul.f32 %v440, %v484
        %v497 = vmul.f32 %v441, %v486
        %v498 = vmul.f32 %v442, %v488
        %v499 = vmul.f32 %v443, %v490
        %v500 = vmul.f32 %v444, %v492
        %v501 = vld [vmem:[#allocation6] sm:$0xff]
        %v502 = vld [vmem:[#allocation6 + $0x8] sm:$0xff]
        %vm503 = vcmask 130048
        %v505 = vsel %vm503, %v501, 0
        %v508 = vsel %vm503, %v502, 0
        %510 = vmatprep.subr.mxu0 %v494
        %511 = vmatpush1.msra.mxu0 %v493
        %512 = vmatprep.subr.mxu0 %v498
        %513 = vmatpush1.msra.mxu0 %v497
        %514 = vmatprep.subr.mxu0 0.0
        %515 = vmatpush1.msra.mxu0 0.0
        %516 = vmatprep.subr.mxu0 0.0
        %517 = vmatpush1.msra.mxu0 0.0
        %518 = vmatprep.subr.mxu0 0.0
        %519 = vmatpush1.msra.mxu0 0.0
        %520 = vmatprep.subr.mxu0 0.0
        %521 = vmatpush1.msra.mxu0 0.0
        %522 = vmatprep.subr.mxu0 0.0
        %523 = vmatpush1.msra.mxu0 0.0
        %524 = vmatprep.subr.mxu0 0.0
        %525 = vmatpush1.msra.mxu0 0.0
        %526 = vmatprep.subr.mxu0 0.0
        %527 = vmatpush1.msra.mxu0 0.0
        %528 = vmatprep.subr.mxu0 0.0
        %529 = vmatpush1.msra.mxu0 0.0
        %530 = vmatprep.subr.mxu0 0.0
        %531 = vmatpush1.msra.mxu0 0.0
        %532 = vmatprep.subr.mxu0 0.0
        %533 = vmatpush1.msra.mxu0 0.0
        %534 = vmatprep.subr.mxu0 0.0
        %535 = vmatpush1.msra.mxu0 0.0
        %536 = vmatprep.subr.mxu0 0.0
        %537 = vmatpush1.msra.mxu0 0.0
        %538 = vmatprep.subr.mxu0 0.0
        %539 = vmatpush1.msra.mxu0 0.0
        %540 = vmatprep.subr.mxu0 0.0
        %541 = vmatpush1.msra.mxu0 0.0
        %542 = vmatprep.subr.mxu0 0.0
        %543 = vmatpush1.msra.mxu0 0.0
        %544 = vmatprep.subr.mxu0 0.0
        %545 = vmatpush1.msra.mxu0 0.0
        %546 = vmatprep.subr.mxu0 0.0
        %547 = vmatpush1.msra.mxu0 0.0
        %548 = vmatprep.subr.mxu0 0.0
        %549 = vmatpush1.msra.mxu0 0.0
        %550 = vmatprep.subr.mxu0 0.0
        %551 = vmatpush1.msra.mxu0 0.0
        %552 = vmatprep.subr.mxu0 0.0
        %553 = vmatpush1.msra.mxu0 0.0
        %554 = vmatprep.subr.mxu0 0.0
        %555 = vmatpush1.msra.mxu0 0.0
        %556 = vmatprep.subr.mxu0 0.0
        %557 = vmatpush1.msra.mxu0 0.0
        %558 = vmatprep.subr.mxu0 0.0
        %559 = vmatpush1.msra.mxu0 0.0
        %560 = vmatprep.subr.mxu0 0.0
        %561 = vmatpush1.msra.mxu0 0.0
        %562 = vmatprep.subr.mxu0 0.0
        %563 = vmatpush1.msra.mxu0 0.0
        %564 = vmatprep.subr.mxu0 0.0
        %565 = vmatpush1.msra.mxu0 0.0
        %566 = vmatprep.subr.mxu0 0.0
        %567 = vmatpush1.msra.mxu0 0.0
        %568 = vmatprep.subr.mxu0 0.0
        %569 = vmatpush1.msra.mxu0 0.0
        %570 = vmatprep.subr.mxu0 0.0
        %571 = vmatpush1.msra.mxu0 0.0
        %572 = vmatprep.subr.mxu0 0.0
        %573 = vmatpush1.msra.mxu0 0.0
        %574 = vmatprep.mubr.f32.mxu0 0.0
        %575 = vmatmul.mubr.f32.gmra.mrb[0].mxu0 %v505
        %v576 = vpop.f32.mrb[0].mxu0
        %v577 = vadd.f32 0.0, %v576
        %v578 = vpop.f32.mrb[0].mxu0
        %v579 = vadd.f32 0.0, %v578
        %580 = vmatprep.mubr.f32.mxu0 0.0
        %581 = vmatmul.mubr.f32.gmra.mrb[0].mxu0 %v508
        %v582 = vpop.f32.mrb[0].mxu0
        %v583 = vadd.f32 0.0, %v582
        %v584 = vpop.f32.mrb[0].mxu0
        %v585 = vadd.f32 0.0, %v584
        %586 = vdwg.mxu0
        %587 = vmatprep.subr.mxu0 %v496
        %588 = vmatpush1.msra.mxu0 %v495
        %589 = vmatprep.subr.mxu0 %v500
        %590 = vmatpush1.msra.mxu0 %v499
        %591 = vmatprep.subr.mxu0 0.0
        %592 = vmatpush1.msra.mxu0 0.0
        %593 = vmatprep.subr.mxu0 0.0
        %594 = vmatpush1.msra.mxu0 0.0
        %595 = vmatprep.subr.mxu0 0.0
        %596 = vmatpush1.msra.mxu0 0.0
        %597 = vmatprep.subr.mxu0 0.0
        %598 = vmatpush1.msra.mxu0 0.0
        %599 = vmatprep.subr.mxu0 0.0
        %600 = vmatpush1.msra.mxu0 0.0
        %601 = vmatprep.subr.mxu0 0.0
        %602 = vmatpush1.msra.mxu0 0.0
        %603 = vmatprep.subr.mxu0 0.0
        %604 = vmatpush1.msra.mxu0 0.0
        %605 = vmatprep.subr.mxu0 0.0
        %606 = vmatpush1.msra.mxu0 0.0
        %607 = vmatprep.subr.mxu0 0.0
        %608 = vmatpush1.msra.mxu0 0.0
        %609 = vmatprep.subr.mxu0 0.0
        %610 = vmatpush1.msra.mxu0 0.0
        %611 = vmatprep.subr.mxu0 0.0
        %612 = vmatpush1.msra.mxu0 0.0
        %613 = vmatprep.subr.mxu0 0.0
        %614 = vmatpush1.msra.mxu0 0.0
        %615 = vmatprep.subr.mxu0 0.0
        %616 = vmatpush1.msra.mxu0 0.0
        %617 = vmatprep.subr.mxu0 0.0
        %618 = vmatpush1.msra.mxu0 0.0
        %619 = vmatprep.subr.mxu0 0.0
        %620 = vmatpush1.msra.mxu0 0.0
        %621 = vmatprep.subr.mxu0 0.0
        %622 = vmatpush1.msra.mxu0 0.0
        %623 = vmatprep.subr.mxu0 0.0
        %624 = vmatpush1.msra.mxu0 0.0
        %625 = vmatprep.subr.mxu0 0.0
        %626 = vmatpush1.msra.mxu0 0.0
        %627 = vmatprep.subr.mxu0 0.0
        %628 = vmatpush1.msra.mxu0 0.0
        %629 = vmatprep.subr.mxu0 0.0
        %630 = vmatpush1.msra.mxu0 0.0
        %631 = vmatprep.subr.mxu0 0.0
        %632 = vmatpush1.msra.mxu0 0.0
        %633 = vmatprep.subr.mxu0 0.0
        %634 = vmatpush1.msra.mxu0 0.0
        %635 = vmatprep.subr.mxu0 0.0
        %636 = vmatpush1.msra.mxu0 0.0
        %637 = vmatprep.subr.mxu0 0.0
        %638 = vmatpush1.msra.mxu0 0.0
        %639 = vmatprep.subr.mxu0 0.0
        %640 = vmatpush1.msra.mxu0 0.0
        %641 = vmatprep.subr.mxu0 0.0
        %642 = vmatpush1.msra.mxu0 0.0
        %643 = vmatprep.subr.mxu0 0.0
        %644 = vmatpush1.msra.mxu0 0.0
        %645 = vmatprep.subr.mxu0 0.0
        %646 = vmatpush1.msra.mxu0 0.0
        %647 = vmatprep.subr.mxu0 0.0
        %648 = vmatpush1.msra.mxu0 0.0
        %649 = vmatprep.subr.mxu0 0.0
        %650 = vmatpush1.msra.mxu0 0.0
        %651 = vmatprep.mubr.f32.mxu0 0.0
        %652 = vmatmul.mubr.f32.gmra.mrb[0].mxu0 %v505
        %v653 = vpop.f32.mrb[0].mxu0
        %v654 = vadd.f32 0.0, %v653
        %v655 = vpop.f32.mrb[0].mxu0
        %v656 = vadd.f32 0.0, %v655
        %657 = vmatprep.mubr.f32.mxu0 0.0
        %658 = vmatmul.mubr.f32.gmra.mrb[0].mxu0 %v508
        %v659 = vpop.f32.mrb[0].mxu0
        %v660 = vadd.f32 0.0, %v659
        %v661 = vpop.f32.mrb[0].mxu0
        %v662 = vadd.f32 0.0, %v661
        %663 = vdwg.mxu0
        %s664 = scalar_lea.vmem [#allocation2], 256
        %v665 = vld [vmem:[%s664] sm:$0xff]
        %v666 = vld [vmem:[%s664 + $0x8] sm:$0xff]
        %v667 = vld [vmem:[%s664 + $0x10] sm:$0xff]
        %v668 = vld [vmem:[%s664 + $0x18] sm:$0xff]
        %v669 = vld [vmem:[%s664 + $0x20] sm:$0xff]
        %v670 = vld [vmem:[%s664 + $0x28] sm:$0xff]
        %v671 = vld [vmem:[%s664 + $0x30] sm:$0xff]
        %v672 = vld [vmem:[%s664 + $0x38] sm:$0xff]
        %673 = vrot.lane.b32.xlu0 %v577, 17
        %v674 = vpop.permute.xlu0 %673
        %675 = vrot.lane.b32.xlu0 %v583, 17
        %v676 = vpop.permute.xlu0 %675
        %677 = vrot.lane.b32.xlu0 %v579, 17
        %v678 = vpop.permute.xlu0 %677
        %679 = vrot.lane.b32.xlu0 %v585, 17
        %v680 = vpop.permute.xlu0 %679
        %681 = vrot.lane.b32.xlu0 %v654, 17
        %v682 = vpop.permute.xlu0 %681
        %683 = vrot.lane.b32.xlu0 %v660, 17
        %v684 = vpop.permute.xlu0 %683
        %685 = vrot.lane.b32.xlu0 %v656, 17
        %v686 = vpop.permute.xlu0 %685
        %687 = vrot.lane.b32.xlu0 %v662, 17
        %v688 = vpop.permute.xlu0 %687
        %v689 = vlaneseq
        %v690 = vand.u32 %v689, 127
        %vm691 = vcmp.lt.s32.totalorder %v690, 17
        %v692 = vsel %vm691, %v682, %v686
        %v693 = vsel %vm691, %v684, %v688
        %v694 = vsel %vm691, %v678, %v682
        %v695 = vsel %vm691, %v680, %v684
        %v696 = vsel %vm691, %v674, %v678
        %v697 = vsel %vm691, %v676, %v680
        %v698 = vsel %vm691, %v686, %v674
        %v699 = vsel %vm691, %v688, %v676
        %v700 = vld [vmem:[#allocation4] sm:$0xff]
        %v701 = vld [vmem:[#allocation4 + $0x8] sm:$0xff]
        %v702 = vld [vmem:[#allocation4 + $0x10] sm:$0xff]
        %v703 = vld [vmem:[#allocation4 + $0x18] sm:$0xff]
        %v704 = vld [vmem:[#allocation4 + $0x20] sm:$0xff]
        %v705 = vld [vmem:[#allocation4 + $0x28] sm:$0xff]
        %v706 = vld [vmem:[#allocation4 + $0x30] sm:$0xff]
        %v707 = vld [vmem:[#allocation4 + $0x38] sm:$0xff]
        %v708 = vmul.f32 %v700, %v698
        %v709 = vmul.f32 %v701, %v696
        %v710 = vmul.f32 %v702, %v694
        %v711 = vmul.f32 %v703, %v692
        %v712 = vmul.f32 %v704, %v699
        %v713 = vmul.f32 %v705, %v697
        %v714 = vmul.f32 %v706, %v695
        %v715 = vmul.f32 %v707, %v693
        %v716 = vadd.f32 %v665, %v708
        %v717 = vadd.f32 %v666, %v709
        %v718 = vadd.f32 %v667, %v710
        %v719 = vadd.f32 %v668, %v711
        %v720 = vadd.f32 %v669, %v712
        %v721 = vadd.f32 %v670, %v713
        %v722 = vadd.f32 %v671, %v714
        %v723 = vadd.f32 %v672, %v715
        %724 = vrot.lane.b32.xlu0 %v577, 16
        %v725 = vpop.permute.xlu0 %724
        %726 = vrot.lane.b32.xlu0 %v583, 16
        %v727 = vpop.permute.xlu0 %726
        %728 = vrot.lane.b32.xlu0 %v579, 16
        %v729 = vpop.permute.xlu0 %728
        %730 = vrot.lane.b32.xlu0 %v585, 16
        %v731 = vpop.permute.xlu0 %730
        %732 = vrot.lane.b32.xlu0 %v654, 16
        %v733 = vpop.permute.xlu0 %732
        %734 = vrot.lane.b32.xlu0 %v660, 16
        %v735 = vpop.permute.xlu0 %734
        %736 = vrot.lane.b32.xlu0 %v656, 16
        %v737 = vpop.permute.xlu0 %736
        %738 = vrot.lane.b32.xlu0 %v662, 16
        %v739 = vpop.permute.xlu0 %738
        %vm740 = vcmp.lt.s32.totalorder %v690, 16
        %v741 = vsel %vm740, %v733, %v737
        %v742 = vsel %vm740, %v735, %v739
        %v743 = vsel %vm740, %v729, %v733
        %v744 = vsel %vm740, %v731, %v735
        %v745 = vsel %vm740, %v725, %v729
        %v746 = vsel %vm740, %v727, %v731
        %v747 = vsel %vm740, %v737, %v725
        %v748 = vsel %vm740, %v739, %v727
        %s749 = scalar_lea.vmem [#allocation4], 64
        %v750 = vld [vmem:[%s749] sm:$0xff]
        %v751 = vld [vmem:[%s749 + $0x8] sm:$0xff]
        %v752 = vld [vmem:[%s749 + $0x10] sm:$0xff]
        %v753 = vld [vmem:[%s749 + $0x18] sm:$0xff]
        %v754 = vld [vmem:[%s749 + $0x20] sm:$0xff]
        %v755 = vld [vmem:[%s749 + $0x28] sm:$0xff]
        %v756 = vld [vmem:[%s749 + $0x30] sm:$0xff]
        %v757 = vld [vmem:[%s749 + $0x38] sm:$0xff]
        %v758 = vmul.f32 %v750, %v747
        %v759 = vmul.f32 %v751, %v745
        %v760 = vmul.f32 %v752, %v743
        %v761 = vmul.f32 %v753, %v741
        %v762 = vmul.f32 %v754, %v748
        %v763 = vmul.f32 %v755, %v746
        %v764 = vmul.f32 %v756, %v744
        %v765 = vmul.f32 %v757, %v742
        %v766 = vadd.f32 %v716, %v758
        %v767 = vadd.f32 %v717, %v759
        %v768 = vadd.f32 %v718, %v760
        %v769 = vadd.f32 %v719, %v761
        %v770 = vadd.f32 %v720, %v762
        %v771 = vadd.f32 %v721, %v763
        %v772 = vadd.f32 %v722, %v764
        %v773 = vadd.f32 %v723, %v765
        %774 = vrot.lane.b32.xlu0 %v577, 15
        %v775 = vpop.permute.xlu0 %774
        %776 = vrot.lane.b32.xlu0 %v583, 15
        %v777 = vpop.permute.xlu0 %776
        %778 = vrot.lane.b32.xlu0 %v579, 15
        %v779 = vpop.permute.xlu0 %778
        %780 = vrot.lane.b32.xlu0 %v585, 15
        %v781 = vpop.permute.xlu0 %780
        %782 = vrot.lane.b32.xlu0 %v654, 15
        %v783 = vpop.permute.xlu0 %782
        %784 = vrot.lane.b32.xlu0 %v660, 15
        %v785 = vpop.permute.xlu0 %784
        %786 = vrot.lane.b32.xlu0 %v656, 15
        %v787 = vpop.permute.xlu0 %786
        %788 = vrot.lane.b32.xlu0 %v662, 15
        %v789 = vpop.permute.xlu0 %788
        %vm790 = vcmp.lt.s32.totalorder %v690, 15
        %v791 = vsel %vm790, %v783, %v787
        %v792 = vsel %vm790, %v785, %v789
        %v793 = vsel %vm790, %v779, %v783
        %v794 = vsel %vm790, %v781, %v785
        %v795 = vsel %vm790, %v775, %v779
        %v796 = vsel %vm790, %v777, %v781
        %v797 = vsel %vm790, %v787, %v775
        %v798 = vsel %vm790, %v789, %v777
        %s799 = scalar_lea.vmem [#allocation4], 128
        %v800 = vld [vmem:[%s799] sm:$0xff]
        %v801 = vld [vmem:[%s799 + $0x8] sm:$0xff]
        %v802 = vld [vmem:[%s799 + $0x10] sm:$0xff]
        %v803 = vld [vmem:[%s799 + $0x18] sm:$0xff]
        %v804 = vld [vmem:[%s799 + $0x20] sm:$0xff]
        %v805 = vld [vmem:[%s799 + $0x28] sm:$0xff]
        %v806 = vld [vmem:[%s799 + $0x30] sm:$0xff]
        %v807 = vld [vmem:[%s799 + $0x38] sm:$0xff]
        %v808 = vmul.f32 %v800, %v797
        %v809 = vmul.f32 %v801, %v795
        %v810 = vmul.f32 %v802, %v793
        %v811 = vmul.f32 %v803, %v791
        %v812 = vmul.f32 %v804, %v798
        %v813 = vmul.f32 %v805, %v796
        %v814 = vmul.f32 %v806, %v794
        %v815 = vmul.f32 %v807, %v792
        %v816 = vadd.f32 %v766, %v808
        %v817 = vadd.f32 %v767, %v809
        %v818 = vadd.f32 %v768, %v810
        %v819 = vadd.f32 %v769, %v811
        %v820 = vadd.f32 %v770, %v812
        %v821 = vadd.f32 %v771, %v813
        %v822 = vadd.f32 %v772, %v814
        %v823 = vadd.f32 %v773, %v815
        %824 = vrot.lane.b32.xlu0 %v577, 1
        %v825 = vpop.permute.xlu0 %824
        %826 = vrot.lane.b32.xlu0 %v583, 1
        %v827 = vpop.permute.xlu0 %826
        %828 = vrot.lane.b32.xlu0 %v579, 1
        %v829 = vpop.permute.xlu0 %828
        %830 = vrot.lane.b32.xlu0 %v585, 1
        %v831 = vpop.permute.xlu0 %830
        %832 = vrot.lane.b32.xlu0 %v654, 1
        %v833 = vpop.permute.xlu0 %832
        %834 = vrot.lane.b32.xlu0 %v660, 1
        %v835 = vpop.permute.xlu0 %834
        %836 = vrot.lane.b32.xlu0 %v656, 1
        %v837 = vpop.permute.xlu0 %836
        %838 = vrot.lane.b32.xlu0 %v662, 1
        %v839 = vpop.permute.xlu0 %838
        %vm840 = vcmp.lt.s32.totalorder %v690, 1
        %v841 = vsel %vm840, %v833, %v837
        %v842 = vsel %vm840, %v835, %v839
        %v843 = vsel %vm840, %v829, %v833
        %v844 = vsel %vm840, %v831, %v835
        %v845 = vsel %vm840, %v825, %v829
        %v846 = vsel %vm840, %v827, %v831
        %v847 = vsel %vm840, %v837, %v825
        %v848 = vsel %vm840, %v839, %v827
        %s849 = scalar_lea.vmem [#allocation4], 192
        %v850 = vld [vmem:[%s849] sm:$0xff]
        %v851 = vld [vmem:[%s849 + $0x8] sm:$0xff]
        %v852 = vld [vmem:[%s849 + $0x10] sm:$0xff]
        %v853 = vld [vmem:[%s849 + $0x18] sm:$0xff]
        %v854 = vld [vmem:[%s849 + $0x20] sm:$0xff]
        %v855 = vld [vmem:[%s849 + $0x28] sm:$0xff]
        %v856 = vld [vmem:[%s849 + $0x30] sm:$0xff]
        %v857 = vld [vmem:[%s849 + $0x38] sm:$0xff]
        %v858 = vmul.f32 %v850, %v847
        %v859 = vmul.f32 %v851, %v845
        %v860 = vmul.f32 %v852, %v843
        %v861 = vmul.f32 %v853, %v841
        %v862 = vmul.f32 %v854, %v848
        %v863 = vmul.f32 %v855, %v846
        %v864 = vmul.f32 %v856, %v844
        %v865 = vmul.f32 %v857, %v842
        %v866 = vadd.f32 %v816, %v858
        %v867 = vadd.f32 %v817, %v859
        %v868 = vadd.f32 %v818, %v860
        %v869 = vadd.f32 %v819, %v861
        %v870 = vadd.f32 %v820, %v862
        %v871 = vadd.f32 %v821, %v863
        %v872 = vadd.f32 %v822, %v864
        %v873 = vadd.f32 %v823, %v865
        %s874 = scalar_lea.vmem [#allocation4], 256
        %v875 = vld [vmem:[%s874] sm:$0xff]
        %v876 = vld [vmem:[%s874 + $0x8] sm:$0xff]
        %v877 = vld [vmem:[%s874 + $0x10] sm:$0xff]
        %v878 = vld [vmem:[%s874 + $0x18] sm:$0xff]
        %v879 = vld [vmem:[%s874 + $0x20] sm:$0xff]
        %v880 = vld [vmem:[%s874 + $0x28] sm:$0xff]
        %v881 = vld [vmem:[%s874 + $0x30] sm:$0xff]
        %v882 = vld [vmem:[%s874 + $0x38] sm:$0xff]
        %v883 = vmul.f32 %v875, %v577
        %v884 = vmul.f32 %v876, %v579
        %v885 = vmul.f32 %v877, %v654
        %v886 = vmul.f32 %v878, %v656
        %v887 = vmul.f32 %v879, %v583
        %v888 = vmul.f32 %v880, %v585
        %v889 = vmul.f32 %v881, %v660
        %v890 = vmul.f32 %v882, %v662
        %v891 = vadd.f32 %v866, %v883
        %v892 = vadd.f32 %v867, %v884
        %v893 = vadd.f32 %v868, %v885
        %v894 = vadd.f32 %v869, %v886
        %v895 = vadd.f32 %v870, %v887
        %v896 = vadd.f32 %v871, %v888
        %v897 = vadd.f32 %v872, %v889
        %v898 = vadd.f32 %v873, %v890
        %899 = vrot.lane.b32.xlu0 %v577, 127
        %v900 = vpop.permute.xlu0 %899
        %901 = vrot.lane.b32.xlu0 %v583, 127
        %v902 = vpop.permute.xlu0 %901
        %903 = vrot.lane.b32.xlu0 %v579, 127
        %v904 = vpop.permute.xlu0 %903
        %905 = vrot.lane.b32.xlu0 %v585, 127
        %v906 = vpop.permute.xlu0 %905
        %907 = vrot.lane.b32.xlu0 %v654, 127
        %v908 = vpop.permute.xlu0 %907
        %909 = vrot.lane.b32.xlu0 %v660, 127
        %v910 = vpop.permute.xlu0 %909
        %911 = vrot.lane.b32.xlu0 %v656, 127
        %v912 = vpop.permute.xlu0 %911
        %913 = vrot.lane.b32.xlu0 %v662, 127
        %v914 = vpop.permute.xlu0 %913
        %vm915 = vcmp.lt.s32.totalorder %v690, 127
        %v916 = vsel %vm915, %v908, %v912
        %v917 = vsel %vm915, %v910, %v914
        %v918 = vsel %vm915, %v904, %v908
        %v919 = vsel %vm915, %v906, %v910
        %v920 = vsel %vm915, %v900, %v904
        %v921 = vsel %vm915, %v902, %v906
        %v922 = vsel %vm915, %v912, %v900
        %v923 = vsel %vm915, %v914, %v902
        %s924 = scalar_lea.vmem [#allocation4], 320
        %v925 = vld [vmem:[%s924] sm:$0xff]
        %v926 = vld [vmem:[%s924 + $0x8] sm:$0xff]
        %v927 = vld [vmem:[%s924 + $0x10] sm:$0xff]
        %v928 = vld [vmem:[%s924 + $0x18] sm:$0xff]
        %v929 = vld [vmem:[%s924 + $0x20] sm:$0xff]
        %v930 = vld [vmem:[%s924 + $0x28] sm:$0xff]
        %v931 = vld [vmem:[%s924 + $0x30] sm:$0xff]
        %v932 = vld [vmem:[%s924 + $0x38] sm:$0xff]
        %v933 = vmul.f32 %v925, %v920
        %v934 = vmul.f32 %v926, %v918
        %v935 = vmul.f32 %v927, %v916
        %v936 = vmul.f32 %v928, %v922
        %v937 = vmul.f32 %v929, %v921
        %v938 = vmul.f32 %v930, %v919
        %v939 = vmul.f32 %v931, %v917
        %v940 = vmul.f32 %v932, %v923
        %v941 = vadd.f32 %v891, %v933
        %v942 = vadd.f32 %v892, %v934
        %v943 = vadd.f32 %v893, %v935
        %v944 = vadd.f32 %v894, %v936
        %v945 = vadd.f32 %v895, %v937
        %v946 = vadd.f32 %v896, %v938
        %v947 = vadd.f32 %v897, %v939
        %v948 = vadd.f32 %v898, %v940
        %949 = vrot.lane.b32.xlu0 %v577, 113
        %v950 = vpop.permute.xlu0 %949
        %951 = vrot.lane.b32.xlu0 %v583, 113
        %v952 = vpop.permute.xlu0 %951
        %953 = vrot.lane.b32.xlu0 %v579, 113
        %v954 = vpop.permute.xlu0 %953
        %955 = vrot.lane.b32.xlu0 %v585, 113
        %v956 = vpop.permute.xlu0 %955
        %957 = vrot.lane.b32.xlu0 %v654, 113
        %v958 = vpop.permute.xlu0 %957
        %959 = vrot.lane.b32.xlu0 %v660, 113
        %v960 = vpop.permute.xlu0 %959
        %961 = vrot.lane.b32.xlu0 %v656, 113
        %v962 = vpop.permute.xlu0 %961
        %963 = vrot.lane.b32.xlu0 %v662, 113
        %v964 = vpop.permute.xlu0 %963
        %vm965 = vcmp.lt.s32.totalorder %v690, 113
        %v966 = vsel %vm965, %v958, %v962
        %v967 = vsel %vm965, %v960, %v964
        %v968 = vsel %vm965, %v954, %v958
        %v969 = vsel %vm965, %v956, %v960
        %v970 = vsel %vm965, %v950, %v954
        %v971 = vsel %vm965, %v952, %v956
        %v972 = vsel %vm965, %v962, %v950
        %v973 = vsel %vm965, %v964, %v952
        %s974 = scalar_lea.vmem [#allocation4], 384
        %v975 = vld [vmem:[%s974] sm:$0xff]
        %v976 = vld [vmem:[%s974 + $0x8] sm:$0xff]
        %v977 = vld [vmem:[%s974 + $0x10] sm:$0xff]
        %v978 = vld [vmem:[%s974 + $0x18] sm:$0xff]
        %v979 = vld [vmem:[%s974 + $0x20] sm:$0xff]
        %v980 = vld [vmem:[%s974 + $0x28] sm:$0xff]
        %v981 = vld [vmem:[%s974 + $0x30] sm:$0xff]
        %v982 = vld [vmem:[%s974 + $0x38] sm:$0xff]
        %v983 = vmul.f32 %v975, %v970
        %v984 = vmul.f32 %v976, %v968
        %v985 = vmul.f32 %v977, %v966
        %v986 = vmul.f32 %v978, %v972
        %v987 = vmul.f32 %v979, %v971
        %v988 = vmul.f32 %v980, %v969
        %v989 = vmul.f32 %v981, %v967
        %v990 = vmul.f32 %v982, %v973
        %v991 = vadd.f32 %v941, %v983
        %v992 = vadd.f32 %v942, %v984
        %v993 = vadd.f32 %v943, %v985
        %v994 = vadd.f32 %v944, %v986
        %v995 = vadd.f32 %v945, %v987
        %v996 = vadd.f32 %v946, %v988
        %v997 = vadd.f32 %v947, %v989
        %v998 = vadd.f32 %v948, %v990
        %999 = vrot.lane.b32.xlu0 %v577, 112
        %v1000 = vpop.permute.xlu0 %999
        %1001 = vrot.lane.b32.xlu0 %v583, 112
        %v1002 = vpop.permute.xlu0 %1001
        %1003 = vrot.lane.b32.xlu0 %v579, 112
        %v1004 = vpop.permute.xlu0 %1003
        %1005 = vrot.lane.b32.xlu0 %v585, 112
        %v1006 = vpop.permute.xlu0 %1005
        %1007 = vrot.lane.b32.xlu0 %v654, 112
        %v1008 = vpop.permute.xlu0 %1007
        %1009 = vrot.lane.b32.xlu0 %v660, 112
        %v1010 = vpop.permute.xlu0 %1009
        %1011 = vrot.lane.b32.xlu0 %v656, 112
        %v1012 = vpop.permute.xlu0 %1011
        %1013 = vrot.lane.b32.xlu0 %v662, 112
        %v1014 = vpop.permute.xlu0 %1013
        %vm1015 = vcmp.lt.s32.totalorder %v690, 112
        %v1016 = vsel %vm1015, %v1008, %v1012
        %v1017 = vsel %vm1015, %v1010, %v1014
        %v1018 = vsel %vm1015, %v1004, %v1008
        %v1019 = vsel %vm1015, %v1006, %v1010
        %v1020 = vsel %vm1015, %v1000, %v1004
        %v1021 = vsel %vm1015, %v1002, %v1006
        %v1022 = vsel %vm1015, %v1012, %v1000
        %v1023 = vsel %vm1015, %v1014, %v1002
        %s1024 = scalar_lea.vmem [#allocation4], 448
        %v1025 = vld [vmem:[%s1024] sm:$0xff]
        %v1026 = vld [vmem:[%s1024 + $0x8] sm:$0xff]
        %v1027 = vld [vmem:[%s1024 + $0x10] sm:$0xff]
        %v1028 = vld [vmem:[%s1024 + $0x18] sm:$0xff]
        %v1029 = vld [vmem:[%s1024 + $0x20] sm:$0xff]
        %v1030 = vld [vmem:[%s1024 + $0x28] sm:$0xff]
        %v1031 = vld [vmem:[%s1024 + $0x30] sm:$0xff]
        %v1032 = vld [vmem:[%s1024 + $0x38] sm:$0xff]
        %v1033 = vmul.f32 %v1025, %v1020
        %v1034 = vmul.f32 %v1026, %v1018
        %v1035 = vmul.f32 %v1027, %v1016
        %v1036 = vmul.f32 %v1028, %v1022
        %v1037 = vmul.f32 %v1029, %v1021
        %v1038 = vmul.f32 %v1030, %v1019
        %v1039 = vmul.f32 %v1031, %v1017
        %v1040 = vmul.f32 %v1032, %v1023
        %v1041 = vadd.f32 %v991, %v1033
        %v1042 = vadd.f32 %v992, %v1034
        %v1043 = vadd.f32 %v993, %v1035
        %v1044 = vadd.f32 %v994, %v1036
        %v1045 = vadd.f32 %v995, %v1037
        %v1046 = vadd.f32 %v996, %v1038
        %v1047 = vadd.f32 %v997, %v1039
        %v1048 = vadd.f32 %v998, %v1040
        %1049 = vrot.lane.b32.xlu0 %v577, 111
        %v1050 = vpop.permute.xlu0 %1049
        %1051 = vrot.lane.b32.xlu0 %v583, 111
        %v1052 = vpop.permute.xlu0 %1051
        %1053 = vrot.lane.b32.xlu0 %v579, 111
        %v1054 = vpop.permute.xlu0 %1053
        %1055 = vrot.lane.b32.xlu0 %v585, 111
        %v1056 = vpop.permute.xlu0 %1055
        %1057 = vrot.lane.b32.xlu0 %v654, 111
        %v1058 = vpop.permute.xlu0 %1057
        %1059 = vrot.lane.b32.xlu0 %v660, 111
        %v1060 = vpop.permute.xlu0 %1059
        %1061 = vrot.lane.b32.xlu0 %v656, 111
        %v1062 = vpop.permute.xlu0 %1061
        %1063 = vrot.lane.b32.xlu0 %v662, 111
        %v1064 = vpop.permute.xlu0 %1063
        %vm1065 = vcmp.lt.s32.totalorder %v690, 111
        %v1066 = vsel %vm1065, %v1058, %v1062
        %v1067 = vsel %vm1065, %v1060, %v1064
        %v1068 = vsel %vm1065, %v1054, %v1058
        %v1069 = vsel %vm1065, %v1056, %v1060
        %v1070 = vsel %vm1065, %v1050, %v1054
        %v1071 = vsel %vm1065, %v1052, %v1056
        %v1072 = vsel %vm1065, %v1062, %v1050
        %v1073 = vsel %vm1065, %v1064, %v1052
        %s1074 = scalar_lea.vmem [#allocation4], 512
        %v1075 = vld [vmem:[%s1074] sm:$0xff]
        %v1076 = vld [vmem:[%s1074 + $0x8] sm:$0xff]
        %v1077 = vld [vmem:[%s1074 + $0x10] sm:$0xff]
        %v1078 = vld [vmem:[%s1074 + $0x18] sm:$0xff]
        %v1079 = vld [vmem:[%s1074 + $0x20] sm:$0xff]
        %v1080 = vld [vmem:[%s1074 + $0x28] sm:$0xff]
        %v1081 = vld [vmem:[%s1074 + $0x30] sm:$0xff]
        %v1082 = vld [vmem:[%s1074 + $0x38] sm:$0xff]
        %v1083 = vmul.f32 %v1075, %v1070
        %v1084 = vmul.f32 %v1076, %v1068
        %v1085 = vmul.f32 %v1077, %v1066
        %v1086 = vmul.f32 %v1078, %v1072
        %v1087 = vmul.f32 %v1079, %v1071
        %v1088 = vmul.f32 %v1080, %v1069
        %v1089 = vmul.f32 %v1081, %v1067
        %v1090 = vmul.f32 %v1082, %v1073
        %v1091 = vadd.f32 %v1041, %v1083
        %v1092 = vadd.f32 %v1042, %v1084
        %v1093 = vadd.f32 %v1043, %v1085
        %v1094 = vadd.f32 %v1044, %v1086
        %v1095 = vadd.f32 %v1045, %v1087
        %v1096 = vadd.f32 %v1046, %v1088
        %v1097 = vadd.f32 %v1047, %v1089
        %v1098 = vadd.f32 %v1048, %v1090
        %v1099 = vmax.f32 %v1091, 0.0
        %v1100 = vmax.f32 %v1092, 0.0
        %v1101 = vmax.f32 %v1093, 0.0
        %v1102 = vmax.f32 %v1094, 0.0
        %v1103 = vmax.f32 %v1095, 0.0
        %v1104 = vmax.f32 %v1096, 0.0
        %v1105 = vmax.f32 %v1097, 0.0
        %v1106 = vmax.f32 %v1098, 0.0
        %s1107 = scalar_lea.vmem [#allocation6], 16
        %v1108 = vld [vmem:[%s1107] sm:$0xff]
        %v1109 = vld [vmem:[%s1107 + $0x8] sm:$0xff]
        %s1110 = scalar_lea.vmem [#allocation2], 768
        %v1111 = vld [vmem:[%s1110] sm:$0xff]
        %v1112 = vld [vmem:[%s1110 + $0x8] sm:$0xff]
        %v1113 = vld [vmem:[%s1110 + $0x10] sm:$0xff]
        %v1114 = vld [vmem:[%s1110 + $0x18] sm:$0xff]
        %v1115 = vld [vmem:[%s1110 + $0x20] sm:$0xff]
        %v1116 = vld [vmem:[%s1110 + $0x28] sm:$0xff]
        %v1117 = vld [vmem:[%s1110 + $0x30] sm:$0xff]
        %v1118 = vld [vmem:[%s1110 + $0x38] sm:$0xff]
        %v1120 = vsel %vm503, %v1108, 0
        %v1123 = vsel %vm503, %v1109, 0
        %1125 = vmatprep.subr.mxu0 %v1100
        %1126 = vmatpush1.msra.mxu0 %v1099
        %1127 = vmatprep.subr.mxu0 %v1104
        %1128 = vmatpush1.msra.mxu0 %v1103
        %1129 = vmatprep.subr.mxu0 0.0
        %1130 = vmatpush1.msra.mxu0 0.0
        %1131 = vmatprep.subr.mxu0 0.0
        %1132 = vmatpush1.msra.mxu0 0.0
        %1133 = vmatprep.subr.mxu0 0.0
        %1134 = vmatpush1.msra.mxu0 0.0
        %1135 = vmatprep.subr.mxu0 0.0
        %1136 = vmatpush1.msra.mxu0 0.0
        %1137 = vmatprep.subr.mxu0 0.0
        %1138 = vmatpush1.msra.mxu0 0.0
        %1139 = vmatprep.subr.mxu0 0.0
        %1140 = vmatpush1.msra.mxu0 0.0
        %1141 = vmatprep.subr.mxu0 0.0
        %1142 = vmatpush1.msra.mxu0 0.0
        %1143 = vmatprep.subr.mxu0 0.0
        %1144 = vmatpush1.msra.mxu0 0.0
        %1145 = vmatprep.subr.mxu0 0.0
        %1146 = vmatpush1.msra.mxu0 0.0
        %1147 = vmatprep.subr.mxu0 0.0
        %1148 = vmatpush1.msra.mxu0 0.0
        %1149 = vmatprep.subr.mxu0 0.0
        %1150 = vmatpush1.msra.mxu0 0.0
        %1151 = vmatprep.subr.mxu0 0.0
        %1152 = vmatpush1.msra.mxu0 0.0
        %1153 = vmatprep.subr.mxu0 0.0
        %1154 = vmatpush1.msra.mxu0 0.0
        %1155 = vmatprep.subr.mxu0 0.0
        %1156 = vmatpush1.msra.mxu0 0.0
        %1157 = vmatprep.subr.mxu0 0.0
        %1158 = vmatpush1.msra.mxu0 0.0
        %1159 = vmatprep.subr.mxu0 0.0
        %1160 = vmatpush1.msra.mxu0 0.0
        %1161 = vmatprep.subr.mxu0 0.0
        %1162 = vmatpush1.msra.mxu0 0.0
        %1163 = vmatprep.subr.mxu0 0.0
        %1164 = vmatpush1.msra.mxu0 0.0
        %1165 = vmatprep.subr.mxu0 0.0
        %1166 = vmatpush1.msra.mxu0 0.0
        %1167 = vmatprep.subr.mxu0 0.0
        %1168 = vmatpush1.msra.mxu0 0.0
        %1169 = vmatprep.subr.mxu0 0.0
        %1170 = vmatpush1.msra.mxu0 0.0
        %1171 = vmatprep.subr.mxu0 0.0
        %1172 = vmatpush1.msra.mxu0 0.0
        %1173 = vmatprep.subr.mxu0 0.0
        %1174 = vmatpush1.msra.mxu0 0.0
        %1175 = vmatprep.subr.mxu0 0.0
        %1176 = vmatpush1.msra.mxu0 0.0
        %1177 = vmatprep.subr.mxu0 0.0
        %1178 = vmatpush1.msra.mxu0 0.0
        %1179 = vmatprep.subr.mxu0 0.0
        %1180 = vmatpush1.msra.mxu0 0.0
        %1181 = vmatprep.subr.mxu0 0.0
        %1182 = vmatpush1.msra.mxu0 0.0
        %1183 = vmatprep.subr.mxu0 0.0
        %1184 = vmatpush1.msra.mxu0 0.0
        %1185 = vmatprep.subr.mxu0 0.0
        %1186 = vmatpush1.msra.mxu0 0.0
        %1187 = vmatprep.subr.mxu0 0.0
        %1188 = vmatpush1.msra.mxu0 0.0
        %1189 = vmatprep.mubr.f32.mxu0 0.0
        %1190 = vmatmul.mubr.f32.gmra.mrb[0].mxu0 %v1120
        %v1191 = vpop.f32.mrb[0].mxu0
        %v1192 = vadd.f32 %v1111, %v1191
        %v1193 = vpop.f32.mrb[0].mxu0
        %v1194 = vadd.f32 %v1112, %v1193
        %1195 = vmatprep.mubr.f32.mxu0 0.0
        %1196 = vmatmul.mubr.f32.gmra.mrb[0].mxu0 %v1123
        %v1197 = vpop.f32.mrb[0].mxu0
        %v1198 = vadd.f32 %v1115, %v1197
        %v1199 = vpop.f32.mrb[0].mxu0
        %v1200 = vadd.f32 %v1116, %v1199
        %1201 = vdwg.mxu0
        %1202 = vmatprep.subr.mxu0 %v1102
        %1203 = vmatpush1.msra.mxu0 %v1101
        %1204 = vmatprep.subr.mxu0 %v1106
        %1205 = vmatpush1.msra.mxu0 %v1105
        %1206 = vmatprep.subr.mxu0 0.0
        %1207 = vmatpush1.msra.mxu0 0.0
        %1208 = vmatprep.subr.mxu0 0.0
        %1209 = vmatpush1.msra.mxu0 0.0
        %1210 = vmatprep.subr.mxu0 0.0
        %1211 = vmatpush1.msra.mxu0 0.0
        %1212 = vmatprep.subr.mxu0 0.0
        %1213 = vmatpush1.msra.mxu0 0.0
        %1214 = vmatprep.subr.mxu0 0.0
        %1215 = vmatpush1.msra.mxu0 0.0
        %1216 = vmatprep.subr.mxu0 0.0
        %1217 = vmatpush1.msra.mxu0 0.0
        %1218 = vmatprep.subr.mxu0 0.0
        %1219 = vmatpush1.msra.mxu0 0.0
        %1220 = vmatprep.subr.mxu0 0.0
        %1221 = vmatpush1.msra.mxu0 0.0
        %1222 = vmatprep.subr.mxu0 0.0
        %1223 = vmatpush1.msra.mxu0 0.0
        %1224 = vmatprep.subr.mxu0 0.0
        %1225 = vmatpush1.msra.mxu0 0.0
        %1226 = vmatprep.subr.mxu0 0.0
        %1227 = vmatpush1.msra.mxu0 0.0
        %1228 = vmatprep.subr.mxu0 0.0
        %1229 = vmatpush1.msra.mxu0 0.0
        %1230 = vmatprep.subr.mxu0 0.0
        %1231 = vmatpush1.msra.mxu0 0.0
        %1232 = vmatprep.subr.mxu0 0.0
        %1233 = vmatpush1.msra.mxu0 0.0
        %1234 = vmatprep.subr.mxu0 0.0
        %1235 = vmatpush1.msra.mxu0 0.0
        %1236 = vmatprep.subr.mxu0 0.0
        %1237 = vmatpush1.msra.mxu0 0.0
        %1238 = vmatprep.subr.mxu0 0.0
        %1239 = vmatpush1.msra.mxu0 0.0
        %1240 = vmatprep.subr.mxu0 0.0
        %1241 = vmatpush1.msra.mxu0 0.0
        %1242 = vmatprep.subr.mxu0 0.0
        %1243 = vmatpush1.msra.mxu0 0.0
        %1244 = vmatprep.subr.mxu0 0.0
        %1245 = vmatpush1.msra.mxu0 0.0
        %1246 = vmatprep.subr.mxu0 0.0
        %1247 = vmatpush1.msra.mxu0 0.0
        %1248 = vmatprep.subr.mxu0 0.0
        %1249 = vmatpush1.msra.mxu0 0.0
        %1250 = vmatprep.subr.mxu0 0.0
        %1251 = vmatpush1.msra.mxu0 0.0
        %1252 = vmatprep.subr.mxu0 0.0
        %1253 = vmatpush1.msra.mxu0 0.0
        %1254 = vmatprep.subr.mxu0 0.0
        %1255 = vmatpush1.msra.mxu0 0.0
        %1256 = vmatprep.subr.mxu0 0.0
        %1257 = vmatpush1.msra.mxu0 0.0
        %1258 = vmatprep.subr.mxu0 0.0
        %1259 = vmatpush1.msra.mxu0 0.0
        %1260 = vmatprep.subr.mxu0 0.0
        %1261 = vmatpush1.msra.mxu0 0.0
        %1262 = vmatprep.subr.mxu0 0.0
        %1263 = vmatpush1.msra.mxu0 0.0
        %1264 = vmatprep.subr.mxu0 0.0
        %1265 = vmatpush1.msra.mxu0 0.0
        %1266 = vmatprep.mubr.f32.mxu0 0.0
        %1267 = vmatmul.mubr.f32.gmra.mrb[0].mxu0 %v1120
        %v1268 = vpop.f32.mrb[0].mxu0
        %v1269 = vadd.f32 %v1113, %v1268
        %v1270 = vpop.f32.mrb[0].mxu0
        %v1271 = vadd.f32 %v1114, %v1270
        %1272 = vmatprep.mubr.f32.mxu0 0.0
        %1273 = vmatmul.mubr.f32.gmra.mrb[0].mxu0 %v1123
        %v1274 = vpop.f32.mrb[0].mxu0
        %v1275 = vadd.f32 %v1117, %v1274
        %v1276 = vpop.f32.mrb[0].mxu0
        %v1277 = vadd.f32 %v1118, %v1276
        %1278 = vdwg.mxu0
        %v1279 = vmax.f32 %v1192, 0.0
        %v1280 = vmax.f32 %v1194, 0.0
        %v1281 = vmax.f32 %v1269, 0.0
        %v1282 = vmax.f32 %v1271, 0.0
        %v1283 = vmax.f32 %v1198, 0.0
        %v1284 = vmax.f32 %v1200, 0.0
        %v1285 = vmax.f32 %v1275, 0.0
        %v1286 = vmax.f32 %v1277, 0.0
        %s1287 = scalar_lea.vmem [#allocation2], 320
        %v1288 = vld [vmem:[%s1287] sm:$0xff]
        %v1289 = vld [vmem:[%s1287 + $0x8] sm:$0xff]
        %v1290 = vld [vmem:[%s1287 + $0x10] sm:$0xff]
        %v1291 = vld [vmem:[%s1287 + $0x18] sm:$0xff]
        %v1292 = vld [vmem:[%s1287 + $0x20] sm:$0xff]
        %v1293 = vld [vmem:[%s1287 + $0x28] sm:$0xff]
        %v1294 = vld [vmem:[%s1287 + $0x30] sm:$0xff]
        %v1295 = vld [vmem:[%s1287 + $0x38] sm:$0xff]
        %1296 = vrot.lane.b32.xlu0 %v1279, 17
        %v1297 = vpop.permute.xlu0 %1296
        %1298 = vrot.lane.b32.xlu0 %v1283, 17
        %v1299 = vpop.permute.xlu0 %1298
        %1300 = vrot.lane.b32.xlu0 %v1280, 17
        %v1301 = vpop.permute.xlu0 %1300
        %1302 = vrot.lane.b32.xlu0 %v1284, 17
        %v1303 = vpop.permute.xlu0 %1302
        %1304 = vrot.lane.b32.xlu0 %v1281, 17
        %v1305 = vpop.permute.xlu0 %1304
        %1306 = vrot.lane.b32.xlu0 %v1285, 17
        %v1307 = vpop.permute.xlu0 %1306
        %1308 = vrot.lane.b32.xlu0 %v1282, 17
        %v1309 = vpop.permute.xlu0 %1308
        %1310 = vrot.lane.b32.xlu0 %v1286, 17
        %v1311 = vpop.permute.xlu0 %1310
        %v1312 = vsel %vm691, %v1305, %v1309
        %v1313 = vsel %vm691, %v1307, %v1311
        %v1314 = vsel %vm691, %v1301, %v1305
        %v1315 = vsel %vm691, %v1303, %v1307
        %v1316 = vsel %vm691, %v1297, %v1301
        %v1317 = vsel %vm691, %v1299, %v1303
        %v1318 = vsel %vm691, %v1309, %v1297
        %v1319 = vsel %vm691, %v1311, %v1299
        %s1320 = scalar_lea.vmem [#allocation4], 576
        %v1321 = vld [vmem:[%s1320] sm:$0xff]
        %v1322 = vld [vmem:[%s1320 + $0x8] sm:$0xff]
        %v1323 = vld [vmem:[%s1320 + $0x10] sm:$0xff]
        %v1324 = vld [vmem:[%s1320 + $0x18] sm:$0xff]
        %v1325 = vld [vmem:[%s1320 + $0x20] sm:$0xff]
        %v1326 = vld [vmem:[%s1320 + $0x28] sm:$0xff]
        %v1327 = vld [vmem:[%s1320 + $0x30] sm:$0xff]
        %v1328 = vld [vmem:[%s1320 + $0x38] sm:$0xff]
        %v1329 = vmul.f32 %v1321, %v1318
        %v1330 = vmul.f32 %v1322, %v1316
        %v1331 = vmul.f32 %v1323, %v1314
        %v1332 = vmul.f32 %v1324, %v1312
        %v1333 = vmul.f32 %v1325, %v1319
        %v1334 = vmul.f32 %v1326, %v1317
        %v1335 = vmul.f32 %v1327, %v1315
        %v1336 = vmul.f32 %v1328, %v1313
        %v1337 = vadd.f32 %v1288, %v1329
        %v1338 = vadd.f32 %v1289, %v1330
        %v1339 = vadd.f32 %v1290, %v1331
        %v1340 = vadd.f32 %v1291, %v1332
        %v1341 = vadd.f32 %v1292, %v1333
        %v1342 = vadd.f32 %v1293, %v1334
        %v1343 = vadd.f32 %v1294, %v1335
        %v1344 = vadd.f32 %v1295, %v1336
        %1345 = vrot.lane.b32.xlu0 %v1279, 16
        %v1346 = vpop.permute.xlu0 %1345
        %1347 = vrot.lane.b32.xlu0 %v1283, 16
        %v1348 = vpop.permute.xlu0 %1347
        %1349 = vrot.lane.b32.xlu0 %v1280, 16
        %v1350 = vpop.permute.xlu0 %1349
        %1351 = vrot.lane.b32.xlu0 %v1284, 16
        %v1352 = vpop.permute.xlu0 %1351
        %1353 = vrot.lane.b32.xlu0 %v1281, 16
        %v1354 = vpop.permute.xlu0 %1353
        %1355 = vrot.lane.b32.xlu0 %v1285, 16
        %v1356 = vpop.permute.xlu0 %1355
        %1357 = vrot.lane.b32.xlu0 %v1282, 16
        %v1358 = vpop.permute.xlu0 %1357
        %1359 = vrot.lane.b32.xlu0 %v1286, 16
        %v1360 = vpop.permute.xlu0 %1359
        %v1361 = vsel %vm740, %v1354, %v1358
        %v1362 = vsel %vm740, %v1356, %v1360
        %v1363 = vsel %vm740, %v1350, %v1354
        %v1364 = vsel %vm740, %v1352, %v1356
        %v1365 = vsel %vm740, %v1346, %v1350
        %v1366 = vsel %vm740, %v1348, %v1352
        %v1367 = vsel %vm740, %v1358, %v1346
        %v1368 = vsel %vm740, %v1360, %v1348
        %s1369 = scalar_lea.vmem [#allocation4], 640
        %v1370 = vld [vmem:[%s1369] sm:$0xff]
        %v1371 = vld [vmem:[%s1369 + $0x8] sm:$0xff]
        %v1372 = vld [vmem:[%s1369 + $0x10] sm:$0xff]
        %v1373 = vld [vmem:[%s1369 + $0x18] sm:$0xff]
        %v1374 = vld [vmem:[%s1369 + $0x20] sm:$0xff]
        %v1375 = vld [vmem:[%s1369 + $0x28] sm:$0xff]
        %v1376 = vld [vmem:[%s1369 + $0x30] sm:$0xff]
        %v1377 = vld [vmem:[%s1369 + $0x38] sm:$0xff]
        %v1378 = vmul.f32 %v1370, %v1367
        %v1379 = vmul.f32 %v1371, %v1365
        %v1380 = vmul.f32 %v1372, %v1363
        %v1381 = vmul.f32 %v1373, %v1361
        %v1382 = vmul.f32 %v1374, %v1368
        %v1383 = vmul.f32 %v1375, %v1366
        %v1384 = vmul.f32 %v1376, %v1364
        %v1385 = vmul.f32 %v1377, %v1362
        %v1386 = vadd.f32 %v1337, %v1378
        %v1387 = vadd.f32 %v1338, %v1379
        %v1388 = vadd.f32 %v1339, %v1380
        %v1389 = vadd.f32 %v1340, %v1381
        %v1390 = vadd.f32 %v1341, %v1382
        %v1391 = vadd.f32 %v1342, %v1383
        %v1392 = vadd.f32 %v1343, %v1384
        %v1393 = vadd.f32 %v1344, %v1385
        %1394 = vrot.lane.b32.xlu0 %v1279, 15
        %v1395 = vpop.permute.xlu0 %1394
        %1396 = vrot.lane.b32.xlu0 %v1283, 15
        %v1397 = vpop.permute.xlu0 %1396
        %1398 = vrot.lane.b32.xlu0 %v1280, 15
        %v1399 = vpop.permute.xlu0 %1398
        %1400 = vrot.lane.b32.xlu0 %v1284, 15
        %v1401 = vpop.permute.xlu0 %1400
        %1402 = vrot.lane.b32.xlu0 %v1281, 15
        %v1403 = vpop.permute.xlu0 %1402
        %1404 = vrot.lane.b32.xlu0 %v1285, 15
        %v1405 = vpop.permute.xlu0 %1404
        %1406 = vrot.lane.b32.xlu0 %v1282, 15
        %v1407 = vpop.permute.xlu0 %1406
        %1408 = vrot.lane.b32.xlu0 %v1286, 15
        %v1409 = vpop.permute.xlu0 %1408
        %v1410 = vsel %vm790, %v1403, %v1407
        %v1411 = vsel %vm790, %v1405, %v1409
        %v1412 = vsel %vm790, %v1399, %v1403
        %v1413 = vsel %vm790, %v1401, %v1405
        %v1414 = vsel %vm790, %v1395, %v1399
        %v1415 = vsel %vm790, %v1397, %v1401
        %v1416 = vsel %vm790, %v1407, %v1395
        %v1417 = vsel %vm790, %v1409, %v1397
        %s1418 = scalar_lea.vmem [#allocation4], 704
        %v1419 = vld [vmem:[%s1418] sm:$0xff]
        %v1420 = vld [vmem:[%s1418 + $0x8] sm:$0xff]
        %v1421 = vld [vmem:[%s1418 + $0x10] sm:$0xff]
        %v1422 = vld [vmem:[%s1418 + $0x18] sm:$0xff]
        %v1423 = vld [vmem:[%s1418 + $0x20] sm:$0xff]
        %v1424 = vld [vmem:[%s1418 + $0x28] sm:$0xff]
        %v1425 = vld [vmem:[%s1418 + $0x30] sm:$0xff]
        %v1426 = vld [vmem:[%s1418 + $0x38] sm:$0xff]
        %v1427 = vmul.f32 %v1419, %v1416
        %v1428 = vmul.f32 %v1420, %v1414
        %v1429 = vmul.f32 %v1421, %v1412
        %v1430 = vmul.f32 %v1422, %v1410
        %v1431 = vmul.f32 %v1423, %v1417
        %v1432 = vmul.f32 %v1424, %v1415
        %v1433 = vmul.f32 %v1425, %v1413
        %v1434 = vmul.f32 %v1426, %v1411
        %v1435 = vadd.f32 %v1386, %v1427
        %v1436 = vadd.f32 %v1387, %v1428
        %v1437 = vadd.f32 %v1388, %v1429
        %v1438 = vadd.f32 %v1389, %v1430
        %v1439 = vadd.f32 %v1390, %v1431
        %v1440 = vadd.f32 %v1391, %v1432
        %v1441 = vadd.f32 %v1392, %v1433
        %v1442 = vadd.f32 %v1393, %v1434
        %1443 = vrot.lane.b32.xlu0 %v1279, 1
        %v1444 = vpop.permute.xlu0 %1443
        %1445 = vrot.lane.b32.xlu0 %v1283, 1
        %v1446 = vpop.permute.xlu0 %1445
        %1447 = vrot.lane.b32.xlu0 %v1280, 1
        %v1448 = vpop.permute.xlu0 %1447
        %1449 = vrot.lane.b32.xlu0 %v1284, 1
        %v1450 = vpop.permute.xlu0 %1449
        %1451 = vrot.lane.b32.xlu0 %v1281, 1
        %v1452 = vpop.permute.xlu0 %1451
        %1453 = vrot.lane.b32.xlu0 %v1285, 1
        %v1454 = vpop.permute.xlu0 %1453
        %1455 = vrot.lane.b32.xlu0 %v1282, 1
        %v1456 = vpop.permute.xlu0 %1455
        %1457 = vrot.lane.b32.xlu0 %v1286, 1
        %v1458 = vpop.permute.xlu0 %1457
        %v1459 = vsel %vm840, %v1452, %v1456
        %v1460 = vsel %vm840, %v1454, %v1458
        %v1461 = vsel %vm840, %v1448, %v1452
        %v1462 = vsel %vm840, %v1450, %v1454
        %v1463 = vsel %vm840, %v1444, %v1448
        %v1464 = vsel %vm840, %v1446, %v1450
        %v1465 = vsel %vm840, %v1456, %v1444
        %v1466 = vsel %vm840, %v1458, %v1446
        %s1467 = scalar_lea.vmem [#allocation4], 768
        %v1468 = vld [vmem:[%s1467] sm:$0xff]
        %v1469 = vld [vmem:[%s1467 + $0x8] sm:$0xff]
        %v1470 = vld [vmem:[%s1467 + $0x10] sm:$0xff]
        %v1471 = vld [vmem:[%s1467 + $0x18] sm:$0xff]
        %v1472 = vld [vmem:[%s1467 + $0x20] sm:$0xff]
        %v1473 = vld [vmem:[%s1467 + $0x28] sm:$0xff]
        %v1474 = vld [vmem:[%s1467 + $0x30] sm:$0xff]
        %v1475 = vld [vmem:[%s1467 + $0x38] sm:$0xff]
        %v1476 = vmul.f32 %v1468, %v1465
        %v1477 = vmul.f32 %v1469, %v1463
        %v1478 = vmul.f32 %v1470, %v1461
        %v1479 = vmul.f32 %v1471, %v1459
        %v1480 = vmul.f32 %v1472, %v1466
        %v1481 = vmul.f32 %v1473, %v1464
        %v1482 = vmul.f32 %v1474, %v1462
        %v1483 = vmul.f32 %v1475, %v1460
        %v1484 = vadd.f32 %v1435, %v1476
        %v1485 = vadd.f32 %v1436, %v1477
        %v1486 = vadd.f32 %v1437, %v1478
        %v1487 = vadd.f32 %v1438, %v1479
        %v1488 = vadd.f32 %v1439, %v1480
        %v1489 = vadd.f32 %v1440, %v1481
        %v1490 = vadd.f32 %v1441, %v1482
        %v1491 = vadd.f32 %v1442, %v1483
        %s1492 = scalar_lea.vmem [#allocation4], 832
        %v1493 = vld [vmem:[%s1492] sm:$0xff]
        %v1494 = vld [vmem:[%s1492 + $0x8] sm:$0xff]
        %v1495 = vld [vmem:[%s1492 + $0x10] sm:$0xff]
        %v1496 = vld [vmem:[%s1492 + $0x18] sm:$0xff]
        %v1497 = vld [vmem:[%s1492 + $0x20] sm:$0xff]
        %v1498 = vld [vmem:[%s1492 + $0x28] sm:$0xff]
        %v1499 = vld [vmem:[%s1492 + $0x30] sm:$0xff]
        %v1500 = vld [vmem:[%s1492 + $0x38] sm:$0xff]
        %v1501 = vmul.f32 %v1493, %v1279
        %v1502 = vmul.f32 %v1494, %v1280
        %v1503 = vmul.f32 %v1495, %v1281
        %v1504 = vmul.f32 %v1496, %v1282
        %v1505 = vmul.f32 %v1497, %v1283
        %v1506 = vmul.f32 %v1498, %v1284
        %v1507 = vmul.f32 %v1499, %v1285
        %v1508 = vmul.f32 %v1500, %v1286
        %v1509 = vadd.f32 %v1484, %v1501
        %v1510 = vadd.f32 %v1485, %v1502
        %v1511 = vadd.f32 %v1486, %v1503
        %v1512 = vadd.f32 %v1487, %v1504
        %v1513 = vadd.f32 %v1488, %v1505
        %v1514 = vadd.f32 %v1489, %v1506
        %v1515 = vadd.f32 %v1490, %v1507
        %v1516 = vadd.f32 %v1491, %v1508
        %1517 = vrot.lane.b32.xlu0 %v1279, 127
        %v1518 = vpop.permute.xlu0 %1517
        %1519 = vrot.lane.b32.xlu0 %v1283, 127
        %v1520 = vpop.permute.xlu0 %1519
        %1521 = vrot.lane.b32.xlu0 %v1280, 127
        %v1522 = vpop.permute.xlu0 %1521
        %1523 = vrot.lane.b32.xlu0 %v1284, 127
        %v1524 = vpop.permute.xlu0 %1523
        %1525 = vrot.lane.b32.xlu0 %v1281, 127
        %v1526 = vpop.permute.xlu0 %1525
        %1527 = vrot.lane.b32.xlu0 %v1285, 127
        %v1528 = vpop.permute.xlu0 %1527
        %1529 = vrot.lane.b32.xlu0 %v1282, 127
        %v1530 = vpop.permute.xlu0 %1529
        %1531 = vrot.lane.b32.xlu0 %v1286, 127
        %v1532 = vpop.permute.xlu0 %1531
        %v1533 = vsel %vm915, %v1526, %v1530
        %v1534 = vsel %vm915, %v1528, %v1532
        %v1535 = vsel %vm915, %v1522, %v1526
        %v1536 = vsel %vm915, %v1524, %v1528
        %v1537 = vsel %vm915, %v1518, %v1522
        %v1538 = vsel %vm915, %v1520, %v1524
        %v1539 = vsel %vm915, %v1530, %v1518
        %v1540 = vsel %vm915, %v1532, %v1520
        %s1541 = scalar_lea.vmem [#allocation4], 896
        %v1542 = vld [vmem:[%s1541] sm:$0xff]
        %v1543 = vld [vmem:[%s1541 + $0x8] sm:$0xff]
        %v1544 = vld [vmem:[%s1541 + $0x10] sm:$0xff]
        %v1545 = vld [vmem:[%s1541 + $0x18] sm:$0xff]
        %v1546 = vld [vmem:[%s1541 + $0x20] sm:$0xff]
        %v1547 = vld [vmem:[%s1541 + $0x28] sm:$0xff]
        %v1548 = vld [vmem:[%s1541 + $0x30] sm:$0xff]
        %v1549 = vld [vmem:[%s1541 + $0x38] sm:$0xff]
        %v1550 = vmul.f32 %v1542, %v1537
        %v1551 = vmul.f32 %v1543, %v1535
        %v1552 = vmul.f32 %v1544, %v1533
        %v1553 = vmul.f32 %v1545, %v1539
        %v1554 = vmul.f32 %v1546, %v1538
        %v1555 = vmul.f32 %v1547, %v1536
        %v1556 = vmul.f32 %v1548, %v1534
        %v1557 = vmul.f32 %v1549, %v1540
        %v1558 = vadd.f32 %v1509, %v1550
        %v1559 = vadd.f32 %v1510, %v1551
        %v1560 = vadd.f32 %v1511, %v1552
        %v1561 = vadd.f32 %v1512, %v1553
        %v1562 = vadd.f32 %v1513, %v1554
        %v1563 = vadd.f32 %v1514, %v1555
        %v1564 = vadd.f32 %v1515, %v1556
        %v1565 = vadd.f32 %v1516, %v1557
        %1566 = vrot.lane.b32.xlu0 %v1279, 113
        %v1567 = vpop.permute.xlu0 %1566
        %1568 = vrot.lane.b32.xlu0 %v1283, 113
        %v1569 = vpop.permute.xlu0 %1568
        %1570 = vrot.lane.b32.xlu0 %v1280, 113
        %v1571 = vpop.permute.xlu0 %1570
        %1572 = vrot.lane.b32.xlu0 %v1284, 113
        %v1573 = vpop.permute.xlu0 %1572
        %1574 = vrot.lane.b32.xlu0 %v1281, 113
        %v1575 = vpop.permute.xlu0 %1574
        %1576 = vrot.lane.b32.xlu0 %v1285, 113
        %v1577 = vpop.permute.xlu0 %1576
        %1578 = vrot.lane.b32.xlu0 %v1282, 113
        %v1579 = vpop.permute.xlu0 %1578
        %1580 = vrot.lane.b32.xlu0 %v1286, 113
        %v1581 = vpop.permute.xlu0 %1580
        %v1582 = vsel %vm965, %v1575, %v1579
        %v1583 = vsel %vm965, %v1577, %v1581
        %v1584 = vsel %vm965, %v1571, %v1575
        %v1585 = vsel %vm965, %v1573, %v1577
        %v1586 = vsel %vm965, %v1567, %v1571
        %v1587 = vsel %vm965, %v1569, %v1573
        %v1588 = vsel %vm965, %v1579, %v1567
        %v1589 = vsel %vm965, %v1581, %v1569
        %s1590 = scalar_lea.vmem [#allocation4], 960
        %v1591 = vld [vmem:[%s1590] sm:$0xff]
        %v1592 = vld [vmem:[%s1590 + $0x8] sm:$0xff]
        %v1593 = vld [vmem:[%s1590 + $0x10] sm:$0xff]
        %v1594 = vld [vmem:[%s1590 + $0x18] sm:$0xff]
        %v1595 = vld [vmem:[%s1590 + $0x20] sm:$0xff]
        %v1596 = vld [vmem:[%s1590 + $0x28] sm:$0xff]
        %v1597 = vld [vmem:[%s1590 + $0x30] sm:$0xff]
        %v1598 = vld [vmem:[%s1590 + $0x38] sm:$0xff]
        %v1599 = vmul.f32 %v1591, %v1586
        %v1600 = vmul.f32 %v1592, %v1584
        %v1601 = vmul.f32 %v1593, %v1582
        %v1602 = vmul.f32 %v1594, %v1588
        %v1603 = vmul.f32 %v1595, %v1587
        %v1604 = vmul.f32 %v1596, %v1585
        %v1605 = vmul.f32 %v1597, %v1583
        %v1606 = vmul.f32 %v1598, %v1589
        %v1607 = vadd.f32 %v1558, %v1599
        %v1608 = vadd.f32 %v1559, %v1600
        %v1609 = vadd.f32 %v1560, %v1601
        %v1610 = vadd.f32 %v1561, %v1602
        %v1611 = vadd.f32 %v1562, %v1603
        %v1612 = vadd.f32 %v1563, %v1604
        %v1613 = vadd.f32 %v1564, %v1605
        %v1614 = vadd.f32 %v1565, %v1606
        %1615 = vrot.lane.b32.xlu0 %v1279, 112
        %v1616 = vpop.permute.xlu0 %1615
        %1617 = vrot.lane.b32.xlu0 %v1283, 112
        %v1618 = vpop.permute.xlu0 %1617
        %1619 = vrot.lane.b32.xlu0 %v1280, 112
        %v1620 = vpop.permute.xlu0 %1619
        %1621 = vrot.lane.b32.xlu0 %v1284, 112
        %v1622 = vpop.permute.xlu0 %1621
        %1623 = vrot.lane.b32.xlu0 %v1281, 112
        %v1624 = vpop.permute.xlu0 %1623
        %1625 = vrot.lane.b32.xlu0 %v1285, 112
        %v1626 = vpop.permute.xlu0 %1625
        %1627 = vrot.lane.b32.xlu0 %v1282, 112
        %v1628 = vpop.permute.xlu0 %1627
        %1629 = vrot.lane.b32.xlu0 %v1286, 112
        %v1630 = vpop.permute.xlu0 %1629
        %v1631 = vsel %vm1015, %v1624, %v1628
        %v1632 = vsel %vm1015, %v1626, %v1630
        %v1633 = vsel %vm1015, %v1620, %v1624
        %v1634 = vsel %vm1015, %v1622, %v1626
        %v1635 = vsel %vm1015, %v1616, %v1620
        %v1636 = vsel %vm1015, %v1618, %v1622
        %v1637 = vsel %vm1015, %v1628, %v1616
        %v1638 = vsel %vm1015, %v1630, %v1618
        %s1639 = scalar_lea.vmem [#allocation4], 1024
        %v1640 = vld [vmem:[%s1639] sm:$0xff]
        %v1641 = vld [vmem:[%s1639 + $0x8] sm:$0xff]
        %v1642 = vld [vmem:[%s1639 + $0x10] sm:$0xff]
        %v1643 = vld [vmem:[%s1639 + $0x18] sm:$0xff]
        %v1644 = vld [vmem:[%s1639 + $0x20] sm:$0xff]
        %v1645 = vld [vmem:[%s1639 + $0x28] sm:$0xff]
        %v1646 = vld [vmem:[%s1639 + $0x30] sm:$0xff]
        %v1647 = vld [vmem:[%s1639 + $0x38] sm:$0xff]
        %v1648 = vmul.f32 %v1640, %v1635
        %v1649 = vmul.f32 %v1641, %v1633
        %v1650 = vmul.f32 %v1642, %v1631
        %v1651 = vmul.f32 %v1643, %v1637
        %v1652 = vmul.f32 %v1644, %v1636
        %v1653 = vmul.f32 %v1645, %v1634
        %v1654 = vmul.f32 %v1646, %v1632
        %v1655 = vmul.f32 %v1647, %v1638
        %v1656 = vadd.f32 %v1607, %v1648
        %v1657 = vadd.f32 %v1608, %v1649
        %v1658 = vadd.f32 %v1609, %v1650
        %v1659 = vadd.f32 %v1610, %v1651
        %v1660 = vadd.f32 %v1611, %v1652
        %v1661 = vadd.f32 %v1612, %v1653
        %v1662 = vadd.f32 %v1613, %v1654
        %v1663 = vadd.f32 %v1614, %v1655
        %1664 = vrot.lane.b32.xlu0 %v1279, 111
        %v1665 = vpop.permute.xlu0 %1664
        %1666 = vrot.lane.b32.xlu0 %v1283, 111
        %v1667 = vpop.permute.xlu0 %1666
        %1668 = vrot.lane.b32.xlu0 %v1280, 111
        %v1669 = vpop.permute.xlu0 %1668
        %1670 = vrot.lane.b32.xlu0 %v1284, 111
        %v1671 = vpop.permute.xlu0 %1670
        %1672 = vrot.lane.b32.xlu0 %v1281, 111
        %v1673 = vpop.permute.xlu0 %1672
        %1674 = vrot.lane.b32.xlu0 %v1285, 111
        %v1675 = vpop.permute.xlu0 %1674
        %1676 = vrot.lane.b32.xlu0 %v1282, 111
        %v1677 = vpop.permute.xlu0 %1676
        %1678 = vrot.lane.b32.xlu0 %v1286, 111
        %v1679 = vpop.permute.xlu0 %1678
        %v1680 = vsel %vm1065, %v1673, %v1677
        %v1681 = vsel %vm1065, %v1675, %v1679
        %v1682 = vsel %vm1065, %v1669, %v1673
        %v1683 = vsel %vm1065, %v1671, %v1675
        %v1684 = vsel %vm1065, %v1665, %v1669
        %v1685 = vsel %vm1065, %v1667, %v1671
        %v1686 = vsel %vm1065, %v1677, %v1665
        %v1687 = vsel %vm1065, %v1679, %v1667
        %s1688 = scalar_lea.vmem [#allocation4], 1088
        %v1689 = vld [vmem:[%s1688] sm:$0xff]
        %v1690 = vld [vmem:[%s1688 + $0x8] sm:$0xff]
        %v1691 = vld [vmem:[%s1688 + $0x10] sm:$0xff]
        %v1692 = vld [vmem:[%s1688 + $0x18] sm:$0xff]
        %v1693 = vld [vmem:[%s1688 + $0x20] sm:$0xff]
        %v1694 = vld [vmem:[%s1688 + $0x28] sm:$0xff]
        %v1695 = vld [vmem:[%s1688 + $0x30] sm:$0xff]
        %v1696 = vld [vmem:[%s1688 + $0x38] sm:$0xff]
        %v1697 = vmul.f32 %v1689, %v1684
        %v1698 = vmul.f32 %v1690, %v1682
        %v1699 = vmul.f32 %v1691, %v1680
        %v1700 = vmul.f32 %v1692, %v1686
        %v1701 = vmul.f32 %v1693, %v1685
        %v1702 = vmul.f32 %v1694, %v1683
        %v1703 = vmul.f32 %v1695, %v1681
        %v1704 = vmul.f32 %v1696, %v1687
        %v1705 = vadd.f32 %v1656, %v1697
        %v1706 = vadd.f32 %v1657, %v1698
        %v1707 = vadd.f32 %v1658, %v1699
        %v1708 = vadd.f32 %v1659, %v1700
        %v1709 = vadd.f32 %v1660, %v1701
        %v1710 = vadd.f32 %v1661, %v1702
        %v1711 = vadd.f32 %v1662, %v1703
        %v1712 = vadd.f32 %v1663, %v1704
        %v1713 = vmax.f32 %v1705, 0.0
        %v1714 = vmax.f32 %v1706, 0.0
        %v1715 = vmax.f32 %v1707, 0.0
        %v1716 = vmax.f32 %v1708, 0.0
        %v1717 = vmax.f32 %v1709, 0.0
        %v1718 = vmax.f32 %v1710, 0.0
        %v1719 = vmax.f32 %v1711, 0.0
        %v1720 = vmax.f32 %v1712, 0.0
        %s1721 = scalar_lea.vmem [#allocation6], 32
        %v1722 = vld [vmem:[%s1721] sm:$0xff]
        %v1723 = vld [vmem:[%s1721 + $0x8] sm:$0xff]
        %s1724 = scalar_lea.vmem [#allocation2], 832
        %v1725 = vld [vmem:[%s1724] sm:$0xff]
        %v1726 = vld [vmem:[%s1724 + $0x8] sm:$0xff]
        %v1727 = vld [vmem:[%s1724 + $0x10] sm:$0xff]
        %v1728 = vld [vmem:[%s1724 + $0x18] sm:$0xff]
        %v1729 = vld [vmem:[%s1724 + $0x20] sm:$0xff]
        %v1730 = vld [vmem:[%s1724 + $0x28] sm:$0xff]
        %v1731 = vld [vmem:[%s1724 + $0x30] sm:$0xff]
        %v1732 = vld [vmem:[%s1724 + $0x38] sm:$0xff]
        %v1734 = vsel %vm503, %v1722, 0
        %v1737 = vsel %vm503, %v1723, 0
        %1739 = vmatprep.subr.mxu0 %v1714
        %1740 = vmatpush1.msra.mxu0 %v1713
        %1741 = vmatprep.subr.mxu0 %v1718
        %1742 = vmatpush1.msra.mxu0 %v1717
        %1743 = vmatprep.subr.mxu0 0.0
        %1744 = vmatpush1.msra.mxu0 0.0
        %1745 = vmatprep.subr.mxu0 0.0
        %1746 = vmatpush1.msra.mxu0 0.0
        %1747 = vmatprep.subr.mxu0 0.0
        %1748 = vmatpush1.msra.mxu0 0.0
        %1749 = vmatprep.subr.mxu0 0.0
        %1750 = vmatpush1.msra.mxu0 0.0
        %1751 = vmatprep.subr.mxu0 0.0
        %1752 = vmatpush1.msra.mxu0 0.0
        %1753 = vmatprep.subr.mxu0 0.0
        %1754 = vmatpush1.msra.mxu0 0.0
        %1755 = vmatprep.subr.mxu0 0.0
        %1756 = vmatpush1.msra.mxu0 0.0
        %1757 = vmatprep.subr.mxu0 0.0
        %1758 = vmatpush1.msra.mxu0 0.0
        %1759 = vmatprep.subr.mxu0 0.0
        %1760 = vmatpush1.msra.mxu0 0.0
        %1761 = vmatprep.subr.mxu0 0.0
        %1762 = vmatpush1.msra.mxu0 0.0
        %1763 = vmatprep.subr.mxu0 0.0
        %1764 = vmatpush1.msra.mxu0 0.0
        %1765 = vmatprep.subr.mxu0 0.0
        %1766 = vmatpush1.msra.mxu0 0.0
        %1767 = vmatprep.subr.mxu0 0.0
        %1768 = vmatpush1.msra.mxu0 0.0
        %1769 = vmatprep.subr.mxu0 0.0
        %1770 = vmatpush1.msra.mxu0 0.0
        %1771 = vmatprep.subr.mxu0 0.0
        %1772 = vmatpush1.msra.mxu0 0.0
        %1773 = vmatprep.subr.mxu0 0.0
        %1774 = vmatpush1.msra.mxu0 0.0
        %1775 = vmatprep.subr.mxu0 0.0
        %1776 = vmatpush1.msra.mxu0 0.0
        %1777 = vmatprep.subr.mxu0 0.0
        %1778 = vmatpush1.msra.mxu0 0.0
        %1779 = vmatprep.subr.mxu0 0.0
        %1780 = vmatpush1.msra.mxu0 0.0
        %1781 = vmatprep.subr.mxu0 0.0
        %1782 = vmatpush1.msra.mxu0 0.0
        %1783 = vmatprep.subr.mxu0 0.0
        %1784 = vmatpush1.msra.mxu0 0.0
        %1785 = vmatprep.subr.mxu0 0.0
        %1786 = vmatpush1.msra.mxu0 0.0
        %1787 = vmatprep.subr.mxu0 0.0
        %1788 = vmatpush1.msra.mxu0 0.0
        %1789 = vmatprep.subr.mxu0 0.0
        %1790 = vmatpush1.msra.mxu0 0.0
        %1791 = vmatprep.subr.mxu0 0.0
        %1792 = vmatpush1.msra.mxu0 0.0
        %1793 = vmatprep.subr.mxu0 0.0
        %1794 = vmatpush1.msra.mxu0 0.0
        %1795 = vmatprep.subr.mxu0 0.0
        %1796 = vmatpush1.msra.mxu0 0.0
        %1797 = vmatprep.subr.mxu0 0.0
        %1798 = vmatpush1.msra.mxu0 0.0
        %1799 = vmatprep.subr.mxu0 0.0
        %1800 = vmatpush1.msra.mxu0 0.0
        %1801 = vmatprep.subr.mxu0 0.0
        %1802 = vmatpush1.msra.mxu0 0.0
        %1803 = vmatprep.mubr.f32.mxu0 0.0
        %1804 = vmatmul.mubr.f32.gmra.mrb[0].mxu0 %v1734
        %v1805 = vpop.f32.mrb[0].mxu0
        %v1806 = vadd.f32 %v1725, %v1805
        %v1807 = vpop.f32.mrb[0].mxu0
        %v1808 = vadd.f32 %v1726, %v1807
        %1809 = vmatprep.mubr.f32.mxu0 0.0
        %1810 = vmatmul.mubr.f32.gmra.mrb[0].mxu0 %v1737
        %v1811 = vpop.f32.mrb[0].mxu0
        %v1812 = vadd.f32 %v1729, %v1811
        %v1813 = vpop.f32.mrb[0].mxu0
        %v1814 = vadd.f32 %v1730, %v1813
        %1815 = vdwg.mxu0
        %1816 = vmatprep.subr.mxu0 %v1716
        %1817 = vmatpush1.msra.mxu0 %v1715
        %1818 = vmatprep.subr.mxu0 %v1720
        %1819 = vmatpush1.msra.mxu0 %v1719
        %1820 = vmatprep.subr.mxu0 0.0
        %1821 = vmatpush1.msra.mxu0 0.0
        %1822 = vmatprep.subr.mxu0 0.0
        %1823 = vmatpush1.msra.mxu0 0.0
        %1824 = vmatprep.subr.mxu0 0.0
        %1825 = vmatpush1.msra.mxu0 0.0
        %1826 = vmatprep.subr.mxu0 0.0
        %1827 = vmatpush1.msra.mxu0 0.0
        %1828 = vmatprep.subr.mxu0 0.0
        %1829 = vmatpush1.msra.mxu0 0.0
        %1830 = vmatprep.subr.mxu0 0.0
        %1831 = vmatpush1.msra.mxu0 0.0
        %1832 = vmatprep.subr.mxu0 0.0
        %1833 = vmatpush1.msra.mxu0 0.0
        %1834 = vmatprep.subr.mxu0 0.0
        %1835 = vmatpush1.msra.mxu0 0.0
        %1836 = vmatprep.subr.mxu0 0.0
        %1837 = vmatpush1.msra.mxu0 0.0
        %1838 = vmatprep.subr.mxu0 0.0
        %1839 = vmatpush1.msra.mxu0 0.0
        %1840 = vmatprep.subr.mxu0 0.0
        %1841 = vmatpush1.msra.mxu0 0.0
        %1842 = vmatprep.subr.mxu0 0.0
        %1843 = vmatpush1.msra.mxu0 0.0
        %1844 = vmatprep.subr.mxu0 0.0
        %1845 = vmatpush1.msra.mxu0 0.0
        %1846 = vmatprep.subr.mxu0 0.0
        %1847 = vmatpush1.msra.mxu0 0.0
        %1848 = vmatprep.subr.mxu0 0.0
        %1849 = vmatpush1.msra.mxu0 0.0
        %1850 = vmatprep.subr.mxu0 0.0
        %1851 = vmatpush1.msra.mxu0 0.0
        %1852 = vmatprep.subr.mxu0 0.0
        %1853 = vmatpush1.msra.mxu0 0.0
        %1854 = vmatprep.subr.mxu0 0.0
        %1855 = vmatpush1.msra.mxu0 0.0
        %1856 = vmatprep.subr.mxu0 0.0
        %1857 = vmatpush1.msra.mxu0 0.0
        %1858 = vmatprep.subr.mxu0 0.0
        %1859 = vmatpush1.msra.mxu0 0.0
        %1860 = vmatprep.subr.mxu0 0.0
        %1861 = vmatpush1.msra.mxu0 0.0
        %1862 = vmatprep.subr.mxu0 0.0
        %1863 = vmatpush1.msra.mxu0 0.0
        %1864 = vmatprep.subr.mxu0 0.0
        %1865 = vmatpush1.msra.mxu0 0.0
        %1866 = vmatprep.subr.mxu0 0.0
        %1867 = vmatpush1.msra.mxu0 0.0
        %1868 = vmatprep.subr.mxu0 0.0
        %1869 = vmatpush1.msra.mxu0 0.0
        %1870 = vmatprep.subr.mxu0 0.0
        %1871 = vmatpush1.msra.mxu0 0.0
        %1872 = vmatprep.subr.mxu0 0.0
        %1873 = vmatpush1.msra.mxu0 0.0
        %1874 = vmatprep.subr.mxu0 0.0
        %1875 = vmatpush1.msra.mxu0 0.0
        %1876 = vmatprep.subr.mxu0 0.0
        %1877 = vmatpush1.msra.mxu0 0.0
        %1878 = vmatprep.subr.mxu0 0.0
        %1879 = vmatpush1.msra.mxu0 0.0
        %1880 = vmatprep.mubr.f32.mxu0 0.0
        %1881 = vmatmul.mubr.f32.gmra.mrb[0].mxu0 %v1734
        %v1882 = vpop.f32.mrb[0].mxu0
        %v1883 = vadd.f32 %v1727, %v1882
        %v1884 = vpop.f32.mrb[0].mxu0
        %v1885 = vadd.f32 %v1728, %v1884
        %1886 = vmatprep.mubr.f32.mxu0 0.0
        %1887 = vmatmul.mubr.f32.gmra.mrb[0].mxu0 %v1737
        %v1888 = vpop.f32.mrb[0].mxu0
        %v1889 = vadd.f32 %v1731, %v1888
        %v1890 = vpop.f32.mrb[0].mxu0
        %v1891 = vadd.f32 %v1732, %v1890
        %1892 = vdwg.mxu0
        %v1893 = vmax.f32 %v1806, 0.0
        %v1894 = vmax.f32 %v1808, 0.0
        %v1895 = vmax.f32 %v1883, 0.0
        %v1896 = vmax.f32 %v1885, 0.0
        %v1897 = vmax.f32 %v1812, 0.0
        %v1898 = vmax.f32 %v1814, 0.0
        %v1899 = vmax.f32 %v1889, 0.0
        %v1900 = vmax.f32 %v1891, 0.0
        %s1901 = scalar_lea.vmem [#allocation2], 384
        %v1902 = vld [vmem:[%s1901] sm:$0xff]
        %v1903 = vld [vmem:[%s1901 + $0x8] sm:$0xff]
        %v1904 = vld [vmem:[%s1901 + $0x10] sm:$0xff]
        %v1905 = vld [vmem:[%s1901 + $0x18] sm:$0xff]
        %v1906 = vld [vmem:[%s1901 + $0x20] sm:$0xff]
        %v1907 = vld [vmem:[%s1901 + $0x28] sm:$0xff]
        %v1908 = vld [vmem:[%s1901 + $0x30] sm:$0xff]
        %v1909 = vld [vmem:[%s1901 + $0x38] sm:$0xff]
        %1910 = vrot.lane.b32.xlu0 %v577, 34
        %v1911 = vpop.permute.xlu0 %1910
        %1912 = vrot.lane.b32.xlu0 %v583, 34
        %v1913 = vpop.permute.xlu0 %1912
        %1914 = vrot.lane.b32.xlu0 %v579, 34
        %v1915 = vpop.permute.xlu0 %1914
        %1916 = vrot.lane.b32.xlu0 %v585, 34
        %v1917 = vpop.permute.xlu0 %1916
        %1918 = vrot.lane.b32.xlu0 %v654, 34
        %v1919 = vpop.permute.xlu0 %1918
        %1920 = vrot.lane.b32.xlu0 %v660, 34
        %v1921 = vpop.permute.xlu0 %1920
        %1922 = vrot.lane.b32.xlu0 %v656, 34
        %v1923 = vpop.permute.xlu0 %1922
        %1924 = vrot.lane.b32.xlu0 %v662, 34
        %v1925 = vpop.permute.xlu0 %1924
        %vm1926 = vcmp.lt.s32.totalorder %v690, 34
        %v1927 = vsel %vm1926, %v1919, %v1923
        %v1928 = vsel %vm1926, %v1921, %v1925
        %v1929 = vsel %vm1926, %v1915, %v1919
        %v1930 = vsel %vm1926, %v1917, %v1921
        %v1931 = vsel %vm1926, %v1911, %v1915
        %v1932 = vsel %vm1926, %v1913, %v1917
        %v1933 = vsel %vm1926, %v1923, %v1911
        %v1934 = vsel %vm1926, %v1925, %v1913
        %s1935 = scalar_lea.vmem [#allocation4], 1152
        %v1936 = vld [vmem:[%s1935] sm:$0xff]
        %v1937 = vld [vmem:[%s1935 + $0x8] sm:$0xff]
        %v1938 = vld [vmem:[%s1935 + $0x10] sm:$0xff]
        %v1939 = vld [vmem:[%s1935 + $0x18] sm:$0xff]
        %v1940 = vld [vmem:[%s1935 + $0x20] sm:$0xff]
        %v1941 = vld [vmem:[%s1935 + $0x28] sm:$0xff]
        %v1942 = vld [vmem:[%s1935 + $0x30] sm:$0xff]
        %v1943 = vld [vmem:[%s1935 + $0x38] sm:$0xff]
        %v1944 = vmul.f32 %v1936, %v1933
        %v1945 = vmul.f32 %v1937, %v1931
        %v1946 = vmul.f32 %v1938, %v1929
        %v1947 = vmul.f32 %v1939, %v1927
        %v1948 = vmul.f32 %v1940, %v1934
        %v1949 = vmul.f32 %v1941, %v1932
        %v1950 = vmul.f32 %v1942, %v1930
        %v1951 = vmul.f32 %v1943, %v1928
        %v1952 = vadd.f32 %v1902, %v1944
        %v1953 = vadd.f32 %v1903, %v1945
        %v1954 = vadd.f32 %v1904, %v1946
        %v1955 = vadd.f32 %v1905, %v1947
        %v1956 = vadd.f32 %v1906, %v1948
        %v1957 = vadd.f32 %v1907, %v1949
        %v1958 = vadd.f32 %v1908, %v1950
        %v1959 = vadd.f32 %v1909, %v1951
        %1960 = vrot.lane.b32.xlu0 %v577, 32
        %v1961 = vpop.permute.xlu0 %1960
        %1962 = vrot.lane.b32.xlu0 %v583, 32
        %v1963 = vpop.permute.xlu0 %1962
        %1964 = vrot.lane.b32.xlu0 %v579, 32
        %v1965 = vpop.permute.xlu0 %1964
        %1966 = vrot.lane.b32.xlu0 %v585, 32
        %v1967 = vpop.permute.xlu0 %1966
        %1968 = vrot.lane.b32.xlu0 %v654, 32
        %v1969 = vpop.permute.xlu0 %1968
        %1970 = vrot.lane.b32.xlu0 %v660, 32
        %v1971 = vpop.permute.xlu0 %1970
        %1972 = vrot.lane.b32.xlu0 %v656, 32
        %v1973 = vpop.permute.xlu0 %1972
        %1974 = vrot.lane.b32.xlu0 %v662, 32
        %v1975 = vpop.permute.xlu0 %1974
        %vm1976 = vcmp.lt.s32.totalorder %v690, 32
        %v1977 = vsel %vm1976, %v1969, %v1973
        %v1978 = vsel %vm1976, %v1971, %v1975
        %v1979 = vsel %vm1976, %v1965, %v1969
        %v1980 = vsel %vm1976, %v1967, %v1971
        %v1981 = vsel %vm1976, %v1961, %v1965
        %v1982 = vsel %vm1976, %v1963, %v1967
        %v1983 = vsel %vm1976, %v1973, %v1961
        %v1984 = vsel %vm1976, %v1975, %v1963
        %s1985 = scalar_lea.vmem [#allocation4], 1216
        %v1986 = vld [vmem:[%s1985] sm:$0xff]
        %v1987 = vld [vmem:[%s1985 + $0x8] sm:$0xff]
        %v1988 = vld [vmem:[%s1985 + $0x10] sm:$0xff]
        %v1989 = vld [vmem:[%s1985 + $0x18] sm:$0xff]
        %v1990 = vld [vmem:[%s1985 + $0x20] sm:$0xff]
        %v1991 = vld [vmem:[%s1985 + $0x28] sm:$0xff]
        %v1992 = vld [vmem:[%s1985 + $0x30] sm:$0xff]
        %v1993 = vld [vmem:[%s1985 + $0x38] sm:$0xff]
        %v1994 = vmul.f32 %v1986, %v1983
        %v1995 = vmul.f32 %v1987, %v1981
        %v1996 = vmul.f32 %v1988, %v1979
        %v1997 = vmul.f32 %v1989, %v1977
        %v1998 = vmul.f32 %v1990, %v1984
        %v1999 = vmul.f32 %v1991, %v1982
        %v2000 = vmul.f32 %v1992, %v1980
        %v2001 = vmul.f32 %v1993, %v1978
        %v2002 = vadd.f32 %v1952, %v1994
        %v2003 = vadd.f32 %v1953, %v1995
        %v2004 = vadd.f32 %v1954, %v1996
        %v2005 = vadd.f32 %v1955, %v1997
        %v2006 = vadd.f32 %v1956, %v1998
        %v2007 = vadd.f32 %v1957, %v1999
        %v2008 = vadd.f32 %v1958, %v2000
        %v2009 = vadd.f32 %v1959, %v2001
        %2010 = vrot.lane.b32.xlu0 %v577, 30
        %v2011 = vpop.permute.xlu0 %2010
        %2012 = vrot.lane.b32.xlu0 %v583, 30
        %v2013 = vpop.permute.xlu0 %2012
        %2014 = vrot.lane.b32.xlu0 %v579, 30
        %v2015 = vpop.permute.xlu0 %2014
        %2016 = vrot.lane.b32.xlu0 %v585, 30
        %v2017 = vpop.permute.xlu0 %2016
        %2018 = vrot.lane.b32.xlu0 %v654, 30
        %v2019 = vpop.permute.xlu0 %2018
        %2020 = vrot.lane.b32.xlu0 %v660, 30
        %v2021 = vpop.permute.xlu0 %2020
        %2022 = vrot.lane.b32.xlu0 %v656, 30
        %v2023 = vpop.permute.xlu0 %2022
        %2024 = vrot.lane.b32.xlu0 %v662, 30
        %v2025 = vpop.permute.xlu0 %2024
        %vm2026 = vcmp.lt.s32.totalorder %v690, 30
        %v2027 = vsel %vm2026, %v2019, %v2023
        %v2028 = vsel %vm2026, %v2021, %v2025
        %v2029 = vsel %vm2026, %v2015, %v2019
        %v2030 = vsel %vm2026, %v2017, %v2021
        %v2031 = vsel %vm2026, %v2011, %v2015
        %v2032 = vsel %vm2026, %v2013, %v2017
        %v2033 = vsel %vm2026, %v2023, %v2011
        %v2034 = vsel %vm2026, %v2025, %v2013
        %s2035 = scalar_lea.vmem [#allocation4], 1280
        %v2036 = vld [vmem:[%s2035] sm:$0xff]
        %v2037 = vld [vmem:[%s2035 + $0x8] sm:$0xff]
        %v2038 = vld [vmem:[%s2035 + $0x10] sm:$0xff]
        %v2039 = vld [vmem:[%s2035 + $0x18] sm:$0xff]
        %v2040 = vld [vmem:[%s2035 + $0x20] sm:$0xff]
        %v2041 = vld [vmem:[%s2035 + $0x28] sm:$0xff]
        %v2042 = vld [vmem:[%s2035 + $0x30] sm:$0xff]
        %v2043 = vld [vmem:[%s2035 + $0x38] sm:$0xff]
        %v2044 = vmul.f32 %v2036, %v2033
        %v2045 = vmul.f32 %v2037, %v2031
        %v2046 = vmul.f32 %v2038, %v2029
        %v2047 = vmul.f32 %v2039, %v2027
        %v2048 = vmul.f32 %v2040, %v2034
        %v2049 = vmul.f32 %v2041, %v2032
        %v2050 = vmul.f32 %v2042, %v2030
        %v2051 = vmul.f32 %v2043, %v2028
        %v2052 = vadd.f32 %v2002, %v2044
        %v2053 = vadd.f32 %v2003, %v2045
        %v2054 = vadd.f32 %v2004, %v2046
        %v2055 = vadd.f32 %v2005, %v2047
        %v2056 = vadd.f32 %v2006, %v2048
        %v2057 = vadd.f32 %v2007, %v2049
        %v2058 = vadd.f32 %v2008, %v2050
        %v2059 = vadd.f32 %v2009, %v2051
        %2060 = vrot.lane.b32.xlu0 %v577, 2
        %v2061 = vpop.permute.xlu0 %2060
        %2062 = vrot.lane.b32.xlu0 %v583, 2
        %v2063 = vpop.permute.xlu0 %2062
        %2064 = vrot.lane.b32.xlu0 %v579, 2
        %v2065 = vpop.permute.xlu0 %2064
        %2066 = vrot.lane.b32.xlu0 %v585, 2
        %v2067 = vpop.permute.xlu0 %2066
        %2068 = vrot.lane.b32.xlu0 %v654, 2
        %v2069 = vpop.permute.xlu0 %2068
        %2070 = vrot.lane.b32.xlu0 %v660, 2
        %v2071 = vpop.permute.xlu0 %2070
        %2072 = vrot.lane.b32.xlu0 %v656, 2
        %v2073 = vpop.permute.xlu0 %2072
        %2074 = vrot.lane.b32.xlu0 %v662, 2
        %v2075 = vpop.permute.xlu0 %2074
        %vm2076 = vcmp.lt.s32.totalorder %v690, 2
        %v2077 = vsel %vm2076, %v2069, %v2073
        %v2078 = vsel %vm2076, %v2071, %v2075
        %v2079 = vsel %vm2076, %v2065, %v2069
        %v2080 = vsel %vm2076, %v2067, %v2071
        %v2081 = vsel %vm2076, %v2061, %v2065
        %v2082 = vsel %vm2076, %v2063, %v2067
        %v2083 = vsel %vm2076, %v2073, %v2061
        %v2084 = vsel %vm2076, %v2075, %v2063
        %s2085 = scalar_lea.vmem [#allocation4], 1344
        %v2086 = vld [vmem:[%s2085] sm:$0xff]
        %v2087 = vld [vmem:[%s2085 + $0x8] sm:$0xff]
        %v2088 = vld [vmem:[%s2085 + $0x10] sm:$0xff]
        %v2089 = vld [vmem:[%s2085 + $0x18] sm:$0xff]
        %v2090 = vld [vmem:[%s2085 + $0x20] sm:$0xff]
        %v2091 = vld [vmem:[%s2085 + $0x28] sm:$0xff]
        %v2092 = vld [vmem:[%s2085 + $0x30] sm:$0xff]
        %v2093 = vld [vmem:[%s2085 + $0x38] sm:$0xff]
        %v2094 = vmul.f32 %v2086, %v2083
        %v2095 = vmul.f32 %v2087, %v2081
        %v2096 = vmul.f32 %v2088, %v2079
        %v2097 = vmul.f32 %v2089, %v2077
        %v2098 = vmul.f32 %v2090, %v2084
        %v2099 = vmul.f32 %v2091, %v2082
        %v2100 = vmul.f32 %v2092, %v2080
        %v2101 = vmul.f32 %v2093, %v2078
        %v2102 = vadd.f32 %v2052, %v2094
        %v2103 = vadd.f32 %v2053, %v2095
        %v2104 = vadd.f32 %v2054, %v2096
        %v2105 = vadd.f32 %v2055, %v2097
        %v2106 = vadd.f32 %v2056, %v2098
        %v2107 = vadd.f32 %v2057, %v2099
        %v2108 = vadd.f32 %v2058, %v2100
        %v2109 = vadd.f32 %v2059, %v2101
        %s2110 = scalar_lea.vmem [#allocation4], 1408
        %v2111 = vld [vmem:[%s2110] sm:$0xff]
        %v2112 = vld [vmem:[%s2110 + $0x8] sm:$0xff]
        %v2113 = vld [vmem:[%s2110 + $0x10] sm:$0xff]
        %v2114 = vld [vmem:[%s2110 + $0x18] sm:$0xff]
        %v2115 = vld [vmem:[%s2110 + $0x20] sm:$0xff]
        %v2116 = vld [vmem:[%s2110 + $0x28] sm:$0xff]
        %v2117 = vld [vmem:[%s2110 + $0x30] sm:$0xff]
        %v2118 = vld [vmem:[%s2110 + $0x38] sm:$0xff]
        %v2119 = vmul.f32 %v2111, %v577
        %v2120 = vmul.f32 %v2112, %v579
        %v2121 = vmul.f32 %v2113, %v654
        %v2122 = vmul.f32 %v2114, %v656
        %v2123 = vmul.f32 %v2115, %v583
        %v2124 = vmul.f32 %v2116, %v585
        %v2125 = vmul.f32 %v2117, %v660
        %v2126 = vmul.f32 %v2118, %v662
        %v2127 = vadd.f32 %v2102, %v2119
        %v2128 = vadd.f32 %v2103, %v2120
        %v2129 = vadd.f32 %v2104, %v2121
        %v2130 = vadd.f32 %v2105, %v2122
        %v2131 = vadd.f32 %v2106, %v2123
        %v2132 = vadd.f32 %v2107, %v2124
        %v2133 = vadd.f32 %v2108, %v2125
        %v2134 = vadd.f32 %v2109, %v2126
        %2135 = vrot.lane.b32.xlu0 %v577, 126
        %v2136 = vpop.permute.xlu0 %2135
        %2137 = vrot.lane.b32.xlu0 %v583, 126
        %v2138 = vpop.permute.xlu0 %2137
        %2139 = vrot.lane.b32.xlu0 %v579, 126
        %v2140 = vpop.permute.xlu0 %2139
        %2141 = vrot.lane.b32.xlu0 %v585, 126
        %v2142 = vpop.permute.xlu0 %2141
        %2143 = vrot.lane.b32.xlu0 %v654, 126
        %v2144 = vpop.permute.xlu0 %2143
        %2145 = vrot.lane.b32.xlu0 %v660, 126
        %v2146 = vpop.permute.xlu0 %2145
        %2147 = vrot.lane.b32.xlu0 %v656, 126
        %v2148 = vpop.permute.xlu0 %2147
        %2149 = vrot.lane.b32.xlu0 %v662, 126
        %v2150 = vpop.permute.xlu0 %2149
        %vm2151 = vcmp.lt.s32.totalorder %v690, 126
        %v2152 = vsel %vm2151, %v2144, %v2148
        %v2153 = vsel %vm2151, %v2146, %v2150
        %v2154 = vsel %vm2151, %v2140, %v2144
        %v2155 = vsel %vm2151, %v2142, %v2146
        %v2156 = vsel %vm2151, %v2136, %v2140
        %v2157 = vsel %vm2151, %v2138, %v2142
        %v2158 = vsel %vm2151, %v2148, %v2136
        %v2159 = vsel %vm2151, %v2150, %v2138
        %s2160 = scalar_lea.vmem [#allocation4], 1472
        %v2161 = vld [vmem:[%s2160] sm:$0xff]
        %v2162 = vld [vmem:[%s2160 + $0x8] sm:$0xff]
        %v2163 = vld [vmem:[%s2160 + $0x10] sm:$0xff]
        %v2164 = vld [vmem:[%s2160 + $0x18] sm:$0xff]
        %v2165 = vld [vmem:[%s2160 + $0x20] sm:$0xff]
        %v2166 = vld [vmem:[%s2160 + $0x28] sm:$0xff]
        %v2167 = vld [vmem:[%s2160 + $0x30] sm:$0xff]
        %v2168 = vld [vmem:[%s2160 + $0x38] sm:$0xff]
        %v2169 = vmul.f32 %v2161, %v2156
        %v2170 = vmul.f32 %v2162, %v2154
        %v2171 = vmul.f32 %v2163, %v2152
        %v2172 = vmul.f32 %v2164, %v2158
        %v2173 = vmul.f32 %v2165, %v2157
        %v2174 = vmul.f32 %v2166, %v2155
        %v2175 = vmul.f32 %v2167, %v2153
        %v2176 = vmul.f32 %v2168, %v2159
        %v2177 = vadd.f32 %v2127, %v2169
        %v2178 = vadd.f32 %v2128, %v2170
        %v2179 = vadd.f32 %v2129, %v2171
        %v2180 = vadd.f32 %v2130, %v2172
        %v2181 = vadd.f32 %v2131, %v2173
        %v2182 = vadd.f32 %v2132, %v2174
        %v2183 = vadd.f32 %v2133, %v2175
        %v2184 = vadd.f32 %v2134, %v2176
        %2185 = vrot.lane.b32.xlu0 %v577, 98
        %v2186 = vpop.permute.xlu0 %2185
        %2187 = vrot.lane.b32.xlu0 %v583, 98
        %v2188 = vpop.permute.xlu0 %2187
        %2189 = vrot.lane.b32.xlu0 %v579, 98
        %v2190 = vpop.permute.xlu0 %2189
        %2191 = vrot.lane.b32.xlu0 %v585, 98
        %v2192 = vpop.permute.xlu0 %2191
        %2193 = vrot.lane.b32.xlu0 %v654, 98
        %v2194 = vpop.permute.xlu0 %2193
        %2195 = vrot.lane.b32.xlu0 %v660, 98
        %v2196 = vpop.permute.xlu0 %2195
        %2197 = vrot.lane.b32.xlu0 %v656, 98
        %v2198 = vpop.permute.xlu0 %2197
        %2199 = vrot.lane.b32.xlu0 %v662, 98
        %v2200 = vpop.permute.xlu0 %2199
        %vm2201 = vcmp.lt.s32.totalorder %v690, 98
        %v2202 = vsel %vm2201, %v2194, %v2198
        %v2203 = vsel %vm2201, %v2196, %v2200
        %v2204 = vsel %vm2201, %v2190, %v2194
        %v2205 = vsel %vm2201, %v2192, %v2196
        %v2206 = vsel %vm2201, %v2186, %v2190
        %v2207 = vsel %vm2201, %v2188, %v2192
        %v2208 = vsel %vm2201, %v2198, %v2186
        %v2209 = vsel %vm2201, %v2200, %v2188
        %s2210 = scalar_lea.vmem [#allocation4], 1536
        %v2211 = vld [vmem:[%s2210] sm:$0xff]
        %v2212 = vld [vmem:[%s2210 + $0x8] sm:$0xff]
        %v2213 = vld [vmem:[%s2210 + $0x10] sm:$0xff]
        %v2214 = vld [vmem:[%s2210 + $0x18] sm:$0xff]
        %v2215 = vld [vmem:[%s2210 + $0x20] sm:$0xff]
        %v2216 = vld [vmem:[%s2210 + $0x28] sm:$0xff]
        %v2217 = vld [vmem:[%s2210 + $0x30] sm:$0xff]
        %v2218 = vld [vmem:[%s2210 + $0x38] sm:$0xff]
        %v2219 = vmul.f32 %v2211, %v2206
        %v2220 = vmul.f32 %v2212, %v2204
        %v2221 = vmul.f32 %v2213, %v2202
        %v2222 = vmul.f32 %v2214, %v2208
        %v2223 = vmul.f32 %v2215, %v2207
        %v2224 = vmul.f32 %v2216, %v2205
        %v2225 = vmul.f32 %v2217, %v2203
        %v2226 = vmul.f32 %v2218, %v2209
        %v2227 = vadd.f32 %v2177, %v2219
        %v2228 = vadd.f32 %v2178, %v2220
        %v2229 = vadd.f32 %v2179, %v2221
        %v2230 = vadd.f32 %v2180, %v2222
        %v2231 = vadd.f32 %v2181, %v2223
        %v2232 = vadd.f32 %v2182, %v2224
        %v2233 = vadd.f32 %v2183, %v2225
        %v2234 = vadd.f32 %v2184, %v2226
        %2235 = vrot.lane.b32.xlu0 %v577, 96
        %v2236 = vpop.permute.xlu0 %2235
        %2237 = vrot.lane.b32.xlu0 %v583, 96
        %v2238 = vpop.permute.xlu0 %2237
        %2239 = vrot.lane.b32.xlu0 %v579, 96
        %v2240 = vpop.permute.xlu0 %2239
        %2241 = vrot.lane.b32.xlu0 %v585, 96
        %v2242 = vpop.permute.xlu0 %2241
        %2243 = vrot.lane.b32.xlu0 %v654, 96
        %v2244 = vpop.permute.xlu0 %2243
        %2245 = vrot.lane.b32.xlu0 %v660, 96
        %v2246 = vpop.permute.xlu0 %2245
        %2247 = vrot.lane.b32.xlu0 %v656, 96
        %v2248 = vpop.permute.xlu0 %2247
        %2249 = vrot.lane.b32.xlu0 %v662, 96
        %v2250 = vpop.permute.xlu0 %2249
        %vm2251 = vcmp.lt.s32.totalorder %v690, 96
        %v2252 = vsel %vm2251, %v2244, %v2248
        %v2253 = vsel %vm2251, %v2246, %v2250
        %v2254 = vsel %vm2251, %v2240, %v2244
        %v2255 = vsel %vm2251, %v2242, %v2246
        %v2256 = vsel %vm2251, %v2236, %v2240
        %v2257 = vsel %vm2251, %v2238, %v2242
        %v2258 = vsel %vm2251, %v2248, %v2236
        %v2259 = vsel %vm2251, %v2250, %v2238
        %s2260 = scalar_lea.vmem [#allocation4], 1600
        %v2261 = vld [vmem:[%s2260] sm:$0xff]
        %v2262 = vld [vmem:[%s2260 + $0x8] sm:$0xff]
        %v2263 = vld [vmem:[%s2260 + $0x10] sm:$0xff]
        %v2264 = vld [vmem:[%s2260 + $0x18] sm:$0xff]
        %v2265 = vld [vmem:[%s2260 + $0x20] sm:$0xff]
        %v2266 = vld [vmem:[%s2260 + $0x28] sm:$0xff]
        %v2267 = vld [vmem:[%s2260 + $0x30] sm:$0xff]
        %v2268 = vld [vmem:[%s2260 + $0x38] sm:$0xff]
        %v2269 = vmul.f32 %v2261, %v2256
        %v2270 = vmul.f32 %v2262, %v2254
        %v2271 = vmul.f32 %v2263, %v2252
        %v2272 = vmul.f32 %v2264, %v2258
        %v2273 = vmul.f32 %v2265, %v2257
        %v2274 = vmul.f32 %v2266, %v2255
        %v2275 = vmul.f32 %v2267, %v2253
        %v2276 = vmul.f32 %v2268, %v2259
        %v2277 = vadd.f32 %v2227, %v2269
        %v2278 = vadd.f32 %v2228, %v2270
        %v2279 = vadd.f32 %v2229, %v2271
        %v2280 = vadd.f32 %v2230, %v2272
        %v2281 = vadd.f32 %v2231, %v2273
        %v2282 = vadd.f32 %v2232, %v2274
        %v2283 = vadd.f32 %v2233, %v2275
        %v2284 = vadd.f32 %v2234, %v2276
        %2285 = vrot.lane.b32.xlu0 %v577, 94
        %v2286 = vpop.permute.xlu0 %2285
        %2287 = vrot.lane.b32.xlu0 %v583, 94
        %v2288 = vpop.permute.xlu0 %2287
        %2289 = vrot.lane.b32.xlu0 %v579, 94
        %v2290 = vpop.permute.xlu0 %2289
        %2291 = vrot.lane.b32.xlu0 %v585, 94
        %v2292 = vpop.permute.xlu0 %2291
        %2293 = vrot.lane.b32.xlu0 %v654, 94
        %v2294 = vpop.permute.xlu0 %2293
        %2295 = vrot.lane.b32.xlu0 %v660, 94
        %v2296 = vpop.permute.xlu0 %2295
        %2297 = vrot.lane.b32.xlu0 %v656, 94
        %v2298 = vpop.permute.xlu0 %2297
        %2299 = vrot.lane.b32.xlu0 %v662, 94
        %v2300 = vpop.permute.xlu0 %2299
        %vm2301 = vcmp.lt.s32.totalorder %v690, 94
        %v2302 = vsel %vm2301, %v2294, %v2298
        %v2303 = vsel %vm2301, %v2296, %v2300
        %v2304 = vsel %vm2301, %v2290, %v2294
        %v2305 = vsel %vm2301, %v2292, %v2296
        %v2306 = vsel %vm2301, %v2286, %v2290
        %v2307 = vsel %vm2301, %v2288, %v2292
        %v2308 = vsel %vm2301, %v2298, %v2286
        %v2309 = vsel %vm2301, %v2300, %v2288
        %s2310 = scalar_lea.vmem [#allocation4], 1664
        %v2311 = vld [vmem:[%s2310] sm:$0xff]
        %v2312 = vld [vmem:[%s2310 + $0x8] sm:$0xff]
        %v2313 = vld [vmem:[%s2310 + $0x10] sm:$0xff]
        %v2314 = vld [vmem:[%s2310 + $0x18] sm:$0xff]
        %v2315 = vld [vmem:[%s2310 + $0x20] sm:$0xff]
        %v2316 = vld [vmem:[%s2310 + $0x28] sm:$0xff]
        %v2317 = vld [vmem:[%s2310 + $0x30] sm:$0xff]
        %v2318 = vld [vmem:[%s2310 + $0x38] sm:$0xff]
        %v2319 = vmul.f32 %v2311, %v2306
        %v2320 = vmul.f32 %v2312, %v2304
        %v2321 = vmul.f32 %v2313, %v2302
        %v2322 = vmul.f32 %v2314, %v2308
        %v2323 = vmul.f32 %v2315, %v2307
        %v2324 = vmul.f32 %v2316, %v2305
        %v2325 = vmul.f32 %v2317, %v2303
        %v2326 = vmul.f32 %v2318, %v2309
        %v2327 = vadd.f32 %v2277, %v2319
        %v2328 = vadd.f32 %v2278, %v2320
        %v2329 = vadd.f32 %v2279, %v2321
        %v2330 = vadd.f32 %v2280, %v2322
        %v2331 = vadd.f32 %v2281, %v2323
        %v2332 = vadd.f32 %v2282, %v2324
        %v2333 = vadd.f32 %v2283, %v2325
        %v2334 = vadd.f32 %v2284, %v2326
        %v2335 = vmax.f32 %v2327, 0.0
        %v2336 = vmax.f32 %v2328, 0.0
        %v2337 = vmax.f32 %v2329, 0.0
        %v2338 = vmax.f32 %v2330, 0.0
        %v2339 = vmax.f32 %v2331, 0.0
        %v2340 = vmax.f32 %v2332, 0.0
        %v2341 = vmax.f32 %v2333, 0.0
        %v2342 = vmax.f32 %v2334, 0.0
        %s2343 = scalar_lea.vmem [#allocation6], 48
        %v2344 = vld [vmem:[%s2343] sm:$0xff]
        %v2345 = vld [vmem:[%s2343 + $0x8] sm:$0xff]
        %s2346 = scalar_lea.vmem [#allocation2], 896
        %v2347 = vld [vmem:[%s2346] sm:$0xff]
        %v2348 = vld [vmem:[%s2346 + $0x8] sm:$0xff]
        %v2349 = vld [vmem:[%s2346 + $0x10] sm:$0xff]
        %v2350 = vld [vmem:[%s2346 + $0x18] sm:$0xff]
        %v2351 = vld [vmem:[%s2346 + $0x20] sm:$0xff]
        %v2352 = vld [vmem:[%s2346 + $0x28] sm:$0xff]
        %v2353 = vld [vmem:[%s2346 + $0x30] sm:$0xff]
        %v2354 = vld [vmem:[%s2346 + $0x38] sm:$0xff]
        %v2356 = vsel %vm503, %v2344, 0
        %v2359 = vsel %vm503, %v2345, 0
        %2361 = vmatprep.subr.mxu0 %v2336
        %2362 = vmatpush1.msra.mxu0 %v2335
        %2363 = vmatprep.subr.mxu0 %v2340
        %2364 = vmatpush1.msra.mxu0 %v2339
        %2365 = vmatprep.subr.mxu0 0.0
        %2366 = vmatpush1.msra.mxu0 0.0
        %2367 = vmatprep.subr.mxu0 0.0
        %2368 = vmatpush1.msra.mxu0 0.0
        %2369 = vmatprep.subr.mxu0 0.0
        %2370 = vmatpush1.msra.mxu0 0.0
        %2371 = vmatprep.subr.mxu0 0.0
        %2372 = vmatpush1.msra.mxu0 0.0
        %2373 = vmatprep.subr.mxu0 0.0
        %2374 = vmatpush1.msra.mxu0 0.0
        %2375 = vmatprep.subr.mxu0 0.0
        %2376 = vmatpush1.msra.mxu0 0.0
        %2377 = vmatprep.subr.mxu0 0.0
        %2378 = vmatpush1.msra.mxu0 0.0
        %2379 = vmatprep.subr.mxu0 0.0
        %2380 = vmatpush1.msra.mxu0 0.0
        %2381 = vmatprep.subr.mxu0 0.0
        %2382 = vmatpush1.msra.mxu0 0.0
        %2383 = vmatprep.subr.mxu0 0.0
        %2384 = vmatpush1.msra.mxu0 0.0
        %2385 = vmatprep.subr.mxu0 0.0
        %2386 = vmatpush1.msra.mxu0 0.0
        %2387 = vmatprep.subr.mxu0 0.0
        %2388 = vmatpush1.msra.mxu0 0.0
        %2389 = vmatprep.subr.mxu0 0.0
        %2390 = vmatpush1.msra.mxu0 0.0
        %2391 = vmatprep.subr.mxu0 0.0
        %2392 = vmatpush1.msra.mxu0 0.0
        %2393 = vmatprep.subr.mxu0 0.0
        %2394 = vmatpush1.msra.mxu0 0.0
        %2395 = vmatprep.subr.mxu0 0.0
        %2396 = vmatpush1.msra.mxu0 0.0
        %2397 = vmatprep.subr.mxu0 0.0
        %2398 = vmatpush1.msra.mxu0 0.0
        %2399 = vmatprep.subr.mxu0 0.0
        %2400 = vmatpush1.msra.mxu0 0.0
        %2401 = vmatprep.subr.mxu0 0.0
        %2402 = vmatpush1.msra.mxu0 0.0
        %2403 = vmatprep.subr.mxu0 0.0
        %2404 = vmatpush1.msra.mxu0 0.0
        %2405 = vmatprep.subr.mxu0 0.0
        %2406 = vmatpush1.msra.mxu0 0.0
        %2407 = vmatprep.subr.mxu0 0.0
        %2408 = vmatpush1.msra.mxu0 0.0
        %2409 = vmatprep.subr.mxu0 0.0
        %2410 = vmatpush1.msra.mxu0 0.0
        %2411 = vmatprep.subr.mxu0 0.0
        %2412 = vmatpush1.msra.mxu0 0.0
        %2413 = vmatprep.subr.mxu0 0.0
        %2414 = vmatpush1.msra.mxu0 0.0
        %2415 = vmatprep.subr.mxu0 0.0
        %2416 = vmatpush1.msra.mxu0 0.0
        %2417 = vmatprep.subr.mxu0 0.0
        %2418 = vmatpush1.msra.mxu0 0.0
        %2419 = vmatprep.subr.mxu0 0.0
        %2420 = vmatpush1.msra.mxu0 0.0
        %2421 = vmatprep.subr.mxu0 0.0
        %2422 = vmatpush1.msra.mxu0 0.0
        %2423 = vmatprep.subr.mxu0 0.0
        %2424 = vmatpush1.msra.mxu0 0.0
        %2425 = vmatprep.mubr.f32.mxu0 0.0
        %2426 = vmatmul.mubr.f32.gmra.mrb[0].mxu0 %v2356
        %v2427 = vpop.f32.mrb[0].mxu0
        %v2428 = vadd.f32 %v2347, %v2427
        %v2429 = vpop.f32.mrb[0].mxu0
        %v2430 = vadd.f32 %v2348, %v2429
        %2431 = vmatprep.mubr.f32.mxu0 0.0
        %2432 = vmatmul.mubr.f32.gmra.mrb[0].mxu0 %v2359
        %v2433 = vpop.f32.mrb[0].mxu0
        %v2434 = vadd.f32 %v2351, %v2433
        %v2435 = vpop.f32.mrb[0].mxu0
        %v2436 = vadd.f32 %v2352, %v2435
        %2437 = vdwg.mxu0
        %2438 = vmatprep.subr.mxu0 %v2338
        %2439 = vmatpush1.msra.mxu0 %v2337
        %2440 = vmatprep.subr.mxu0 %v2342
        %2441 = vmatpush1.msra.mxu0 %v2341
        %2442 = vmatprep.subr.mxu0 0.0
        %2443 = vmatpush1.msra.mxu0 0.0
        %2444 = vmatprep.subr.mxu0 0.0
        %2445 = vmatpush1.msra.mxu0 0.0
        %2446 = vmatprep.subr.mxu0 0.0
        %2447 = vmatpush1.msra.mxu0 0.0
        %2448 = vmatprep.subr.mxu0 0.0
        %2449 = vmatpush1.msra.mxu0 0.0
        %2450 = vmatprep.subr.mxu0 0.0
        %2451 = vmatpush1.msra.mxu0 0.0
        %2452 = vmatprep.subr.mxu0 0.0
        %2453 = vmatpush1.msra.mxu0 0.0
        %2454 = vmatprep.subr.mxu0 0.0
        %2455 = vmatpush1.msra.mxu0 0.0
        %2456 = vmatprep.subr.mxu0 0.0
        %2457 = vmatpush1.msra.mxu0 0.0
        %2458 = vmatprep.subr.mxu0 0.0
        %2459 = vmatpush1.msra.mxu0 0.0
        %2460 = vmatprep.subr.mxu0 0.0
        %2461 = vmatpush1.msra.mxu0 0.0
        %2462 = vmatprep.subr.mxu0 0.0
        %2463 = vmatpush1.msra.mxu0 0.0
        %2464 = vmatprep.subr.mxu0 0.0
        %2465 = vmatpush1.msra.mxu0 0.0
        %2466 = vmatprep.subr.mxu0 0.0
        %2467 = vmatpush1.msra.mxu0 0.0
        %2468 = vmatprep.subr.mxu0 0.0
        %2469 = vmatpush1.msra.mxu0 0.0
        %2470 = vmatprep.subr.mxu0 0.0
        %2471 = vmatpush1.msra.mxu0 0.0
        %2472 = vmatprep.subr.mxu0 0.0
        %2473 = vmatpush1.msra.mxu0 0.0
        %2474 = vmatprep.subr.mxu0 0.0
        %2475 = vmatpush1.msra.mxu0 0.0
        %2476 = vmatprep.subr.mxu0 0.0
        %2477 = vmatpush1.msra.mxu0 0.0
        %2478 = vmatprep.subr.mxu0 0.0
        %2479 = vmatpush1.msra.mxu0 0.0
        %2480 = vmatprep.subr.mxu0 0.0
        %2481 = vmatpush1.msra.mxu0 0.0
        %2482 = vmatprep.subr.mxu0 0.0
        %2483 = vmatpush1.msra.mxu0 0.0
        %2484 = vmatprep.subr.mxu0 0.0
        %2485 = vmatpush1.msra.mxu0 0.0
        %2486 = vmatprep.subr.mxu0 0.0
        %2487 = vmatpush1.msra.mxu0 0.0
        %2488 = vmatprep.subr.mxu0 0.0
        %2489 = vmatpush1.msra.mxu0 0.0
        %2490 = vmatprep.subr.mxu0 0.0
        %2491 = vmatpush1.msra.mxu0 0.0
        %2492 = vmatprep.subr.mxu0 0.0
        %2493 = vmatpush1.msra.mxu0 0.0
        %2494 = vmatprep.subr.mxu0 0.0
        %2495 = vmatpush1.msra.mxu0 0.0
        %2496 = vmatprep.subr.mxu0 0.0
        %2497 = vmatpush1.msra.mxu0 0.0
        %2498 = vmatprep.subr.mxu0 0.0
        %2499 = vmatpush1.msra.mxu0 0.0
        %2500 = vmatprep.subr.mxu0 0.0
        %2501 = vmatpush1.msra.mxu0 0.0
        %2502 = vmatprep.mubr.f32.mxu0 0.0
        %2503 = vmatmul.mubr.f32.gmra.mrb[0].mxu0 %v2356
        %v2504 = vpop.f32.mrb[0].mxu0
        %v2505 = vadd.f32 %v2349, %v2504
        %v2506 = vpop.f32.mrb[0].mxu0
        %v2507 = vadd.f32 %v2350, %v2506
        %2508 = vmatprep.mubr.f32.mxu0 0.0
        %2509 = vmatmul.mubr.f32.gmra.mrb[0].mxu0 %v2359
        %v2510 = vpop.f32.mrb[0].mxu0
        %v2511 = vadd.f32 %v2353, %v2510
        %v2512 = vpop.f32.mrb[0].mxu0
        %v2513 = vadd.f32 %v2354, %v2512
        %2514 = vdwg.mxu0
        %v2515 = vmax.f32 %v2428, 0.0
        %v2516 = vmax.f32 %v2430, 0.0
        %v2517 = vmax.f32 %v2505, 0.0
        %v2518 = vmax.f32 %v2507, 0.0
        %v2519 = vmax.f32 %v2434, 0.0
        %v2520 = vmax.f32 %v2436, 0.0
        %v2521 = vmax.f32 %v2511, 0.0
        %v2522 = vmax.f32 %v2513, 0.0
        %s2523 = scalar_lea.vmem [#allocation2], 448
        %v2524 = vld [vmem:[%s2523] sm:$0xff]
        %v2525 = vld [vmem:[%s2523 + $0x8] sm:$0xff]
        %v2526 = vld [vmem:[%s2523 + $0x10] sm:$0xff]
        %v2527 = vld [vmem:[%s2523 + $0x18] sm:$0xff]
        %v2528 = vld [vmem:[%s2523 + $0x20] sm:$0xff]
        %v2529 = vld [vmem:[%s2523 + $0x28] sm:$0xff]
        %v2530 = vld [vmem:[%s2523 + $0x30] sm:$0xff]
        %v2531 = vld [vmem:[%s2523 + $0x38] sm:$0xff]
        %2532 = vrot.lane.b32.xlu0 %v2515, 17
        %v2533 = vpop.permute.xlu0 %2532
        %2534 = vrot.lane.b32.xlu0 %v2519, 17
        %v2535 = vpop.permute.xlu0 %2534
        %2536 = vrot.lane.b32.xlu0 %v2516, 17
        %v2537 = vpop.permute.xlu0 %2536
        %2538 = vrot.lane.b32.xlu0 %v2520, 17
        %v2539 = vpop.permute.xlu0 %2538
        %2540 = vrot.lane.b32.xlu0 %v2517, 17
        %v2541 = vpop.permute.xlu0 %2540
        %2542 = vrot.lane.b32.xlu0 %v2521, 17
        %v2543 = vpop.permute.xlu0 %2542
        %2544 = vrot.lane.b32.xlu0 %v2518, 17
        %v2545 = vpop.permute.xlu0 %2544
        %2546 = vrot.lane.b32.xlu0 %v2522, 17
        %v2547 = vpop.permute.xlu0 %2546
        %v2548 = vsel %vm691, %v2541, %v2545
        %v2549 = vsel %vm691, %v2543, %v2547
        %v2550 = vsel %vm691, %v2537, %v2541
        %v2551 = vsel %vm691, %v2539, %v2543
        %v2552 = vsel %vm691, %v2533, %v2537
        %v2553 = vsel %vm691, %v2535, %v2539
        %v2554 = vsel %vm691, %v2545, %v2533
        %v2555 = vsel %vm691, %v2547, %v2535
        %s2556 = scalar_lea.vmem [#allocation4], 1728
        %v2557 = vld [vmem:[%s2556] sm:$0xff]
        %v2558 = vld [vmem:[%s2556 + $0x8] sm:$0xff]
        %v2559 = vld [vmem:[%s2556 + $0x10] sm:$0xff]
        %v2560 = vld [vmem:[%s2556 + $0x18] sm:$0xff]
        %v2561 = vld [vmem:[%s2556 + $0x20] sm:$0xff]
        %v2562 = vld [vmem:[%s2556 + $0x28] sm:$0xff]
        %v2563 = vld [vmem:[%s2556 + $0x30] sm:$0xff]
        %v2564 = vld [vmem:[%s2556 + $0x38] sm:$0xff]
        %v2565 = vmul.f32 %v2557, %v2554
        %v2566 = vmul.f32 %v2558, %v2552
        %v2567 = vmul.f32 %v2559, %v2550
        %v2568 = vmul.f32 %v2560, %v2548
        %v2569 = vmul.f32 %v2561, %v2555
        %v2570 = vmul.f32 %v2562, %v2553
        %v2571 = vmul.f32 %v2563, %v2551
        %v2572 = vmul.f32 %v2564, %v2549
        %v2573 = vadd.f32 %v2524, %v2565
        %v2574 = vadd.f32 %v2525, %v2566
        %v2575 = vadd.f32 %v2526, %v2567
        %v2576 = vadd.f32 %v2527, %v2568
        %v2577 = vadd.f32 %v2528, %v2569
        %v2578 = vadd.f32 %v2529, %v2570
        %v2579 = vadd.f32 %v2530, %v2571
        %v2580 = vadd.f32 %v2531, %v2572
        %2581 = vrot.lane.b32.xlu0 %v2515, 16
        %v2582 = vpop.permute.xlu0 %2581
        %2583 = vrot.lane.b32.xlu0 %v2519, 16
        %v2584 = vpop.permute.xlu0 %2583
        %2585 = vrot.lane.b32.xlu0 %v2516, 16
        %v2586 = vpop.permute.xlu0 %2585
        %2587 = vrot.lane.b32.xlu0 %v2520, 16
        %v2588 = vpop.permute.xlu0 %2587
        %2589 = vrot.lane.b32.xlu0 %v2517, 16
        %v2590 = vpop.permute.xlu0 %2589
        %2591 = vrot.lane.b32.xlu0 %v2521, 16
        %v2592 = vpop.permute.xlu0 %2591
        %2593 = vrot.lane.b32.xlu0 %v2518, 16
        %v2594 = vpop.permute.xlu0 %2593
        %2595 = vrot.lane.b32.xlu0 %v2522, 16
        %v2596 = vpop.permute.xlu0 %2595
        %v2597 = vsel %vm740, %v2590, %v2594
        %v2598 = vsel %vm740, %v2592, %v2596
        %v2599 = vsel %vm740, %v2586, %v2590
        %v2600 = vsel %vm740, %v2588, %v2592
        %v2601 = vsel %vm740, %v2582, %v2586
        %v2602 = vsel %vm740, %v2584, %v2588
        %v2603 = vsel %vm740, %v2594, %v2582
        %v2604 = vsel %vm740, %v2596, %v2584
        %s2605 = scalar_lea.vmem [#allocation4], 1792
        %v2606 = vld [vmem:[%s2605] sm:$0xff]
        %v2607 = vld [vmem:[%s2605 + $0x8] sm:$0xff]
        %v2608 = vld [vmem:[%s2605 + $0x10] sm:$0xff]
        %v2609 = vld [vmem:[%s2605 + $0x18] sm:$0xff]
        %v2610 = vld [vmem:[%s2605 + $0x20] sm:$0xff]
        %v2611 = vld [vmem:[%s2605 + $0x28] sm:$0xff]
        %v2612 = vld [vmem:[%s2605 + $0x30] sm:$0xff]
        %v2613 = vld [vmem:[%s2605 + $0x38] sm:$0xff]
        %v2614 = vmul.f32 %v2606, %v2603
        %v2615 = vmul.f32 %v2607, %v2601
        %v2616 = vmul.f32 %v2608, %v2599
        %v2617 = vmul.f32 %v2609, %v2597
        %v2618 = vmul.f32 %v2610, %v2604
        %v2619 = vmul.f32 %v2611, %v2602
        %v2620 = vmul.f32 %v2612, %v2600
        %v2621 = vmul.f32 %v2613, %v2598
        %v2622 = vadd.f32 %v2573, %v2614
        %v2623 = vadd.f32 %v2574, %v2615
        %v2624 = vadd.f32 %v2575, %v2616
        %v2625 = vadd.f32 %v2576, %v2617
        %v2626 = vadd.f32 %v2577, %v2618
        %v2627 = vadd.f32 %v2578, %v2619
        %v2628 = vadd.f32 %v2579, %v2620
        %v2629 = vadd.f32 %v2580, %v2621
        %2630 = vrot.lane.b32.xlu0 %v2515, 15
        %v2631 = vpop.permute.xlu0 %2630
        %2632 = vrot.lane.b32.xlu0 %v2519, 15
        %v2633 = vpop.permute.xlu0 %2632
        %2634 = vrot.lane.b32.xlu0 %v2516, 15
        %v2635 = vpop.permute.xlu0 %2634
        %2636 = vrot.lane.b32.xlu0 %v2520, 15
        %v2637 = vpop.permute.xlu0 %2636
        %2638 = vrot.lane.b32.xlu0 %v2517, 15
        %v2639 = vpop.permute.xlu0 %2638
        %2640 = vrot.lane.b32.xlu0 %v2521, 15
        %v2641 = vpop.permute.xlu0 %2640
        %2642 = vrot.lane.b32.xlu0 %v2518, 15
        %v2643 = vpop.permute.xlu0 %2642
        %2644 = vrot.lane.b32.xlu0 %v2522, 15
        %v2645 = vpop.permute.xlu0 %2644
        %v2646 = vsel %vm790, %v2639, %v2643
        %v2647 = vsel %vm790, %v2641, %v2645
        %v2648 = vsel %vm790, %v2635, %v2639
        %v2649 = vsel %vm790, %v2637, %v2641
        %v2650 = vsel %vm790, %v2631, %v2635
        %v2651 = vsel %vm790, %v2633, %v2637
        %v2652 = vsel %vm790, %v2643, %v2631
        %v2653 = vsel %vm790, %v2645, %v2633
        %s2654 = scalar_lea.vmem [#allocation4], 1856
        %v2655 = vld [vmem:[%s2654] sm:$0xff]
        %v2656 = vld [vmem:[%s2654 + $0x8] sm:$0xff]
        %v2657 = vld [vmem:[%s2654 + $0x10] sm:$0xff]
        %v2658 = vld [vmem:[%s2654 + $0x18] sm:$0xff]
        %v2659 = vld [vmem:[%s2654 + $0x20] sm:$0xff]
        %v2660 = vld [vmem:[%s2654 + $0x28] sm:$0xff]
        %v2661 = vld [vmem:[%s2654 + $0x30] sm:$0xff]
        %v2662 = vld [vmem:[%s2654 + $0x38] sm:$0xff]
        %v2663 = vmul.f32 %v2655, %v2652
        %v2664 = vmul.f32 %v2656, %v2650
        %v2665 = vmul.f32 %v2657, %v2648
        %v2666 = vmul.f32 %v2658, %v2646
        %v2667 = vmul.f32 %v2659, %v2653
        %v2668 = vmul.f32 %v2660, %v2651
        %v2669 = vmul.f32 %v2661, %v2649
        %v2670 = vmul.f32 %v2662, %v2647
        %v2671 = vadd.f32 %v2622, %v2663
        %v2672 = vadd.f32 %v2623, %v2664
        %v2673 = vadd.f32 %v2624, %v2665
        %v2674 = vadd.f32 %v2625, %v2666
        %v2675 = vadd.f32 %v2626, %v2667
        %v2676 = vadd.f32 %v2627, %v2668
        %v2677 = vadd.f32 %v2628, %v2669
        %v2678 = vadd.f32 %v2629, %v2670
        %2679 = vrot.lane.b32.xlu0 %v2515, 1
        %v2680 = vpop.permute.xlu0 %2679
        %2681 = vrot.lane.b32.xlu0 %v2519, 1
        %v2682 = vpop.permute.xlu0 %2681
        %2683 = vrot.lane.b32.xlu0 %v2516, 1
        %v2684 = vpop.permute.xlu0 %2683
        %2685 = vrot.lane.b32.xlu0 %v2520, 1
        %v2686 = vpop.permute.xlu0 %2685
        %2687 = vrot.lane.b32.xlu0 %v2517, 1
        %v2688 = vpop.permute.xlu0 %2687
        %2689 = vrot.lane.b32.xlu0 %v2521, 1
        %v2690 = vpop.permute.xlu0 %2689
        %2691 = vrot.lane.b32.xlu0 %v2518, 1
        %v2692 = vpop.permute.xlu0 %2691
        %2693 = vrot.lane.b32.xlu0 %v2522, 1
        %v2694 = vpop.permute.xlu0 %2693
        %v2695 = vsel %vm840, %v2688, %v2692
        %v2696 = vsel %vm840, %v2690, %v2694
        %v2697 = vsel %vm840, %v2684, %v2688
        %v2698 = vsel %vm840, %v2686, %v2690
        %v2699 = vsel %vm840, %v2680, %v2684
        %v2700 = vsel %vm840, %v2682, %v2686
        %v2701 = vsel %vm840, %v2692, %v2680
        %v2702 = vsel %vm840, %v2694, %v2682
        %s2703 = scalar_lea.vmem [#allocation4], 1920
        %v2704 = vld [vmem:[%s2703] sm:$0xff]
        %v2705 = vld [vmem:[%s2703 + $0x8] sm:$0xff]
        %v2706 = vld [vmem:[%s2703 + $0x10] sm:$0xff]
        %v2707 = vld [vmem:[%s2703 + $0x18] sm:$0xff]
        %v2708 = vld [vmem:[%s2703 + $0x20] sm:$0xff]
        %v2709 = vld [vmem:[%s2703 + $0x28] sm:$0xff]
        %v2710 = vld [vmem:[%s2703 + $0x30] sm:$0xff]
        %v2711 = vld [vmem:[%s2703 + $0x38] sm:$0xff]
        %v2712 = vmul.f32 %v2704, %v2701
        %v2713 = vmul.f32 %v2705, %v2699
        %v2714 = vmul.f32 %v2706, %v2697
        %v2715 = vmul.f32 %v2707, %v2695
        %v2716 = vmul.f32 %v2708, %v2702
        %v2717 = vmul.f32 %v2709, %v2700
        %v2718 = vmul.f32 %v2710, %v2698
        %v2719 = vmul.f32 %v2711, %v2696
        %v2720 = vadd.f32 %v2671, %v2712
        %v2721 = vadd.f32 %v2672, %v2713
        %v2722 = vadd.f32 %v2673, %v2714
        %v2723 = vadd.f32 %v2674, %v2715
        %v2724 = vadd.f32 %v2675, %v2716
        %v2725 = vadd.f32 %v2676, %v2717
        %v2726 = vadd.f32 %v2677, %v2718
        %v2727 = vadd.f32 %v2678, %v2719
        %s2728 = scalar_lea.vmem [#allocation4], 1984
        %v2729 = vld [vmem:[%s2728] sm:$0xff]
        %v2730 = vld [vmem:[%s2728 + $0x8] sm:$0xff]
        %v2731 = vld [vmem:[%s2728 + $0x10] sm:$0xff]
        %v2732 = vld [vmem:[%s2728 + $0x18] sm:$0xff]
        %v2733 = vld [vmem:[%s2728 + $0x20] sm:$0xff]
        %v2734 = vld [vmem:[%s2728 + $0x28] sm:$0xff]
        %v2735 = vld [vmem:[%s2728 + $0x30] sm:$0xff]
        %v2736 = vld [vmem:[%s2728 + $0x38] sm:$0xff]
        %v2737 = vmul.f32 %v2729, %v2515
        %v2738 = vmul.f32 %v2730, %v2516
        %v2739 = vmul.f32 %v2731, %v2517
        %v2740 = vmul.f32 %v2732, %v2518
        %v2741 = vmul.f32 %v2733, %v2519
        %v2742 = vmul.f32 %v2734, %v2520
        %v2743 = vmul.f32 %v2735, %v2521
        %v2744 = vmul.f32 %v2736, %v2522
        %v2745 = vadd.f32 %v2720, %v2737
        %v2746 = vadd.f32 %v2721, %v2738
        %v2747 = vadd.f32 %v2722, %v2739
        %v2748 = vadd.f32 %v2723, %v2740
        %v2749 = vadd.f32 %v2724, %v2741
        %v2750 = vadd.f32 %v2725, %v2742
        %v2751 = vadd.f32 %v2726, %v2743
        %v2752 = vadd.f32 %v2727, %v2744
        %2753 = vrot.lane.b32.xlu0 %v2515, 127
        %v2754 = vpop.permute.xlu0 %2753
        %2755 = vrot.lane.b32.xlu0 %v2519, 127
        %v2756 = vpop.permute.xlu0 %2755
        %2757 = vrot.lane.b32.xlu0 %v2516, 127
        %v2758 = vpop.permute.xlu0 %2757
        %2759 = vrot.lane.b32.xlu0 %v2520, 127
        %v2760 = vpop.permute.xlu0 %2759
        %2761 = vrot.lane.b32.xlu0 %v2517, 127
        %v2762 = vpop.permute.xlu0 %2761
        %2763 = vrot.lane.b32.xlu0 %v2521, 127
        %v2764 = vpop.permute.xlu0 %2763
        %2765 = vrot.lane.b32.xlu0 %v2518, 127
        %v2766 = vpop.permute.xlu0 %2765
        %2767 = vrot.lane.b32.xlu0 %v2522, 127
        %v2768 = vpop.permute.xlu0 %2767
        %v2769 = vsel %vm915, %v2762, %v2766
        %v2770 = vsel %vm915, %v2764, %v2768
        %v2771 = vsel %vm915, %v2758, %v2762
        %v2772 = vsel %vm915, %v2760, %v2764
        %v2773 = vsel %vm915, %v2754, %v2758
        %v2774 = vsel %vm915, %v2756, %v2760
        %v2775 = vsel %vm915, %v2766, %v2754
        %v2776 = vsel %vm915, %v2768, %v2756
        %s2777 = scalar_lea.vmem [#allocation4], 2048
        %v2778 = vld [vmem:[%s2777] sm:$0xff]
        %v2779 = vld [vmem:[%s2777 + $0x8] sm:$0xff]
        %v2780 = vld [vmem:[%s2777 + $0x10] sm:$0xff]
        %v2781 = vld [vmem:[%s2777 + $0x18] sm:$0xff]
        %v2782 = vld [vmem:[%s2777 + $0x20] sm:$0xff]
        %v2783 = vld [vmem:[%s2777 + $0x28] sm:$0xff]
        %v2784 = vld [vmem:[%s2777 + $0x30] sm:$0xff]
        %v2785 = vld [vmem:[%s2777 + $0x38] sm:$0xff]
        %v2786 = vmul.f32 %v2778, %v2773
        %v2787 = vmul.f32 %v2779, %v2771
        %v2788 = vmul.f32 %v2780, %v2769
        %v2789 = vmul.f32 %v2781, %v2775
        %v2790 = vmul.f32 %v2782, %v2774
        %v2791 = vmul.f32 %v2783, %v2772
        %v2792 = vmul.f32 %v2784, %v2770
        %v2793 = vmul.f32 %v2785, %v2776
        %v2794 = vadd.f32 %v2745, %v2786
        %v2795 = vadd.f32 %v2746, %v2787
        %v2796 = vadd.f32 %v2747, %v2788
        %v2797 = vadd.f32 %v2748, %v2789
        %v2798 = vadd.f32 %v2749, %v2790
        %v2799 = vadd.f32 %v2750, %v2791
        %v2800 = vadd.f32 %v2751, %v2792
        %v2801 = vadd.f32 %v2752, %v2793
        %2802 = vrot.lane.b32.xlu0 %v2515, 113
        %v2803 = vpop.permute.xlu0 %2802
        %2804 = vrot.lane.b32.xlu0 %v2519, 113
        %v2805 = vpop.permute.xlu0 %2804
        %2806 = vrot.lane.b32.xlu0 %v2516, 113
        %v2807 = vpop.permute.xlu0 %2806
        %2808 = vrot.lane.b32.xlu0 %v2520, 113
        %v2809 = vpop.permute.xlu0 %2808
        %2810 = vrot.lane.b32.xlu0 %v2517, 113
        %v2811 = vpop.permute.xlu0 %2810
        %2812 = vrot.lane.b32.xlu0 %v2521, 113
        %v2813 = vpop.permute.xlu0 %2812
        %2814 = vrot.lane.b32.xlu0 %v2518, 113
        %v2815 = vpop.permute.xlu0 %2814
        %2816 = vrot.lane.b32.xlu0 %v2522, 113
        %v2817 = vpop.permute.xlu0 %2816
        %v2818 = vsel %vm965, %v2811, %v2815
        %v2819 = vsel %vm965, %v2813, %v2817
        %v2820 = vsel %vm965, %v2807, %v2811
        %v2821 = vsel %vm965, %v2809, %v2813
        %v2822 = vsel %vm965, %v2803, %v2807
        %v2823 = vsel %vm965, %v2805, %v2809
        %v2824 = vsel %vm965, %v2815, %v2803
        %v2825 = vsel %vm965, %v2817, %v2805
        %s2826 = scalar_lea.vmem [#allocation4], 2112
        %v2827 = vld [vmem:[%s2826] sm:$0xff]
        %v2828 = vld [vmem:[%s2826 + $0x8] sm:$0xff]
        %v2829 = vld [vmem:[%s2826 + $0x10] sm:$0xff]
        %v2830 = vld [vmem:[%s2826 + $0x18] sm:$0xff]
        %v2831 = vld [vmem:[%s2826 + $0x20] sm:$0xff]
        %v2832 = vld [vmem:[%s2826 + $0x28] sm:$0xff]
        %v2833 = vld [vmem:[%s2826 + $0x30] sm:$0xff]
        %v2834 = vld [vmem:[%s2826 + $0x38] sm:$0xff]
        %v2835 = vmul.f32 %v2827, %v2822
        %v2836 = vmul.f32 %v2828, %v2820
        %v2837 = vmul.f32 %v2829, %v2818
        %v2838 = vmul.f32 %v2830, %v2824
        %v2839 = vmul.f32 %v2831, %v2823
        %v2840 = vmul.f32 %v2832, %v2821
        %v2841 = vmul.f32 %v2833, %v2819
        %v2842 = vmul.f32 %v2834, %v2825
        %v2843 = vadd.f32 %v2794, %v2835
        %v2844 = vadd.f32 %v2795, %v2836
        %v2845 = vadd.f32 %v2796, %v2837
        %v2846 = vadd.f32 %v2797, %v2838
        %v2847 = vadd.f32 %v2798, %v2839
        %v2848 = vadd.f32 %v2799, %v2840
        %v2849 = vadd.f32 %v2800, %v2841
        %v2850 = vadd.f32 %v2801, %v2842
        %2851 = vrot.lane.b32.xlu0 %v2515, 112
        %v2852 = vpop.permute.xlu0 %2851
        %2853 = vrot.lane.b32.xlu0 %v2519, 112
        %v2854 = vpop.permute.xlu0 %2853
        %2855 = vrot.lane.b32.xlu0 %v2516, 112
        %v2856 = vpop.permute.xlu0 %2855
        %2857 = vrot.lane.b32.xlu0 %v2520, 112
        %v2858 = vpop.permute.xlu0 %2857
        %2859 = vrot.lane.b32.xlu0 %v2517, 112
        %v2860 = vpop.permute.xlu0 %2859
        %2861 = vrot.lane.b32.xlu0 %v2521, 112
        %v2862 = vpop.permute.xlu0 %2861
        %2863 = vrot.lane.b32.xlu0 %v2518, 112
        %v2864 = vpop.permute.xlu0 %2863
        %2865 = vrot.lane.b32.xlu0 %v2522, 112
        %v2866 = vpop.permute.xlu0 %2865
        %v2867 = vsel %vm1015, %v2860, %v2864
        %v2868 = vsel %vm1015, %v2862, %v2866
        %v2869 = vsel %vm1015, %v2856, %v2860
        %v2870 = vsel %vm1015, %v2858, %v2862
        %v2871 = vsel %vm1015, %v2852, %v2856
        %v2872 = vsel %vm1015, %v2854, %v2858
        %v2873 = vsel %vm1015, %v2864, %v2852
        %v2874 = vsel %vm1015, %v2866, %v2854
        %s2875 = scalar_lea.vmem [#allocation4], 2176
        %v2876 = vld [vmem:[%s2875] sm:$0xff]
        %v2877 = vld [vmem:[%s2875 + $0x8] sm:$0xff]
        %v2878 = vld [vmem:[%s2875 + $0x10] sm:$0xff]
        %v2879 = vld [vmem:[%s2875 + $0x18] sm:$0xff]
        %v2880 = vld [vmem:[%s2875 + $0x20] sm:$0xff]
        %v2881 = vld [vmem:[%s2875 + $0x28] sm:$0xff]
        %v2882 = vld [vmem:[%s2875 + $0x30] sm:$0xff]
        %v2883 = vld [vmem:[%s2875 + $0x38] sm:$0xff]
        %v2884 = vmul.f32 %v2876, %v2871
        %v2885 = vmul.f32 %v2877, %v2869
        %v2886 = vmul.f32 %v2878, %v2867
        %v2887 = vmul.f32 %v2879, %v2873
        %v2888 = vmul.f32 %v2880, %v2872
        %v2889 = vmul.f32 %v2881, %v2870
        %v2890 = vmul.f32 %v2882, %v2868
        %v2891 = vmul.f32 %v2883, %v2874
        %v2892 = vadd.f32 %v2843, %v2884
        %v2893 = vadd.f32 %v2844, %v2885
        %v2894 = vadd.f32 %v2845, %v2886
        %v2895 = vadd.f32 %v2846, %v2887
        %v2896 = vadd.f32 %v2847, %v2888
        %v2897 = vadd.f32 %v2848, %v2889
        %v2898 = vadd.f32 %v2849, %v2890
        %v2899 = vadd.f32 %v2850, %v2891
        %2900 = vrot.lane.b32.xlu0 %v2515, 111
        %v2901 = vpop.permute.xlu0 %2900
        %2902 = vrot.lane.b32.xlu0 %v2519, 111
        %v2903 = vpop.permute.xlu0 %2902
        %2904 = vrot.lane.b32.xlu0 %v2516, 111
        %v2905 = vpop.permute.xlu0 %2904
        %2906 = vrot.lane.b32.xlu0 %v2520, 111
        %v2907 = vpop.permute.xlu0 %2906
        %2908 = vrot.lane.b32.xlu0 %v2517, 111
        %v2909 = vpop.permute.xlu0 %2908
        %2910 = vrot.lane.b32.xlu0 %v2521, 111
        %v2911 = vpop.permute.xlu0 %2910
        %2912 = vrot.lane.b32.xlu0 %v2518, 111
        %v2913 = vpop.permute.xlu0 %2912
        %2914 = vrot.lane.b32.xlu0 %v2522, 111
        %v2915 = vpop.permute.xlu0 %2914
        %v2916 = vsel %vm1065, %v2909, %v2913
        %v2917 = vsel %vm1065, %v2911, %v2915
        %v2918 = vsel %vm1065, %v2905, %v2909
        %v2919 = vsel %vm1065, %v2907, %v2911
        %v2920 = vsel %vm1065, %v2901, %v2905
        %v2921 = vsel %vm1065, %v2903, %v2907
        %v2922 = vsel %vm1065, %v2913, %v2901
        %v2923 = vsel %vm1065, %v2915, %v2903
        %s2924 = scalar_lea.vmem [#allocation4], 2240
        %v2925 = vld [vmem:[%s2924] sm:$0xff]
        %v2926 = vld [vmem:[%s2924 + $0x8] sm:$0xff]
        %v2927 = vld [vmem:[%s2924 + $0x10] sm:$0xff]
        %v2928 = vld [vmem:[%s2924 + $0x18] sm:$0xff]
        %v2929 = vld [vmem:[%s2924 + $0x20] sm:$0xff]
        %v2930 = vld [vmem:[%s2924 + $0x28] sm:$0xff]
        %v2931 = vld [vmem:[%s2924 + $0x30] sm:$0xff]
        %v2932 = vld [vmem:[%s2924 + $0x38] sm:$0xff]
        %v2933 = vmul.f32 %v2925, %v2920
        %v2934 = vmul.f32 %v2926, %v2918
        %v2935 = vmul.f32 %v2927, %v2916
        %v2936 = vmul.f32 %v2928, %v2922
        %v2937 = vmul.f32 %v2929, %v2921
        %v2938 = vmul.f32 %v2930, %v2919
        %v2939 = vmul.f32 %v2931, %v2917
        %v2940 = vmul.f32 %v2932, %v2923
        %v2941 = vadd.f32 %v2892, %v2933
        %v2942 = vadd.f32 %v2893, %v2934
        %v2943 = vadd.f32 %v2894, %v2935
        %v2944 = vadd.f32 %v2895, %v2936
        %v2945 = vadd.f32 %v2896, %v2937
        %v2946 = vadd.f32 %v2897, %v2938
        %v2947 = vadd.f32 %v2898, %v2939
        %v2948 = vadd.f32 %v2899, %v2940
        %v2949 = vmax.f32 %v2941, 0.0
        %v2950 = vmax.f32 %v2942, 0.0
        %v2951 = vmax.f32 %v2943, 0.0
        %v2952 = vmax.f32 %v2944, 0.0
        %v2953 = vmax.f32 %v2945, 0.0
        %v2954 = vmax.f32 %v2946, 0.0
        %v2955 = vmax.f32 %v2947, 0.0
        %v2956 = vmax.f32 %v2948, 0.0
        %s2957 = scalar_lea.vmem [#allocation6], 64
        %v2958 = vld [vmem:[%s2957] sm:$0xff]
        %v2959 = vld [vmem:[%s2957 + $0x8] sm:$0xff]
        %s2960 = scalar_lea.vmem [#allocation2], 960
        %v2961 = vld [vmem:[%s2960] sm:$0xff]
        %v2962 = vld [vmem:[%s2960 + $0x8] sm:$0xff]
        %v2963 = vld [vmem:[%s2960 + $0x10] sm:$0xff]
        %v2964 = vld [vmem:[%s2960 + $0x18] sm:$0xff]
        %v2965 = vld [vmem:[%s2960 + $0x20] sm:$0xff]
        %v2966 = vld [vmem:[%s2960 + $0x28] sm:$0xff]
        %v2967 = vld [vmem:[%s2960 + $0x30] sm:$0xff]
        %v2968 = vld [vmem:[%s2960 + $0x38] sm:$0xff]
        %v2970 = vsel %vm503, %v2958, 0
        %v2973 = vsel %vm503, %v2959, 0
        %2975 = vmatprep.subr.mxu0 %v2950
        %2976 = vmatpush1.msra.mxu0 %v2949
        %2977 = vmatprep.subr.mxu0 %v2954
        %2978 = vmatpush1.msra.mxu0 %v2953
        %2979 = vmatprep.subr.mxu0 0.0
        %2980 = vmatpush1.msra.mxu0 0.0
        %2981 = vmatprep.subr.mxu0 0.0
        %2982 = vmatpush1.msra.mxu0 0.0
        %2983 = vmatprep.subr.mxu0 0.0
        %2984 = vmatpush1.msra.mxu0 0.0
        %2985 = vmatprep.subr.mxu0 0.0
        %2986 = vmatpush1.msra.mxu0 0.0
        %2987 = vmatprep.subr.mxu0 0.0
        %2988 = vmatpush1.msra.mxu0 0.0
        %2989 = vmatprep.subr.mxu0 0.0
        %2990 = vmatpush1.msra.mxu0 0.0
        %2991 = vmatprep.subr.mxu0 0.0
        %2992 = vmatpush1.msra.mxu0 0.0
        %2993 = vmatprep.subr.mxu0 0.0
        %2994 = vmatpush1.msra.mxu0 0.0
        %2995 = vmatprep.subr.mxu0 0.0
        %2996 = vmatpush1.msra.mxu0 0.0
        %2997 = vmatprep.subr.mxu0 0.0
        %2998 = vmatpush1.msra.mxu0 0.0
        %2999 = vmatprep.subr.mxu0 0.0
        %3000 = vmatpush1.msra.mxu0 0.0
        %3001 = vmatprep.subr.mxu0 0.0
        %3002 = vmatpush1.msra.mxu0 0.0
        %3003 = vmatprep.subr.mxu0 0.0
        %3004 = vmatpush1.msra.mxu0 0.0
        %3005 = vmatprep.subr.mxu0 0.0
        %3006 = vmatpush1.msra.mxu0 0.0
        %3007 = vmatprep.subr.mxu0 0.0
        %3008 = vmatpush1.msra.mxu0 0.0
        %3009 = vmatprep.subr.mxu0 0.0
        %3010 = vmatpush1.msra.mxu0 0.0
        %3011 = vmatprep.subr.mxu0 0.0
        %3012 = vmatpush1.msra.mxu0 0.0
        %3013 = vmatprep.subr.mxu0 0.0
        %3014 = vmatpush1.msra.mxu0 0.0
        %3015 = vmatprep.subr.mxu0 0.0
        %3016 = vmatpush1.msra.mxu0 0.0
        %3017 = vmatprep.subr.mxu0 0.0
        %3018 = vmatpush1.msra.mxu0 0.0
        %3019 = vmatprep.subr.mxu0 0.0
        %3020 = vmatpush1.msra.mxu0 0.0
        %3021 = vmatprep.subr.mxu0 0.0
        %3022 = vmatpush1.msra.mxu0 0.0
        %3023 = vmatprep.subr.mxu0 0.0
        %3024 = vmatpush1.msra.mxu0 0.0
        %3025 = vmatprep.subr.mxu0 0.0
        %3026 = vmatpush1.msra.mxu0 0.0
        %3027 = vmatprep.subr.mxu0 0.0
        %3028 = vmatpush1.msra.mxu0 0.0
        %3029 = vmatprep.subr.mxu0 0.0
        %3030 = vmatpush1.msra.mxu0 0.0
        %3031 = vmatprep.subr.mxu0 0.0
        %3032 = vmatpush1.msra.mxu0 0.0
        %3033 = vmatprep.subr.mxu0 0.0
        %3034 = vmatpush1.msra.mxu0 0.0
        %3035 = vmatprep.subr.mxu0 0.0
        %3036 = vmatpush1.msra.mxu0 0.0
        %3037 = vmatprep.subr.mxu0 0.0
        %3038 = vmatpush1.msra.mxu0 0.0
        %3039 = vmatprep.mubr.f32.mxu0 0.0
        %3040 = vmatmul.mubr.f32.gmra.mrb[0].mxu0 %v2970
        %v3041 = vpop.f32.mrb[0].mxu0
        %v3042 = vadd.f32 %v2961, %v3041
        %v3043 = vpop.f32.mrb[0].mxu0
        %v3044 = vadd.f32 %v2962, %v3043
        %3045 = vmatprep.mubr.f32.mxu0 0.0
        %3046 = vmatmul.mubr.f32.gmra.mrb[0].mxu0 %v2973
        %v3047 = vpop.f32.mrb[0].mxu0
        %v3048 = vadd.f32 %v2965, %v3047
        %v3049 = vpop.f32.mrb[0].mxu0
        %v3050 = vadd.f32 %v2966, %v3049
        %3051 = vdwg.mxu0
        %3052 = vmatprep.subr.mxu0 %v2952
        %3053 = vmatpush1.msra.mxu0 %v2951
        %3054 = vmatprep.subr.mxu0 %v2956
        %3055 = vmatpush1.msra.mxu0 %v2955
        %3056 = vmatprep.subr.mxu0 0.0
        %3057 = vmatpush1.msra.mxu0 0.0
        %3058 = vmatprep.subr.mxu0 0.0
        %3059 = vmatpush1.msra.mxu0 0.0
        %3060 = vmatprep.subr.mxu0 0.0
        %3061 = vmatpush1.msra.mxu0 0.0
        %3062 = vmatprep.subr.mxu0 0.0
        %3063 = vmatpush1.msra.mxu0 0.0
        %3064 = vmatprep.subr.mxu0 0.0
        %3065 = vmatpush1.msra.mxu0 0.0
        %3066 = vmatprep.subr.mxu0 0.0
        %3067 = vmatpush1.msra.mxu0 0.0
        %3068 = vmatprep.subr.mxu0 0.0
        %3069 = vmatpush1.msra.mxu0 0.0
        %3070 = vmatprep.subr.mxu0 0.0
        %3071 = vmatpush1.msra.mxu0 0.0
        %3072 = vmatprep.subr.mxu0 0.0
        %3073 = vmatpush1.msra.mxu0 0.0
        %3074 = vmatprep.subr.mxu0 0.0
        %3075 = vmatpush1.msra.mxu0 0.0
        %3076 = vmatprep.subr.mxu0 0.0
        %3077 = vmatpush1.msra.mxu0 0.0
        %3078 = vmatprep.subr.mxu0 0.0
        %3079 = vmatpush1.msra.mxu0 0.0
        %3080 = vmatprep.subr.mxu0 0.0
        %3081 = vmatpush1.msra.mxu0 0.0
        %3082 = vmatprep.subr.mxu0 0.0
        %3083 = vmatpush1.msra.mxu0 0.0
        %3084 = vmatprep.subr.mxu0 0.0
        %3085 = vmatpush1.msra.mxu0 0.0
        %3086 = vmatprep.subr.mxu0 0.0
        %3087 = vmatpush1.msra.mxu0 0.0
        %3088 = vmatprep.subr.mxu0 0.0
        %3089 = vmatpush1.msra.mxu0 0.0
        %3090 = vmatprep.subr.mxu0 0.0
        %3091 = vmatpush1.msra.mxu0 0.0
        %3092 = vmatprep.subr.mxu0 0.0
        %3093 = vmatpush1.msra.mxu0 0.0
        %3094 = vmatprep.subr.mxu0 0.0
        %3095 = vmatpush1.msra.mxu0 0.0
        %3096 = vmatprep.subr.mxu0 0.0
        %3097 = vmatpush1.msra.mxu0 0.0
        %3098 = vmatprep.subr.mxu0 0.0
        %3099 = vmatpush1.msra.mxu0 0.0
        %3100 = vmatprep.subr.mxu0 0.0
        %3101 = vmatpush1.msra.mxu0 0.0
        %3102 = vmatprep.subr.mxu0 0.0
        %3103 = vmatpush1.msra.mxu0 0.0
        %3104 = vmatprep.subr.mxu0 0.0
        %3105 = vmatpush1.msra.mxu0 0.0
        %3106 = vmatprep.subr.mxu0 0.0
        %3107 = vmatpush1.msra.mxu0 0.0
        %3108 = vmatprep.subr.mxu0 0.0
        %3109 = vmatpush1.msra.mxu0 0.0
        %3110 = vmatprep.subr.mxu0 0.0
        %3111 = vmatpush1.msra.mxu0 0.0
        %3112 = vmatprep.subr.mxu0 0.0
        %3113 = vmatpush1.msra.mxu0 0.0
        %3114 = vmatprep.subr.mxu0 0.0
        %3115 = vmatpush1.msra.mxu0 0.0
        %3116 = vmatprep.mubr.f32.mxu0 0.0
        %3117 = vmatmul.mubr.f32.gmra.mrb[0].mxu0 %v2970
        %v3118 = vpop.f32.mrb[0].mxu0
        %v3119 = vadd.f32 %v2963, %v3118
        %v3120 = vpop.f32.mrb[0].mxu0
        %v3121 = vadd.f32 %v2964, %v3120
        %3122 = vmatprep.mubr.f32.mxu0 0.0
        %3123 = vmatmul.mubr.f32.gmra.mrb[0].mxu0 %v2973
        %v3124 = vpop.f32.mrb[0].mxu0
        %v3125 = vadd.f32 %v2967, %v3124
        %v3126 = vpop.f32.mrb[0].mxu0
        %v3127 = vadd.f32 %v2968, %v3126
        %3128 = vdwg.mxu0
        %v3129 = vmax.f32 %v3042, 0.0
        %v3130 = vmax.f32 %v3044, 0.0
        %v3131 = vmax.f32 %v3119, 0.0
        %v3132 = vmax.f32 %v3121, 0.0
        %v3133 = vmax.f32 %v3048, 0.0
        %v3134 = vmax.f32 %v3050, 0.0
        %v3135 = vmax.f32 %v3125, 0.0
        %v3136 = vmax.f32 %v3127, 0.0
        %v3137 = vadd.f32 %v1893, %v3129
        %v3138 = vadd.f32 %v1894, %v3130
        %v3139 = vadd.f32 %v1895, %v3131
        %v3140 = vadd.f32 %v1896, %v3132
        %v3141 = vadd.f32 %v1897, %v3133
        %v3142 = vadd.f32 %v1898, %v3134
        %v3143 = vadd.f32 %v1899, %v3135
        %v3144 = vadd.f32 %v1900, %v3136
        %s3145 = scalar_lea.vmem [#allocation2], 512
        %v3146 = vld [vmem:[%s3145] sm:$0xff]
        %v3147 = vld [vmem:[%s3145 + $0x8] sm:$0xff]
        %v3148 = vld [vmem:[%s3145 + $0x10] sm:$0xff]
        %v3149 = vld [vmem:[%s3145 + $0x18] sm:$0xff]
        %v3150 = vld [vmem:[%s3145 + $0x20] sm:$0xff]
        %v3151 = vld [vmem:[%s3145 + $0x28] sm:$0xff]
        %v3152 = vld [vmem:[%s3145 + $0x30] sm:$0xff]
        %v3153 = vld [vmem:[%s3145 + $0x38] sm:$0xff]
        %3154 = vrot.lane.b32.xlu0 %v3137, 17
        %v3155 = vpop.permute.xlu0 %3154
        %3156 = vrot.lane.b32.xlu0 %v3141, 17
        %v3157 = vpop.permute.xlu0 %3156
        %3158 = vrot.lane.b32.xlu0 %v3138, 17
        %v3159 = vpop.permute.xlu0 %3158
        %3160 = vrot.lane.b32.xlu0 %v3142, 17
        %v3161 = vpop.permute.xlu0 %3160
        %3162 = vrot.lane.b32.xlu0 %v3139, 17
        %v3163 = vpop.permute.xlu0 %3162
        %3164 = vrot.lane.b32.xlu0 %v3143, 17
        %v3165 = vpop.permute.xlu0 %3164
        %3166 = vrot.lane.b32.xlu0 %v3140, 17
        %v3167 = vpop.permute.xlu0 %3166
        %3168 = vrot.lane.b32.xlu0 %v3144, 17
        %v3169 = vpop.permute.xlu0 %3168
        %v3170 = vsel %vm691, %v3163, %v3167
        %v3171 = vsel %vm691, %v3165, %v3169
        %v3172 = vsel %vm691, %v3159, %v3163
        %v3173 = vsel %vm691, %v3161, %v3165
        %v3174 = vsel %vm691, %v3155, %v3159
        %v3175 = vsel %vm691, %v3157, %v3161
        %v3176 = vsel %vm691, %v3167, %v3155
        %v3177 = vsel %vm691, %v3169, %v3157
        %s3178 = scalar_lea.vmem [#allocation4], 2304
        %v3179 = vld [vmem:[%s3178] sm:$0xff]
        %v3180 = vld [vmem:[%s3178 + $0x8] sm:$0xff]
        %v3181 = vld [vmem:[%s3178 + $0x10] sm:$0xff]
        %v3182 = vld [vmem:[%s3178 + $0x18] sm:$0xff]
        %v3183 = vld [vmem:[%s3178 + $0x20] sm:$0xff]
        %v3184 = vld [vmem:[%s3178 + $0x28] sm:$0xff]
        %v3185 = vld [vmem:[%s3178 + $0x30] sm:$0xff]
        %v3186 = vld [vmem:[%s3178 + $0x38] sm:$0xff]
        %v3187 = vmul.f32 %v3179, %v3176
        %v3188 = vmul.f32 %v3180, %v3174
        %v3189 = vmul.f32 %v3181, %v3172
        %v3190 = vmul.f32 %v3182, %v3170
        %v3191 = vmul.f32 %v3183, %v3177
        %v3192 = vmul.f32 %v3184, %v3175
        %v3193 = vmul.f32 %v3185, %v3173
        %v3194 = vmul.f32 %v3186, %v3171
        %v3195 = vadd.f32 %v3146, %v3187
        %v3196 = vadd.f32 %v3147, %v3188
        %v3197 = vadd.f32 %v3148, %v3189
        %v3198 = vadd.f32 %v3149, %v3190
        %v3199 = vadd.f32 %v3150, %v3191
        %v3200 = vadd.f32 %v3151, %v3192
        %v3201 = vadd.f32 %v3152, %v3193
        %v3202 = vadd.f32 %v3153, %v3194
        %3203 = vrot.lane.b32.xlu0 %v3137, 16
        %v3204 = vpop.permute.xlu0 %3203
        %3205 = vrot.lane.b32.xlu0 %v3141, 16
        %v3206 = vpop.permute.xlu0 %3205
        %3207 = vrot.lane.b32.xlu0 %v3138, 16
        %v3208 = vpop.permute.xlu0 %3207
        %3209 = vrot.lane.b32.xlu0 %v3142, 16
        %v3210 = vpop.permute.xlu0 %3209
        %3211 = vrot.lane.b32.xlu0 %v3139, 16
        %v3212 = vpop.permute.xlu0 %3211
        %3213 = vrot.lane.b32.xlu0 %v3143, 16
        %v3214 = vpop.permute.xlu0 %3213
        %3215 = vrot.lane.b32.xlu0 %v3140, 16
        %v3216 = vpop.permute.xlu0 %3215
        %3217 = vrot.lane.b32.xlu0 %v3144, 16
        %v3218 = vpop.permute.xlu0 %3217
        %v3219 = vsel %vm740, %v3212, %v3216
        %v3220 = vsel %vm740, %v3214, %v3218
        %v3221 = vsel %vm740, %v3208, %v3212
        %v3222 = vsel %vm740, %v3210, %v3214
        %v3223 = vsel %vm740, %v3204, %v3208
        %v3224 = vsel %vm740, %v3206, %v3210
        %v3225 = vsel %vm740, %v3216, %v3204
        %v3226 = vsel %vm740, %v3218, %v3206
        %s3227 = scalar_lea.vmem [#allocation4], 2368
        %v3228 = vld [vmem:[%s3227] sm:$0xff]
        %v3229 = vld [vmem:[%s3227 + $0x8] sm:$0xff]
        %v3230 = vld [vmem:[%s3227 + $0x10] sm:$0xff]
        %v3231 = vld [vmem:[%s3227 + $0x18] sm:$0xff]
        %v3232 = vld [vmem:[%s3227 + $0x20] sm:$0xff]
        %v3233 = vld [vmem:[%s3227 + $0x28] sm:$0xff]
        %v3234 = vld [vmem:[%s3227 + $0x30] sm:$0xff]
        %v3235 = vld [vmem:[%s3227 + $0x38] sm:$0xff]
        %v3236 = vmul.f32 %v3228, %v3225
        %v3237 = vmul.f32 %v3229, %v3223
        %v3238 = vmul.f32 %v3230, %v3221
        %v3239 = vmul.f32 %v3231, %v3219
        %v3240 = vmul.f32 %v3232, %v3226
        %v3241 = vmul.f32 %v3233, %v3224
        %v3242 = vmul.f32 %v3234, %v3222
        %v3243 = vmul.f32 %v3235, %v3220
        %v3244 = vadd.f32 %v3195, %v3236
        %v3245 = vadd.f32 %v3196, %v3237
        %v3246 = vadd.f32 %v3197, %v3238
        %v3247 = vadd.f32 %v3198, %v3239
        %v3248 = vadd.f32 %v3199, %v3240
        %v3249 = vadd.f32 %v3200, %v3241
        %v3250 = vadd.f32 %v3201, %v3242
        %v3251 = vadd.f32 %v3202, %v3243
        %3252 = vrot.lane.b32.xlu0 %v3137, 15
        %v3253 = vpop.permute.xlu0 %3252
        %3254 = vrot.lane.b32.xlu0 %v3141, 15
        %v3255 = vpop.permute.xlu0 %3254
        %3256 = vrot.lane.b32.xlu0 %v3138, 15
        %v3257 = vpop.permute.xlu0 %3256
        %3258 = vrot.lane.b32.xlu0 %v3142, 15
        %v3259 = vpop.permute.xlu0 %3258
        %3260 = vrot.lane.b32.xlu0 %v3139, 15
        %v3261 = vpop.permute.xlu0 %3260
        %3262 = vrot.lane.b32.xlu0 %v3143, 15
        %v3263 = vpop.permute.xlu0 %3262
        %3264 = vrot.lane.b32.xlu0 %v3140, 15
        %v3265 = vpop.permute.xlu0 %3264
        %3266 = vrot.lane.b32.xlu0 %v3144, 15
        %v3267 = vpop.permute.xlu0 %3266
        %v3268 = vsel %vm790, %v3261, %v3265
        %v3269 = vsel %vm790, %v3263, %v3267
        %v3270 = vsel %vm790, %v3257, %v3261
        %v3271 = vsel %vm790, %v3259, %v3263
        %v3272 = vsel %vm790, %v3253, %v3257
        %v3273 = vsel %vm790, %v3255, %v3259
        %v3274 = vsel %vm790, %v3265, %v3253
        %v3275 = vsel %vm790, %v3267, %v3255
        %s3276 = scalar_lea.vmem [#allocation4], 2432
        %v3277 = vld [vmem:[%s3276] sm:$0xff]
        %v3278 = vld [vmem:[%s3276 + $0x8] sm:$0xff]
        %v3279 = vld [vmem:[%s3276 + $0x10] sm:$0xff]
        %v3280 = vld [vmem:[%s3276 + $0x18] sm:$0xff]
        %v3281 = vld [vmem:[%s3276 + $0x20] sm:$0xff]
        %v3282 = vld [vmem:[%s3276 + $0x28] sm:$0xff]
        %v3283 = vld [vmem:[%s3276 + $0x30] sm:$0xff]
        %v3284 = vld [vmem:[%s3276 + $0x38] sm:$0xff]
        %v3285 = vmul.f32 %v3277, %v3274
        %v3286 = vmul.f32 %v3278, %v3272
        %v3287 = vmul.f32 %v3279, %v3270
        %v3288 = vmul.f32 %v3280, %v3268
        %v3289 = vmul.f32 %v3281, %v3275
        %v3290 = vmul.f32 %v3282, %v3273
        %v3291 = vmul.f32 %v3283, %v3271
        %v3292 = vmul.f32 %v3284, %v3269
        %v3293 = vadd.f32 %v3244, %v3285
        %v3294 = vadd.f32 %v3245, %v3286
        %v3295 = vadd.f32 %v3246, %v3287
        %v3296 = vadd.f32 %v3247, %v3288
        %v3297 = vadd.f32 %v3248, %v3289
        %v3298 = vadd.f32 %v3249, %v3290
        %v3299 = vadd.f32 %v3250, %v3291
        %v3300 = vadd.f32 %v3251, %v3292
        %3301 = vrot.lane.b32.xlu0 %v3137, 1
        %v3302 = vpop.permute.xlu0 %3301
        %3303 = vrot.lane.b32.xlu0 %v3141, 1
        %v3304 = vpop.permute.xlu0 %3303
        %3305 = vrot.lane.b32.xlu0 %v3138, 1
        %v3306 = vpop.permute.xlu0 %3305
        %3307 = vrot.lane.b32.xlu0 %v3142, 1
        %v3308 = vpop.permute.xlu0 %3307
        %3309 = vrot.lane.b32.xlu0 %v3139, 1
        %v3310 = vpop.permute.xlu0 %3309
        %3311 = vrot.lane.b32.xlu0 %v3143, 1
        %v3312 = vpop.permute.xlu0 %3311
        %3313 = vrot.lane.b32.xlu0 %v3140, 1
        %v3314 = vpop.permute.xlu0 %3313
        %3315 = vrot.lane.b32.xlu0 %v3144, 1
        %v3316 = vpop.permute.xlu0 %3315
        %v3317 = vsel %vm840, %v3310, %v3314
        %v3318 = vsel %vm840, %v3312, %v3316
        %v3319 = vsel %vm840, %v3306, %v3310
        %v3320 = vsel %vm840, %v3308, %v3312
        %v3321 = vsel %vm840, %v3302, %v3306
        %v3322 = vsel %vm840, %v3304, %v3308
        %v3323 = vsel %vm840, %v3314, %v3302
        %v3324 = vsel %vm840, %v3316, %v3304
        %s3325 = scalar_lea.vmem [#allocation4], 2496
        %v3326 = vld [vmem:[%s3325] sm:$0xff]
        %v3327 = vld [vmem:[%s3325 + $0x8] sm:$0xff]
        %v3328 = vld [vmem:[%s3325 + $0x10] sm:$0xff]
        %v3329 = vld [vmem:[%s3325 + $0x18] sm:$0xff]
        %v3330 = vld [vmem:[%s3325 + $0x20] sm:$0xff]
        %v3331 = vld [vmem:[%s3325 + $0x28] sm:$0xff]
        %v3332 = vld [vmem:[%s3325 + $0x30] sm:$0xff]
        %v3333 = vld [vmem:[%s3325 + $0x38] sm:$0xff]
        %v3334 = vmul.f32 %v3326, %v3323
        %v3335 = vmul.f32 %v3327, %v3321
        %v3336 = vmul.f32 %v3328, %v3319
        %v3337 = vmul.f32 %v3329, %v3317
        %v3338 = vmul.f32 %v3330, %v3324
        %v3339 = vmul.f32 %v3331, %v3322
        %v3340 = vmul.f32 %v3332, %v3320
        %v3341 = vmul.f32 %v3333, %v3318
        %v3342 = vadd.f32 %v3293, %v3334
        %v3343 = vadd.f32 %v3294, %v3335
        %v3344 = vadd.f32 %v3295, %v3336
        %v3345 = vadd.f32 %v3296, %v3337
        %v3346 = vadd.f32 %v3297, %v3338
        %v3347 = vadd.f32 %v3298, %v3339
        %v3348 = vadd.f32 %v3299, %v3340
        %v3349 = vadd.f32 %v3300, %v3341
        %s3350 = scalar_lea.vmem [#allocation4], 2560
        %v3351 = vld [vmem:[%s3350] sm:$0xff]
        %v3352 = vld [vmem:[%s3350 + $0x8] sm:$0xff]
        %v3353 = vld [vmem:[%s3350 + $0x10] sm:$0xff]
        %v3354 = vld [vmem:[%s3350 + $0x18] sm:$0xff]
        %v3355 = vld [vmem:[%s3350 + $0x20] sm:$0xff]
        %v3356 = vld [vmem:[%s3350 + $0x28] sm:$0xff]
        %v3357 = vld [vmem:[%s3350 + $0x30] sm:$0xff]
        %v3358 = vld [vmem:[%s3350 + $0x38] sm:$0xff]
        %v3359 = vmul.f32 %v3351, %v3137
        %v3360 = vmul.f32 %v3352, %v3138
        %v3361 = vmul.f32 %v3353, %v3139
        %v3362 = vmul.f32 %v3354, %v3140
        %v3363 = vmul.f32 %v3355, %v3141
        %v3364 = vmul.f32 %v3356, %v3142
        %v3365 = vmul.f32 %v3357, %v3143
        %v3366 = vmul.f32 %v3358, %v3144
        %v3367 = vadd.f32 %v3342, %v3359
        %v3368 = vadd.f32 %v3343, %v3360
        %v3369 = vadd.f32 %v3344, %v3361
        %v3370 = vadd.f32 %v3345, %v3362
        %v3371 = vadd.f32 %v3346, %v3363
        %v3372 = vadd.f32 %v3347, %v3364
        %v3373 = vadd.f32 %v3348, %v3365
        %v3374 = vadd.f32 %v3349, %v3366
        %3375 = vrot.lane.b32.xlu0 %v3137, 127
        %v3376 = vpop.permute.xlu0 %3375
        %3377 = vrot.lane.b32.xlu0 %v3141, 127
        %v3378 = vpop.permute.xlu0 %3377
        %3379 = vrot.lane.b32.xlu0 %v3138, 127
        %v3380 = vpop.permute.xlu0 %3379
        %3381 = vrot.lane.b32.xlu0 %v3142, 127
        %v3382 = vpop.permute.xlu0 %3381
        %3383 = vrot.lane.b32.xlu0 %v3139, 127
        %v3384 = vpop.permute.xlu0 %3383
        %3385 = vrot.lane.b32.xlu0 %v3143, 127
        %v3386 = vpop.permute.xlu0 %3385
        %3387 = vrot.lane.b32.xlu0 %v3140, 127
        %v3388 = vpop.permute.xlu0 %3387
        %3389 = vrot.lane.b32.xlu0 %v3144, 127
        %v3390 = vpop.permute.xlu0 %3389
        %v3391 = vsel %vm915, %v3384, %v3388
        %v3392 = vsel %vm915, %v3386, %v3390
        %v3393 = vsel %vm915, %v3380, %v3384
        %v3394 = vsel %vm915, %v3382, %v3386
        %v3395 = vsel %vm915, %v3376, %v3380
        %v3396 = vsel %vm915, %v3378, %v3382
        %v3397 = vsel %vm915, %v3388, %v3376
        %v3398 = vsel %vm915, %v3390, %v3378
        %s3399 = scalar_lea.vmem [#allocation4], 2624
        %v3400 = vld [vmem:[%s3399] sm:$0xff]
        %v3401 = vld [vmem:[%s3399 + $0x8] sm:$0xff]
        %v3402 = vld [vmem:[%s3399 + $0x10] sm:$0xff]
        %v3403 = vld [vmem:[%s3399 + $0x18] sm:$0xff]
        %v3404 = vld [vmem:[%s3399 + $0x20] sm:$0xff]
        %v3405 = vld [vmem:[%s3399 + $0x28] sm:$0xff]
        %v3406 = vld [vmem:[%s3399 + $0x30] sm:$0xff]
        %v3407 = vld [vmem:[%s3399 + $0x38] sm:$0xff]
        %v3408 = vmul.f32 %v3400, %v3395
        %v3409 = vmul.f32 %v3401, %v3393
        %v3410 = vmul.f32 %v3402, %v3391
        %v3411 = vmul.f32 %v3403, %v3397
        %v3412 = vmul.f32 %v3404, %v3396
        %v3413 = vmul.f32 %v3405, %v3394
        %v3414 = vmul.f32 %v3406, %v3392
        %v3415 = vmul.f32 %v3407, %v3398
        %v3416 = vadd.f32 %v3367, %v3408
        %v3417 = vadd.f32 %v3368, %v3409
        %v3418 = vadd.f32 %v3369, %v3410
        %v3419 = vadd.f32 %v3370, %v3411
        %v3420 = vadd.f32 %v3371, %v3412
        %v3421 = vadd.f32 %v3372, %v3413
        %v3422 = vadd.f32 %v3373, %v3414
        %v3423 = vadd.f32 %v3374, %v3415
        %3424 = vrot.lane.b32.xlu0 %v3137, 113
        %v3425 = vpop.permute.xlu0 %3424
        %3426 = vrot.lane.b32.xlu0 %v3141, 113
        %v3427 = vpop.permute.xlu0 %3426
        %3428 = vrot.lane.b32.xlu0 %v3138, 113
        %v3429 = vpop.permute.xlu0 %3428
        %3430 = vrot.lane.b32.xlu0 %v3142, 113
        %v3431 = vpop.permute.xlu0 %3430
        %3432 = vrot.lane.b32.xlu0 %v3139, 113
        %v3433 = vpop.permute.xlu0 %3432
        %3434 = vrot.lane.b32.xlu0 %v3143, 113
        %v3435 = vpop.permute.xlu0 %3434
        %3436 = vrot.lane.b32.xlu0 %v3140, 113
        %v3437 = vpop.permute.xlu0 %3436
        %3438 = vrot.lane.b32.xlu0 %v3144, 113
        %v3439 = vpop.permute.xlu0 %3438
        %v3440 = vsel %vm965, %v3433, %v3437
        %v3441 = vsel %vm965, %v3435, %v3439
        %v3442 = vsel %vm965, %v3429, %v3433
        %v3443 = vsel %vm965, %v3431, %v3435
        %v3444 = vsel %vm965, %v3425, %v3429
        %v3445 = vsel %vm965, %v3427, %v3431
        %v3446 = vsel %vm965, %v3437, %v3425
        %v3447 = vsel %vm965, %v3439, %v3427
        %s3448 = scalar_lea.vmem [#allocation4], 2688
        %v3449 = vld [vmem:[%s3448] sm:$0xff]
        %v3450 = vld [vmem:[%s3448 + $0x8] sm:$0xff]
        %v3451 = vld [vmem:[%s3448 + $0x10] sm:$0xff]
        %v3452 = vld [vmem:[%s3448 + $0x18] sm:$0xff]
        %v3453 = vld [vmem:[%s3448 + $0x20] sm:$0xff]
        %v3454 = vld [vmem:[%s3448 + $0x28] sm:$0xff]
        %v3455 = vld [vmem:[%s3448 + $0x30] sm:$0xff]
        %v3456 = vld [vmem:[%s3448 + $0x38] sm:$0xff]
        %v3457 = vmul.f32 %v3449, %v3444
        %v3458 = vmul.f32 %v3450, %v3442
        %v3459 = vmul.f32 %v3451, %v3440
        %v3460 = vmul.f32 %v3452, %v3446
        %v3461 = vmul.f32 %v3453, %v3445
        %v3462 = vmul.f32 %v3454, %v3443
        %v3463 = vmul.f32 %v3455, %v3441
        %v3464 = vmul.f32 %v3456, %v3447
        %v3465 = vadd.f32 %v3416, %v3457
        %v3466 = vadd.f32 %v3417, %v3458
        %v3467 = vadd.f32 %v3418, %v3459
        %v3468 = vadd.f32 %v3419, %v3460
        %v3469 = vadd.f32 %v3420, %v3461
        %v3470 = vadd.f32 %v3421, %v3462
        %v3471 = vadd.f32 %v3422, %v3463
        %v3472 = vadd.f32 %v3423, %v3464
        %3473 = vrot.lane.b32.xlu0 %v3137, 112
        %v3474 = vpop.permute.xlu0 %3473
        %3475 = vrot.lane.b32.xlu0 %v3141, 112
        %v3476 = vpop.permute.xlu0 %3475
        %3477 = vrot.lane.b32.xlu0 %v3138, 112
        %v3478 = vpop.permute.xlu0 %3477
        %3479 = vrot.lane.b32.xlu0 %v3142, 112
        %v3480 = vpop.permute.xlu0 %3479
        %3481 = vrot.lane.b32.xlu0 %v3139, 112
        %v3482 = vpop.permute.xlu0 %3481
        %3483 = vrot.lane.b32.xlu0 %v3143, 112
        %v3484 = vpop.permute.xlu0 %3483
        %3485 = vrot.lane.b32.xlu0 %v3140, 112
        %v3486 = vpop.permute.xlu0 %3485
        %3487 = vrot.lane.b32.xlu0 %v3144, 112
        %v3488 = vpop.permute.xlu0 %3487
        %v3489 = vsel %vm1015, %v3482, %v3486
        %v3490 = vsel %vm1015, %v3484, %v3488
        %v3491 = vsel %vm1015, %v3478, %v3482
        %v3492 = vsel %vm1015, %v3480, %v3484
        %v3493 = vsel %vm1015, %v3474, %v3478
        %v3494 = vsel %vm1015, %v3476, %v3480
        %v3495 = vsel %vm1015, %v3486, %v3474
        %v3496 = vsel %vm1015, %v3488, %v3476
        %s3497 = scalar_lea.vmem [#allocation4], 2752
        %v3498 = vld [vmem:[%s3497] sm:$0xff]
        %v3499 = vld [vmem:[%s3497 + $0x8] sm:$0xff]
        %v3500 = vld [vmem:[%s3497 + $0x10] sm:$0xff]
        %v3501 = vld [vmem:[%s3497 + $0x18] sm:$0xff]
        %v3502 = vld [vmem:[%s3497 + $0x20] sm:$0xff]
        %v3503 = vld [vmem:[%s3497 + $0x28] sm:$0xff]
        %v3504 = vld [vmem:[%s3497 + $0x30] sm:$0xff]
        %v3505 = vld [vmem:[%s3497 + $0x38] sm:$0xff]
        %v3506 = vmul.f32 %v3498, %v3493
        %v3507 = vmul.f32 %v3499, %v3491
        %v3508 = vmul.f32 %v3500, %v3489
        %v3509 = vmul.f32 %v3501, %v3495
        %v3510 = vmul.f32 %v3502, %v3494
        %v3511 = vmul.f32 %v3503, %v3492
        %v3512 = vmul.f32 %v3504, %v3490
        %v3513 = vmul.f32 %v3505, %v3496
        %v3514 = vadd.f32 %v3465, %v3506
        %v3515 = vadd.f32 %v3466, %v3507
        %v3516 = vadd.f32 %v3467, %v3508
        %v3517 = vadd.f32 %v3468, %v3509
        %v3518 = vadd.f32 %v3469, %v3510
        %v3519 = vadd.f32 %v3470, %v3511
        %v3520 = vadd.f32 %v3471, %v3512
        %v3521 = vadd.f32 %v3472, %v3513
        %3522 = vrot.lane.b32.xlu0 %v3137, 111
        %v3523 = vpop.permute.xlu0 %3522
        %3524 = vrot.lane.b32.xlu0 %v3141, 111
        %v3525 = vpop.permute.xlu0 %3524
        %3526 = vrot.lane.b32.xlu0 %v3138, 111
        %v3527 = vpop.permute.xlu0 %3526
        %3528 = vrot.lane.b32.xlu0 %v3142, 111
        %v3529 = vpop.permute.xlu0 %3528
        %3530 = vrot.lane.b32.xlu0 %v3139, 111
        %v3531 = vpop.permute.xlu0 %3530
        %3532 = vrot.lane.b32.xlu0 %v3143, 111
        %v3533 = vpop.permute.xlu0 %3532
        %3534 = vrot.lane.b32.xlu0 %v3140, 111
        %v3535 = vpop.permute.xlu0 %3534
        %3536 = vrot.lane.b32.xlu0 %v3144, 111
        %v3537 = vpop.permute.xlu0 %3536
        %v3538 = vsel %vm1065, %v3531, %v3535
        %v3539 = vsel %vm1065, %v3533, %v3537
        %v3540 = vsel %vm1065, %v3527, %v3531
        %v3541 = vsel %vm1065, %v3529, %v3533
        %v3542 = vsel %vm1065, %v3523, %v3527
        %v3543 = vsel %vm1065, %v3525, %v3529
        %v3544 = vsel %vm1065, %v3535, %v3523
        %v3545 = vsel %vm1065, %v3537, %v3525
        %s3546 = scalar_lea.vmem [#allocation4], 2816
        %v3547 = vld [vmem:[%s3546] sm:$0xff]
        %v3548 = vld [vmem:[%s3546 + $0x8] sm:$0xff]
        %v3549 = vld [vmem:[%s3546 + $0x10] sm:$0xff]
        %v3550 = vld [vmem:[%s3546 + $0x18] sm:$0xff]
        %v3551 = vld [vmem:[%s3546 + $0x20] sm:$0xff]
        %v3552 = vld [vmem:[%s3546 + $0x28] sm:$0xff]
        %v3553 = vld [vmem:[%s3546 + $0x30] sm:$0xff]
        %v3554 = vld [vmem:[%s3546 + $0x38] sm:$0xff]
        %v3555 = vmul.f32 %v3547, %v3542
        %v3556 = vmul.f32 %v3548, %v3540
        %v3557 = vmul.f32 %v3549, %v3538
        %v3558 = vmul.f32 %v3550, %v3544
        %v3559 = vmul.f32 %v3551, %v3543
        %v3560 = vmul.f32 %v3552, %v3541
        %v3561 = vmul.f32 %v3553, %v3539
        %v3562 = vmul.f32 %v3554, %v3545
        %v3563 = vadd.f32 %v3514, %v3555
        %v3564 = vadd.f32 %v3515, %v3556
        %v3565 = vadd.f32 %v3516, %v3557
        %v3566 = vadd.f32 %v3517, %v3558
        %v3567 = vadd.f32 %v3518, %v3559
        %v3568 = vadd.f32 %v3519, %v3560
        %v3569 = vadd.f32 %v3520, %v3561
        %v3570 = vadd.f32 %v3521, %v3562
        %v3571 = vmax.f32 %v3563, 0.0
        %v3572 = vmax.f32 %v3564, 0.0
        %v3573 = vmax.f32 %v3565, 0.0
        %v3574 = vmax.f32 %v3566, 0.0
        %v3575 = vmax.f32 %v3567, 0.0
        %v3576 = vmax.f32 %v3568, 0.0
        %v3577 = vmax.f32 %v3569, 0.0
        %v3578 = vmax.f32 %v3570, 0.0
        %s3579 = scalar_lea.vmem [#allocation6], 80
        %v3580 = vld [vmem:[%s3579] sm:$0xff]
        %v3581 = vld [vmem:[%s3579 + $0x8] sm:$0xff]
        %s3582 = scalar_lea.vmem [#allocation2], 1024
        %v3583 = vld [vmem:[%s3582] sm:$0xff]
        %v3584 = vld [vmem:[%s3582 + $0x8] sm:$0xff]
        %v3585 = vld [vmem:[%s3582 + $0x10] sm:$0xff]
        %v3586 = vld [vmem:[%s3582 + $0x18] sm:$0xff]
        %v3587 = vld [vmem:[%s3582 + $0x20] sm:$0xff]
        %v3588 = vld [vmem:[%s3582 + $0x28] sm:$0xff]
        %v3589 = vld [vmem:[%s3582 + $0x30] sm:$0xff]
        %v3590 = vld [vmem:[%s3582 + $0x38] sm:$0xff]
        %v3592 = vsel %vm503, %v3580, 0
        %v3595 = vsel %vm503, %v3581, 0
        %3597 = vmatprep.subr.mxu0 %v3572
        %3598 = vmatpush1.msra.mxu0 %v3571
        %3599 = vmatprep.subr.mxu0 %v3576
        %3600 = vmatpush1.msra.mxu0 %v3575
        %3601 = vmatprep.subr.mxu0 0.0
        %3602 = vmatpush1.msra.mxu0 0.0
        %3603 = vmatprep.subr.mxu0 0.0
        %3604 = vmatpush1.msra.mxu0 0.0
        %3605 = vmatprep.subr.mxu0 0.0
        %3606 = vmatpush1.msra.mxu0 0.0
        %3607 = vmatprep.subr.mxu0 0.0
        %3608 = vmatpush1.msra.mxu0 0.0
        %3609 = vmatprep.subr.mxu0 0.0
        %3610 = vmatpush1.msra.mxu0 0.0
        %3611 = vmatprep.subr.mxu0 0.0
        %3612 = vmatpush1.msra.mxu0 0.0
        %3613 = vmatprep.subr.mxu0 0.0
        %3614 = vmatpush1.msra.mxu0 0.0
        %3615 = vmatprep.subr.mxu0 0.0
        %3616 = vmatpush1.msra.mxu0 0.0
        %3617 = vmatprep.subr.mxu0 0.0
        %3618 = vmatpush1.msra.mxu0 0.0
        %3619 = vmatprep.subr.mxu0 0.0
        %3620 = vmatpush1.msra.mxu0 0.0
        %3621 = vmatprep.subr.mxu0 0.0
        %3622 = vmatpush1.msra.mxu0 0.0
        %3623 = vmatprep.subr.mxu0 0.0
        %3624 = vmatpush1.msra.mxu0 0.0
        %3625 = vmatprep.subr.mxu0 0.0
        %3626 = vmatpush1.msra.mxu0 0.0
        %3627 = vmatprep.subr.mxu0 0.0
        %3628 = vmatpush1.msra.mxu0 0.0
        %3629 = vmatprep.subr.mxu0 0.0
        %3630 = vmatpush1.msra.mxu0 0.0
        %3631 = vmatprep.subr.mxu0 0.0
        %3632 = vmatpush1.msra.mxu0 0.0
        %3633 = vmatprep.subr.mxu0 0.0
        %3634 = vmatpush1.msra.mxu0 0.0
        %3635 = vmatprep.subr.mxu0 0.0
        %3636 = vmatpush1.msra.mxu0 0.0
        %3637 = vmatprep.subr.mxu0 0.0
        %3638 = vmatpush1.msra.mxu0 0.0
        %3639 = vmatprep.subr.mxu0 0.0
        %3640 = vmatpush1.msra.mxu0 0.0
        %3641 = vmatprep.subr.mxu0 0.0
        %3642 = vmatpush1.msra.mxu0 0.0
        %3643 = vmatprep.subr.mxu0 0.0
        %3644 = vmatpush1.msra.mxu0 0.0
        %3645 = vmatprep.subr.mxu0 0.0
        %3646 = vmatpush1.msra.mxu0 0.0
        %3647 = vmatprep.subr.mxu0 0.0
        %3648 = vmatpush1.msra.mxu0 0.0
        %3649 = vmatprep.subr.mxu0 0.0
        %3650 = vmatpush1.msra.mxu0 0.0
        %3651 = vmatprep.subr.mxu0 0.0
        %3652 = vmatpush1.msra.mxu0 0.0
        %3653 = vmatprep.subr.mxu0 0.0
        %3654 = vmatpush1.msra.mxu0 0.0
        %3655 = vmatprep.subr.mxu0 0.0
        %3656 = vmatpush1.msra.mxu0 0.0
        %3657 = vmatprep.subr.mxu0 0.0
        %3658 = vmatpush1.msra.mxu0 0.0
        %3659 = vmatprep.subr.mxu0 0.0
        %3660 = vmatpush1.msra.mxu0 0.0
        %3661 = vmatprep.mubr.f32.mxu0 0.0
        %3662 = vmatmul.mubr.f32.gmra.mrb[0].mxu0 %v3592
        %v3663 = vpop.f32.mrb[0].mxu0
        %v3664 = vadd.f32 %v3583, %v3663
        %v3665 = vpop.f32.mrb[0].mxu0
        %v3666 = vadd.f32 %v3584, %v3665
        %3667 = vmatprep.mubr.f32.mxu0 0.0
        %3668 = vmatmul.mubr.f32.gmra.mrb[0].mxu0 %v3595
        %v3669 = vpop.f32.mrb[0].mxu0
        %v3670 = vadd.f32 %v3587, %v3669
        %v3671 = vpop.f32.mrb[0].mxu0
        %v3672 = vadd.f32 %v3588, %v3671
        %3673 = vdwg.mxu0
        %3674 = vmatprep.subr.mxu0 %v3574
        %3675 = vmatpush1.msra.mxu0 %v3573
        %3676 = vmatprep.subr.mxu0 %v3578
        %3677 = vmatpush1.msra.mxu0 %v3577
        %3678 = vmatprep.subr.mxu0 0.0
        %3679 = vmatpush1.msra.mxu0 0.0
        %3680 = vmatprep.subr.mxu0 0.0
        %3681 = vmatpush1.msra.mxu0 0.0
        %3682 = vmatprep.subr.mxu0 0.0
        %3683 = vmatpush1.msra.mxu0 0.0
        %3684 = vmatprep.subr.mxu0 0.0
        %3685 = vmatpush1.msra.mxu0 0.0
        %3686 = vmatprep.subr.mxu0 0.0
        %3687 = vmatpush1.msra.mxu0 0.0
        %3688 = vmatprep.subr.mxu0 0.0
        %3689 = vmatpush1.msra.mxu0 0.0
        %3690 = vmatprep.subr.mxu0 0.0
        %3691 = vmatpush1.msra.mxu0 0.0
        %3692 = vmatprep.subr.mxu0 0.0
        %3693 = vmatpush1.msra.mxu0 0.0
        %3694 = vmatprep.subr.mxu0 0.0
        %3695 = vmatpush1.msra.mxu0 0.0
        %3696 = vmatprep.subr.mxu0 0.0
        %3697 = vmatpush1.msra.mxu0 0.0
        %3698 = vmatprep.subr.mxu0 0.0
        %3699 = vmatpush1.msra.mxu0 0.0
        %3700 = vmatprep.subr.mxu0 0.0
        %3701 = vmatpush1.msra.mxu0 0.0
        %3702 = vmatprep.subr.mxu0 0.0
        %3703 = vmatpush1.msra.mxu0 0.0
        %3704 = vmatprep.subr.mxu0 0.0
        %3705 = vmatpush1.msra.mxu0 0.0
        %3706 = vmatprep.subr.mxu0 0.0
        %3707 = vmatpush1.msra.mxu0 0.0
        %3708 = vmatprep.subr.mxu0 0.0
        %3709 = vmatpush1.msra.mxu0 0.0
        %3710 = vmatprep.subr.mxu0 0.0
        %3711 = vmatpush1.msra.mxu0 0.0
        %3712 = vmatprep.subr.mxu0 0.0
        %3713 = vmatpush1.msra.mxu0 0.0
        %3714 = vmatprep.subr.mxu0 0.0
        %3715 = vmatpush1.msra.mxu0 0.0
        %3716 = vmatprep.subr.mxu0 0.0
        %3717 = vmatpush1.msra.mxu0 0.0
        %3718 = vmatprep.subr.mxu0 0.0
        %3719 = vmatpush1.msra.mxu0 0.0
        %3720 = vmatprep.subr.mxu0 0.0
        %3721 = vmatpush1.msra.mxu0 0.0
        %3722 = vmatprep.subr.mxu0 0.0
        %3723 = vmatpush1.msra.mxu0 0.0
        %3724 = vmatprep.subr.mxu0 0.0
        %3725 = vmatpush1.msra.mxu0 0.0
        %3726 = vmatprep.subr.mxu0 0.0
        %3727 = vmatpush1.msra.mxu0 0.0
        %3728 = vmatprep.subr.mxu0 0.0
        %3729 = vmatpush1.msra.mxu0 0.0
        %3730 = vmatprep.subr.mxu0 0.0
        %3731 = vmatpush1.msra.mxu0 0.0
        %3732 = vmatprep.subr.mxu0 0.0
        %3733 = vmatpush1.msra.mxu0 0.0
        %3734 = vmatprep.subr.mxu0 0.0
        %3735 = vmatpush1.msra.mxu0 0.0
        %3736 = vmatprep.subr.mxu0 0.0
        %3737 = vmatpush1.msra.mxu0 0.0
        %3738 = vmatprep.mubr.f32.mxu0 0.0
        %3739 = vmatmul.mubr.f32.gmra.mrb[0].mxu0 %v3592
        %v3740 = vpop.f32.mrb[0].mxu0
        %v3741 = vadd.f32 %v3585, %v3740
        %v3742 = vpop.f32.mrb[0].mxu0
        %v3743 = vadd.f32 %v3586, %v3742
        %3744 = vmatprep.mubr.f32.mxu0 0.0
        %3745 = vmatmul.mubr.f32.gmra.mrb[0].mxu0 %v3595
        %v3746 = vpop.f32.mrb[0].mxu0
        %v3747 = vadd.f32 %v3589, %v3746
        %v3748 = vpop.f32.mrb[0].mxu0
        %v3749 = vadd.f32 %v3590, %v3748
        %3750 = vdwg.mxu0
        %v3751 = vmax.f32 %v3664, 0.0
        %v3752 = vmax.f32 %v3666, 0.0
        %v3753 = vmax.f32 %v3741, 0.0
        %v3754 = vmax.f32 %v3743, 0.0
        %v3755 = vmax.f32 %v3670, 0.0
        %v3756 = vmax.f32 %v3672, 0.0
        %v3757 = vmax.f32 %v3747, 0.0
        %v3758 = vmax.f32 %v3749, 0.0
        %s3759 = scalar_lea.vmem [#allocation2], 576
        %v3760 = vld [vmem:[%s3759] sm:$0xff]
        %v3761 = vld [vmem:[%s3759 + $0x8] sm:$0xff]
        %v3762 = vld [vmem:[%s3759 + $0x10] sm:$0xff]
        %v3763 = vld [vmem:[%s3759 + $0x18] sm:$0xff]
        %v3764 = vld [vmem:[%s3759 + $0x20] sm:$0xff]
        %v3765 = vld [vmem:[%s3759 + $0x28] sm:$0xff]
        %v3766 = vld [vmem:[%s3759 + $0x30] sm:$0xff]
        %v3767 = vld [vmem:[%s3759 + $0x38] sm:$0xff]
        %3768 = vrot.lane.b32.xlu0 %v3751, 17
        %v3769 = vpop.permute.xlu0 %3768
        %3770 = vrot.lane.b32.xlu0 %v3755, 17
        %v3771 = vpop.permute.xlu0 %3770
        %3772 = vrot.lane.b32.xlu0 %v3752, 17
        %v3773 = vpop.permute.xlu0 %3772
        %3774 = vrot.lane.b32.xlu0 %v3756, 17
        %v3775 = vpop.permute.xlu0 %3774
        %3776 = vrot.lane.b32.xlu0 %v3753, 17
        %v3777 = vpop.permute.xlu0 %3776
        %3778 = vrot.lane.b32.xlu0 %v3757, 17
        %v3779 = vpop.permute.xlu0 %3778
        %3780 = vrot.lane.b32.xlu0 %v3754, 17
        %v3781 = vpop.permute.xlu0 %3780
        %3782 = vrot.lane.b32.xlu0 %v3758, 17
        %v3783 = vpop.permute.xlu0 %3782
        %v3784 = vsel %vm691, %v3777, %v3781
        %v3785 = vsel %vm691, %v3779, %v3783
        %v3786 = vsel %vm691, %v3773, %v3777
        %v3787 = vsel %vm691, %v3775, %v3779
        %v3788 = vsel %vm691, %v3769, %v3773
        %v3789 = vsel %vm691, %v3771, %v3775
        %v3790 = vsel %vm691, %v3781, %v3769
        %v3791 = vsel %vm691, %v3783, %v3771
        %s3792 = scalar_lea.vmem [#allocation4], 2880
        %v3793 = vld [vmem:[%s3792] sm:$0xff]
        %v3794 = vld [vmem:[%s3792 + $0x8] sm:$0xff]
        %v3795 = vld [vmem:[%s3792 + $0x10] sm:$0xff]
        %v3796 = vld [vmem:[%s3792 + $0x18] sm:$0xff]
        %v3797 = vld [vmem:[%s3792 + $0x20] sm:$0xff]
        %v3798 = vld [vmem:[%s3792 + $0x28] sm:$0xff]
        %v3799 = vld [vmem:[%s3792 + $0x30] sm:$0xff]
        %v3800 = vld [vmem:[%s3792 + $0x38] sm:$0xff]
        %v3801 = vmul.f32 %v3793, %v3790
        %v3802 = vmul.f32 %v3794, %v3788
        %v3803 = vmul.f32 %v3795, %v3786
        %v3804 = vmul.f32 %v3796, %v3784
        %v3805 = vmul.f32 %v3797, %v3791
        %v3806 = vmul.f32 %v3798, %v3789
        %v3807 = vmul.f32 %v3799, %v3787
        %v3808 = vmul.f32 %v3800, %v3785
        %v3809 = vadd.f32 %v3760, %v3801
        %v3810 = vadd.f32 %v3761, %v3802
        %v3811 = vadd.f32 %v3762, %v3803
        %v3812 = vadd.f32 %v3763, %v3804
        %v3813 = vadd.f32 %v3764, %v3805
        %v3814 = vadd.f32 %v3765, %v3806
        %v3815 = vadd.f32 %v3766, %v3807
        %v3816 = vadd.f32 %v3767, %v3808
        %3817 = vrot.lane.b32.xlu0 %v3751, 16
        %v3818 = vpop.permute.xlu0 %3817
        %3819 = vrot.lane.b32.xlu0 %v3755, 16
        %v3820 = vpop.permute.xlu0 %3819
        %3821 = vrot.lane.b32.xlu0 %v3752, 16
        %v3822 = vpop.permute.xlu0 %3821
        %3823 = vrot.lane.b32.xlu0 %v3756, 16
        %v3824 = vpop.permute.xlu0 %3823
        %3825 = vrot.lane.b32.xlu0 %v3753, 16
        %v3826 = vpop.permute.xlu0 %3825
        %3827 = vrot.lane.b32.xlu0 %v3757, 16
        %v3828 = vpop.permute.xlu0 %3827
        %3829 = vrot.lane.b32.xlu0 %v3754, 16
        %v3830 = vpop.permute.xlu0 %3829
        %3831 = vrot.lane.b32.xlu0 %v3758, 16
        %v3832 = vpop.permute.xlu0 %3831
        %v3833 = vsel %vm740, %v3826, %v3830
        %v3834 = vsel %vm740, %v3828, %v3832
        %v3835 = vsel %vm740, %v3822, %v3826
        %v3836 = vsel %vm740, %v3824, %v3828
        %v3837 = vsel %vm740, %v3818, %v3822
        %v3838 = vsel %vm740, %v3820, %v3824
        %v3839 = vsel %vm740, %v3830, %v3818
        %v3840 = vsel %vm740, %v3832, %v3820
        %s3841 = scalar_lea.vmem [#allocation4], 2944
        %v3842 = vld [vmem:[%s3841] sm:$0xff]
        %v3843 = vld [vmem:[%s3841 + $0x8] sm:$0xff]
        %v3844 = vld [vmem:[%s3841 + $0x10] sm:$0xff]
        %v3845 = vld [vmem:[%s3841 + $0x18] sm:$0xff]
        %v3846 = vld [vmem:[%s3841 + $0x20] sm:$0xff]
        %v3847 = vld [vmem:[%s3841 + $0x28] sm:$0xff]
        %v3848 = vld [vmem:[%s3841 + $0x30] sm:$0xff]
        %v3849 = vld [vmem:[%s3841 + $0x38] sm:$0xff]
        %v3850 = vmul.f32 %v3842, %v3839
        %v3851 = vmul.f32 %v3843, %v3837
        %v3852 = vmul.f32 %v3844, %v3835
        %v3853 = vmul.f32 %v3845, %v3833
        %v3854 = vmul.f32 %v3846, %v3840
        %v3855 = vmul.f32 %v3847, %v3838
        %v3856 = vmul.f32 %v3848, %v3836
        %v3857 = vmul.f32 %v3849, %v3834
        %v3858 = vadd.f32 %v3809, %v3850
        %v3859 = vadd.f32 %v3810, %v3851
        %v3860 = vadd.f32 %v3811, %v3852
        %v3861 = vadd.f32 %v3812, %v3853
        %v3862 = vadd.f32 %v3813, %v3854
        %v3863 = vadd.f32 %v3814, %v3855
        %v3864 = vadd.f32 %v3815, %v3856
        %v3865 = vadd.f32 %v3816, %v3857
        %3866 = vrot.lane.b32.xlu0 %v3751, 15
        %v3867 = vpop.permute.xlu0 %3866
        %3868 = vrot.lane.b32.xlu0 %v3755, 15
        %v3869 = vpop.permute.xlu0 %3868
        %3870 = vrot.lane.b32.xlu0 %v3752, 15
        %v3871 = vpop.permute.xlu0 %3870
        %3872 = vrot.lane.b32.xlu0 %v3756, 15
        %v3873 = vpop.permute.xlu0 %3872
        %3874 = vrot.lane.b32.xlu0 %v3753, 15
        %v3875 = vpop.permute.xlu0 %3874
        %3876 = vrot.lane.b32.xlu0 %v3757, 15
        %v3877 = vpop.permute.xlu0 %3876
        %3878 = vrot.lane.b32.xlu0 %v3754, 15
        %v3879 = vpop.permute.xlu0 %3878
        %3880 = vrot.lane.b32.xlu0 %v3758, 15
        %v3881 = vpop.permute.xlu0 %3880
        %v3882 = vsel %vm790, %v3875, %v3879
        %v3883 = vsel %vm790, %v3877, %v3881
        %v3884 = vsel %vm790, %v3871, %v3875
        %v3885 = vsel %vm790, %v3873, %v3877
        %v3886 = vsel %vm790, %v3867, %v3871
        %v3887 = vsel %vm790, %v3869, %v3873
        %v3888 = vsel %vm790, %v3879, %v3867
        %v3889 = vsel %vm790, %v3881, %v3869
        %s3890 = scalar_lea.vmem [#allocation4], 3008
        %v3891 = vld [vmem:[%s3890] sm:$0xff]
        %v3892 = vld [vmem:[%s3890 + $0x8] sm:$0xff]
        %v3893 = vld [vmem:[%s3890 + $0x10] sm:$0xff]
        %v3894 = vld [vmem:[%s3890 + $0x18] sm:$0xff]
        %v3895 = vld [vmem:[%s3890 + $0x20] sm:$0xff]
        %v3896 = vld [vmem:[%s3890 + $0x28] sm:$0xff]
        %v3897 = vld [vmem:[%s3890 + $0x30] sm:$0xff]
        %v3898 = vld [vmem:[%s3890 + $0x38] sm:$0xff]
        %v3899 = vmul.f32 %v3891, %v3888
        %v3900 = vmul.f32 %v3892, %v3886
        %v3901 = vmul.f32 %v3893, %v3884
        %v3902 = vmul.f32 %v3894, %v3882
        %v3903 = vmul.f32 %v3895, %v3889
        %v3904 = vmul.f32 %v3896, %v3887
        %v3905 = vmul.f32 %v3897, %v3885
        %v3906 = vmul.f32 %v3898, %v3883
        %v3907 = vadd.f32 %v3858, %v3899
        %v3908 = vadd.f32 %v3859, %v3900
        %v3909 = vadd.f32 %v3860, %v3901
        %v3910 = vadd.f32 %v3861, %v3902
        %v3911 = vadd.f32 %v3862, %v3903
        %v3912 = vadd.f32 %v3863, %v3904
        %v3913 = vadd.f32 %v3864, %v3905
        %v3914 = vadd.f32 %v3865, %v3906
        %3915 = vrot.lane.b32.xlu0 %v3751, 1
        %v3916 = vpop.permute.xlu0 %3915
        %3917 = vrot.lane.b32.xlu0 %v3755, 1
        %v3918 = vpop.permute.xlu0 %3917
        %3919 = vrot.lane.b32.xlu0 %v3752, 1
        %v3920 = vpop.permute.xlu0 %3919
        %3921 = vrot.lane.b32.xlu0 %v3756, 1
        %v3922 = vpop.permute.xlu0 %3921
        %3923 = vrot.lane.b32.xlu0 %v3753, 1
        %v3924 = vpop.permute.xlu0 %3923
        %3925 = vrot.lane.b32.xlu0 %v3757, 1
        %v3926 = vpop.permute.xlu0 %3925
        %3927 = vrot.lane.b32.xlu0 %v3754, 1
        %v3928 = vpop.permute.xlu0 %3927
        %3929 = vrot.lane.b32.xlu0 %v3758, 1
        %v3930 = vpop.permute.xlu0 %3929
        %v3931 = vsel %vm840, %v3924, %v3928
        %v3932 = vsel %vm840, %v3926, %v3930
        %v3933 = vsel %vm840, %v3920, %v3924
        %v3934 = vsel %vm840, %v3922, %v3926
        %v3935 = vsel %vm840, %v3916, %v3920
        %v3936 = vsel %vm840, %v3918, %v3922
        %v3937 = vsel %vm840, %v3928, %v3916
        %v3938 = vsel %vm840, %v3930, %v3918
        %s3939 = scalar_lea.vmem [#allocation4], 3072
        %v3940 = vld [vmem:[%s3939] sm:$0xff]
        %v3941 = vld [vmem:[%s3939 + $0x8] sm:$0xff]
        %v3942 = vld [vmem:[%s3939 + $0x10] sm:$0xff]
        %v3943 = vld [vmem:[%s3939 + $0x18] sm:$0xff]
        %v3944 = vld [vmem:[%s3939 + $0x20] sm:$0xff]
        %v3945 = vld [vmem:[%s3939 + $0x28] sm:$0xff]
        %v3946 = vld [vmem:[%s3939 + $0x30] sm:$0xff]
        %v3947 = vld [vmem:[%s3939 + $0x38] sm:$0xff]
        %v3948 = vmul.f32 %v3940, %v3937
        %v3949 = vmul.f32 %v3941, %v3935
        %v3950 = vmul.f32 %v3942, %v3933
        %v3951 = vmul.f32 %v3943, %v3931
        %v3952 = vmul.f32 %v3944, %v3938
        %v3953 = vmul.f32 %v3945, %v3936
        %v3954 = vmul.f32 %v3946, %v3934
        %v3955 = vmul.f32 %v3947, %v3932
        %v3956 = vadd.f32 %v3907, %v3948
        %v3957 = vadd.f32 %v3908, %v3949
        %v3958 = vadd.f32 %v3909, %v3950
        %v3959 = vadd.f32 %v3910, %v3951
        %v3960 = vadd.f32 %v3911, %v3952
        %v3961 = vadd.f32 %v3912, %v3953
        %v3962 = vadd.f32 %v3913, %v3954
        %v3963 = vadd.f32 %v3914, %v3955
        %s3964 = scalar_lea.vmem [#allocation4], 3136
        %v3965 = vld [vmem:[%s3964] sm:$0xff]
        %v3966 = vld [vmem:[%s3964 + $0x8] sm:$0xff]
        %v3967 = vld [vmem:[%s3964 + $0x10] sm:$0xff]
        %v3968 = vld [vmem:[%s3964 + $0x18] sm:$0xff]
        %v3969 = vld [vmem:[%s3964 + $0x20] sm:$0xff]
        %v3970 = vld [vmem:[%s3964 + $0x28] sm:$0xff]
        %v3971 = vld [vmem:[%s3964 + $0x30] sm:$0xff]
        %v3972 = vld [vmem:[%s3964 + $0x38] sm:$0xff]
        %v3973 = vmul.f32 %v3965, %v3751
        %v3974 = vmul.f32 %v3966, %v3752
        %v3975 = vmul.f32 %v3967, %v3753
        %v3976 = vmul.f32 %v3968, %v3754
        %v3977 = vmul.f32 %v3969, %v3755
        %v3978 = vmul.f32 %v3970, %v3756
        %v3979 = vmul.f32 %v3971, %v3757
        %v3980 = vmul.f32 %v3972, %v3758
        %v3981 = vadd.f32 %v3956, %v3973
        %v3982 = vadd.f32 %v3957, %v3974
        %v3983 = vadd.f32 %v3958, %v3975
        %v3984 = vadd.f32 %v3959, %v3976
        %v3985 = vadd.f32 %v3960, %v3977
        %v3986 = vadd.f32 %v3961, %v3978
        %v3987 = vadd.f32 %v3962, %v3979
        %v3988 = vadd.f32 %v3963, %v3980
        %3989 = vrot.lane.b32.xlu0 %v3751, 127
        %v3990 = vpop.permute.xlu0 %3989
        %3991 = vrot.lane.b32.xlu0 %v3755, 127
        %v3992 = vpop.permute.xlu0 %3991
        %3993 = vrot.lane.b32.xlu0 %v3752, 127
        %v3994 = vpop.permute.xlu0 %3993
        %3995 = vrot.lane.b32.xlu0 %v3756, 127
        %v3996 = vpop.permute.xlu0 %3995
        %3997 = vrot.lane.b32.xlu0 %v3753, 127
        %v3998 = vpop.permute.xlu0 %3997
        %3999 = vrot.lane.b32.xlu0 %v3757, 127
        %v4000 = vpop.permute.xlu0 %3999
        %4001 = vrot.lane.b32.xlu0 %v3754, 127
        %v4002 = vpop.permute.xlu0 %4001
        %4003 = vrot.lane.b32.xlu0 %v3758, 127
        %v4004 = vpop.permute.xlu0 %4003
        %v4005 = vsel %vm915, %v3998, %v4002
        %v4006 = vsel %vm915, %v4000, %v4004
        %v4007 = vsel %vm915, %v3994, %v3998
        %v4008 = vsel %vm915, %v3996, %v4000
        %v4009 = vsel %vm915, %v3990, %v3994
        %v4010 = vsel %vm915, %v3992, %v3996
        %v4011 = vsel %vm915, %v4002, %v3990
        %v4012 = vsel %vm915, %v4004, %v3992
        %s4013 = scalar_lea.vmem [#allocation4], 3200
        %v4014 = vld [vmem:[%s4013] sm:$0xff]
        %v4015 = vld [vmem:[%s4013 + $0x8] sm:$0xff]
        %v4016 = vld [vmem:[%s4013 + $0x10] sm:$0xff]
        %v4017 = vld [vmem:[%s4013 + $0x18] sm:$0xff]
        %v4018 = vld [vmem:[%s4013 + $0x20] sm:$0xff]
        %v4019 = vld [vmem:[%s4013 + $0x28] sm:$0xff]
        %v4020 = vld [vmem:[%s4013 + $0x30] sm:$0xff]
        %v4021 = vld [vmem:[%s4013 + $0x38] sm:$0xff]
        %v4022 = vmul.f32 %v4014, %v4009
        %v4023 = vmul.f32 %v4015, %v4007
        %v4024 = vmul.f32 %v4016, %v4005
        %v4025 = vmul.f32 %v4017, %v4011
        %v4026 = vmul.f32 %v4018, %v4010
        %v4027 = vmul.f32 %v4019, %v4008
        %v4028 = vmul.f32 %v4020, %v4006
        %v4029 = vmul.f32 %v4021, %v4012
        %v4030 = vadd.f32 %v3981, %v4022
        %v4031 = vadd.f32 %v3982, %v4023
        %v4032 = vadd.f32 %v3983, %v4024
        %v4033 = vadd.f32 %v3984, %v4025
        %v4034 = vadd.f32 %v3985, %v4026
        %v4035 = vadd.f32 %v3986, %v4027
        %v4036 = vadd.f32 %v3987, %v4028
        %v4037 = vadd.f32 %v3988, %v4029
        %4038 = vrot.lane.b32.xlu0 %v3751, 113
        %v4039 = vpop.permute.xlu0 %4038
        %4040 = vrot.lane.b32.xlu0 %v3755, 113
        %v4041 = vpop.permute.xlu0 %4040
        %4042 = vrot.lane.b32.xlu0 %v3752, 113
        %v4043 = vpop.permute.xlu0 %4042
        %4044 = vrot.lane.b32.xlu0 %v3756, 113
        %v4045 = vpop.permute.xlu0 %4044
        %4046 = vrot.lane.b32.xlu0 %v3753, 113
        %v4047 = vpop.permute.xlu0 %4046
        %4048 = vrot.lane.b32.xlu0 %v3757, 113
        %v4049 = vpop.permute.xlu0 %4048
        %4050 = vrot.lane.b32.xlu0 %v3754, 113
        %v4051 = vpop.permute.xlu0 %4050
        %4052 = vrot.lane.b32.xlu0 %v3758, 113
        %v4053 = vpop.permute.xlu0 %4052
        %v4054 = vsel %vm965, %v4047, %v4051
        %v4055 = vsel %vm965, %v4049, %v4053
        %v4056 = vsel %vm965, %v4043, %v4047
        %v4057 = vsel %vm965, %v4045, %v4049
        %v4058 = vsel %vm965, %v4039, %v4043
        %v4059 = vsel %vm965, %v4041, %v4045
        %v4060 = vsel %vm965, %v4051, %v4039
        %v4061 = vsel %vm965, %v4053, %v4041
        %s4062 = scalar_lea.vmem [#allocation4], 3264
        %v4063 = vld [vmem:[%s4062] sm:$0xff]
        %v4064 = vld [vmem:[%s4062 + $0x8] sm:$0xff]
        %v4065 = vld [vmem:[%s4062 + $0x10] sm:$0xff]
        %v4066 = vld [vmem:[%s4062 + $0x18] sm:$0xff]
        %v4067 = vld [vmem:[%s4062 + $0x20] sm:$0xff]
        %v4068 = vld [vmem:[%s4062 + $0x28] sm:$0xff]
        %v4069 = vld [vmem:[%s4062 + $0x30] sm:$0xff]
        %v4070 = vld [vmem:[%s4062 + $0x38] sm:$0xff]
        %v4071 = vmul.f32 %v4063, %v4058
        %v4072 = vmul.f32 %v4064, %v4056
        %v4073 = vmul.f32 %v4065, %v4054
        %v4074 = vmul.f32 %v4066, %v4060
        %v4075 = vmul.f32 %v4067, %v4059
        %v4076 = vmul.f32 %v4068, %v4057
        %v4077 = vmul.f32 %v4069, %v4055
        %v4078 = vmul.f32 %v4070, %v4061
        %v4079 = vadd.f32 %v4030, %v4071
        %v4080 = vadd.f32 %v4031, %v4072
        %v4081 = vadd.f32 %v4032, %v4073
        %v4082 = vadd.f32 %v4033, %v4074
        %v4083 = vadd.f32 %v4034, %v4075
        %v4084 = vadd.f32 %v4035, %v4076
        %v4085 = vadd.f32 %v4036, %v4077
        %v4086 = vadd.f32 %v4037, %v4078
        %4087 = vrot.lane.b32.xlu0 %v3751, 112
        %v4088 = vpop.permute.xlu0 %4087
        %4089 = vrot.lane.b32.xlu0 %v3755, 112
        %v4090 = vpop.permute.xlu0 %4089
        %4091 = vrot.lane.b32.xlu0 %v3752, 112
        %v4092 = vpop.permute.xlu0 %4091
        %4093 = vrot.lane.b32.xlu0 %v3756, 112
        %v4094 = vpop.permute.xlu0 %4093
        %4095 = vrot.lane.b32.xlu0 %v3753, 112
        %v4096 = vpop.permute.xlu0 %4095
        %4097 = vrot.lane.b32.xlu0 %v3757, 112
        %v4098 = vpop.permute.xlu0 %4097
        %4099 = vrot.lane.b32.xlu0 %v3754, 112
        %v4100 = vpop.permute.xlu0 %4099
        %4101 = vrot.lane.b32.xlu0 %v3758, 112
        %v4102 = vpop.permute.xlu0 %4101
        %v4103 = vsel %vm1015, %v4096, %v4100
        %v4104 = vsel %vm1015, %v4098, %v4102
        %v4105 = vsel %vm1015, %v4092, %v4096
        %v4106 = vsel %vm1015, %v4094, %v4098
        %v4107 = vsel %vm1015, %v4088, %v4092
        %v4108 = vsel %vm1015, %v4090, %v4094
        %v4109 = vsel %vm1015, %v4100, %v4088
        %v4110 = vsel %vm1015, %v4102, %v4090
        %s4111 = scalar_lea.vmem [#allocation4], 3328
        %v4112 = vld [vmem:[%s4111] sm:$0xff]
        %v4113 = vld [vmem:[%s4111 + $0x8] sm:$0xff]
        %v4114 = vld [vmem:[%s4111 + $0x10] sm:$0xff]
        %v4115 = vld [vmem:[%s4111 + $0x18] sm:$0xff]
        %v4116 = vld [vmem:[%s4111 + $0x20] sm:$0xff]
        %v4117 = vld [vmem:[%s4111 + $0x28] sm:$0xff]
        %v4118 = vld [vmem:[%s4111 + $0x30] sm:$0xff]
        %v4119 = vld [vmem:[%s4111 + $0x38] sm:$0xff]
        %v4120 = vmul.f32 %v4112, %v4107
        %v4121 = vmul.f32 %v4113, %v4105
        %v4122 = vmul.f32 %v4114, %v4103
        %v4123 = vmul.f32 %v4115, %v4109
        %v4124 = vmul.f32 %v4116, %v4108
        %v4125 = vmul.f32 %v4117, %v4106
        %v4126 = vmul.f32 %v4118, %v4104
        %v4127 = vmul.f32 %v4119, %v4110
        %v4128 = vadd.f32 %v4079, %v4120
        %v4129 = vadd.f32 %v4080, %v4121
        %v4130 = vadd.f32 %v4081, %v4122
        %v4131 = vadd.f32 %v4082, %v4123
        %v4132 = vadd.f32 %v4083, %v4124
        %v4133 = vadd.f32 %v4084, %v4125
        %v4134 = vadd.f32 %v4085, %v4126
        %v4135 = vadd.f32 %v4086, %v4127
        %4136 = vrot.lane.b32.xlu0 %v3751, 111
        %v4137 = vpop.permute.xlu0 %4136
        %4138 = vrot.lane.b32.xlu0 %v3755, 111
        %v4139 = vpop.permute.xlu0 %4138
        %4140 = vrot.lane.b32.xlu0 %v3752, 111
        %v4141 = vpop.permute.xlu0 %4140
        %4142 = vrot.lane.b32.xlu0 %v3756, 111
        %v4143 = vpop.permute.xlu0 %4142
        %4144 = vrot.lane.b32.xlu0 %v3753, 111
        %v4145 = vpop.permute.xlu0 %4144
        %4146 = vrot.lane.b32.xlu0 %v3757, 111
        %v4147 = vpop.permute.xlu0 %4146
        %4148 = vrot.lane.b32.xlu0 %v3754, 111
        %v4149 = vpop.permute.xlu0 %4148
        %4150 = vrot.lane.b32.xlu0 %v3758, 111
        %v4151 = vpop.permute.xlu0 %4150
        %v4152 = vsel %vm1065, %v4145, %v4149
        %v4153 = vsel %vm1065, %v4147, %v4151
        %v4154 = vsel %vm1065, %v4141, %v4145
        %v4155 = vsel %vm1065, %v4143, %v4147
        %v4156 = vsel %vm1065, %v4137, %v4141
        %v4157 = vsel %vm1065, %v4139, %v4143
        %v4158 = vsel %vm1065, %v4149, %v4137
        %v4159 = vsel %vm1065, %v4151, %v4139
        %s4160 = scalar_lea.vmem [#allocation4], 3392
        %v4161 = vld [vmem:[%s4160] sm:$0xff]
        %v4162 = vld [vmem:[%s4160 + $0x8] sm:$0xff]
        %v4163 = vld [vmem:[%s4160 + $0x10] sm:$0xff]
        %v4164 = vld [vmem:[%s4160 + $0x18] sm:$0xff]
        %v4165 = vld [vmem:[%s4160 + $0x20] sm:$0xff]
        %v4166 = vld [vmem:[%s4160 + $0x28] sm:$0xff]
        %v4167 = vld [vmem:[%s4160 + $0x30] sm:$0xff]
        %v4168 = vld [vmem:[%s4160 + $0x38] sm:$0xff]
        %v4169 = vmul.f32 %v4161, %v4156
        %v4170 = vmul.f32 %v4162, %v4154
        %v4171 = vmul.f32 %v4163, %v4152
        %v4172 = vmul.f32 %v4164, %v4158
        %v4173 = vmul.f32 %v4165, %v4157
        %v4174 = vmul.f32 %v4166, %v4155
        %v4175 = vmul.f32 %v4167, %v4153
        %v4176 = vmul.f32 %v4168, %v4159
        %v4177 = vadd.f32 %v4128, %v4169
        %v4178 = vadd.f32 %v4129, %v4170
        %v4179 = vadd.f32 %v4130, %v4171
        %v4180 = vadd.f32 %v4131, %v4172
        %v4181 = vadd.f32 %v4132, %v4173
        %v4182 = vadd.f32 %v4133, %v4174
        %v4183 = vadd.f32 %v4134, %v4175
        %v4184 = vadd.f32 %v4135, %v4176
        %v4185 = vmax.f32 %v4177, 0.0
        %v4186 = vmax.f32 %v4178, 0.0
        %v4187 = vmax.f32 %v4179, 0.0
        %v4188 = vmax.f32 %v4180, 0.0
        %v4189 = vmax.f32 %v4181, 0.0
        %v4190 = vmax.f32 %v4182, 0.0
        %v4191 = vmax.f32 %v4183, 0.0
        %v4192 = vmax.f32 %v4184, 0.0
        %s4193 = scalar_lea.vmem [#allocation6], 96
        %v4194 = vld [vmem:[%s4193] sm:$0xff]
        %v4195 = vld [vmem:[%s4193 + $0x8] sm:$0xff]
        %s4196 = scalar_lea.vmem [#allocation2], 1088
        %v4197 = vld [vmem:[%s4196] sm:$0xff]
        %v4198 = vld [vmem:[%s4196 + $0x8] sm:$0xff]
        %v4199 = vld [vmem:[%s4196 + $0x10] sm:$0xff]
        %v4200 = vld [vmem:[%s4196 + $0x18] sm:$0xff]
        %v4201 = vld [vmem:[%s4196 + $0x20] sm:$0xff]
        %v4202 = vld [vmem:[%s4196 + $0x28] sm:$0xff]
        %v4203 = vld [vmem:[%s4196 + $0x30] sm:$0xff]
        %v4204 = vld [vmem:[%s4196 + $0x38] sm:$0xff]
        %v4206 = vsel %vm503, %v4194, 0
        %v4209 = vsel %vm503, %v4195, 0
        %4211 = vmatprep.subr.mxu0 %v4186
        %4212 = vmatpush1.msra.mxu0 %v4185
        %4213 = vmatprep.subr.mxu0 %v4190
        %4214 = vmatpush1.msra.mxu0 %v4189
        %4215 = vmatprep.subr.mxu0 0.0
        %4216 = vmatpush1.msra.mxu0 0.0
        %4217 = vmatprep.subr.mxu0 0.0
        %4218 = vmatpush1.msra.mxu0 0.0
        %4219 = vmatprep.subr.mxu0 0.0
        %4220 = vmatpush1.msra.mxu0 0.0
        %4221 = vmatprep.subr.mxu0 0.0
        %4222 = vmatpush1.msra.mxu0 0.0
        %4223 = vmatprep.subr.mxu0 0.0
        %4224 = vmatpush1.msra.mxu0 0.0
        %4225 = vmatprep.subr.mxu0 0.0
        %4226 = vmatpush1.msra.mxu0 0.0
        %4227 = vmatprep.subr.mxu0 0.0
        %4228 = vmatpush1.msra.mxu0 0.0
        %4229 = vmatprep.subr.mxu0 0.0
        %4230 = vmatpush1.msra.mxu0 0.0
        %4231 = vmatprep.subr.mxu0 0.0
        %4232 = vmatpush1.msra.mxu0 0.0
        %4233 = vmatprep.subr.mxu0 0.0
        %4234 = vmatpush1.msra.mxu0 0.0
        %4235 = vmatprep.subr.mxu0 0.0
        %4236 = vmatpush1.msra.mxu0 0.0
        %4237 = vmatprep.subr.mxu0 0.0
        %4238 = vmatpush1.msra.mxu0 0.0
        %4239 = vmatprep.subr.mxu0 0.0
        %4240 = vmatpush1.msra.mxu0 0.0
        %4241 = vmatprep.subr.mxu0 0.0
        %4242 = vmatpush1.msra.mxu0 0.0
        %4243 = vmatprep.subr.mxu0 0.0
        %4244 = vmatpush1.msra.mxu0 0.0
        %4245 = vmatprep.subr.mxu0 0.0
        %4246 = vmatpush1.msra.mxu0 0.0
        %4247 = vmatprep.subr.mxu0 0.0
        %4248 = vmatpush1.msra.mxu0 0.0
        %4249 = vmatprep.subr.mxu0 0.0
        %4250 = vmatpush1.msra.mxu0 0.0
        %4251 = vmatprep.subr.mxu0 0.0
        %4252 = vmatpush1.msra.mxu0 0.0
        %4253 = vmatprep.subr.mxu0 0.0
        %4254 = vmatpush1.msra.mxu0 0.0
        %4255 = vmatprep.subr.mxu0 0.0
        %4256 = vmatpush1.msra.mxu0 0.0
        %4257 = vmatprep.subr.mxu0 0.0
        %4258 = vmatpush1.msra.mxu0 0.0
        %4259 = vmatprep.subr.mxu0 0.0
        %4260 = vmatpush1.msra.mxu0 0.0
        %4261 = vmatprep.subr.mxu0 0.0
        %4262 = vmatpush1.msra.mxu0 0.0
        %4263 = vmatprep.subr.mxu0 0.0
        %4264 = vmatpush1.msra.mxu0 0.0
        %4265 = vmatprep.subr.mxu0 0.0
        %4266 = vmatpush1.msra.mxu0 0.0
        %4267 = vmatprep.subr.mxu0 0.0
        %4268 = vmatpush1.msra.mxu0 0.0
        %4269 = vmatprep.subr.mxu0 0.0
        %4270 = vmatpush1.msra.mxu0 0.0
        %4271 = vmatprep.subr.mxu0 0.0
        %4272 = vmatpush1.msra.mxu0 0.0
        %4273 = vmatprep.subr.mxu0 0.0
        %4274 = vmatpush1.msra.mxu0 0.0
        %4275 = vmatprep.mubr.f32.mxu0 0.0
        %4276 = vmatmul.mubr.f32.gmra.mrb[0].mxu0 %v4206
        %v4277 = vpop.f32.mrb[0].mxu0
        %v4278 = vadd.f32 %v4197, %v4277
        %v4279 = vpop.f32.mrb[0].mxu0
        %v4280 = vadd.f32 %v4198, %v4279
        %4281 = vmatprep.mubr.f32.mxu0 0.0
        %4282 = vmatmul.mubr.f32.gmra.mrb[0].mxu0 %v4209
        %v4283 = vpop.f32.mrb[0].mxu0
        %v4284 = vadd.f32 %v4201, %v4283
        %v4285 = vpop.f32.mrb[0].mxu0
        %v4286 = vadd.f32 %v4202, %v4285
        %4287 = vdwg.mxu0
        %4288 = vmatprep.subr.mxu0 %v4188
        %4289 = vmatpush1.msra.mxu0 %v4187
        %4290 = vmatprep.subr.mxu0 %v4192
        %4291 = vmatpush1.msra.mxu0 %v4191
        %4292 = vmatprep.subr.mxu0 0.0
        %4293 = vmatpush1.msra.mxu0 0.0
        %4294 = vmatprep.subr.mxu0 0.0
        %4295 = vmatpush1.msra.mxu0 0.0
        %4296 = vmatprep.subr.mxu0 0.0
        %4297 = vmatpush1.msra.mxu0 0.0
        %4298 = vmatprep.subr.mxu0 0.0
        %4299 = vmatpush1.msra.mxu0 0.0
        %4300 = vmatprep.subr.mxu0 0.0
        %4301 = vmatpush1.msra.mxu0 0.0
        %4302 = vmatprep.subr.mxu0 0.0
        %4303 = vmatpush1.msra.mxu0 0.0
        %4304 = vmatprep.subr.mxu0 0.0
        %4305 = vmatpush1.msra.mxu0 0.0
        %4306 = vmatprep.subr.mxu0 0.0
        %4307 = vmatpush1.msra.mxu0 0.0
        %4308 = vmatprep.subr.mxu0 0.0
        %4309 = vmatpush1.msra.mxu0 0.0
        %4310 = vmatprep.subr.mxu0 0.0
        %4311 = vmatpush1.msra.mxu0 0.0
        %4312 = vmatprep.subr.mxu0 0.0
        %4313 = vmatpush1.msra.mxu0 0.0
        %4314 = vmatprep.subr.mxu0 0.0
        %4315 = vmatpush1.msra.mxu0 0.0
        %4316 = vmatprep.subr.mxu0 0.0
        %4317 = vmatpush1.msra.mxu0 0.0
        %4318 = vmatprep.subr.mxu0 0.0
        %4319 = vmatpush1.msra.mxu0 0.0
        %4320 = vmatprep.subr.mxu0 0.0
        %4321 = vmatpush1.msra.mxu0 0.0
        %4322 = vmatprep.subr.mxu0 0.0
        %4323 = vmatpush1.msra.mxu0 0.0
        %4324 = vmatprep.subr.mxu0 0.0
        %4325 = vmatpush1.msra.mxu0 0.0
        %4326 = vmatprep.subr.mxu0 0.0
        %4327 = vmatpush1.msra.mxu0 0.0
        %4328 = vmatprep.subr.mxu0 0.0
        %4329 = vmatpush1.msra.mxu0 0.0
        %4330 = vmatprep.subr.mxu0 0.0
        %4331 = vmatpush1.msra.mxu0 0.0
        %4332 = vmatprep.subr.mxu0 0.0
        %4333 = vmatpush1.msra.mxu0 0.0
        %4334 = vmatprep.subr.mxu0 0.0
        %4335 = vmatpush1.msra.mxu0 0.0
        %4336 = vmatprep.subr.mxu0 0.0
        %4337 = vmatpush1.msra.mxu0 0.0
        %4338 = vmatprep.subr.mxu0 0.0
        %4339 = vmatpush1.msra.mxu0 0.0
        %4340 = vmatprep.subr.mxu0 0.0
        %4341 = vmatpush1.msra.mxu0 0.0
        %4342 = vmatprep.subr.mxu0 0.0
        %4343 = vmatpush1.msra.mxu0 0.0
        %4344 = vmatprep.subr.mxu0 0.0
        %4345 = vmatpush1.msra.mxu0 0.0
        %4346 = vmatprep.subr.mxu0 0.0
        %4347 = vmatpush1.msra.mxu0 0.0
        %4348 = vmatprep.subr.mxu0 0.0
        %4349 = vmatpush1.msra.mxu0 0.0
        %4350 = vmatprep.subr.mxu0 0.0
        %4351 = vmatpush1.msra.mxu0 0.0
        %4352 = vmatprep.mubr.f32.mxu0 0.0
        %4353 = vmatmul.mubr.f32.gmra.mrb[0].mxu0 %v4206
        %v4354 = vpop.f32.mrb[0].mxu0
        %v4355 = vadd.f32 %v4199, %v4354
        %v4356 = vpop.f32.mrb[0].mxu0
        %v4357 = vadd.f32 %v4200, %v4356
        %4358 = vmatprep.mubr.f32.mxu0 0.0
        %4359 = vmatmul.mubr.f32.gmra.mrb[0].mxu0 %v4209
        %v4360 = vpop.f32.mrb[0].mxu0
        %v4361 = vadd.f32 %v4203, %v4360
        %v4362 = vpop.f32.mrb[0].mxu0
        %v4363 = vadd.f32 %v4204, %v4362
        %4364 = vdwg.mxu0
        %v4365 = vmax.f32 %v4278, 0.0
        %v4366 = vmax.f32 %v4280, 0.0
        %v4367 = vmax.f32 %v4355, 0.0
        %v4368 = vmax.f32 %v4357, 0.0
        %v4369 = vmax.f32 %v4284, 0.0
        %v4370 = vmax.f32 %v4286, 0.0
        %v4371 = vmax.f32 %v4361, 0.0
        %v4372 = vmax.f32 %v4363, 0.0
        %s4373 = scalar_lea.vmem [#allocation2], 640
        %v4374 = vld [vmem:[%s4373] sm:$0xff]
        %v4375 = vld [vmem:[%s4373 + $0x8] sm:$0xff]
        %v4376 = vld [vmem:[%s4373 + $0x10] sm:$0xff]
        %v4377 = vld [vmem:[%s4373 + $0x18] sm:$0xff]
        %v4378 = vld [vmem:[%s4373 + $0x20] sm:$0xff]
        %v4379 = vld [vmem:[%s4373 + $0x28] sm:$0xff]
        %v4380 = vld [vmem:[%s4373 + $0x30] sm:$0xff]
        %v4381 = vld [vmem:[%s4373 + $0x38] sm:$0xff]
        %4382 = vrot.lane.b32.xlu0 %v3137, 34
        %v4383 = vpop.permute.xlu0 %4382
        %4384 = vrot.lane.b32.xlu0 %v3141, 34
        %v4385 = vpop.permute.xlu0 %4384
        %4386 = vrot.lane.b32.xlu0 %v3138, 34
        %v4387 = vpop.permute.xlu0 %4386
        %4388 = vrot.lane.b32.xlu0 %v3142, 34
        %v4389 = vpop.permute.xlu0 %4388
        %4390 = vrot.lane.b32.xlu0 %v3139, 34
        %v4391 = vpop.permute.xlu0 %4390
        %4392 = vrot.lane.b32.xlu0 %v3143, 34
        %v4393 = vpop.permute.xlu0 %4392
        %4394 = vrot.lane.b32.xlu0 %v3140, 34
        %v4395 = vpop.permute.xlu0 %4394
        %4396 = vrot.lane.b32.xlu0 %v3144, 34
        %v4397 = vpop.permute.xlu0 %4396
        %v4398 = vsel %vm1926, %v4391, %v4395
        %v4399 = vsel %vm1926, %v4393, %v4397
        %v4400 = vsel %vm1926, %v4387, %v4391
        %v4401 = vsel %vm1926, %v4389, %v4393
        %v4402 = vsel %vm1926, %v4383, %v4387
        %v4403 = vsel %vm1926, %v4385, %v4389
        %v4404 = vsel %vm1926, %v4395, %v4383
        %v4405 = vsel %vm1926, %v4397, %v4385
        %s4406 = scalar_lea.vmem [#allocation4], 3456
        %v4407 = vld [vmem:[%s4406] sm:$0xff]
        %v4408 = vld [vmem:[%s4406 + $0x8] sm:$0xff]
        %v4409 = vld [vmem:[%s4406 + $0x10] sm:$0xff]
        %v4410 = vld [vmem:[%s4406 + $0x18] sm:$0xff]
        %v4411 = vld [vmem:[%s4406 + $0x20] sm:$0xff]
        %v4412 = vld [vmem:[%s4406 + $0x28] sm:$0xff]
        %v4413 = vld [vmem:[%s4406 + $0x30] sm:$0xff]
        %v4414 = vld [vmem:[%s4406 + $0x38] sm:$0xff]
        %v4415 = vmul.f32 %v4407, %v4404
        %v4416 = vmul.f32 %v4408, %v4402
        %v4417 = vmul.f32 %v4409, %v4400
        %v4418 = vmul.f32 %v4410, %v4398
        %v4419 = vmul.f32 %v4411, %v4405
        %v4420 = vmul.f32 %v4412, %v4403
        %v4421 = vmul.f32 %v4413, %v4401
        %v4422 = vmul.f32 %v4414, %v4399
        %v4423 = vadd.f32 %v4374, %v4415
        %v4424 = vadd.f32 %v4375, %v4416
        %v4425 = vadd.f32 %v4376, %v4417
        %v4426 = vadd.f32 %v4377, %v4418
        %v4427 = vadd.f32 %v4378, %v4419
        %v4428 = vadd.f32 %v4379, %v4420
        %v4429 = vadd.f32 %v4380, %v4421
        %v4430 = vadd.f32 %v4381, %v4422
        %4431 = vrot.lane.b32.xlu0 %v3137, 32
        %v4432 = vpop.permute.xlu0 %4431
        %4433 = vrot.lane.b32.xlu0 %v3141, 32
        %v4434 = vpop.permute.xlu0 %4433
        %4435 = vrot.lane.b32.xlu0 %v3138, 32
        %v4436 = vpop.permute.xlu0 %4435
        %4437 = vrot.lane.b32.xlu0 %v3142, 32
        %v4438 = vpop.permute.xlu0 %4437
        %4439 = vrot.lane.b32.xlu0 %v3139, 32
        %v4440 = vpop.permute.xlu0 %4439
        %4441 = vrot.lane.b32.xlu0 %v3143, 32
        %v4442 = vpop.permute.xlu0 %4441
        %4443 = vrot.lane.b32.xlu0 %v3140, 32
        %v4444 = vpop.permute.xlu0 %4443
        %4445 = vrot.lane.b32.xlu0 %v3144, 32
        %v4446 = vpop.permute.xlu0 %4445
        %v4447 = vsel %vm1976, %v4440, %v4444
        %v4448 = vsel %vm1976, %v4442, %v4446
        %v4449 = vsel %vm1976, %v4436, %v4440
        %v4450 = vsel %vm1976, %v4438, %v4442
        %v4451 = vsel %vm1976, %v4432, %v4436
        %v4452 = vsel %vm1976, %v4434, %v4438
        %v4453 = vsel %vm1976, %v4444, %v4432
        %v4454 = vsel %vm1976, %v4446, %v4434
        %s4455 = scalar_lea.vmem [#allocation4], 3520
        %v4456 = vld [vmem:[%s4455] sm:$0xff]
        %v4457 = vld [vmem:[%s4455 + $0x8] sm:$0xff]
        %v4458 = vld [vmem:[%s4455 + $0x10] sm:$0xff]
        %v4459 = vld [vmem:[%s4455 + $0x18] sm:$0xff]
        %v4460 = vld [vmem:[%s4455 + $0x20] sm:$0xff]
        %v4461 = vld [vmem:[%s4455 + $0x28] sm:$0xff]
        %v4462 = vld [vmem:[%s4455 + $0x30] sm:$0xff]
        %v4463 = vld [vmem:[%s4455 + $0x38] sm:$0xff]
        %v4464 = vmul.f32 %v4456, %v4453
        %v4465 = vmul.f32 %v4457, %v4451
        %v4466 = vmul.f32 %v4458, %v4449
        %v4467 = vmul.f32 %v4459, %v4447
        %v4468 = vmul.f32 %v4460, %v4454
        %v4469 = vmul.f32 %v4461, %v4452
        %v4470 = vmul.f32 %v4462, %v4450
        %v4471 = vmul.f32 %v4463, %v4448
        %v4472 = vadd.f32 %v4423, %v4464
        %v4473 = vadd.f32 %v4424, %v4465
        %v4474 = vadd.f32 %v4425, %v4466
        %v4475 = vadd.f32 %v4426, %v4467
        %v4476 = vadd.f32 %v4427, %v4468
        %v4477 = vadd.f32 %v4428, %v4469
        %v4478 = vadd.f32 %v4429, %v4470
        %v4479 = vadd.f32 %v4430, %v4471
        %4480 = vrot.lane.b32.xlu0 %v3137, 30
        %v4481 = vpop.permute.xlu0 %4480
        %4482 = vrot.lane.b32.xlu0 %v3141, 30
        %v4483 = vpop.permute.xlu0 %4482
        %4484 = vrot.lane.b32.xlu0 %v3138, 30
        %v4485 = vpop.permute.xlu0 %4484
        %4486 = vrot.lane.b32.xlu0 %v3142, 30
        %v4487 = vpop.permute.xlu0 %4486
        %4488 = vrot.lane.b32.xlu0 %v3139, 30
        %v4489 = vpop.permute.xlu0 %4488
        %4490 = vrot.lane.b32.xlu0 %v3143, 30
        %v4491 = vpop.permute.xlu0 %4490
        %4492 = vrot.lane.b32.xlu0 %v3140, 30
        %v4493 = vpop.permute.xlu0 %4492
        %4494 = vrot.lane.b32.xlu0 %v3144, 30
        %v4495 = vpop.permute.xlu0 %4494
        %v4496 = vsel %vm2026, %v4489, %v4493
        %v4497 = vsel %vm2026, %v4491, %v4495
        %v4498 = vsel %vm2026, %v4485, %v4489
        %v4499 = vsel %vm2026, %v4487, %v4491
        %v4500 = vsel %vm2026, %v4481, %v4485
        %v4501 = vsel %vm2026, %v4483, %v4487
        %v4502 = vsel %vm2026, %v4493, %v4481
        %v4503 = vsel %vm2026, %v4495, %v4483
        %s4504 = scalar_lea.vmem [#allocation4], 3584
        %v4505 = vld [vmem:[%s4504] sm:$0xff]
        %v4506 = vld [vmem:[%s4504 + $0x8] sm:$0xff]
        %v4507 = vld [vmem:[%s4504 + $0x10] sm:$0xff]
        %v4508 = vld [vmem:[%s4504 + $0x18] sm:$0xff]
        %v4509 = vld [vmem:[%s4504 + $0x20] sm:$0xff]
        %v4510 = vld [vmem:[%s4504 + $0x28] sm:$0xff]
        %v4511 = vld [vmem:[%s4504 + $0x30] sm:$0xff]
        %v4512 = vld [vmem:[%s4504 + $0x38] sm:$0xff]
        %v4513 = vmul.f32 %v4505, %v4502
        %v4514 = vmul.f32 %v4506, %v4500
        %v4515 = vmul.f32 %v4507, %v4498
        %v4516 = vmul.f32 %v4508, %v4496
        %v4517 = vmul.f32 %v4509, %v4503
        %v4518 = vmul.f32 %v4510, %v4501
        %v4519 = vmul.f32 %v4511, %v4499
        %v4520 = vmul.f32 %v4512, %v4497
        %v4521 = vadd.f32 %v4472, %v4513
        %v4522 = vadd.f32 %v4473, %v4514
        %v4523 = vadd.f32 %v4474, %v4515
        %v4524 = vadd.f32 %v4475, %v4516
        %v4525 = vadd.f32 %v4476, %v4517
        %v4526 = vadd.f32 %v4477, %v4518
        %v4527 = vadd.f32 %v4478, %v4519
        %v4528 = vadd.f32 %v4479, %v4520
        %4529 = vrot.lane.b32.xlu0 %v3137, 2
        %v4530 = vpop.permute.xlu0 %4529
        %4531 = vrot.lane.b32.xlu0 %v3141, 2
        %v4532 = vpop.permute.xlu0 %4531
        %4533 = vrot.lane.b32.xlu0 %v3138, 2
        %v4534 = vpop.permute.xlu0 %4533
        %4535 = vrot.lane.b32.xlu0 %v3142, 2
        %v4536 = vpop.permute.xlu0 %4535
        %4537 = vrot.lane.b32.xlu0 %v3139, 2
        %v4538 = vpop.permute.xlu0 %4537
        %4539 = vrot.lane.b32.xlu0 %v3143, 2
        %v4540 = vpop.permute.xlu0 %4539
        %4541 = vrot.lane.b32.xlu0 %v3140, 2
        %v4542 = vpop.permute.xlu0 %4541
        %4543 = vrot.lane.b32.xlu0 %v3144, 2
        %v4544 = vpop.permute.xlu0 %4543
        %v4545 = vsel %vm2076, %v4538, %v4542
        %v4546 = vsel %vm2076, %v4540, %v4544
        %v4547 = vsel %vm2076, %v4534, %v4538
        %v4548 = vsel %vm2076, %v4536, %v4540
        %v4549 = vsel %vm2076, %v4530, %v4534
        %v4550 = vsel %vm2076, %v4532, %v4536
        %v4551 = vsel %vm2076, %v4542, %v4530
        %v4552 = vsel %vm2076, %v4544, %v4532
        %s4553 = scalar_lea.vmem [#allocation4], 3648
        %v4554 = vld [vmem:[%s4553] sm:$0xff]
        %v4555 = vld [vmem:[%s4553 + $0x8] sm:$0xff]
        %v4556 = vld [vmem:[%s4553 + $0x10] sm:$0xff]
        %v4557 = vld [vmem:[%s4553 + $0x18] sm:$0xff]
        %v4558 = vld [vmem:[%s4553 + $0x20] sm:$0xff]
        %v4559 = vld [vmem:[%s4553 + $0x28] sm:$0xff]
        %v4560 = vld [vmem:[%s4553 + $0x30] sm:$0xff]
        %v4561 = vld [vmem:[%s4553 + $0x38] sm:$0xff]
        %v4562 = vmul.f32 %v4554, %v4551
        %v4563 = vmul.f32 %v4555, %v4549
        %v4564 = vmul.f32 %v4556, %v4547
        %v4565 = vmul.f32 %v4557, %v4545
        %v4566 = vmul.f32 %v4558, %v4552
        %v4567 = vmul.f32 %v4559, %v4550
        %v4568 = vmul.f32 %v4560, %v4548
        %v4569 = vmul.f32 %v4561, %v4546
        %v4570 = vadd.f32 %v4521, %v4562
        %v4571 = vadd.f32 %v4522, %v4563
        %v4572 = vadd.f32 %v4523, %v4564
        %v4573 = vadd.f32 %v4524, %v4565
        %v4574 = vadd.f32 %v4525, %v4566
        %v4575 = vadd.f32 %v4526, %v4567
        %v4576 = vadd.f32 %v4527, %v4568
        %v4577 = vadd.f32 %v4528, %v4569
        %s4578 = scalar_lea.vmem [#allocation4], 3712
        %v4579 = vld [vmem:[%s4578] sm:$0xff]
        %v4580 = vld [vmem:[%s4578 + $0x8] sm:$0xff]
        %v4581 = vld [vmem:[%s4578 + $0x10] sm:$0xff]
        %v4582 = vld [vmem:[%s4578 + $0x18] sm:$0xff]
        %v4583 = vld [vmem:[%s4578 + $0x20] sm:$0xff]
        %v4584 = vld [vmem:[%s4578 + $0x28] sm:$0xff]
        %v4585 = vld [vmem:[%s4578 + $0x30] sm:$0xff]
        %v4586 = vld [vmem:[%s4578 + $0x38] sm:$0xff]
        %v4587 = vmul.f32 %v4579, %v3137
        %v4588 = vmul.f32 %v4580, %v3138
        %v4589 = vmul.f32 %v4581, %v3139
        %v4590 = vmul.f32 %v4582, %v3140
        %v4591 = vmul.f32 %v4583, %v3141
        %v4592 = vmul.f32 %v4584, %v3142
        %v4593 = vmul.f32 %v4585, %v3143
        %v4594 = vmul.f32 %v4586, %v3144
        %v4595 = vadd.f32 %v4570, %v4587
        %v4596 = vadd.f32 %v4571, %v4588
        %v4597 = vadd.f32 %v4572, %v4589
        %v4598 = vadd.f32 %v4573, %v4590
        %v4599 = vadd.f32 %v4574, %v4591
        %v4600 = vadd.f32 %v4575, %v4592
        %v4601 = vadd.f32 %v4576, %v4593
        %v4602 = vadd.f32 %v4577, %v4594
        %4603 = vrot.lane.b32.xlu0 %v3137, 126
        %v4604 = vpop.permute.xlu0 %4603
        %4605 = vrot.lane.b32.xlu0 %v3141, 126
        %v4606 = vpop.permute.xlu0 %4605
        %4607 = vrot.lane.b32.xlu0 %v3138, 126
        %v4608 = vpop.permute.xlu0 %4607
        %4609 = vrot.lane.b32.xlu0 %v3142, 126
        %v4610 = vpop.permute.xlu0 %4609
        %4611 = vrot.lane.b32.xlu0 %v3139, 126
        %v4612 = vpop.permute.xlu0 %4611
        %4613 = vrot.lane.b32.xlu0 %v3143, 126
        %v4614 = vpop.permute.xlu0 %4613
        %4615 = vrot.lane.b32.xlu0 %v3140, 126
        %v4616 = vpop.permute.xlu0 %4615
        %4617 = vrot.lane.b32.xlu0 %v3144, 126
        %v4618 = vpop.permute.xlu0 %4617
        %v4619 = vsel %vm2151, %v4612, %v4616
        %v4620 = vsel %vm2151, %v4614, %v4618
        %v4621 = vsel %vm2151, %v4608, %v4612
        %v4622 = vsel %vm2151, %v4610, %v4614
        %v4623 = vsel %vm2151, %v4604, %v4608
        %v4624 = vsel %vm2151, %v4606, %v4610
        %v4625 = vsel %vm2151, %v4616, %v4604
        %v4626 = vsel %vm2151, %v4618, %v4606
        %s4627 = scalar_lea.vmem [#allocation4], 3776
        %v4628 = vld [vmem:[%s4627] sm:$0xff]
        %v4629 = vld [vmem:[%s4627 + $0x8] sm:$0xff]
        %v4630 = vld [vmem:[%s4627 + $0x10] sm:$0xff]
        %v4631 = vld [vmem:[%s4627 + $0x18] sm:$0xff]
        %v4632 = vld [vmem:[%s4627 + $0x20] sm:$0xff]
        %v4633 = vld [vmem:[%s4627 + $0x28] sm:$0xff]
        %v4634 = vld [vmem:[%s4627 + $0x30] sm:$0xff]
        %v4635 = vld [vmem:[%s4627 + $0x38] sm:$0xff]
        %v4636 = vmul.f32 %v4628, %v4623
        %v4637 = vmul.f32 %v4629, %v4621
        %v4638 = vmul.f32 %v4630, %v4619
        %v4639 = vmul.f32 %v4631, %v4625
        %v4640 = vmul.f32 %v4632, %v4624
        %v4641 = vmul.f32 %v4633, %v4622
        %v4642 = vmul.f32 %v4634, %v4620
        %v4643 = vmul.f32 %v4635, %v4626
        %v4644 = vadd.f32 %v4595, %v4636
        %v4645 = vadd.f32 %v4596, %v4637
        %v4646 = vadd.f32 %v4597, %v4638
        %v4647 = vadd.f32 %v4598, %v4639
        %v4648 = vadd.f32 %v4599, %v4640
        %v4649 = vadd.f32 %v4600, %v4641
        %v4650 = vadd.f32 %v4601, %v4642
        %v4651 = vadd.f32 %v4602, %v4643
        %4652 = vrot.lane.b32.xlu0 %v3137, 98
        %v4653 = vpop.permute.xlu0 %4652
        %4654 = vrot.lane.b32.xlu0 %v3141, 98
        %v4655 = vpop.permute.xlu0 %4654
        %4656 = vrot.lane.b32.xlu0 %v3138, 98
        %v4657 = vpop.permute.xlu0 %4656
        %4658 = vrot.lane.b32.xlu0 %v3142, 98
        %v4659 = vpop.permute.xlu0 %4658
        %4660 = vrot.lane.b32.xlu0 %v3139, 98
        %v4661 = vpop.permute.xlu0 %4660
        %4662 = vrot.lane.b32.xlu0 %v3143, 98
        %v4663 = vpop.permute.xlu0 %4662
        %4664 = vrot.lane.b32.xlu0 %v3140, 98
        %v4665 = vpop.permute.xlu0 %4664
        %4666 = vrot.lane.b32.xlu0 %v3144, 98
        %v4667 = vpop.permute.xlu0 %4666
        %v4668 = vsel %vm2201, %v4661, %v4665
        %v4669 = vsel %vm2201, %v4663, %v4667
        %v4670 = vsel %vm2201, %v4657, %v4661
        %v4671 = vsel %vm2201, %v4659, %v4663
        %v4672 = vsel %vm2201, %v4653, %v4657
        %v4673 = vsel %vm2201, %v4655, %v4659
        %v4674 = vsel %vm2201, %v4665, %v4653
        %v4675 = vsel %vm2201, %v4667, %v4655
        %s4676 = scalar_lea.vmem [#allocation4], 3840
        %v4677 = vld [vmem:[%s4676] sm:$0xff]
        %v4678 = vld [vmem:[%s4676 + $0x8] sm:$0xff]
        %v4679 = vld [vmem:[%s4676 + $0x10] sm:$0xff]
        %v4680 = vld [vmem:[%s4676 + $0x18] sm:$0xff]
        %v4681 = vld [vmem:[%s4676 + $0x20] sm:$0xff]
        %v4682 = vld [vmem:[%s4676 + $0x28] sm:$0xff]
        %v4683 = vld [vmem:[%s4676 + $0x30] sm:$0xff]
        %v4684 = vld [vmem:[%s4676 + $0x38] sm:$0xff]
        %v4685 = vmul.f32 %v4677, %v4672
        %v4686 = vmul.f32 %v4678, %v4670
        %v4687 = vmul.f32 %v4679, %v4668
        %v4688 = vmul.f32 %v4680, %v4674
        %v4689 = vmul.f32 %v4681, %v4673
        %v4690 = vmul.f32 %v4682, %v4671
        %v4691 = vmul.f32 %v4683, %v4669
        %v4692 = vmul.f32 %v4684, %v4675
        %v4693 = vadd.f32 %v4644, %v4685
        %v4694 = vadd.f32 %v4645, %v4686
        %v4695 = vadd.f32 %v4646, %v4687
        %v4696 = vadd.f32 %v4647, %v4688
        %v4697 = vadd.f32 %v4648, %v4689
        %v4698 = vadd.f32 %v4649, %v4690
        %v4699 = vadd.f32 %v4650, %v4691
        %v4700 = vadd.f32 %v4651, %v4692
        %4701 = vrot.lane.b32.xlu0 %v3137, 96
        %v4702 = vpop.permute.xlu0 %4701
        %4703 = vrot.lane.b32.xlu0 %v3141, 96
        %v4704 = vpop.permute.xlu0 %4703
        %4705 = vrot.lane.b32.xlu0 %v3138, 96
        %v4706 = vpop.permute.xlu0 %4705
        %4707 = vrot.lane.b32.xlu0 %v3142, 96
        %v4708 = vpop.permute.xlu0 %4707
        %4709 = vrot.lane.b32.xlu0 %v3139, 96
        %v4710 = vpop.permute.xlu0 %4709
        %4711 = vrot.lane.b32.xlu0 %v3143, 96
        %v4712 = vpop.permute.xlu0 %4711
        %4713 = vrot.lane.b32.xlu0 %v3140, 96
        %v4714 = vpop.permute.xlu0 %4713
        %4715 = vrot.lane.b32.xlu0 %v3144, 96
        %v4716 = vpop.permute.xlu0 %4715
        %v4717 = vsel %vm2251, %v4710, %v4714
        %v4718 = vsel %vm2251, %v4712, %v4716
        %v4719 = vsel %vm2251, %v4706, %v4710
        %v4720 = vsel %vm2251, %v4708, %v4712
        %v4721 = vsel %vm2251, %v4702, %v4706
        %v4722 = vsel %vm2251, %v4704, %v4708
        %v4723 = vsel %vm2251, %v4714, %v4702
        %v4724 = vsel %vm2251, %v4716, %v4704
        %s4725 = scalar_lea.vmem [#allocation4], 3904
        %v4726 = vld [vmem:[%s4725] sm:$0xff]
        %v4727 = vld [vmem:[%s4725 + $0x8] sm:$0xff]
        %v4728 = vld [vmem:[%s4725 + $0x10] sm:$0xff]
        %v4729 = vld [vmem:[%s4725 + $0x18] sm:$0xff]
        %v4730 = vld [vmem:[%s4725 + $0x20] sm:$0xff]
        %v4731 = vld [vmem:[%s4725 + $0x28] sm:$0xff]
        %v4732 = vld [vmem:[%s4725 + $0x30] sm:$0xff]
        %v4733 = vld [vmem:[%s4725 + $0x38] sm:$0xff]
        %v4734 = vmul.f32 %v4726, %v4721
        %v4735 = vmul.f32 %v4727, %v4719
        %v4736 = vmul.f32 %v4728, %v4717
        %v4737 = vmul.f32 %v4729, %v4723
        %v4738 = vmul.f32 %v4730, %v4722
        %v4739 = vmul.f32 %v4731, %v4720
        %v4740 = vmul.f32 %v4732, %v4718
        %v4741 = vmul.f32 %v4733, %v4724
        %v4742 = vadd.f32 %v4693, %v4734
        %v4743 = vadd.f32 %v4694, %v4735
        %v4744 = vadd.f32 %v4695, %v4736
        %v4745 = vadd.f32 %v4696, %v4737
        %v4746 = vadd.f32 %v4697, %v4738
        %v4747 = vadd.f32 %v4698, %v4739
        %v4748 = vadd.f32 %v4699, %v4740
        %v4749 = vadd.f32 %v4700, %v4741
        %4750 = vrot.lane.b32.xlu0 %v3137, 94
        %v4751 = vpop.permute.xlu0 %4750
        %4752 = vrot.lane.b32.xlu0 %v3141, 94
        %v4753 = vpop.permute.xlu0 %4752
        %4754 = vrot.lane.b32.xlu0 %v3138, 94
        %v4755 = vpop.permute.xlu0 %4754
        %4756 = vrot.lane.b32.xlu0 %v3142, 94
        %v4757 = vpop.permute.xlu0 %4756
        %4758 = vrot.lane.b32.xlu0 %v3139, 94
        %v4759 = vpop.permute.xlu0 %4758
        %4760 = vrot.lane.b32.xlu0 %v3143, 94
        %v4761 = vpop.permute.xlu0 %4760
        %4762 = vrot.lane.b32.xlu0 %v3140, 94
        %v4763 = vpop.permute.xlu0 %4762
        %4764 = vrot.lane.b32.xlu0 %v3144, 94
        %v4765 = vpop.permute.xlu0 %4764
        %v4766 = vsel %vm2301, %v4759, %v4763
        %v4767 = vsel %vm2301, %v4761, %v4765
        %v4768 = vsel %vm2301, %v4755, %v4759
        %v4769 = vsel %vm2301, %v4757, %v4761
        %v4770 = vsel %vm2301, %v4751, %v4755
        %v4771 = vsel %vm2301, %v4753, %v4757
        %v4772 = vsel %vm2301, %v4763, %v4751
        %v4773 = vsel %vm2301, %v4765, %v4753
        %s4774 = scalar_lea.vmem [#allocation4], 3968
        %v4775 = vld [vmem:[%s4774] sm:$0xff]
        %v4776 = vld [vmem:[%s4774 + $0x8] sm:$0xff]
        %v4777 = vld [vmem:[%s4774 + $0x10] sm:$0xff]
        %v4778 = vld [vmem:[%s4774 + $0x18] sm:$0xff]
        %v4779 = vld [vmem:[%s4774 + $0x20] sm:$0xff]
        %v4780 = vld [vmem:[%s4774 + $0x28] sm:$0xff]
        %v4781 = vld [vmem:[%s4774 + $0x30] sm:$0xff]
        %v4782 = vld [vmem:[%s4774 + $0x38] sm:$0xff]
        %v4783 = vmul.f32 %v4775, %v4770
        %v4784 = vmul.f32 %v4776, %v4768
        %v4785 = vmul.f32 %v4777, %v4766
        %v4786 = vmul.f32 %v4778, %v4772
        %v4787 = vmul.f32 %v4779, %v4771
        %v4788 = vmul.f32 %v4780, %v4769
        %v4789 = vmul.f32 %v4781, %v4767
        %v4790 = vmul.f32 %v4782, %v4773
        %v4791 = vadd.f32 %v4742, %v4783
        %v4792 = vadd.f32 %v4743, %v4784
        %v4793 = vadd.f32 %v4744, %v4785
        %v4794 = vadd.f32 %v4745, %v4786
        %v4795 = vadd.f32 %v4746, %v4787
        %v4796 = vadd.f32 %v4747, %v4788
        %v4797 = vadd.f32 %v4748, %v4789
        %v4798 = vadd.f32 %v4749, %v4790
        %v4799 = vmax.f32 %v4791, 0.0
        %v4800 = vmax.f32 %v4792, 0.0
        %v4801 = vmax.f32 %v4793, 0.0
        %v4802 = vmax.f32 %v4794, 0.0
        %v4803 = vmax.f32 %v4795, 0.0
        %v4804 = vmax.f32 %v4796, 0.0
        %v4805 = vmax.f32 %v4797, 0.0
        %v4806 = vmax.f32 %v4798, 0.0
        %s4807 = scalar_lea.vmem [#allocation6], 112
        %v4808 = vld [vmem:[%s4807] sm:$0xff]
        %v4809 = vld [vmem:[%s4807 + $0x8] sm:$0xff]
        %s4810 = scalar_lea.vmem [#allocation2], 1152
        %v4811 = vld [vmem:[%s4810] sm:$0xff]
        %v4812 = vld [vmem:[%s4810 + $0x8] sm:$0xff]
        %v4813 = vld [vmem:[%s4810 + $0x10] sm:$0xff]
        %v4814 = vld [vmem:[%s4810 + $0x18] sm:$0xff]
        %v4815 = vld [vmem:[%s4810 + $0x20] sm:$0xff]
        %v4816 = vld [vmem:[%s4810 + $0x28] sm:$0xff]
        %v4817 = vld [vmem:[%s4810 + $0x30] sm:$0xff]
        %v4818 = vld [vmem:[%s4810 + $0x38] sm:$0xff]
        %v4820 = vsel %vm503, %v4808, 0
        %v4823 = vsel %vm503, %v4809, 0
        %4825 = vmatprep.subr.mxu0 %v4800
        %4826 = vmatpush1.msra.mxu0 %v4799
        %4827 = vmatprep.subr.mxu0 %v4804
        %4828 = vmatpush1.msra.mxu0 %v4803
        %4829 = vmatprep.subr.mxu0 0.0
        %4830 = vmatpush1.msra.mxu0 0.0
        %4831 = vmatprep.subr.mxu0 0.0
        %4832 = vmatpush1.msra.mxu0 0.0
        %4833 = vmatprep.subr.mxu0 0.0
        %4834 = vmatpush1.msra.mxu0 0.0
        %4835 = vmatprep.subr.mxu0 0.0
        %4836 = vmatpush1.msra.mxu0 0.0
        %4837 = vmatprep.subr.mxu0 0.0
        %4838 = vmatpush1.msra.mxu0 0.0
        %4839 = vmatprep.subr.mxu0 0.0
        %4840 = vmatpush1.msra.mxu0 0.0
        %4841 = vmatprep.subr.mxu0 0.0
        %4842 = vmatpush1.msra.mxu0 0.0
        %4843 = vmatprep.subr.mxu0 0.0
        %4844 = vmatpush1.msra.mxu0 0.0
        %4845 = vmatprep.subr.mxu0 0.0
        %4846 = vmatpush1.msra.mxu0 0.0
        %4847 = vmatprep.subr.mxu0 0.0
        %4848 = vmatpush1.msra.mxu0 0.0
        %4849 = vmatprep.subr.mxu0 0.0
        %4850 = vmatpush1.msra.mxu0 0.0
        %4851 = vmatprep.subr.mxu0 0.0
        %4852 = vmatpush1.msra.mxu0 0.0
        %4853 = vmatprep.subr.mxu0 0.0
        %4854 = vmatpush1.msra.mxu0 0.0
        %4855 = vmatprep.subr.mxu0 0.0
        %4856 = vmatpush1.msra.mxu0 0.0
        %4857 = vmatprep.subr.mxu0 0.0
        %4858 = vmatpush1.msra.mxu0 0.0
        %4859 = vmatprep.subr.mxu0 0.0
        %4860 = vmatpush1.msra.mxu0 0.0
        %4861 = vmatprep.subr.mxu0 0.0
        %4862 = vmatpush1.msra.mxu0 0.0
        %4863 = vmatprep.subr.mxu0 0.0
        %4864 = vmatpush1.msra.mxu0 0.0
        %4865 = vmatprep.subr.mxu0 0.0
        %4866 = vmatpush1.msra.mxu0 0.0
        %4867 = vmatprep.subr.mxu0 0.0
        %4868 = vmatpush1.msra.mxu0 0.0
        %4869 = vmatprep.subr.mxu0 0.0
        %4870 = vmatpush1.msra.mxu0 0.0
        %4871 = vmatprep.subr.mxu0 0.0
        %4872 = vmatpush1.msra.mxu0 0.0
        %4873 = vmatprep.subr.mxu0 0.0
        %4874 = vmatpush1.msra.mxu0 0.0
        %4875 = vmatprep.subr.mxu0 0.0
        %4876 = vmatpush1.msra.mxu0 0.0
        %4877 = vmatprep.subr.mxu0 0.0
        %4878 = vmatpush1.msra.mxu0 0.0
        %4879 = vmatprep.subr.mxu0 0.0
        %4880 = vmatpush1.msra.mxu0 0.0
        %4881 = vmatprep.subr.mxu0 0.0
        %4882 = vmatpush1.msra.mxu0 0.0
        %4883 = vmatprep.subr.mxu0 0.0
        %4884 = vmatpush1.msra.mxu0 0.0
        %4885 = vmatprep.subr.mxu0 0.0
        %4886 = vmatpush1.msra.mxu0 0.0
        %4887 = vmatprep.subr.mxu0 0.0
        %4888 = vmatpush1.msra.mxu0 0.0
        %4889 = vmatprep.mubr.f32.mxu0 0.0
        %4890 = vmatmul.mubr.f32.gmra.mrb[0].mxu0 %v4820
        %v4891 = vpop.f32.mrb[0].mxu0
        %v4892 = vadd.f32 %v4811, %v4891
        %v4893 = vpop.f32.mrb[0].mxu0
        %v4894 = vadd.f32 %v4812, %v4893
        %4895 = vmatprep.mubr.f32.mxu0 0.0
        %4896 = vmatmul.mubr.f32.gmra.mrb[0].mxu0 %v4823
        %v4897 = vpop.f32.mrb[0].mxu0
        %v4898 = vadd.f32 %v4815, %v4897
        %v4899 = vpop.f32.mrb[0].mxu0
        %v4900 = vadd.f32 %v4816, %v4899
        %4901 = vdwg.mxu0
        %4902 = vmatprep.subr.mxu0 %v4802
        %4903 = vmatpush1.msra.mxu0 %v4801
        %4904 = vmatprep.subr.mxu0 %v4806
        %4905 = vmatpush1.msra.mxu0 %v4805
        %4906 = vmatprep.subr.mxu0 0.0
        %4907 = vmatpush1.msra.mxu0 0.0
        %4908 = vmatprep.subr.mxu0 0.0
        %4909 = vmatpush1.msra.mxu0 0.0
        %4910 = vmatprep.subr.mxu0 0.0
        %4911 = vmatpush1.msra.mxu0 0.0
        %4912 = vmatprep.subr.mxu0 0.0
        %4913 = vmatpush1.msra.mxu0 0.0
        %4914 = vmatprep.subr.mxu0 0.0
        %4915 = vmatpush1.msra.mxu0 0.0
        %4916 = vmatprep.subr.mxu0 0.0
        %4917 = vmatpush1.msra.mxu0 0.0
        %4918 = vmatprep.subr.mxu0 0.0
        %4919 = vmatpush1.msra.mxu0 0.0
        %4920 = vmatprep.subr.mxu0 0.0
        %4921 = vmatpush1.msra.mxu0 0.0
        %4922 = vmatprep.subr.mxu0 0.0
        %4923 = vmatpush1.msra.mxu0 0.0
        %4924 = vmatprep.subr.mxu0 0.0
        %4925 = vmatpush1.msra.mxu0 0.0
        %4926 = vmatprep.subr.mxu0 0.0
        %4927 = vmatpush1.msra.mxu0 0.0
        %4928 = vmatprep.subr.mxu0 0.0
        %4929 = vmatpush1.msra.mxu0 0.0
        %4930 = vmatprep.subr.mxu0 0.0
        %4931 = vmatpush1.msra.mxu0 0.0
        %4932 = vmatprep.subr.mxu0 0.0
        %4933 = vmatpush1.msra.mxu0 0.0
        %4934 = vmatprep.subr.mxu0 0.0
        %4935 = vmatpush1.msra.mxu0 0.0
        %4936 = vmatprep.subr.mxu0 0.0
        %4937 = vmatpush1.msra.mxu0 0.0
        %4938 = vmatprep.subr.mxu0 0.0
        %4939 = vmatpush1.msra.mxu0 0.0
        %4940 = vmatprep.subr.mxu0 0.0
        %4941 = vmatpush1.msra.mxu0 0.0
        %4942 = vmatprep.subr.mxu0 0.0
        %4943 = vmatpush1.msra.mxu0 0.0
        %4944 = vmatprep.subr.mxu0 0.0
        %4945 = vmatpush1.msra.mxu0 0.0
        %4946 = vmatprep.subr.mxu0 0.0
        %4947 = vmatpush1.msra.mxu0 0.0
        %4948 = vmatprep.subr.mxu0 0.0
        %4949 = vmatpush1.msra.mxu0 0.0
        %4950 = vmatprep.subr.mxu0 0.0
        %4951 = vmatpush1.msra.mxu0 0.0
        %4952 = vmatprep.subr.mxu0 0.0
        %4953 = vmatpush1.msra.mxu0 0.0
        %4954 = vmatprep.subr.mxu0 0.0
        %4955 = vmatpush1.msra.mxu0 0.0
        %4956 = vmatprep.subr.mxu0 0.0
        %4957 = vmatpush1.msra.mxu0 0.0
        %4958 = vmatprep.subr.mxu0 0.0
        %4959 = vmatpush1.msra.mxu0 0.0
        %4960 = vmatprep.subr.mxu0 0.0
        %4961 = vmatpush1.msra.mxu0 0.0
        %4962 = vmatprep.subr.mxu0 0.0
        %4963 = vmatpush1.msra.mxu0 0.0
        %4964 = vmatprep.subr.mxu0 0.0
        %4965 = vmatpush1.msra.mxu0 0.0
        %4966 = vmatprep.mubr.f32.mxu0 0.0
        %4967 = vmatmul.mubr.f32.gmra.mrb[0].mxu0 %v4820
        %v4968 = vpop.f32.mrb[0].mxu0
        %v4969 = vadd.f32 %v4813, %v4968
        %v4970 = vpop.f32.mrb[0].mxu0
        %v4971 = vadd.f32 %v4814, %v4970
        %4972 = vmatprep.mubr.f32.mxu0 0.0
        %4973 = vmatmul.mubr.f32.gmra.mrb[0].mxu0 %v4823
        %v4974 = vpop.f32.mrb[0].mxu0
        %v4975 = vadd.f32 %v4817, %v4974
        %v4976 = vpop.f32.mrb[0].mxu0
        %v4977 = vadd.f32 %v4818, %v4976
        %4978 = vdwg.mxu0
        %v4979 = vmax.f32 %v4892, 0.0
        %v4980 = vmax.f32 %v4894, 0.0
        %v4981 = vmax.f32 %v4969, 0.0
        %v4982 = vmax.f32 %v4971, 0.0
        %v4983 = vmax.f32 %v4898, 0.0
        %v4984 = vmax.f32 %v4900, 0.0
        %v4985 = vmax.f32 %v4975, 0.0
        %v4986 = vmax.f32 %v4977, 0.0
        %s4987 = scalar_lea.vmem [#allocation2], 704
        %v4988 = vld [vmem:[%s4987] sm:$0xff]
        %v4989 = vld [vmem:[%s4987 + $0x8] sm:$0xff]
        %v4990 = vld [vmem:[%s4987 + $0x10] sm:$0xff]
        %v4991 = vld [vmem:[%s4987 + $0x18] sm:$0xff]
        %v4992 = vld [vmem:[%s4987 + $0x20] sm:$0xff]
        %v4993 = vld [vmem:[%s4987 + $0x28] sm:$0xff]
        %v4994 = vld [vmem:[%s4987 + $0x30] sm:$0xff]
        %v4995 = vld [vmem:[%s4987 + $0x38] sm:$0xff]
        %4996 = vrot.lane.b32.xlu0 %v4979, 17
        %v4997 = vpop.permute.xlu0 %4996
        %4998 = vrot.lane.b32.xlu0 %v4983, 17
        %v4999 = vpop.permute.xlu0 %4998
        %5000 = vrot.lane.b32.xlu0 %v4980, 17
        %v5001 = vpop.permute.xlu0 %5000
        %5002 = vrot.lane.b32.xlu0 %v4984, 17
        %v5003 = vpop.permute.xlu0 %5002
        %5004 = vrot.lane.b32.xlu0 %v4981, 17
        %v5005 = vpop.permute.xlu0 %5004
        %5006 = vrot.lane.b32.xlu0 %v4985, 17
        %v5007 = vpop.permute.xlu0 %5006
        %5008 = vrot.lane.b32.xlu0 %v4982, 17
        %v5009 = vpop.permute.xlu0 %5008
        %5010 = vrot.lane.b32.xlu0 %v4986, 17
        %v5011 = vpop.permute.xlu0 %5010
        %v5012 = vsel %vm691, %v5005, %v5009
        %v5013 = vsel %vm691, %v5007, %v5011
        %v5014 = vsel %vm691, %v5001, %v5005
        %v5015 = vsel %vm691, %v5003, %v5007
        %v5016 = vsel %vm691, %v4997, %v5001
        %v5017 = vsel %vm691, %v4999, %v5003
        %v5018 = vsel %vm691, %v5009, %v4997
        %v5019 = vsel %vm691, %v5011, %v4999
        %s5020 = scalar_lea.vmem [#allocation4], 4032
        %v5021 = vld [vmem:[%s5020] sm:$0xff]
        %v5022 = vld [vmem:[%s5020 + $0x8] sm:$0xff]
        %v5023 = vld [vmem:[%s5020 + $0x10] sm:$0xff]
        %v5024 = vld [vmem:[%s5020 + $0x18] sm:$0xff]
        %v5025 = vld [vmem:[%s5020 + $0x20] sm:$0xff]
        %v5026 = vld [vmem:[%s5020 + $0x28] sm:$0xff]
        %v5027 = vld [vmem:[%s5020 + $0x30] sm:$0xff]
        %v5028 = vld [vmem:[%s5020 + $0x38] sm:$0xff]
        %v5029 = vmul.f32 %v5021, %v5018
        %v5030 = vmul.f32 %v5022, %v5016
        %v5031 = vmul.f32 %v5023, %v5014
        %v5032 = vmul.f32 %v5024, %v5012
        %v5033 = vmul.f32 %v5025, %v5019
        %v5034 = vmul.f32 %v5026, %v5017
        %v5035 = vmul.f32 %v5027, %v5015
        %v5036 = vmul.f32 %v5028, %v5013
        %v5037 = vadd.f32 %v4988, %v5029
        %v5038 = vadd.f32 %v4989, %v5030
        %v5039 = vadd.f32 %v4990, %v5031
        %v5040 = vadd.f32 %v4991, %v5032
        %v5041 = vadd.f32 %v4992, %v5033
        %v5042 = vadd.f32 %v4993, %v5034
        %v5043 = vadd.f32 %v4994, %v5035
        %v5044 = vadd.f32 %v4995, %v5036
        %5045 = vrot.lane.b32.xlu0 %v4979, 16
        %v5046 = vpop.permute.xlu0 %5045
        %5047 = vrot.lane.b32.xlu0 %v4983, 16
        %v5048 = vpop.permute.xlu0 %5047
        %5049 = vrot.lane.b32.xlu0 %v4980, 16
        %v5050 = vpop.permute.xlu0 %5049
        %5051 = vrot.lane.b32.xlu0 %v4984, 16
        %v5052 = vpop.permute.xlu0 %5051
        %5053 = vrot.lane.b32.xlu0 %v4981, 16
        %v5054 = vpop.permute.xlu0 %5053
        %5055 = vrot.lane.b32.xlu0 %v4985, 16
        %v5056 = vpop.permute.xlu0 %5055
        %5057 = vrot.lane.b32.xlu0 %v4982, 16
        %v5058 = vpop.permute.xlu0 %5057
        %5059 = vrot.lane.b32.xlu0 %v4986, 16
        %v5060 = vpop.permute.xlu0 %5059
        %v5061 = vsel %vm740, %v5054, %v5058
        %v5062 = vsel %vm740, %v5056, %v5060
        %v5063 = vsel %vm740, %v5050, %v5054
        %v5064 = vsel %vm740, %v5052, %v5056
        %v5065 = vsel %vm740, %v5046, %v5050
        %v5066 = vsel %vm740, %v5048, %v5052
        %v5067 = vsel %vm740, %v5058, %v5046
        %v5068 = vsel %vm740, %v5060, %v5048
        %s5069 = scalar_lea.vmem [#allocation4], 4096
        %v5070 = vld [vmem:[%s5069] sm:$0xff]
        %v5071 = vld [vmem:[%s5069 + $0x8] sm:$0xff]
        %v5072 = vld [vmem:[%s5069 + $0x10] sm:$0xff]
        %v5073 = vld [vmem:[%s5069 + $0x18] sm:$0xff]
        %v5074 = vld [vmem:[%s5069 + $0x20] sm:$0xff]
        %v5075 = vld [vmem:[%s5069 + $0x28] sm:$0xff]
        %v5076 = vld [vmem:[%s5069 + $0x30] sm:$0xff]
        %v5077 = vld [vmem:[%s5069 + $0x38] sm:$0xff]
        %v5078 = vmul.f32 %v5070, %v5067
        %v5079 = vmul.f32 %v5071, %v5065
        %v5080 = vmul.f32 %v5072, %v5063
        %v5081 = vmul.f32 %v5073, %v5061
        %v5082 = vmul.f32 %v5074, %v5068
        %v5083 = vmul.f32 %v5075, %v5066
        %v5084 = vmul.f32 %v5076, %v5064
        %v5085 = vmul.f32 %v5077, %v5062
        %v5086 = vadd.f32 %v5037, %v5078
        %v5087 = vadd.f32 %v5038, %v5079
        %v5088 = vadd.f32 %v5039, %v5080
        %v5089 = vadd.f32 %v5040, %v5081
        %v5090 = vadd.f32 %v5041, %v5082
        %v5091 = vadd.f32 %v5042, %v5083
        %v5092 = vadd.f32 %v5043, %v5084
        %v5093 = vadd.f32 %v5044, %v5085
        %5094 = vrot.lane.b32.xlu0 %v4979, 15
        %v5095 = vpop.permute.xlu0 %5094
        %5096 = vrot.lane.b32.xlu0 %v4983, 15
        %v5097 = vpop.permute.xlu0 %5096
        %5098 = vrot.lane.b32.xlu0 %v4980, 15
        %v5099 = vpop.permute.xlu0 %5098
        %5100 = vrot.lane.b32.xlu0 %v4984, 15
        %v5101 = vpop.permute.xlu0 %5100
        %5102 = vrot.lane.b32.xlu0 %v4981, 15
        %v5103 = vpop.permute.xlu0 %5102
        %5104 = vrot.lane.b32.xlu0 %v4985, 15
        %v5105 = vpop.permute.xlu0 %5104
        %5106 = vrot.lane.b32.xlu0 %v4982, 15
        %v5107 = vpop.permute.xlu0 %5106
        %5108 = vrot.lane.b32.xlu0 %v4986, 15
        %v5109 = vpop.permute.xlu0 %5108
        %v5110 = vsel %vm790, %v5103, %v5107
        %v5111 = vsel %vm790, %v5105, %v5109
        %v5112 = vsel %vm790, %v5099, %v5103
        %v5113 = vsel %vm790, %v5101, %v5105
        %v5114 = vsel %vm790, %v5095, %v5099
        %v5115 = vsel %vm790, %v5097, %v5101
        %v5116 = vsel %vm790, %v5107, %v5095
        %v5117 = vsel %vm790, %v5109, %v5097
        %s5118 = scalar_lea.vmem [#allocation4], 4160
        %v5119 = vld [vmem:[%s5118] sm:$0xff]
        %v5120 = vld [vmem:[%s5118 + $0x8] sm:$0xff]
        %v5121 = vld [vmem:[%s5118 + $0x10] sm:$0xff]
        %v5122 = vld [vmem:[%s5118 + $0x18] sm:$0xff]
        %v5123 = vld [vmem:[%s5118 + $0x20] sm:$0xff]
        %v5124 = vld [vmem:[%s5118 + $0x28] sm:$0xff]
        %v5125 = vld [vmem:[%s5118 + $0x30] sm:$0xff]
        %v5126 = vld [vmem:[%s5118 + $0x38] sm:$0xff]
        %v5127 = vmul.f32 %v5119, %v5116
        %v5128 = vmul.f32 %v5120, %v5114
        %v5129 = vmul.f32 %v5121, %v5112
        %v5130 = vmul.f32 %v5122, %v5110
        %v5131 = vmul.f32 %v5123, %v5117
        %v5132 = vmul.f32 %v5124, %v5115
        %v5133 = vmul.f32 %v5125, %v5113
        %v5134 = vmul.f32 %v5126, %v5111
        %v5135 = vadd.f32 %v5086, %v5127
        %v5136 = vadd.f32 %v5087, %v5128
        %v5137 = vadd.f32 %v5088, %v5129
        %v5138 = vadd.f32 %v5089, %v5130
        %v5139 = vadd.f32 %v5090, %v5131
        %v5140 = vadd.f32 %v5091, %v5132
        %v5141 = vadd.f32 %v5092, %v5133
        %v5142 = vadd.f32 %v5093, %v5134
        %5143 = vrot.lane.b32.xlu0 %v4979, 1
        %v5144 = vpop.permute.xlu0 %5143
        %5145 = vrot.lane.b32.xlu0 %v4983, 1
        %v5146 = vpop.permute.xlu0 %5145
        %5147 = vrot.lane.b32.xlu0 %v4980, 1
        %v5148 = vpop.permute.xlu0 %5147
        %5149 = vrot.lane.b32.xlu0 %v4984, 1
        %v5150 = vpop.permute.xlu0 %5149
        %5151 = vrot.lane.b32.xlu0 %v4981, 1
        %v5152 = vpop.permute.xlu0 %5151
        %5153 = vrot.lane.b32.xlu0 %v4985, 1
        %v5154 = vpop.permute.xlu0 %5153
        %5155 = vrot.lane.b32.xlu0 %v4982, 1
        %v5156 = vpop.permute.xlu0 %5155
        %5157 = vrot.lane.b32.xlu0 %v4986, 1
        %v5158 = vpop.permute.xlu0 %5157
        %v5159 = vsel %vm840, %v5152, %v5156
        %v5160 = vsel %vm840, %v5154, %v5158
        %v5161 = vsel %vm840, %v5148, %v5152
        %v5162 = vsel %vm840, %v5150, %v5154
        %v5163 = vsel %vm840, %v5144, %v5148
        %v5164 = vsel %vm840, %v5146, %v5150
        %v5165 = vsel %vm840, %v5156, %v5144
        %v5166 = vsel %vm840, %v5158, %v5146
        %s5167 = scalar_lea.vmem [#allocation4], 4224
        %v5168 = vld [vmem:[%s5167] sm:$0xff]
        %v5169 = vld [vmem:[%s5167 + $0x8] sm:$0xff]
        %v5170 = vld [vmem:[%s5167 + $0x10] sm:$0xff]
        %v5171 = vld [vmem:[%s5167 + $0x18] sm:$0xff]
        %v5172 = vld [vmem:[%s5167 + $0x20] sm:$0xff]
        %v5173 = vld [vmem:[%s5167 + $0x28] sm:$0xff]
        %v5174 = vld [vmem:[%s5167 + $0x30] sm:$0xff]
        %v5175 = vld [vmem:[%s5167 + $0x38] sm:$0xff]
        %v5176 = vmul.f32 %v5168, %v5165
        %v5177 = vmul.f32 %v5169, %v5163
        %v5178 = vmul.f32 %v5170, %v5161
        %v5179 = vmul.f32 %v5171, %v5159
        %v5180 = vmul.f32 %v5172, %v5166
        %v5181 = vmul.f32 %v5173, %v5164
        %v5182 = vmul.f32 %v5174, %v5162
        %v5183 = vmul.f32 %v5175, %v5160
        %v5184 = vadd.f32 %v5135, %v5176
        %v5185 = vadd.f32 %v5136, %v5177
        %v5186 = vadd.f32 %v5137, %v5178
        %v5187 = vadd.f32 %v5138, %v5179
        %v5188 = vadd.f32 %v5139, %v5180
        %v5189 = vadd.f32 %v5140, %v5181
        %v5190 = vadd.f32 %v5141, %v5182
        %v5191 = vadd.f32 %v5142, %v5183
        %s5192 = scalar_lea.vmem [#allocation4], 4288
        %v5193 = vld [vmem:[%s5192] sm:$0xff]
        %v5194 = vld [vmem:[%s5192 + $0x8] sm:$0xff]
        %v5195 = vld [vmem:[%s5192 + $0x10] sm:$0xff]
        %v5196 = vld [vmem:[%s5192 + $0x18] sm:$0xff]
        %v5197 = vld [vmem:[%s5192 + $0x20] sm:$0xff]
        %v5198 = vld [vmem:[%s5192 + $0x28] sm:$0xff]
        %v5199 = vld [vmem:[%s5192 + $0x30] sm:$0xff]
        %v5200 = vld [vmem:[%s5192 + $0x38] sm:$0xff]
        %v5201 = vmul.f32 %v5193, %v4979
        %v5202 = vmul.f32 %v5194, %v4980
        %v5203 = vmul.f32 %v5195, %v4981
        %v5204 = vmul.f32 %v5196, %v4982
        %v5205 = vmul.f32 %v5197, %v4983
        %v5206 = vmul.f32 %v5198, %v4984
        %v5207 = vmul.f32 %v5199, %v4985
        %v5208 = vmul.f32 %v5200, %v4986
        %v5209 = vadd.f32 %v5184, %v5201
        %v5210 = vadd.f32 %v5185, %v5202
        %v5211 = vadd.f32 %v5186, %v5203
        %v5212 = vadd.f32 %v5187, %v5204
        %v5213 = vadd.f32 %v5188, %v5205
        %v5214 = vadd.f32 %v5189, %v5206
        %v5215 = vadd.f32 %v5190, %v5207
        %v5216 = vadd.f32 %v5191, %v5208
        %5217 = vrot.lane.b32.xlu0 %v4979, 127
        %v5218 = vpop.permute.xlu0 %5217
        %5219 = vrot.lane.b32.xlu0 %v4983, 127
        %v5220 = vpop.permute.xlu0 %5219
        %5221 = vrot.lane.b32.xlu0 %v4980, 127
        %v5222 = vpop.permute.xlu0 %5221
        %5223 = vrot.lane.b32.xlu0 %v4984, 127
        %v5224 = vpop.permute.xlu0 %5223
        %5225 = vrot.lane.b32.xlu0 %v4981, 127
        %v5226 = vpop.permute.xlu0 %5225
        %5227 = vrot.lane.b32.xlu0 %v4985, 127
        %v5228 = vpop.permute.xlu0 %5227
        %5229 = vrot.lane.b32.xlu0 %v4982, 127
        %v5230 = vpop.permute.xlu0 %5229
        %5231 = vrot.lane.b32.xlu0 %v4986, 127
        %v5232 = vpop.permute.xlu0 %5231
        %v5233 = vsel %vm915, %v5226, %v5230
        %v5234 = vsel %vm915, %v5228, %v5232
        %v5235 = vsel %vm915, %v5222, %v5226
        %v5236 = vsel %vm915, %v5224, %v5228
        %v5237 = vsel %vm915, %v5218, %v5222
        %v5238 = vsel %vm915, %v5220, %v5224
        %v5239 = vsel %vm915, %v5230, %v5218
        %v5240 = vsel %vm915, %v5232, %v5220
        %s5241 = scalar_lea.vmem [#allocation4], 4352
        %v5242 = vld [vmem:[%s5241] sm:$0xff]
        %v5243 = vld [vmem:[%s5241 + $0x8] sm:$0xff]
        %v5244 = vld [vmem:[%s5241 + $0x10] sm:$0xff]
        %v5245 = vld [vmem:[%s5241 + $0x18] sm:$0xff]
        %v5246 = vld [vmem:[%s5241 + $0x20] sm:$0xff]
        %v5247 = vld [vmem:[%s5241 + $0x28] sm:$0xff]
        %v5248 = vld [vmem:[%s5241 + $0x30] sm:$0xff]
        %v5249 = vld [vmem:[%s5241 + $0x38] sm:$0xff]
        %v5250 = vmul.f32 %v5242, %v5237
        %v5251 = vmul.f32 %v5243, %v5235
        %v5252 = vmul.f32 %v5244, %v5233
        %v5253 = vmul.f32 %v5245, %v5239
        %v5254 = vmul.f32 %v5246, %v5238
        %v5255 = vmul.f32 %v5247, %v5236
        %v5256 = vmul.f32 %v5248, %v5234
        %v5257 = vmul.f32 %v5249, %v5240
        %v5258 = vadd.f32 %v5209, %v5250
        %v5259 = vadd.f32 %v5210, %v5251
        %v5260 = vadd.f32 %v5211, %v5252
        %v5261 = vadd.f32 %v5212, %v5253
        %v5262 = vadd.f32 %v5213, %v5254
        %v5263 = vadd.f32 %v5214, %v5255
        %v5264 = vadd.f32 %v5215, %v5256
        %v5265 = vadd.f32 %v5216, %v5257
        %5266 = vrot.lane.b32.xlu0 %v4979, 113
        %v5267 = vpop.permute.xlu0 %5266
        %5268 = vrot.lane.b32.xlu0 %v4983, 113
        %v5269 = vpop.permute.xlu0 %5268
        %5270 = vrot.lane.b32.xlu0 %v4980, 113
        %v5271 = vpop.permute.xlu0 %5270
        %5272 = vrot.lane.b32.xlu0 %v4984, 113
        %v5273 = vpop.permute.xlu0 %5272
        %5274 = vrot.lane.b32.xlu0 %v4981, 113
        %v5275 = vpop.permute.xlu0 %5274
        %5276 = vrot.lane.b32.xlu0 %v4985, 113
        %v5277 = vpop.permute.xlu0 %5276
        %5278 = vrot.lane.b32.xlu0 %v4982, 113
        %v5279 = vpop.permute.xlu0 %5278
        %5280 = vrot.lane.b32.xlu0 %v4986, 113
        %v5281 = vpop.permute.xlu0 %5280
        %v5282 = vsel %vm965, %v5275, %v5279
        %v5283 = vsel %vm965, %v5277, %v5281
        %v5284 = vsel %vm965, %v5271, %v5275
        %v5285 = vsel %vm965, %v5273, %v5277
        %v5286 = vsel %vm965, %v5267, %v5271
        %v5287 = vsel %vm965, %v5269, %v5273
        %v5288 = vsel %vm965, %v5279, %v5267
        %v5289 = vsel %vm965, %v5281, %v5269
        %s5290 = scalar_lea.vmem [#allocation4], 4416
        %v5291 = vld [vmem:[%s5290] sm:$0xff]
        %v5292 = vld [vmem:[%s5290 + $0x8] sm:$0xff]
        %v5293 = vld [vmem:[%s5290 + $0x10] sm:$0xff]
        %v5294 = vld [vmem:[%s5290 + $0x18] sm:$0xff]
        %v5295 = vld [vmem:[%s5290 + $0x20] sm:$0xff]
        %v5296 = vld [vmem:[%s5290 + $0x28] sm:$0xff]
        %v5297 = vld [vmem:[%s5290 + $0x30] sm:$0xff]
        %v5298 = vld [vmem:[%s5290 + $0x38] sm:$0xff]
        %v5299 = vmul.f32 %v5291, %v5286
        %v5300 = vmul.f32 %v5292, %v5284
        %v5301 = vmul.f32 %v5293, %v5282
        %v5302 = vmul.f32 %v5294, %v5288
        %v5303 = vmul.f32 %v5295, %v5287
        %v5304 = vmul.f32 %v5296, %v5285
        %v5305 = vmul.f32 %v5297, %v5283
        %v5306 = vmul.f32 %v5298, %v5289
        %v5307 = vadd.f32 %v5258, %v5299
        %v5308 = vadd.f32 %v5259, %v5300
        %v5309 = vadd.f32 %v5260, %v5301
        %v5310 = vadd.f32 %v5261, %v5302
        %v5311 = vadd.f32 %v5262, %v5303
        %v5312 = vadd.f32 %v5263, %v5304
        %v5313 = vadd.f32 %v5264, %v5305
        %v5314 = vadd.f32 %v5265, %v5306
        %5315 = vrot.lane.b32.xlu0 %v4979, 112
        %v5316 = vpop.permute.xlu0 %5315
        %5317 = vrot.lane.b32.xlu0 %v4983, 112
        %v5318 = vpop.permute.xlu0 %5317
        %5319 = vrot.lane.b32.xlu0 %v4980, 112
        %v5320 = vpop.permute.xlu0 %5319
        %5321 = vrot.lane.b32.xlu0 %v4984, 112
        %v5322 = vpop.permute.xlu0 %5321
        %5323 = vrot.lane.b32.xlu0 %v4981, 112
        %v5324 = vpop.permute.xlu0 %5323
        %5325 = vrot.lane.b32.xlu0 %v4985, 112
        %v5326 = vpop.permute.xlu0 %5325
        %5327 = vrot.lane.b32.xlu0 %v4982, 112
        %v5328 = vpop.permute.xlu0 %5327
        %5329 = vrot.lane.b32.xlu0 %v4986, 112
        %v5330 = vpop.permute.xlu0 %5329
        %v5331 = vsel %vm1015, %v5324, %v5328
        %v5332 = vsel %vm1015, %v5326, %v5330
        %v5333 = vsel %vm1015, %v5320, %v5324
        %v5334 = vsel %vm1015, %v5322, %v5326
        %v5335 = vsel %vm1015, %v5316, %v5320
        %v5336 = vsel %vm1015, %v5318, %v5322
        %v5337 = vsel %vm1015, %v5328, %v5316
        %v5338 = vsel %vm1015, %v5330, %v5318
        %s5339 = scalar_lea.vmem [#allocation4], 4480
        %v5340 = vld [vmem:[%s5339] sm:$0xff]
        %v5341 = vld [vmem:[%s5339 + $0x8] sm:$0xff]
        %v5342 = vld [vmem:[%s5339 + $0x10] sm:$0xff]
        %v5343 = vld [vmem:[%s5339 + $0x18] sm:$0xff]
        %v5344 = vld [vmem:[%s5339 + $0x20] sm:$0xff]
        %v5345 = vld [vmem:[%s5339 + $0x28] sm:$0xff]
        %v5346 = vld [vmem:[%s5339 + $0x30] sm:$0xff]
        %v5347 = vld [vmem:[%s5339 + $0x38] sm:$0xff]
        %v5348 = vmul.f32 %v5340, %v5335
        %v5349 = vmul.f32 %v5341, %v5333
        %v5350 = vmul.f32 %v5342, %v5331
        %v5351 = vmul.f32 %v5343, %v5337
        %v5352 = vmul.f32 %v5344, %v5336
        %v5353 = vmul.f32 %v5345, %v5334
        %v5354 = vmul.f32 %v5346, %v5332
        %v5355 = vmul.f32 %v5347, %v5338
        %v5356 = vadd.f32 %v5307, %v5348
        %v5357 = vadd.f32 %v5308, %v5349
        %v5358 = vadd.f32 %v5309, %v5350
        %v5359 = vadd.f32 %v5310, %v5351
        %v5360 = vadd.f32 %v5311, %v5352
        %v5361 = vadd.f32 %v5312, %v5353
        %v5362 = vadd.f32 %v5313, %v5354
        %v5363 = vadd.f32 %v5314, %v5355
        %5364 = vrot.lane.b32.xlu0 %v4979, 111
        %v5365 = vpop.permute.xlu0 %5364
        %5366 = vrot.lane.b32.xlu0 %v4983, 111
        %v5367 = vpop.permute.xlu0 %5366
        %5368 = vrot.lane.b32.xlu0 %v4980, 111
        %v5369 = vpop.permute.xlu0 %5368
        %5370 = vrot.lane.b32.xlu0 %v4984, 111
        %v5371 = vpop.permute.xlu0 %5370
        %5372 = vrot.lane.b32.xlu0 %v4981, 111
        %v5373 = vpop.permute.xlu0 %5372
        %5374 = vrot.lane.b32.xlu0 %v4985, 111
        %v5375 = vpop.permute.xlu0 %5374
        %5376 = vrot.lane.b32.xlu0 %v4982, 111
        %v5377 = vpop.permute.xlu0 %5376
        %5378 = vrot.lane.b32.xlu0 %v4986, 111
        %v5379 = vpop.permute.xlu0 %5378
        %v5380 = vsel %vm1065, %v5373, %v5377
        %v5381 = vsel %vm1065, %v5375, %v5379
        %v5382 = vsel %vm1065, %v5369, %v5373
        %v5383 = vsel %vm1065, %v5371, %v5375
        %v5384 = vsel %vm1065, %v5365, %v5369
        %v5385 = vsel %vm1065, %v5367, %v5371
        %v5386 = vsel %vm1065, %v5377, %v5365
        %v5387 = vsel %vm1065, %v5379, %v5367
        %s5388 = scalar_lea.vmem [#allocation4], 4544
        %v5389 = vld [vmem:[%s5388] sm:$0xff]
        %v5390 = vld [vmem:[%s5388 + $0x8] sm:$0xff]
        %v5391 = vld [vmem:[%s5388 + $0x10] sm:$0xff]
        %v5392 = vld [vmem:[%s5388 + $0x18] sm:$0xff]
        %v5393 = vld [vmem:[%s5388 + $0x20] sm:$0xff]
        %v5394 = vld [vmem:[%s5388 + $0x28] sm:$0xff]
        %v5395 = vld [vmem:[%s5388 + $0x30] sm:$0xff]
        %v5396 = vld [vmem:[%s5388 + $0x38] sm:$0xff]
        %v5397 = vmul.f32 %v5389, %v5384
        %v5398 = vmul.f32 %v5390, %v5382
        %v5399 = vmul.f32 %v5391, %v5380
        %v5400 = vmul.f32 %v5392, %v5386
        %v5401 = vmul.f32 %v5393, %v5385
        %v5402 = vmul.f32 %v5394, %v5383
        %v5403 = vmul.f32 %v5395, %v5381
        %v5404 = vmul.f32 %v5396, %v5387
        %v5405 = vadd.f32 %v5356, %v5397
        %v5406 = vadd.f32 %v5357, %v5398
        %v5407 = vadd.f32 %v5358, %v5399
        %v5408 = vadd.f32 %v5359, %v5400
        %v5409 = vadd.f32 %v5360, %v5401
        %v5410 = vadd.f32 %v5361, %v5402
        %v5411 = vadd.f32 %v5362, %v5403
        %v5412 = vadd.f32 %v5363, %v5404
        %v5413 = vmax.f32 %v5405, 0.0
        %v5414 = vmax.f32 %v5406, 0.0
        %v5415 = vmax.f32 %v5407, 0.0
        %v5416 = vmax.f32 %v5408, 0.0
        %v5417 = vmax.f32 %v5409, 0.0
        %v5418 = vmax.f32 %v5410, 0.0
        %v5419 = vmax.f32 %v5411, 0.0
        %v5420 = vmax.f32 %v5412, 0.0
        %s5421 = scalar_lea.vmem [#allocation6], 128
        %v5422 = vld [vmem:[%s5421] sm:$0xff]
        %v5423 = vld [vmem:[%s5421 + $0x8] sm:$0xff]
        %s5424 = scalar_lea.vmem [#allocation2], 1216
        %v5425 = vld [vmem:[%s5424] sm:$0xff]
        %v5426 = vld [vmem:[%s5424 + $0x8] sm:$0xff]
        %v5427 = vld [vmem:[%s5424 + $0x10] sm:$0xff]
        %v5428 = vld [vmem:[%s5424 + $0x18] sm:$0xff]
        %v5429 = vld [vmem:[%s5424 + $0x20] sm:$0xff]
        %v5430 = vld [vmem:[%s5424 + $0x28] sm:$0xff]
        %v5431 = vld [vmem:[%s5424 + $0x30] sm:$0xff]
        %v5432 = vld [vmem:[%s5424 + $0x38] sm:$0xff]
        %v5434 = vsel %vm503, %v5422, 0
        %v5437 = vsel %vm503, %v5423, 0
        %5439 = vmatprep.subr.mxu0 %v5414
        %5440 = vmatpush1.msra.mxu0 %v5413
        %5441 = vmatprep.subr.mxu0 %v5418
        %5442 = vmatpush1.msra.mxu0 %v5417
        %5443 = vmatprep.subr.mxu0 0.0
        %5444 = vmatpush1.msra.mxu0 0.0
        %5445 = vmatprep.subr.mxu0 0.0
        %5446 = vmatpush1.msra.mxu0 0.0
        %5447 = vmatprep.subr.mxu0 0.0
        %5448 = vmatpush1.msra.mxu0 0.0
        %5449 = vmatprep.subr.mxu0 0.0
        %5450 = vmatpush1.msra.mxu0 0.0
        %5451 = vmatprep.subr.mxu0 0.0
        %5452 = vmatpush1.msra.mxu0 0.0
        %5453 = vmatprep.subr.mxu0 0.0
        %5454 = vmatpush1.msra.mxu0 0.0
        %5455 = vmatprep.subr.mxu0 0.0
        %5456 = vmatpush1.msra.mxu0 0.0
        %5457 = vmatprep.subr.mxu0 0.0
        %5458 = vmatpush1.msra.mxu0 0.0
        %5459 = vmatprep.subr.mxu0 0.0
        %5460 = vmatpush1.msra.mxu0 0.0
        %5461 = vmatprep.subr.mxu0 0.0
        %5462 = vmatpush1.msra.mxu0 0.0
        %5463 = vmatprep.subr.mxu0 0.0
        %5464 = vmatpush1.msra.mxu0 0.0
        %5465 = vmatprep.subr.mxu0 0.0
        %5466 = vmatpush1.msra.mxu0 0.0
        %5467 = vmatprep.subr.mxu0 0.0
        %5468 = vmatpush1.msra.mxu0 0.0
        %5469 = vmatprep.subr.mxu0 0.0
        %5470 = vmatpush1.msra.mxu0 0.0
        %5471 = vmatprep.subr.mxu0 0.0
        %5472 = vmatpush1.msra.mxu0 0.0
        %5473 = vmatprep.subr.mxu0 0.0
        %5474 = vmatpush1.msra.mxu0 0.0
        %5475 = vmatprep.subr.mxu0 0.0
        %5476 = vmatpush1.msra.mxu0 0.0
        %5477 = vmatprep.subr.mxu0 0.0
        %5478 = vmatpush1.msra.mxu0 0.0
        %5479 = vmatprep.subr.mxu0 0.0
        %5480 = vmatpush1.msra.mxu0 0.0
        %5481 = vmatprep.subr.mxu0 0.0
        %5482 = vmatpush1.msra.mxu0 0.0
        %5483 = vmatprep.subr.mxu0 0.0
        %5484 = vmatpush1.msra.mxu0 0.0
        %5485 = vmatprep.subr.mxu0 0.0
        %5486 = vmatpush1.msra.mxu0 0.0
        %5487 = vmatprep.subr.mxu0 0.0
        %5488 = vmatpush1.msra.mxu0 0.0
        %5489 = vmatprep.subr.mxu0 0.0
        %5490 = vmatpush1.msra.mxu0 0.0
        %5491 = vmatprep.subr.mxu0 0.0
        %5492 = vmatpush1.msra.mxu0 0.0
        %5493 = vmatprep.subr.mxu0 0.0
        %5494 = vmatpush1.msra.mxu0 0.0
        %5495 = vmatprep.subr.mxu0 0.0
        %5496 = vmatpush1.msra.mxu0 0.0
        %5497 = vmatprep.subr.mxu0 0.0
        %5498 = vmatpush1.msra.mxu0 0.0
        %5499 = vmatprep.subr.mxu0 0.0
        %5500 = vmatpush1.msra.mxu0 0.0
        %5501 = vmatprep.subr.mxu0 0.0
        %5502 = vmatpush1.msra.mxu0 0.0
        %5503 = vmatprep.mubr.f32.mxu0 0.0
        %5504 = vmatmul.mubr.f32.gmra.mrb[0].mxu0 %v5434
        %v5505 = vpop.f32.mrb[0].mxu0
        %v5506 = vadd.f32 %v5425, %v5505
        %v5507 = vpop.f32.mrb[0].mxu0
        %v5508 = vadd.f32 %v5426, %v5507
        %5509 = vmatprep.mubr.f32.mxu0 0.0
        %5510 = vmatmul.mubr.f32.gmra.mrb[0].mxu0 %v5437
        %v5511 = vpop.f32.mrb[0].mxu0
        %v5512 = vadd.f32 %v5429, %v5511
        %v5513 = vpop.f32.mrb[0].mxu0
        %v5514 = vadd.f32 %v5430, %v5513
        %5515 = vdwg.mxu0
        %5516 = vmatprep.subr.mxu0 %v5416
        %5517 = vmatpush1.msra.mxu0 %v5415
        %5518 = vmatprep.subr.mxu0 %v5420
        %5519 = vmatpush1.msra.mxu0 %v5419
        %5520 = vmatprep.subr.mxu0 0.0
        %5521 = vmatpush1.msra.mxu0 0.0
        %5522 = vmatprep.subr.mxu0 0.0
        %5523 = vmatpush1.msra.mxu0 0.0
        %5524 = vmatprep.subr.mxu0 0.0
        %5525 = vmatpush1.msra.mxu0 0.0
        %5526 = vmatprep.subr.mxu0 0.0
        %5527 = vmatpush1.msra.mxu0 0.0
        %5528 = vmatprep.subr.mxu0 0.0
        %5529 = vmatpush1.msra.mxu0 0.0
        %5530 = vmatprep.subr.mxu0 0.0
        %5531 = vmatpush1.msra.mxu0 0.0
        %5532 = vmatprep.subr.mxu0 0.0
        %5533 = vmatpush1.msra.mxu0 0.0
        %5534 = vmatprep.subr.mxu0 0.0
        %5535 = vmatpush1.msra.mxu0 0.0
        %5536 = vmatprep.subr.mxu0 0.0
        %5537 = vmatpush1.msra.mxu0 0.0
        %5538 = vmatprep.subr.mxu0 0.0
        %5539 = vmatpush1.msra.mxu0 0.0
        %5540 = vmatprep.subr.mxu0 0.0
        %5541 = vmatpush1.msra.mxu0 0.0
        %5542 = vmatprep.subr.mxu0 0.0
        %5543 = vmatpush1.msra.mxu0 0.0
        %5544 = vmatprep.subr.mxu0 0.0
        %5545 = vmatpush1.msra.mxu0 0.0
        %5546 = vmatprep.subr.mxu0 0.0
        %5547 = vmatpush1.msra.mxu0 0.0
        %5548 = vmatprep.subr.mxu0 0.0
        %5549 = vmatpush1.msra.mxu0 0.0
        %5550 = vmatprep.subr.mxu0 0.0
        %5551 = vmatpush1.msra.mxu0 0.0
        %5552 = vmatprep.subr.mxu0 0.0
        %5553 = vmatpush1.msra.mxu0 0.0
        %5554 = vmatprep.subr.mxu0 0.0
        %5555 = vmatpush1.msra.mxu0 0.0
        %5556 = vmatprep.subr.mxu0 0.0
        %5557 = vmatpush1.msra.mxu0 0.0
        %5558 = vmatprep.subr.mxu0 0.0
        %5559 = vmatpush1.msra.mxu0 0.0
        %5560 = vmatprep.subr.mxu0 0.0
        %5561 = vmatpush1.msra.mxu0 0.0
        %5562 = vmatprep.subr.mxu0 0.0
        %5563 = vmatpush1.msra.mxu0 0.0
        %5564 = vmatprep.subr.mxu0 0.0
        %5565 = vmatpush1.msra.mxu0 0.0
        %5566 = vmatprep.subr.mxu0 0.0
        %5567 = vmatpush1.msra.mxu0 0.0
        %5568 = vmatprep.subr.mxu0 0.0
        %5569 = vmatpush1.msra.mxu0 0.0
        %5570 = vmatprep.subr.mxu0 0.0
        %5571 = vmatpush1.msra.mxu0 0.0
        %5572 = vmatprep.subr.mxu0 0.0
        %5573 = vmatpush1.msra.mxu0 0.0
        %5574 = vmatprep.subr.mxu0 0.0
        %5575 = vmatpush1.msra.mxu0 0.0
        %5576 = vmatprep.subr.mxu0 0.0
        %5577 = vmatpush1.msra.mxu0 0.0
        %5578 = vmatprep.subr.mxu0 0.0
        %5579 = vmatpush1.msra.mxu0 0.0
        %5580 = vmatprep.mubr.f32.mxu0 0.0
        %5581 = vmatmul.mubr.f32.gmra.mrb[0].mxu0 %v5434
        %v5582 = vpop.f32.mrb[0].mxu0
        %v5583 = vadd.f32 %v5427, %v5582
        %v5584 = vpop.f32.mrb[0].mxu0
        %v5585 = vadd.f32 %v5428, %v5584
        %5586 = vmatprep.mubr.f32.mxu0 0.0
        %5587 = vmatmul.mubr.f32.gmra.mrb[0].mxu0 %v5437
        %v5588 = vpop.f32.mrb[0].mxu0
        %v5589 = vadd.f32 %v5431, %v5588
        %v5590 = vpop.f32.mrb[0].mxu0
        %v5591 = vadd.f32 %v5432, %v5590
        %5592 = vdwg.mxu0
        %v5593 = vmax.f32 %v5506, 0.0
        %v5594 = vmax.f32 %v5508, 0.0
        %v5595 = vmax.f32 %v5583, 0.0
        %v5596 = vmax.f32 %v5585, 0.0
        %v5597 = vmax.f32 %v5512, 0.0
        %v5598 = vmax.f32 %v5514, 0.0
        %v5599 = vmax.f32 %v5589, 0.0
        %v5600 = vmax.f32 %v5591, 0.0
        %v5601 = vadd.f32 %v4365, %v5593
        %v5602 = vadd.f32 %v4366, %v5594
        %v5603 = vadd.f32 %v4367, %v5595
        %v5604 = vadd.f32 %v4368, %v5596
        %v5605 = vadd.f32 %v4369, %v5597
        %v5606 = vadd.f32 %v4370, %v5598
        %v5607 = vadd.f32 %v4371, %v5599
        %v5608 = vadd.f32 %v4372, %v5600
        %v5609 = vadd.f32 %v5601, %v404
        %v5610 = vadd.f32 %v5602, %v405
        %v5611 = vadd.f32 %v5603, %v406
        %v5612 = vadd.f32 %v5604, %v407
        %v5613 = vadd.f32 %v5605, %v408
        %v5614 = vadd.f32 %v5606, %v409
        %v5615 = vadd.f32 %v5607, %v410
        %v5616 = vadd.f32 %v5608, %v411
        %s5617 = scalar_lea.vmem [#allocation2], 128
        %v5618 = vld [vmem:[%s5617] sm:$0xff]
        %v5619 = vld [vmem:[%s5617 + $0x8] sm:$0xff]
        %v5620 = vld [vmem:[%s5617 + $0x10] sm:$0xff]
        %v5621 = vld [vmem:[%s5617 + $0x18] sm:$0xff]
        %v5622 = vld [vmem:[%s5617 + $0x20] sm:$0xff]
        %v5623 = vld [vmem:[%s5617 + $0x28] sm:$0xff]
        %v5624 = vld [vmem:[%s5617 + $0x30] sm:$0xff]
        %v5625 = vld [vmem:[%s5617 + $0x38] sm:$0xff]
        %v5626 = vmul.f32 %v5609, %v5618
        %v5627 = vmul.f32 %v5610, %v5619
        %v5628 = vmul.f32 %v5611, %v5620
        %v5629 = vmul.f32 %v5612, %v5621
        %v5630 = vmul.f32 %v5613, %v5622
        %v5631 = vmul.f32 %v5614, %v5623
        %v5632 = vmul.f32 %v5615, %v5624
        %v5633 = vmul.f32 %v5616, %v5625
        %s5634 = scalar_lea.vmem [#allocation2], 192
        %v5635 = vld [vmem:[%s5634] sm:$0xff]
        %v5636 = vld [vmem:[%s5634 + $0x8] sm:$0xff]
        %v5637 = vld [vmem:[%s5634 + $0x10] sm:$0xff]
        %v5638 = vld [vmem:[%s5634 + $0x18] sm:$0xff]
        %v5639 = vld [vmem:[%s5634 + $0x20] sm:$0xff]
        %v5640 = vld [vmem:[%s5634 + $0x28] sm:$0xff]
        %v5641 = vld [vmem:[%s5634 + $0x30] sm:$0xff]
        %v5642 = vld [vmem:[%s5634 + $0x38] sm:$0xff]
        %v5643 = vadd.f32 %v5626, %v5635
        %v5644 = vadd.f32 %v5627, %v5636
        %v5645 = vadd.f32 %v5628, %v5637
        %v5646 = vadd.f32 %v5629, %v5638
        %v5647 = vadd.f32 %v5630, %v5639
        %v5648 = vadd.f32 %v5631, %v5640
        %v5649 = vadd.f32 %v5632, %v5641
        %v5650 = vadd.f32 %v5633, %v5642
        %v5651 = vxor.u32 %v5643, 2147483648
        %v5652 = vxor.u32 %v5644, 2147483648
        %v5653 = vxor.u32 %v5645, 2147483648
        %v5654 = vxor.u32 %v5646, 2147483648
        %v5655 = vxor.u32 %v5647, 2147483648
        %v5656 = vxor.u32 %v5648, 2147483648
        %v5657 = vxor.u32 %v5649, 2147483648
        %v5658 = vxor.u32 %v5650, 2147483648
        %v5659 = vmul.f32 %v5651, 1.442695
        %v5660 = vpow.pop %v5659
        %v5661 = vmul.f32 %v5652, 1.442695
        %v5662 = vpow.pop %v5661
        %v5663 = vmul.f32 %v5653, 1.442695
        %v5664 = vpow.pop %v5663
        %v5665 = vmul.f32 %v5654, 1.442695
        %v5666 = vpow.pop %v5665
        %v5667 = vmul.f32 %v5655, 1.442695
        %v5668 = vpow.pop %v5667
        %v5669 = vmul.f32 %v5656, 1.442695
        %v5670 = vpow.pop %v5669
        %v5671 = vmul.f32 %v5657, 1.442695
        %v5672 = vpow.pop %v5671
        %v5673 = vmul.f32 %v5658, 1.442695
        %v5674 = vpow.pop %v5673
        %v5675 = vadd.f32 %v5660, 1.0
        %v5676 = vadd.f32 %v5662, 1.0
        %v5677 = vadd.f32 %v5664, 1.0
        %v5678 = vadd.f32 %v5666, 1.0
        %v5679 = vadd.f32 %v5668, 1.0
        %v5680 = vadd.f32 %v5670, 1.0
        %v5681 = vadd.f32 %v5672, 1.0
        %v5682 = vadd.f32 %v5674, 1.0
        %v5683 = vrcp.pop %v5675
        %v5684 = vmul.f32 1.0, %v5683
        %v5685 = vrcp.pop %v5676
        %v5686 = vmul.f32 1.0, %v5685
        %v5687 = vrcp.pop %v5677
        %v5688 = vmul.f32 1.0, %v5687
        %v5689 = vrcp.pop %v5678
        %v5690 = vmul.f32 1.0, %v5689
        %v5691 = vrcp.pop %v5679
        %v5692 = vmul.f32 1.0, %v5691
        %v5693 = vrcp.pop %v5680
        %v5694 = vmul.f32 1.0, %v5693
        %v5695 = vrcp.pop %v5681
        %v5696 = vmul.f32 1.0, %v5695
        %v5697 = vrcp.pop %v5682
        %v5698 = vmul.f32 1.0, %v5697
        %v5699 = vmul.f32 %v5643, %v5684
        %v5700 = vmul.f32 %v5644, %v5686
        %v5701 = vmul.f32 %v5645, %v5688
        %v5702 = vmul.f32 %v5646, %v5690
        %v5703 = vmul.f32 %v5647, %v5692
        %v5704 = vmul.f32 %v5648, %v5694
        %v5705 = vmul.f32 %v5649, %v5696
        %v5706 = vmul.f32 %v5650, %v5698
        %s5707 = scalar_lea.vmem [#allocation6], 144
        %v5708 = vld [vmem:[%s5707] sm:$0xff]
        %v5709 = vld [vmem:[%s5707 + $0x8] sm:$0xff]
        %v5711 = vsel %vm503, %v5708, 0
        %v5714 = vsel %vm503, %v5709, 0
        %5716 = vmatprep.subr.mxu0 %v5700
        %5717 = vmatpush1.msra.mxu0 %v5699
        %5718 = vmatprep.subr.mxu0 %v5704
        %5719 = vmatpush1.msra.mxu0 %v5703
        %5720 = vmatprep.subr.mxu0 0.0
        %5721 = vmatpush1.msra.mxu0 0.0
        %5722 = vmatprep.subr.mxu0 0.0
        %5723 = vmatpush1.msra.mxu0 0.0
        %5724 = vmatprep.subr.mxu0 0.0
        %5725 = vmatpush1.msra.mxu0 0.0
        %5726 = vmatprep.subr.mxu0 0.0
        %5727 = vmatpush1.msra.mxu0 0.0
        %5728 = vmatprep.subr.mxu0 0.0
        %5729 = vmatpush1.msra.mxu0 0.0
        %5730 = vmatprep.subr.mxu0 0.0
        %5731 = vmatpush1.msra.mxu0 0.0
        %5732 = vmatprep.subr.mxu0 0.0
        %5733 = vmatpush1.msra.mxu0 0.0
        %5734 = vmatprep.subr.mxu0 0.0
        %5735 = vmatpush1.msra.mxu0 0.0
        %5736 = vmatprep.subr.mxu0 0.0
        %5737 = vmatpush1.msra.mxu0 0.0
        %5738 = vmatprep.subr.mxu0 0.0
        %5739 = vmatpush1.msra.mxu0 0.0
        %5740 = vmatprep.subr.mxu0 0.0
        %5741 = vmatpush1.msra.mxu0 0.0
        %5742 = vmatprep.subr.mxu0 0.0
        %5743 = vmatpush1.msra.mxu0 0.0
        %5744 = vmatprep.subr.mxu0 0.0
        %5745 = vmatpush1.msra.mxu0 0.0
        %5746 = vmatprep.subr.mxu0 0.0
        %5747 = vmatpush1.msra.mxu0 0.0
        %5748 = vmatprep.subr.mxu0 0.0
        %5749 = vmatpush1.msra.mxu0 0.0
        %5750 = vmatprep.subr.mxu0 0.0
        %5751 = vmatpush1.msra.mxu0 0.0
        %5752 = vmatprep.subr.mxu0 0.0
        %5753 = vmatpush1.msra.mxu0 0.0
        %5754 = vmatprep.subr.mxu0 0.0
        %5755 = vmatpush1.msra.mxu0 0.0
        %5756 = vmatprep.subr.mxu0 0.0
        %5757 = vmatpush1.msra.mxu0 0.0
        %5758 = vmatprep.subr.mxu0 0.0
        %5759 = vmatpush1.msra.mxu0 0.0
        %5760 = vmatprep.subr.mxu0 0.0
        %5761 = vmatpush1.msra.mxu0 0.0
        %5762 = vmatprep.subr.mxu0 0.0
        %5763 = vmatpush1.msra.mxu0 0.0
        %5764 = vmatprep.subr.mxu0 0.0
        %5765 = vmatpush1.msra.mxu0 0.0
        %5766 = vmatprep.subr.mxu0 0.0
        %5767 = vmatpush1.msra.mxu0 0.0
        %5768 = vmatprep.subr.mxu0 0.0
        %5769 = vmatpush1.msra.mxu0 0.0
        %5770 = vmatprep.subr.mxu0 0.0
        %5771 = vmatpush1.msra.mxu0 0.0
        %5772 = vmatprep.subr.mxu0 0.0
        %5773 = vmatpush1.msra.mxu0 0.0
        %5774 = vmatprep.subr.mxu0 0.0
        %5775 = vmatpush1.msra.mxu0 0.0
        %5776 = vmatprep.subr.mxu0 0.0
        %5777 = vmatpush1.msra.mxu0 0.0
        %5778 = vmatprep.subr.mxu0 0.0
        %5779 = vmatpush1.msra.mxu0 0.0
        %5780 = vmatprep.mubr.f32.mxu0 0.0
        %5781 = vmatmul.mubr.f32.gmra.mrb[0].mxu0 %v5711
        %v5782 = vpop.f32.mrb[0].mxu0
        %v5783 = vadd.f32 0.0, %v5782
        %v5784 = vpop.f32.mrb[0].mxu0
        %v5785 = vadd.f32 0.0, %v5784
        %5786 = vmatprep.mubr.f32.mxu0 0.0
        %5787 = vmatmul.mubr.f32.gmra.mrb[0].mxu0 %v5714
        %v5788 = vpop.f32.mrb[0].mxu0
        %v5789 = vadd.f32 0.0, %v5788
        %v5790 = vpop.f32.mrb[0].mxu0
        %v5791 = vadd.f32 0.0, %v5790
        %5792 = vdwg.mxu0
        %5793 = vmatprep.subr.mxu0 %v5702
        %5794 = vmatpush1.msra.mxu0 %v5701
        %5795 = vmatprep.subr.mxu0 %v5706
        %5796 = vmatpush1.msra.mxu0 %v5705
        %5797 = vmatprep.subr.mxu0 0.0
        %5798 = vmatpush1.msra.mxu0 0.0
        %5799 = vmatprep.subr.mxu0 0.0
        %5800 = vmatpush1.msra.mxu0 0.0
        %5801 = vmatprep.subr.mxu0 0.0
        %5802 = vmatpush1.msra.mxu0 0.0
        %5803 = vmatprep.subr.mxu0 0.0
        %5804 = vmatpush1.msra.mxu0 0.0
        %5805 = vmatprep.subr.mxu0 0.0
        %5806 = vmatpush1.msra.mxu0 0.0
        %5807 = vmatprep.subr.mxu0 0.0
        %5808 = vmatpush1.msra.mxu0 0.0
        %5809 = vmatprep.subr.mxu0 0.0
        %5810 = vmatpush1.msra.mxu0 0.0
        %5811 = vmatprep.subr.mxu0 0.0
        %5812 = vmatpush1.msra.mxu0 0.0
        %5813 = vmatprep.subr.mxu0 0.0
        %5814 = vmatpush1.msra.mxu0 0.0
        %5815 = vmatprep.subr.mxu0 0.0
        %5816 = vmatpush1.msra.mxu0 0.0
        %5817 = vmatprep.subr.mxu0 0.0
        %5818 = vmatpush1.msra.mxu0 0.0
        %5819 = vmatprep.subr.mxu0 0.0
        %5820 = vmatpush1.msra.mxu0 0.0
        %5821 = vmatprep.subr.mxu0 0.0
        %5822 = vmatpush1.msra.mxu0 0.0
        %5823 = vmatprep.subr.mxu0 0.0
        %5824 = vmatpush1.msra.mxu0 0.0
        %5825 = vmatprep.subr.mxu0 0.0
        %5826 = vmatpush1.msra.mxu0 0.0
        %5827 = vmatprep.subr.mxu0 0.0
        %5828 = vmatpush1.msra.mxu0 0.0
        %5829 = vmatprep.subr.mxu0 0.0
        %5830 = vmatpush1.msra.mxu0 0.0
        %5831 = vmatprep.subr.mxu0 0.0
        %5832 = vmatpush1.msra.mxu0 0.0
        %5833 = vmatprep.subr.mxu0 0.0
        %5834 = vmatpush1.msra.mxu0 0.0
        %5835 = vmatprep.subr.mxu0 0.0
        %5836 = vmatpush1.msra.mxu0 0.0
        %5837 = vmatprep.subr.mxu0 0.0
        %5838 = vmatpush1.msra.mxu0 0.0
        %5839 = vmatprep.subr.mxu0 0.0
        %5840 = vmatpush1.msra.mxu0 0.0
        %5841 = vmatprep.subr.mxu0 0.0
        %5842 = vmatpush1.msra.mxu0 0.0
        %5843 = vmatprep.subr.mxu0 0.0
        %5844 = vmatpush1.msra.mxu0 0.0
        %5845 = vmatprep.subr.mxu0 0.0
        %5846 = vmatpush1.msra.mxu0 0.0
        %5847 = vmatprep.subr.mxu0 0.0
        %5848 = vmatpush1.msra.mxu0 0.0
        %5849 = vmatprep.subr.mxu0 0.0
        %5850 = vmatpush1.msra.mxu0 0.0
        %5851 = vmatprep.subr.mxu0 0.0
        %5852 = vmatpush1.msra.mxu0 0.0
        %5853 = vmatprep.subr.mxu0 0.0
        %5854 = vmatpush1.msra.mxu0 0.0
        %5855 = vmatprep.subr.mxu0 0.0
        %5856 = vmatpush1.msra.mxu0 0.0
        %5857 = vmatprep.mubr.f32.mxu0 0.0
        %5858 = vmatmul.mubr.f32.gmra.mrb[0].mxu0 %v5711
        %v5859 = vpop.f32.mrb[0].mxu0
        %v5860 = vadd.f32 0.0, %v5859
        %v5861 = vpop.f32.mrb[0].mxu0
        %v5862 = vadd.f32 0.0, %v5861
        %5863 = vmatprep.mubr.f32.mxu0 0.0
        %5864 = vmatmul.mubr.f32.gmra.mrb[0].mxu0 %v5714
        %v5865 = vpop.f32.mrb[0].mxu0
        %v5866 = vadd.f32 0.0, %v5865
        %v5867 = vpop.f32.mrb[0].mxu0
        %v5868 = vadd.f32 0.0, %v5867
        %5869 = vdwg.mxu0
        %v5870 = vld [vmem:[%s6] sm:$0xff]
        %v5871 = vld [vmem:[%s6 + $0x8] sm:$0xff]
        %v5872 = vld [vmem:[%s6 + $0x10] sm:$0xff]
        %v5873 = vld [vmem:[%s6 + $0x18] sm:$0xff]
        %v5874 = vld [vmem:[%s6 + $0x20] sm:$0xff]
        %v5875 = vld [vmem:[%s6 + $0x28] sm:$0xff]
        %v5876 = vld [vmem:[%s6 + $0x30] sm:$0xff]
        %v5877 = vld [vmem:[%s6 + $0x38] sm:$0xff]
        %v5878 = vld [vmem:[%s6 + $0x40] sm:$0xff]
        %v5879 = vld [vmem:[%s6 + $0x48] sm:$0xff]
        %v5880 = vld [vmem:[%s6 + $0x50] sm:$0xff]
        %v5881 = vld [vmem:[%s6 + $0x58] sm:$0xff]
        %v5882 = vld [vmem:[%s6 + $0x60] sm:$0xff]
        %v5883 = vld [vmem:[%s6 + $0x68] sm:$0xff]
        %v5884 = vld [vmem:[%s6 + $0x70] sm:$0xff]
        %v5885 = vld [vmem:[%s6 + $0x78] sm:$0xff]
        %v5886 = vld [vmem:[%s6 + $0x80] sm:$0xff]
        %v5887 = vld [vmem:[%s6 + $0x88] sm:$0xff]
        %v5888 = vld [vmem:[%s6 + $0x90] sm:$0xff]
        %v5889 = vld [vmem:[%s6 + $0x98] sm:$0xff]
        %v5890 = vld [vmem:[%s6 + $0xa0] sm:$0xff]
        %v5891 = vld [vmem:[%s6 + $0xa8] sm:$0xff]
        %v5892 = vld [vmem:[%s6 + $0xb0] sm:$0xff]
        %v5893 = vld [vmem:[%s6 + $0xb8] sm:$0xff]
        %v5894 = vld [vmem:[%s6 + $0xc0] sm:$0xff]
        %v5895 = vld [vmem:[%s6 + $0xc8] sm:$0xff]
        %v5896 = vld [vmem:[%s6 + $0xd0] sm:$0xff]
        %v5897 = vld [vmem:[%s6 + $0xd8] sm:$0xff]
        %v5898 = vld [vmem:[%s6 + $0xe0] sm:$0xff]
        %v5899 = vld [vmem:[%s6 + $0xe8] sm:$0xff]
        %v5900 = vld [vmem:[%s6 + $0xf0] sm:$0xff]
        %v5901 = vld [vmem:[%s6 + $0xf8] sm:$0xff]
        %v5902 = vld [vmem:[%s6 + $0x100] sm:$0xff]
        %v5903 = vld [vmem:[%s6 + $0x108] sm:$0xff]
        %v5904 = vld [vmem:[%s6 + $0x110] sm:$0xff]
        %v5905 = vld [vmem:[%s6 + $0x118] sm:$0xff]
        %v5906 = vld [vmem:[%s6 + $0x120] sm:$0xff]
        %v5907 = vld [vmem:[%s6 + $0x128] sm:$0xff]
        %v5908 = vld [vmem:[%s6 + $0x130] sm:$0xff]
        %v5909 = vld [vmem:[%s6 + $0x138] sm:$0xff]
        %v5910 = vld [vmem:[%s6 + $0x140] sm:$0xff]
        %v5911 = vld [vmem:[%s6 + $0x148] sm:$0xff]
        %v5912 = vld [vmem:[%s6 + $0x150] sm:$0xff]
        %v5913 = vld [vmem:[%s6 + $0x158] sm:$0xff]
        %v5914 = vld [vmem:[%s6 + $0x160] sm:$0xff]
        %v5915 = vld [vmem:[%s6 + $0x168] sm:$0xff]
        %v5916 = vld [vmem:[%s6 + $0x170] sm:$0xff]
        %v5917 = vld [vmem:[%s6 + $0x178] sm:$0xff]
        %v5918 = vld [vmem:[%s6 + $0x180] sm:$0xff]
        %v5919 = vld [vmem:[%s6 + $0x188] sm:$0xff]
        %v5920 = vld [vmem:[%s6 + $0x190] sm:$0xff]
        %v5921 = vld [vmem:[%s6 + $0x198] sm:$0xff]
        %v5922 = vld [vmem:[%s6 + $0x1a0] sm:$0xff]
        %v5923 = vld [vmem:[%s6 + $0x1a8] sm:$0xff]
        %v5924 = vld [vmem:[%s6 + $0x1b0] sm:$0xff]
        %v5925 = vld [vmem:[%s6 + $0x1b8] sm:$0xff]
        %v5926 = vld [vmem:[%s6 + $0x1c0] sm:$0xff]
        %v5927 = vld [vmem:[%s6 + $0x1c8] sm:$0xff]
        %v5928 = vld [vmem:[%s6 + $0x1d0] sm:$0xff]
        %v5929 = vld [vmem:[%s6 + $0x1d8] sm:$0xff]
        %v5930 = vld [vmem:[%s6 + $0x1e0] sm:$0xff]
        %v5931 = vld [vmem:[%s6 + $0x1e8] sm:$0xff]
        %v5932 = vld [vmem:[%s6 + $0x1f0] sm:$0xff]
        %v5933 = vld [vmem:[%s6 + $0x1f8] sm:$0xff]
        %5934 = vmatprep.subr.mxu0 0.0
        %5935 = vmatpush1.msra.mxu0 %v5870
        %5936 = vmatprep.subr.mxu0 0.0
        %5937 = vmatpush1.msra.mxu0 %v5871
        %5938 = vmatprep.subr.mxu0 0.0
        %5939 = vmatpush1.msra.mxu0 %v5872
        %5940 = vmatprep.subr.mxu0 0.0
        %5941 = vmatpush1.msra.mxu0 %v5873
        %5942 = vmatprep.subr.mxu0 0.0
        %5943 = vmatpush1.msra.mxu0 %v5874
        %5944 = vmatprep.subr.mxu0 0.0
        %5945 = vmatpush1.msra.mxu0 %v5875
        %5946 = vmatprep.subr.mxu0 0.0
        %5947 = vmatpush1.msra.mxu0 %v5876
        %5948 = vmatprep.subr.mxu0 0.0
        %5949 = vmatpush1.msra.mxu0 %v5877
        %5950 = vmatprep.subr.mxu0 0.0
        %5951 = vmatpush1.msra.mxu0 %v5878
        %5952 = vmatprep.subr.mxu0 0.0
        %5953 = vmatpush1.msra.mxu0 %v5879
        %5954 = vmatprep.subr.mxu0 0.0
        %5955 = vmatpush1.msra.mxu0 %v5880
        %5956 = vmatprep.subr.mxu0 0.0
        %5957 = vmatpush1.msra.mxu0 %v5881
        %5958 = vmatprep.subr.mxu0 0.0
        %5959 = vmatpush1.msra.mxu0 %v5882
        %5960 = vmatprep.subr.mxu0 0.0
        %5961 = vmatpush1.msra.mxu0 %v5883
        %5962 = vmatprep.subr.mxu0 0.0
        %5963 = vmatpush1.msra.mxu0 %v5884
        %5964 = vmatprep.subr.mxu0 0.0
        %5965 = vmatpush1.msra.mxu0 %v5885
        %5966 = vmatprep.subr.mxu0 0.0
        %5967 = vmatpush1.msra.mxu0 %v5886
        %5968 = vmatprep.subr.mxu0 0.0
        %5969 = vmatpush1.msra.mxu0 %v5887
        %5970 = vmatprep.subr.mxu0 0.0
        %5971 = vmatpush1.msra.mxu0 %v5888
        %5972 = vmatprep.subr.mxu0 0.0
        %5973 = vmatpush1.msra.mxu0 %v5889
        %5974 = vmatprep.subr.mxu0 0.0
        %5975 = vmatpush1.msra.mxu0 %v5890
        %5976 = vmatprep.subr.mxu0 0.0
        %5977 = vmatpush1.msra.mxu0 %v5891
        %5978 = vmatprep.subr.mxu0 0.0
        %5979 = vmatpush1.msra.mxu0 %v5892
        %5980 = vmatprep.subr.mxu0 0.0
        %5981 = vmatpush1.msra.mxu0 %v5893
        %5982 = vmatprep.subr.mxu0 0.0
        %5983 = vmatpush1.msra.mxu0 %v5894
        %5984 = vmatprep.subr.mxu0 0.0
        %5985 = vmatpush1.msra.mxu0 %v5895
        %5986 = vmatprep.subr.mxu0 0.0
        %5987 = vmatpush1.msra.mxu0 %v5896
        %5988 = vmatprep.subr.mxu0 0.0
        %5989 = vmatpush1.msra.mxu0 %v5897
        %5990 = vmatprep.subr.mxu0 0.0
        %5991 = vmatpush1.msra.mxu0 %v5898
        %5992 = vmatprep.subr.mxu0 0.0
        %5993 = vmatpush1.msra.mxu0 %v5899
        %5994 = vmatprep.subr.mxu0 0.0
        %5995 = vmatpush1.msra.mxu0 %v5900
        %5996 = vmatprep.subr.mxu0 0.0
        %5997 = vmatpush1.msra.mxu0 %v5901
        %5998 = vmatprep.mubr.f32.mxu0 %v5785
        %5999 = vmatmul.mubr.f32.gmra.mrb[0].mxu0 %v5783
        %v6000 = vpop.f32.mrb[0].mxu0
        %v6001 = vadd.f32 0.0, %v6000
        %v6002 = vpop.f32.mrb[0].mxu0
        %6003 = vmatprep.mubr.f32.mxu0 %v5791
        %6004 = vmatmul.mubr.f32.gmra.mrb[0].mxu0 %v5789
        %v6005 = vpop.f32.mrb[0].mxu0
        %v6006 = vadd.f32 0.0, %v6005
        %v6007 = vpop.f32.mrb[0].mxu0
        %6008 = vdwg.mxu0
        %6009 = vmatprep.subr.mxu0 0.0
        %6010 = vmatpush1.msra.mxu0 %v5902
        %6011 = vmatprep.subr.mxu0 0.0
        %6012 = vmatpush1.msra.mxu0 %v5903
        %6013 = vmatprep.subr.mxu0 0.0
        %6014 = vmatpush1.msra.mxu0 %v5904
        %6015 = vmatprep.subr.mxu0 0.0
        %6016 = vmatpush1.msra.mxu0 %v5905
        %6017 = vmatprep.subr.mxu0 0.0
        %6018 = vmatpush1.msra.mxu0 %v5906
        %6019 = vmatprep.subr.mxu0 0.0
        %6020 = vmatpush1.msra.mxu0 %v5907
        %6021 = vmatprep.subr.mxu0 0.0
        %6022 = vmatpush1.msra.mxu0 %v5908
        %6023 = vmatprep.subr.mxu0 0.0
        %6024 = vmatpush1.msra.mxu0 %v5909
        %6025 = vmatprep.subr.mxu0 0.0
        %6026 = vmatpush1.msra.mxu0 %v5910
        %6027 = vmatprep.subr.mxu0 0.0
        %6028 = vmatpush1.msra.mxu0 %v5911
        %6029 = vmatprep.subr.mxu0 0.0
        %6030 = vmatpush1.msra.mxu0 %v5912
        %6031 = vmatprep.subr.mxu0 0.0
        %6032 = vmatpush1.msra.mxu0 %v5913
        %6033 = vmatprep.subr.mxu0 0.0
        %6034 = vmatpush1.msra.mxu0 %v5914
        %6035 = vmatprep.subr.mxu0 0.0
        %6036 = vmatpush1.msra.mxu0 %v5915
        %6037 = vmatprep.subr.mxu0 0.0
        %6038 = vmatpush1.msra.mxu0 %v5916
        %6039 = vmatprep.subr.mxu0 0.0
        %6040 = vmatpush1.msra.mxu0 %v5917
        %6041 = vmatprep.subr.mxu0 0.0
        %6042 = vmatpush1.msra.mxu0 %v5918
        %6043 = vmatprep.subr.mxu0 0.0
        %6044 = vmatpush1.msra.mxu0 %v5919
        %6045 = vmatprep.subr.mxu0 0.0
        %6046 = vmatpush1.msra.mxu0 %v5920
        %6047 = vmatprep.subr.mxu0 0.0
        %6048 = vmatpush1.msra.mxu0 %v5921
        %6049 = vmatprep.subr.mxu0 0.0
        %6050 = vmatpush1.msra.mxu0 %v5922
        %6051 = vmatprep.subr.mxu0 0.0
        %6052 = vmatpush1.msra.mxu0 %v5923
        %6053 = vmatprep.subr.mxu0 0.0
        %6054 = vmatpush1.msra.mxu0 %v5924
        %6055 = vmatprep.subr.mxu0 0.0
        %6056 = vmatpush1.msra.mxu0 %v5925
        %6057 = vmatprep.subr.mxu0 0.0
        %6058 = vmatpush1.msra.mxu0 %v5926
        %6059 = vmatprep.subr.mxu0 0.0
        %6060 = vmatpush1.msra.mxu0 %v5927
        %6061 = vmatprep.subr.mxu0 0.0
        %6062 = vmatpush1.msra.mxu0 %v5928
        %6063 = vmatprep.subr.mxu0 0.0
        %6064 = vmatpush1.msra.mxu0 %v5929
        %6065 = vmatprep.subr.mxu0 0.0
        %6066 = vmatpush1.msra.mxu0 %v5930
        %6067 = vmatprep.subr.mxu0 0.0
        %6068 = vmatpush1.msra.mxu0 %v5931
        %6069 = vmatprep.subr.mxu0 0.0
        %6070 = vmatpush1.msra.mxu0 %v5932
        %6071 = vmatprep.subr.mxu0 0.0
        %6072 = vmatpush1.msra.mxu0 %v5933
        %6073 = vmatprep.mubr.f32.mxu0 %v5862
        %6074 = vmatmul.mubr.f32.gmra.mrb[0].mxu0 %v5860
        %v6075 = vpop.f32.mrb[0].mxu0
        %v6076 = vadd.f32 %v6001, %v6075
        %v6077 = vpop.f32.mrb[0].mxu0
        %6078 = vmatprep.mubr.f32.mxu0 %v5868
        %6079 = vmatmul.mubr.f32.gmra.mrb[0].mxu0 %v5866
        %v6080 = vpop.f32.mrb[0].mxu0
        %v6081 = vadd.f32 %v6006, %v6080
        %v6082 = vpop.f32.mrb[0].mxu0
        %6083 = vdwg.mxu0
        %v6084 = vld [vmem:[%s4] sm:$0xff]
        %v6085 = vld [vmem:[%s4 + $0x8] sm:$0xff]
        %6087 = vset.pattern.permute.xlu0 0
        %6088 = vperm.xlu0 %6087, %v6084
        %v6089 = vpop.permute.xlu0 %6088
        %6092 = vset.pattern.permute.xlu0 0
        %6093 = vperm.xlu0 %6092, %v6085
        %v6094 = vpop.permute.xlu0 %6093
        %v6096 = vmul.f32 %v6076, %v6089
        %v6097 = vmul.f32 %v6081, %v6094
        %6098 = vset.pattern.permute.xlu0 1
        %6099 = vperm.xlu0 %6098, %v6084
        %v6100 = vpop.permute.xlu0 %6099
        %6102 = vset.pattern.permute.xlu0 1
        %6103 = vperm.xlu0 %6102, %v6085
        %v6104 = vpop.permute.xlu0 %6103
        %v6106 = vadd.f32 %v6096, %v6100
        %v6107 = vadd.f32 %v6097, %v6104
        %v6108 = vmax.f32 %v6106, 0.0
        %v6109 = vmax.f32 %v6107, 0.0
        %v6110 = vld [vmem:[#allocation7] sm:$0xff]
        %v6111 = vld [vmem:[#allocation7 + $0x8] sm:$0xff]
        %v6112 = vmul.f32 %v6108, %v6110
        %v6113 = vmul.f32 %v6109, %v6111
        %v6114 = vld [vmem:[%s7] sm:$0xff]
        %v6115 = vld [vmem:[%s7 + $0x8] sm:$0xff]
        %v6116 = vld [vmem:[%s7 + $0x10] sm:$0x3]
        %6117 = vset.pattern.permute.xlu0 2
        %6118 = vperm.xlu0 %6117, %v6084
        %v6119 = vpop.permute.xlu0 %6118
        %6121 = vset.pattern.permute.xlu0 2
        %6122 = vperm.xlu0 %6121, %v6085
        %v6123 = vpop.permute.xlu0 %6122
        %vm6125 = vcmask 146432
        %v6127 = vsel %vm6125, %v6112, 0
        %v6130 = vsel %vm6125, %v6113, 0
        %vm6132 = vcmask 1041408
        %v6134 = vsel %vm6132, %v6116, 0
        %6136 = vmatprep.subr.mxu0 0.0
        %6137 = vmatpush1.msra.mxu0 %v6114
        %6138 = vmatprep.subr.mxu0 0.0
        %6139 = vmatpush1.msra.mxu0 %v6115
        %6140 = vmatprep.subr.mxu0 0.0
        %6141 = vmatpush1.msra.mxu0 %v6134
        %6142 = vmatprep.subr.mxu0 0.0
        %6143 = vmatpush1.msra.mxu0 0.0
        %6144 = vmatprep.subr.mxu0 0.0
        %6145 = vmatpush1.msra.mxu0 0.0
        %6146 = vmatprep.subr.mxu0 0.0
        %6147 = vmatpush1.msra.mxu0 0.0
        %6148 = vmatprep.subr.mxu0 0.0
        %6149 = vmatpush1.msra.mxu0 0.0
        %6150 = vmatprep.subr.mxu0 0.0
        %6151 = vmatpush1.msra.mxu0 0.0
        %6152 = vmatprep.subr.mxu0 0.0
        %6153 = vmatpush1.msra.mxu0 0.0
        %6154 = vmatprep.subr.mxu0 0.0
        %6155 = vmatpush1.msra.mxu0 0.0
        %6156 = vmatprep.subr.mxu0 0.0
        %6157 = vmatpush1.msra.mxu0 0.0
        %6158 = vmatprep.subr.mxu0 0.0
        %6159 = vmatpush1.msra.mxu0 0.0
        %6160 = vmatprep.subr.mxu0 0.0
        %6161 = vmatpush1.msra.mxu0 0.0
        %6162 = vmatprep.subr.mxu0 0.0
        %6163 = vmatpush1.msra.mxu0 0.0
        %6164 = vmatprep.subr.mxu0 0.0
        %6165 = vmatpush1.msra.mxu0 0.0
        %6166 = vmatprep.subr.mxu0 0.0
        %6167 = vmatpush1.msra.mxu0 0.0
        %6168 = vmatprep.subr.mxu0 0.0
        %6169 = vmatpush1.msra.mxu0 0.0
        %6170 = vmatprep.subr.mxu0 0.0
        %6171 = vmatpush1.msra.mxu0 0.0
        %6172 = vmatprep.subr.mxu0 0.0
        %6173 = vmatpush1.msra.mxu0 0.0
        %6174 = vmatprep.subr.mxu0 0.0
        %6175 = vmatpush1.msra.mxu0 0.0
        %6176 = vmatprep.subr.mxu0 0.0
        %6177 = vmatpush1.msra.mxu0 0.0
        %6178 = vmatprep.subr.mxu0 0.0
        %6179 = vmatpush1.msra.mxu0 0.0
        %6180 = vmatprep.subr.mxu0 0.0
        %6181 = vmatpush1.msra.mxu0 0.0
        %6182 = vmatprep.subr.mxu0 0.0
        %6183 = vmatpush1.msra.mxu0 0.0
        %6184 = vmatprep.subr.mxu0 0.0
        %6185 = vmatpush1.msra.mxu0 0.0
        %6186 = vmatprep.subr.mxu0 0.0
        %6187 = vmatpush1.msra.mxu0 0.0
        %6188 = vmatprep.subr.mxu0 0.0
        %6189 = vmatpush1.msra.mxu0 0.0
        %6190 = vmatprep.subr.mxu0 0.0
        %6191 = vmatpush1.msra.mxu0 0.0
        %6192 = vmatprep.subr.mxu0 0.0
        %6193 = vmatpush1.msra.mxu0 0.0
        %6194 = vmatprep.subr.mxu0 0.0
        %6195 = vmatpush1.msra.mxu0 0.0
        %6196 = vmatprep.subr.mxu0 0.0
        %6197 = vmatpush1.msra.mxu0 0.0
        %6198 = vmatprep.subr.mxu0 0.0
        %6199 = vmatpush1.msra.mxu0 0.0
        %6200 = vmatprep.mubr.f32.mxu0 0.0
        %6201 = vmatmul.mubr.f32.gmra.mrb[0].mxu0 %v6127
        %v6202 = vpop.f32.mrb[0].mxu0
        %v6203 = vadd.f32 %v6119, %v6202
        %v6204 = vpop.f32.mrb[0].mxu0
        %6205 = vmatprep.mubr.f32.mxu0 0.0
        %6206 = vmatmul.mubr.f32.gmra.mrb[0].mxu0 %v6130
        %v6207 = vpop.f32.mrb[0].mxu0
        %v6208 = vadd.f32 %v6123, %v6207
        %v6209 = vpop.f32.mrb[0].mxu0
        %6210 = vdwg.mxu0
        %s6211 = scalar_lea.vmem [#allocation6], 160
        %v6212 = vld [vmem:[%s6211] sm:$0xff]
        %v6213 = vld [vmem:[%s6211 + $0x8] sm:$0xff]
        %6214 = vset.pattern.permute.xlu0 3
        %6215 = vperm.xlu0 %6214, %v6084
        %v6216 = vpop.permute.xlu0 %6215
        %6218 = vset.pattern.permute.xlu0 3
        %6219 = vperm.xlu0 %6218, %v6085
        %v6220 = vpop.permute.xlu0 %6219
        %v6223 = vsel %vm503, %v6212, 0
        %v6226 = vsel %vm503, %v6213, 0
        %6228 = vmatprep.subr.mxu0 0.0
        %6229 = vmatpush1.msra.mxu0 %v6203
        %6230 = vmatprep.subr.mxu0 0.0
        %6231 = vmatpush1.msra.mxu0 %v6208
        %6232 = vmatprep.subr.mxu0 0.0
        %6233 = vmatpush1.msra.mxu0 0.0
        %6234 = vmatprep.subr.mxu0 0.0
        %6235 = vmatpush1.msra.mxu0 0.0
        %6236 = vmatprep.subr.mxu0 0.0
        %6237 = vmatpush1.msra.mxu0 0.0
        %6238 = vmatprep.subr.mxu0 0.0
        %6239 = vmatpush1.msra.mxu0 0.0
        %6240 = vmatprep.subr.mxu0 0.0
        %6241 = vmatpush1.msra.mxu0 0.0
        %6242 = vmatprep.subr.mxu0 0.0
        %6243 = vmatpush1.msra.mxu0 0.0
        %6244 = vmatprep.subr.mxu0 0.0
        %6245 = vmatpush1.msra.mxu0 0.0
        %6246 = vmatprep.subr.mxu0 0.0
        %6247 = vmatpush1.msra.mxu0 0.0
        %6248 = vmatprep.subr.mxu0 0.0
        %6249 = vmatpush1.msra.mxu0 0.0
        %6250 = vmatprep.subr.mxu0 0.0
        %6251 = vmatpush1.msra.mxu0 0.0
        %6252 = vmatprep.subr.mxu0 0.0
        %6253 = vmatpush1.msra.mxu0 0.0
        %6254 = vmatprep.subr.mxu0 0.0
        %6255 = vmatpush1.msra.mxu0 0.0
        %6256 = vmatprep.subr.mxu0 0.0
        %6257 = vmatpush1.msra.mxu0 0.0
        %6258 = vmatprep.subr.mxu0 0.0
        %6259 = vmatpush1.msra.mxu0 0.0
        %6260 = vmatprep.subr.mxu0 0.0
        %6261 = vmatpush1.msra.mxu0 0.0
        %6262 = vmatprep.subr.mxu0 0.0
        %6263 = vmatpush1.msra.mxu0 0.0
        %6264 = vmatprep.subr.mxu0 0.0
        %6265 = vmatpush1.msra.mxu0 0.0
        %6266 = vmatprep.subr.mxu0 0.0
        %6267 = vmatpush1.msra.mxu0 0.0
        %6268 = vmatprep.subr.mxu0 0.0
        %6269 = vmatpush1.msra.mxu0 0.0
        %6270 = vmatprep.subr.mxu0 0.0
        %6271 = vmatpush1.msra.mxu0 0.0
        %6272 = vmatprep.subr.mxu0 0.0
        %6273 = vmatpush1.msra.mxu0 0.0
        %6274 = vmatprep.subr.mxu0 0.0
        %6275 = vmatpush1.msra.mxu0 0.0
        %6276 = vmatprep.subr.mxu0 0.0
        %6277 = vmatpush1.msra.mxu0 0.0
        %6278 = vmatprep.subr.mxu0 0.0
        %6279 = vmatpush1.msra.mxu0 0.0
        %6280 = vmatprep.subr.mxu0 0.0
        %6281 = vmatpush1.msra.mxu0 0.0
        %6282 = vmatprep.subr.mxu0 0.0
        %6283 = vmatpush1.msra.mxu0 0.0
        %6284 = vmatprep.subr.mxu0 0.0
        %6285 = vmatpush1.msra.mxu0 0.0
        %6286 = vmatprep.subr.mxu0 0.0
        %6287 = vmatpush1.msra.mxu0 0.0
        %6288 = vmatprep.subr.mxu0 0.0
        %6289 = vmatpush1.msra.mxu0 0.0
        %6290 = vmatprep.subr.mxu0 0.0
        %6291 = vmatpush1.msra.mxu0 0.0
        %6292 = vmatprep.mubr.f32.mxu0 0.0
        %6293 = vmatmul.mubr.f32.gmra.mrb[0].mxu0 %v6223
        %v6294 = vpop.f32.mrb[0].mxu0
        %v6295 = vadd.f32 %v6216, %v6294
        %v6296 = vpop.f32.mrb[0].mxu0
        %6297 = vmatprep.mubr.f32.mxu0 0.0
        %6298 = vmatmul.mubr.f32.gmra.mrb[0].mxu0 %v6226
        %v6299 = vpop.f32.mrb[0].mxu0
        %v6300 = vadd.f32 %v6220, %v6299
        %v6301 = vpop.f32.mrb[0].mxu0
        %6302 = vdwg.mxu0
        %v6303 = vxor.u32 %v6295, 2147483648
        %v6304 = vxor.u32 %v6300, 2147483648
        %v6305 = vmul.f32 %v6303, 1.442695
        %v6306 = vpow.pop %v6305
        %v6307 = vmul.f32 %v6304, 1.442695
        %v6308 = vpow.pop %v6307
        %v6309 = vadd.f32 %v6306, 1.0
        %v6310 = vadd.f32 %v6308, 1.0
        %v6311 = vrcp.pop %v6309
        %v6312 = vmul.f32 1.0, %v6311
        %v6313 = vrcp.pop %v6310
        %v6314 = vmul.f32 1.0, %v6313
        %v6315 = vld [vmem:[#allocation9] sm:$0xff]
        %v6317 = vcombine.high %v6315, %v6315
        %v6319 = vunpack.c.l.s4 1983009808
        %v6320 = vunpack.c.0.s8 %v6319
        %v6321 = vlaneseq
        %v6322 = vshrl.u32 %v6321, 7
        %v6323 = vsub.s32 %v6320, %v6322
        %v6324 = vrot.slane %v6315, %v6323
        %v6326 = vunpack.c.l.s4 1983009808
        %v6327 = vunpack.c.0.s8 %v6326
        %v6328 = vlaneseq
        %v6329 = vshrl.u32 %v6328, 7
        %v6330 = vsub.s32 %v6327, %v6329
        %v6331 = vrot.slane %v6317, %v6330
        %v6332 = vcombine.high %v6324, %v6324
        %v6333 = vcombine.high %v6331, %v6331
        %vm6334 = vcmask 15360
        %v6336 = vsel %vm6334, %v6312, 0
        %v6339 = vsel %vm6334, %v6314, 0
        %v6341 = vsel %vm6132, %v6324, 0
        %v6343 = vsel %vm6132, %v6332, 0
        %v6345 = vsel %vm6132, %v6331, 0
        %v6347 = vsel %vm6132, %v6333, 0
        %6349 = vmatprep.subr.mxu0 %v6343
        %6350 = vmatpush1.msra.mxu0 %v6341
        %6351 = vmatprep.subr.mxu0 0.0
        %6352 = vmatpush1.msra.mxu0 0.0
        %6353 = vmatprep.subr.mxu0 0.0
        %6354 = vmatpush1.msra.mxu0 0.0
        %6355 = vmatprep.subr.mxu0 0.0
        %6356 = vmatpush1.msra.mxu0 0.0
        %6357 = vmatprep.subr.mxu0 0.0
        %6358 = vmatpush1.msra.mxu0 0.0
        %6359 = vmatprep.subr.mxu0 0.0
        %6360 = vmatpush1.msra.mxu0 0.0
        %6361 = vmatprep.subr.mxu0 0.0
        %6362 = vmatpush1.msra.mxu0 0.0
        %6363 = vmatprep.subr.mxu0 0.0
        %6364 = vmatpush1.msra.mxu0 0.0
        %6365 = vmatprep.subr.mxu0 0.0
        %6366 = vmatpush1.msra.mxu0 0.0
        %6367 = vmatprep.subr.mxu0 0.0
        %6368 = vmatpush1.msra.mxu0 0.0
        %6369 = vmatprep.subr.mxu0 0.0
        %6370 = vmatpush1.msra.mxu0 0.0
        %6371 = vmatprep.subr.mxu0 0.0
        %6372 = vmatpush1.msra.mxu0 0.0
        %6373 = vmatprep.subr.mxu0 0.0
        %6374 = vmatpush1.msra.mxu0 0.0
        %6375 = vmatprep.subr.mxu0 0.0
        %6376 = vmatpush1.msra.mxu0 0.0
        %6377 = vmatprep.subr.mxu0 0.0
        %6378 = vmatpush1.msra.mxu0 0.0
        %6379 = vmatprep.subr.mxu0 0.0
        %6380 = vmatpush1.msra.mxu0 0.0
        %6381 = vmatprep.subr.mxu0 0.0
        %6382 = vmatpush1.msra.mxu0 0.0
        %6383 = vmatprep.subr.mxu0 0.0
        %6384 = vmatpush1.msra.mxu0 0.0
        %6385 = vmatprep.subr.mxu0 0.0
        %6386 = vmatpush1.msra.mxu0 0.0
        %6387 = vmatprep.subr.mxu0 0.0
        %6388 = vmatpush1.msra.mxu0 0.0
        %6389 = vmatprep.subr.mxu0 0.0
        %6390 = vmatpush1.msra.mxu0 0.0
        %6391 = vmatprep.subr.mxu0 0.0
        %6392 = vmatpush1.msra.mxu0 0.0
        %6393 = vmatprep.subr.mxu0 0.0
        %6394 = vmatpush1.msra.mxu0 0.0
        %6395 = vmatprep.subr.mxu0 0.0
        %6396 = vmatpush1.msra.mxu0 0.0
        %6397 = vmatprep.subr.mxu0 0.0
        %6398 = vmatpush1.msra.mxu0 0.0
        %6399 = vmatprep.subr.mxu0 0.0
        %6400 = vmatpush1.msra.mxu0 0.0
        %6401 = vmatprep.subr.mxu0 0.0
        %6402 = vmatpush1.msra.mxu0 0.0
        %6403 = vmatprep.subr.mxu0 0.0
        %6404 = vmatpush1.msra.mxu0 0.0
        %6405 = vmatprep.subr.mxu0 0.0
        %6406 = vmatpush1.msra.mxu0 0.0
        %6407 = vmatprep.subr.mxu0 0.0
        %6408 = vmatpush1.msra.mxu0 0.0
        %6409 = vmatprep.subr.mxu0 0.0
        %6410 = vmatpush1.msra.mxu0 0.0
        %6411 = vmatprep.subr.mxu0 0.0
        %6412 = vmatpush1.msra.mxu0 0.0
        %6413 = vmatprep.mubr.f32.mxu0 0.0
        %6414 = vmatmul.mubr.f32.gmra.mrb[0].mxu0 %v6336
        %v6415 = vpop.f32.mrb[0].mxu0
        %v6416 = vadd.f32 0.0, %v6415
        %v6417 = vpop.f32.mrb[0].mxu0
        %v6418 = vadd.f32 0.0, %v6417
        %6419 = vmatprep.mubr.f32.mxu0 0.0
        %6420 = vmatmul.mubr.f32.gmra.mrb[0].mxu0 %v6339
        %v6421 = vpop.f32.mrb[0].mxu0
        %v6422 = vadd.f32 0.0, %v6421
        %v6423 = vpop.f32.mrb[0].mxu0
        %v6424 = vadd.f32 0.0, %v6423
        %6425 = vdwg.mxu0
        %6426 = vmatprep.subr.mxu0 %v6347
        %6427 = vmatpush1.msra.mxu0 %v6345
        %6428 = vmatprep.subr.mxu0 0.0
        %6429 = vmatpush1.msra.mxu0 0.0
        %6430 = vmatprep.subr.mxu0 0.0
        %6431 = vmatpush1.msra.mxu0 0.0
        %6432 = vmatprep.subr.mxu0 0.0
        %6433 = vmatpush1.msra.mxu0 0.0
        %6434 = vmatprep.subr.mxu0 0.0
        %6435 = vmatpush1.msra.mxu0 0.0
        %6436 = vmatprep.subr.mxu0 0.0
        %6437 = vmatpush1.msra.mxu0 0.0
        %6438 = vmatprep.subr.mxu0 0.0
        %6439 = vmatpush1.msra.mxu0 0.0
        %6440 = vmatprep.subr.mxu0 0.0
        %6441 = vmatpush1.msra.mxu0 0.0
        %6442 = vmatprep.subr.mxu0 0.0
        %6443 = vmatpush1.msra.mxu0 0.0
        %6444 = vmatprep.subr.mxu0 0.0
        %6445 = vmatpush1.msra.mxu0 0.0
        %6446 = vmatprep.subr.mxu0 0.0
        %6447 = vmatpush1.msra.mxu0 0.0
        %6448 = vmatprep.subr.mxu0 0.0
        %6449 = vmatpush1.msra.mxu0 0.0
        %6450 = vmatprep.subr.mxu0 0.0
        %6451 = vmatpush1.msra.mxu0 0.0
        %6452 = vmatprep.subr.mxu0 0.0
        %6453 = vmatpush1.msra.mxu0 0.0
        %6454 = vmatprep.subr.mxu0 0.0
        %6455 = vmatpush1.msra.mxu0 0.0
        %6456 = vmatprep.subr.mxu0 0.0
        %6457 = vmatpush1.msra.mxu0 0.0
        %6458 = vmatprep.subr.mxu0 0.0
        %6459 = vmatpush1.msra.mxu0 0.0
        %6460 = vmatprep.subr.mxu0 0.0
        %6461 = vmatpush1.msra.mxu0 0.0
        %6462 = vmatprep.subr.mxu0 0.0
        %6463 = vmatpush1.msra.mxu0 0.0
        %6464 = vmatprep.subr.mxu0 0.0
        %6465 = vmatpush1.msra.mxu0 0.0
        %6466 = vmatprep.subr.mxu0 0.0
        %6467 = vmatpush1.msra.mxu0 0.0
        %6468 = vmatprep.subr.mxu0 0.0
        %6469 = vmatpush1.msra.mxu0 0.0
        %6470 = vmatprep.subr.mxu0 0.0
        %6471 = vmatpush1.msra.mxu0 0.0
        %6472 = vmatprep.subr.mxu0 0.0
        %6473 = vmatpush1.msra.mxu0 0.0
        %6474 = vmatprep.subr.mxu0 0.0
        %6475 = vmatpush1.msra.mxu0 0.0
        %6476 = vmatprep.subr.mxu0 0.0
        %6477 = vmatpush1.msra.mxu0 0.0
        %6478 = vmatprep.subr.mxu0 0.0
        %6479 = vmatpush1.msra.mxu0 0.0
        %6480 = vmatprep.subr.mxu0 0.0
        %6481 = vmatpush1.msra.mxu0 0.0
        %6482 = vmatprep.subr.mxu0 0.0
        %6483 = vmatpush1.msra.mxu0 0.0
        %6484 = vmatprep.subr.mxu0 0.0
        %6485 = vmatpush1.msra.mxu0 0.0
        %6486 = vmatprep.subr.mxu0 0.0
        %6487 = vmatpush1.msra.mxu0 0.0
        %6488 = vmatprep.subr.mxu0 0.0
        %6489 = vmatpush1.msra.mxu0 0.0
        %6490 = vmatprep.mubr.f32.mxu0 0.0
        %6491 = vmatmul.mubr.f32.gmra.mrb[0].mxu0 %v6336
        %v6492 = vpop.f32.mrb[0].mxu0
        %v6493 = vadd.f32 0.0, %v6492
        %v6494 = vpop.f32.mrb[0].mxu0
        %v6495 = vadd.f32 0.0, %v6494
        %6496 = vmatprep.mubr.f32.mxu0 0.0
        %6497 = vmatmul.mubr.f32.gmra.mrb[0].mxu0 %v6339
        %v6498 = vpop.f32.mrb[0].mxu0
        %v6499 = vadd.f32 0.0, %v6498
        %v6500 = vpop.f32.mrb[0].mxu0
        %v6501 = vadd.f32 0.0, %v6500
        %6502 = vdwg.mxu0
        %v6503 = vmul.f32 %v5783, %v6416
        %v6504 = vmul.f32 %v5785, %v6418
        %v6505 = vmul.f32 %v5860, %v6493
        %v6506 = vmul.f32 %v5862, %v6495
        %v6507 = vmul.f32 %v5789, %v6422
        %v6508 = vmul.f32 %v5791, %v6424
        %v6509 = vmul.f32 %v5866, %v6499
        %v6510 = vmul.f32 %v5868, %v6501
        %6511 = vst [vmem:[%s403] sm:$0xff] %v6503
        %6512 = vst [vmem:[%s403 + $0x8] sm:$0xff] %v6504
        %6513 = vst [vmem:[%s403 + $0x10] sm:$0xff] %v6505
        %6514 = vst [vmem:[%s403 + $0x18] sm:$0xff] %v6506
        %6515 = vst [vmem:[%s403 + $0x20] sm:$0xff] %v6507
        %6516 = vst [vmem:[%s403 + $0x28] sm:$0xff] %v6508
        %6517 = vst [vmem:[%s403 + $0x30] sm:$0xff] %v6509
        %6518 = vst [vmem:[%s403 + $0x38] sm:$0xff] %v6510
        %p6519 = scmp.lt.s32.totalorder %s23, 1
        %s6520 = scalar_select %p6519, %s23, 1
        %s6521 = smul.addr %s6520, 8
        %s6522 = smul.addr %s6521, 8
        %s6523 = scalar_lea.vmem %s9, %s6522
        // Predicated region
        $region77: #{me_att_forward.1} parent=55 // pred_check
          %p6524 = pneg %p235
        $region78: #{me_att_forward.1} parent=55 // pred_check_branch
          %6526 = sbr.rel (%p6524) target = $region80
        $region79: #{me_att_forward.1} parent=55 // pred_region
          _
        $region80: #{me_att_forward.1} parent=55 // pred_fallthru
          _
      $region56: #{me_att_forward.1} parent=5 // pred_fallthru
        _
      %p6527 = scmp.le.s32.totalorder 2, %s18
      // Predicated region
      $region81: #{me_att_forward.1} parent=5 // pred_check
        %p6528 = pneg %p6527
      $region82: #{me_att_forward.1} parent=5 // pred_check_branch
        %6530 = sbr.rel (%p6528) target = $region84
      $region83: #{me_att_forward.1} parent=5 // pred_region
        %s6531 = ssub.s32 %s18, 2
        // Predicated region
        $region85: #{me_att_forward.1} parent=83 // pred_check
          %p6532 = pneg %p241
        $region86: #{me_att_forward.1} parent=83 // pred_check_branch
          %6534 = sbr.rel (%p6532) target = $region88
        $region87: #{me_att_forward.1} parent=83 // pred_region
          %p6535 = scmp.lt.s32.totalorder %s24, 1
          %s6536 = scalar_select %p6535, %s24, 1
          %s6537 = smul.addr %s6536, 8
          %s6538 = smul.addr %s6537, 8
          %s6539 = scalar_lea.vmem %s9, %s6538
        $region88: #{me_att_forward.1} parent=83 // pred_fallthru
          _
      $region84: #{me_att_forward.1} parent=5 // pred_fallthru
        _
    $region6: #{me_att_forward.1} parent=1 // loop_footer
      %s22 = sadd.s32 1, %s18
    $region7: #{me_att_forward.1} parent=1 // loop_footer_branch
      %17 = sbr.rel target = $region3
    $region8: #{me_att_forward.1} parent=1 // loop_exit
      _
    %6540 = vsyncpa [#allocation3], 1
    %s6541 = scalar_lea.sflag [#allocation3], 1
    %6542 = vsyncpa %s6541, 1
    %6543 = vsyncpa [#allocation5], 1
    %6544 = vsyncpa [#allocation8], 1

</llo_original>
